<compile_context>
chip_gen: v7x
topology: tpu7x:2x2x1
jax: 0.10.0
libtpu: 0.0.40
codegen_flags: <defaults>
</compile_context>

<pallas_src>
import functools

import jax
import jax.numpy as jnp
import numpy as np
from jax.experimental import pallas as pl
from jax.experimental.pallas import tpu as pltpu

PRELU_ALPHA = 0.25
ACT_DTYPE = jnp.bfloat16
SCALE_CFG = {2: (6, 2, 2), 4: (8, 4, 2), 8: (12, 8, 2)}  # kernel, stride, pad


def _rup(v, m):
    return (v + m - 1) // m * m


@functools.lru_cache(maxsize=None)
def _tm_pref():
    """M-tile preference per TPU generation (256x256 MXU on v6e/v7x)."""
    try:
        kind = jax.devices()[0].device_kind.lower()
    except Exception:
        kind = ""
    return 256 if ("v6" in kind or "v7" in kind) else 128


def _pick_tm(m, pref):
    """Minimise M padding waste; keep >=2 M blocks when it costs nothing so
    the 'parallel' M axis can be sharded across v7x's two TensorCores."""
    mp128 = _rup(m, 128)
    if pref < 256 or mp128 <= 256:
        return 128
    return 256 if _rup(m, 256) == mp128 else 128


# ----------------------------------------------------------------------------
# Pallas kernels: fused (A @ W) + bias + PReLU (+ residual), full-K per step
# ----------------------------------------------------------------------------
def _mm_kernel(a_ref, b_ref, bias_ref, o_ref, *, prelu, alpha, cout):
    r = jnp.dot(a_ref[...], b_ref[...], preferred_element_type=jnp.float32)
    r = r + bias_ref[...]
    if prelu:
        r = jnp.where(r > 0, r, alpha * r)
    o_ref[...] = r[:, :cout].astype(o_ref.dtype)


def _mm_res_kernel(a_ref, b_ref, bias_ref, res_ref, o_ref, *, prelu, alpha,
                   cout, res_sign):
    r = jnp.dot(a_ref[...], b_ref[...], preferred_element_type=jnp.float32)
    r = r + bias_ref[...]
    if prelu:
        r = jnp.where(r > 0, r, alpha * r)
    res = res_ref[...].astype(jnp.float32)
    r = r[:, :cout] + (res if res_sign >= 0 else -res)
    o_ref[...] = r.astype(o_ref.dtype)


def matmul_bias_act(a, wm, bias, prelu, residual=None, res_sign=1.0):
    """a: (M,K) bf16 im2col slab; wm: (Kp,Np) bf16 pre-padded matmul-layout
    weight; bias: (Cout,) f32; residual: optional (M,Cout) bf16 fused into the
    epilogue (applied after the activation).  Returns (M,Cout) bf16."""
    M, K = a.shape
    Kp, Np = wm.shape
    cout = bias.shape[0]

    tm = _pick_tm(M, _tm_pref())
    Mp = _rup(M, tm)

    a_p = jnp.pad(a, ((0, Mp - M), (0, Kp - K)))
    bias_p = jnp.pad(bias.astype(jnp.float32), (0, Np - cout)).reshape(1, Np)

    args = [a_p, wm, bias_p]
    in_specs = [
        pl.BlockSpec((tm, Kp), lambda i: (i, 0)),
        pl.BlockSpec((Kp, Np), lambda i: (0, 0)),   # weight VMEM-resident
        pl.BlockSpec((1, Np), lambda i: (0, 0)),    # bias VMEM-resident
    ]
    res_bytes = 0
    if residual is not None:
        args.append(jnp.pad(residual, ((0, Mp - M), (0, 0))))
        in_specs.append(pl.BlockSpec((tm, cout), lambda i: (i, 0)))
        kernel = functools.partial(_mm_res_kernel, prelu=prelu,
                                   alpha=PRELU_ALPHA, cout=cout,
                                   res_sign=res_sign)
        res_bytes = Mp * cout * 2
    else:
        kernel = functools.partial(_mm_kernel, prelu=prelu,
                                   alpha=PRELU_ALPHA, cout=cout)

    cost = pl.CostEstimate(
        flops=2 * Mp * Np * Kp, transcendentals=0,
        bytes_accessed=(Mp * Kp * 2 + Kp * Np * 2 + Np * 4 + Mp * cout * 2
                        + res_bytes))

    out = pl.pallas_call(
        kernel,
        out_shape=jax.ShapeDtypeStruct((Mp, cout), ACT_DTYPE),
        grid_spec=pltpu.PrefetchScalarGridSpec(
            num_scalar_prefetch=0,
            grid=(Mp // tm,),
            in_specs=in_specs,
            out_specs=pl.BlockSpec((tm, cout), lambda i: (i, 0)),
        ),
        compiler_params=pltpu.CompilerParams(
            dimension_semantics=("parallel",)),
        cost_estimate=cost,
    )(*args)
    return out[:M]


# ----------------------------------------------------------------------------
# Conv wrapper (im2col glue + fused Pallas matmul)
# ----------------------------------------------------------------------------
def conv2d(x, layer, k, stride, padding, prelu, residual=None, res_sign=1.0):
    """x: (N,H,W,Cin) bf16; residual (optional): (N,OH,OW,Cout) bf16 fused into
    the kernel epilogue (after the activation, with sign res_sign)."""
    n, h, wd, cin = x.shape
    cout = layer['b'].shape[0]
    oh = (h + 2 * padding - k) // stride + 1
    ow = (wd + 2 * padding - k) // stride + 1
    xp = jnp.pad(x, ((0, 0), (padding, padding), (padding, padding), (0, 0)))
    cols = []
    for i in range(k):
        for j in range(k):
            cols.append(xp[:, i:i + (oh - 1) * stride + 1:stride,
                            j:j + (ow - 1) * stride + 1:stride, :])
    a = jnp.concatenate(cols, axis=-1).reshape(n * oh * ow, k * k * cin)
    res2d = (residual.reshape(n * oh * ow, cout)
             if residual is not None else None)
    y = matmul_bias_act(a, layer['wm'], layer['b'], prelu,
                        residual=res2d, res_sign=res_sign)
    return y.reshape(n, oh, ow, cout)


# ----------------------------------------------------------------------------
# Sub-pixel transposed conv (no zero-stuffed input)
# ----------------------------------------------------------------------------
def _phase_geometry(k, s, p):
    """Per output phase r (mod s): (first weight tap, #taps, input offset)."""
    pad_eff = k - 1 - p
    geo = []
    for r in range(s):
        rr = (pad_eff - r) % s
        taps = -(-(k - rr) // s)
        off = (r + rr - pad_eff) // s
        geo.append((rr, taps, off))
    return geo


def _uniform_phases(k, s, p):
    geo = _phase_geometry(k, s, p)
    return all(g[1:] == geo[0][1:] for g in geo) and (k - 2 * p) % s == 0


def _gather_taps(x, taps, off, ohp, owp):
    """Shared-phase im2col: taps x taps stride-1 windows of x at offset `off`."""
    n, h, w_in, cin = x.shape
    pt = max(0, -off)
    pb = max(0, (ohp + taps - 1 + off + pt) - (h + pt))
    pr = max(0, (owp + taps - 1 + off + pt) - (w_in + pt))
    xp = jnp.pad(x, ((0, 0), (pt, pb), (pt, pr), (0, 0)))
    cols = []
    for ty in range(taps):
        r0 = ty + off + pt
        for tx in range(taps):
            c0 = tx + off + pt
            cols.append(xp[:, r0:r0 + ohp, c0:c0 + owp, :])
    return jnp.concatenate(cols, axis=-1).reshape(
        n * ohp * owp, taps * taps * cin)


def deconv2d(x, layer, stride, kernel, padding, prelu):
    """ConvTranspose2d via sub-pixel decomposition.  For uniform phase
    geometry (scale 2) all s*s phases share one A matrix and are computed by a
    single matmul with the phase weights stacked along N."""
    n, h, w_in, cin = x.shape
    s, k, p = stride, kernel, padding
    cout = layer['b'].shape[0]
    oh = (h - 1) * s + k - 2 * p
    ow = (w_in - 1) * s + k - 2 * p
    geo = _phase_geometry(k, s, p)

    if 'wm_cat' in layer:                     # fused, uniform-geometry path
        _, taps, off = geo[0]
        ohp, owp = oh // s, ow // s
        a = _gather_taps(x, taps, off, ohp, owp)
        b_cat = jnp.tile(layer['b'], s * s)
        y = matmul_bias_act(a, layer['wm_cat'], b_cat, prelu)
        y = y.reshape(n, ohp, owp, s, s, cout)            # (.., py, px, c)
        return jnp.transpose(y, (0, 1, 3, 2, 4, 5)).reshape(n, oh, ow, cout)

    # General per-phase path (scale 4 / 8 geometries).
    out = jnp.zeros((n, oh, ow, cout), ACT_DTYPE)
    for py in range(s):
        _, ty_n, dy = geo[py]
        ohp = -(-(oh - py) // s)
        for px in range(s):
            _, tx_n, dx = geo[px]
            owp = -(-(ow - px) // s)
            pt, pl_ = max(0, -dy), max(0, -dx)
            pb = max(0, (ohp + ty_n - 1 + dy + pt) - (h + pt))
            pr = max(0, (owp + tx_n - 1 + dx + pl_) - (w_in + pl_))
            xp = jnp.pad(x, ((0, 0), (pt, pb), (pl_, pr), (0, 0)))
            cols = []
            for ty in range(ty_n):
                r0 = ty + dy + pt
                for tx in range(tx_n):
                    c0 = tx + dx + pl_
                    cols.append(xp[:, r0:r0 + ohp, c0:c0 + owp, :])
            a = jnp.concatenate(cols, axis=-1).reshape(
                n * ohp * owp, ty_n * tx_n * cin)
            yph = matmul_bias_act(a, layer['wm_ph'][py][px], layer['b'], prelu)
            out = out.at[:, py::s, px::s, :].set(yph.reshape(n, ohp, owp, cout))
    return out


# ----------------------------------------------------------------------------
# Parameter packing (matmul layout, 128-padded, bf16) + init
# ----------------------------------------------------------------------------
def _pack_w(wm, cout):
    kdim = wm.shape[0]
    kp, np_ = _rup(kdim, 128), _rup(cout, 128)
    return jnp.pad(wm, ((0, kp - kdim), (0, np_ - cout))).astype(jnp.bfloat16)


def pack_conv(w, b):
    """w: (Cout, Cin, KH, KW), b: (Cout,)."""
    cout, cin, kh, kw = w.shape
    wm = jnp.transpose(w, (2, 3, 1, 0)).reshape(kh * kw * cin, cout)
    return {'wm': _pack_w(wm, cout), 'b': b.astype(jnp.float32)}


def pack_conv_multi(ws, bs):
    """Stack several conv weights with identical (Cin, K) along the output
    channel axis so one pallas_call serves all of them (better MXU column
    occupancy, fewer launches)."""
    wms = []
    for w in ws:
        cout, cin, kh, kw = w.shape
        wms.append(jnp.transpose(w, (2, 3, 1, 0)).reshape(kh * kw * cin, cout))
    wm = jnp.concatenate(wms, axis=1)
    b = jnp.concatenate(bs).astype(jnp.float32)
    return {'wm': _pack_w(wm, b.shape[0]), 'b': b}


def pack_deconv(wt, b, k, s, p):
    """wt: PyTorch ConvTranspose2d weight (Cin, Cout, K, K), b: (Cout,)."""
    cin, cout = wt.shape[0], wt.shape[1]
    # equivalent forward-conv weight: swap in/out channels, flip spatially
    wf = jnp.transpose(wt, (1, 0, 2, 3))[:, :, ::-1, ::-1]     # (Cout,Cin,K,K)
    geo = _phase_geometry(k, s, p)

    def phase_wm(py, px):
        ry, ty_n, _ = geo[py]
        rx, tx_n, _ = geo[px]
        taps = []
        for ty in range(ty_n):
            for tx in range(tx_n):
                taps.append(wf[:, :, ry + ty * s, rx + tx * s])   # (Cout, Cin)
        wm = jnp.stack(taps, 0)                                   # (T,Cout,Cin)
        return jnp.transpose(wm, (0, 2, 1)).reshape(ty_n * tx_n * cin, cout)

    out = {'b': b.astype(jnp.float32)}
    if _uniform_phases(k, s, p):
        cat = jnp.concatenate([phase_wm(py, px) for py in range(s)
                               for px in range(s)], axis=1)
        out['wm_cat'] = _pack_w(cat, s * s * cout)
    else:
        out['wm_ph'] = [[_pack_w(phase_wm(py, px), cout)
                         for px in range(s)] for py in range(s)]
    return out


class KeyGen:
    def __init__(self, seed):
        self._key = jax.random.PRNGKey(seed)

    def __call__(self):
        self._key, k = jax.random.split(self._key)
        return k


def conv_params(kg, cin, cout, k):
    w = jax.random.normal(kg(), (cout, cin, k, k), jnp.float32) / np.sqrt(cin * k * k)
    b = jax.random.normal(kg(), (cout,), jnp.float32) * 0.01
    return pack_conv(w, b)


def conv_params_multi(kg, cin, couts, k):
    ws, bs = [], []
    for cout in couts:
        ws.append(jax.random.normal(kg(), (cout, cin, k, k), jnp.float32)
                  / np.sqrt(cin * k * k))
        bs.append(jax.random.normal(kg(), (cout,), jnp.float32) * 0.01)
    return pack_conv_multi(ws, bs)


def deconv_params(kg, cin, cout, k, s, p):
    wt = jax.random.normal(kg(), (cin, cout, k, k), jnp.float32) / np.sqrt(cin * k * k)
    b = jax.random.normal(kg(), (cout,), jnp.float32) * 0.01
    return pack_deconv(wt, b, k, s, p)


def init_resblock(kg, nf):
    return {'conv1': conv_params(kg, nf, nf, 3),
            'conv2': conv_params(kg, nf, nf, 3)}


def init_up(kg, nf, k, s, p):
    return {'c1': deconv_params(kg, nf, nf, k, s, p),
            'c2': conv_params(kg, nf, nf, k),
            'c3': deconv_params(kg, nf, nf, k, s, p)}


def init_down(kg, nf, k, s, p):
    return {'c1': conv_params(kg, nf, nf, k),
            'c2': deconv_params(kg, nf, nf, k, s, p),
            'c3': conv_params(kg, nf, nf, k)}


def init_dbpns(kg, base_filter, feat, num_stages, k, s, p):
    return {'feat0': conv_params(kg, base_filter, feat, 3),
            'up1': init_up(kg, feat, k, s, p), 'down1': init_down(kg, feat, k, s, p),
            'up2': init_up(kg, feat, k, s, p), 'down2': init_down(kg, feat, k, s, p),
            'up3': init_up(kg, feat, k, s, p),
            'out': conv_params(kg, num_stages * feat, feat, 3)}


def init_rbpn(kg, num_channels, base_filter, feat, num_stages, n_resblock,
              nFrames, scale_factor):
    k, s, p = SCALE_CFG[scale_factor]
    return {
        'dbpn': init_dbpns(kg, base_filter, feat, num_stages, k, s, p),
        'res_feat1': {'res': [init_resblock(kg, base_filter) for _ in range(n_resblock)],
                      'tail': deconv_params(kg, base_filter, feat, k, s, p)},
        'res_feat2': {'res': [init_resblock(kg, feat) for _ in range(n_resblock)],
                      'tail': conv_params(kg, feat, feat, 3)},
        'res_feat3': {'res': [init_resblock(kg, feat) for _ in range(n_resblock)],
                      'tail': conv_params(kg, feat, base_filter, k)},
        'output': conv_params(kg, (nFrames - 1) * feat, num_channels, 3),
    }


def init_tounet(kg, num_channels, base_filter, feat, nFrames, scale_factor):
    # TouNet hard-codes num_stages=3 and n_resblock=5 for both RBPNs.
    # feat0 / feat1 of the two RBPNs are stored merged (stacked along Cout) so
    # one pallas_call serves both networks.
    return {
        'feat0': conv_params_multi(kg, num_channels,
                                   [base_filter, base_filter], 3),
        'feat1': conv_params_multi(kg, num_channels * 2 + 2,
                                   [base_filter, base_filter], 3),
        'forward_rbpn': init_rbpn(kg, num_channels, base_filter, feat, 3, 5,
                                  nFrames, scale_factor),
        'backward_rbpn': init_rbpn(kg, num_channels, base_filter, feat, 3, 5,
                                   nFrames, scale_factor),
        'output': conv_params(kg, num_channels * 2, num_channels, 3),
    }


# ----------------------------------------------------------------------------
# Forward passes (NHWC bf16), run under one outer jit
# ----------------------------------------------------------------------------
def resblock_fwd(p, x):
    out = conv2d(x, p['conv1'], 3, 1, 1, True)
    # residual "+ x" fused into the (non-activated) conv2 epilogue
    return conv2d(out, p['conv2'], 3, 1, 1, False, residual=x, res_sign=1.0)


def up_block(p, x, k, s, pad):
    h0 = deconv2d(x, p['c1'], s, k, pad, True)
    # "l0 - x" fused into c2's epilogue (after PReLU)
    l0mx = conv2d(h0, p['c2'], k, s, pad, True, residual=x, res_sign=-1.0)
    h1 = deconv2d(l0mx, p['c3'], s, k, pad, True)
    return h1 + h0


def down_block(p, x, k, s, pad):
    l0 = conv2d(x, p['c1'], k, s, pad, True)
    h0 = deconv2d(l0, p['c2'], s, k, pad, True)
    # "l1 + l0" fused into c3's epilogue (after PReLU)
    return conv2d(h0 - x, p['c3'], k, s, pad, True, residual=l0, res_sign=1.0)


def dbpns_fwd(p, x, k, s, pad):
    x = conv2d(x, p['feat0'], 3, 1, 1, True)
    h1 = up_block(p['up1'], x, k, s, pad)
    h2 = up_block(p['up2'], down_block(p['down1'], h1, k, s, pad), k, s, pad)
    h3 = up_block(p['up3'], down_block(p['down2'], h2, k, s, pad), k, s, pad)
    cat = jnp.concatenate([h3, h2, h1], axis=-1)
    return conv2d(cat, p['out'], 3, 1, 1, False)


def res_feat1_fwd(p, x, k, s, pad):
    for rb in p['res']:
        x = resblock_fwd(rb, x)
    return deconv2d(x, p['tail'], s, k, pad, True)


def res_feat2_fwd(p, x, h0):
    for rb in p['res']:
        x = resblock_fwd(rb, x)
    # h = h0 + e fused into the tail conv's epilogue (after PReLU)
    return conv2d(x, p['tail'], 3, 1, 1, True, residual=h0, res_sign=1.0)


def res_feat3_fwd(p, x, k, s, pad):
    for rb in p['res']:
        x = resblock_fwd(rb, x)
    return conv2d(x, p['tail'], k, s, pad, True)


def rbpn_fwd(p, feat_input, feat_frames, k, s, pad):
    Ht = []
    for ff in feat_frames:
        h0 = dbpns_fwd(p['dbpn'], feat_input, k, s, pad)
        h1 = res_feat1_fwd(p['res_feat1'], ff, k, s, pad)
        h = res_feat2_fwd(p['res_feat2'], h0 - h1, h0)     # h = h0 + e
        Ht.append(h)
        feat_input = res_feat3_fwd(p['res_feat3'], h, k, s, pad)
    out = jnp.concatenate(Ht, axis=-1)
    return conv2d(out, p['output'], 3, 1, 1, False)


def tounet_fwd(params, x_nchw, neigbor_nchw, flow_nchw, scale_factor):
    """x: (N,C,H,W); neigbor/flow: lists of (N,C,H,W)/(N,2,H,W) — PyTorch layout."""
    k, s, pad = SCALE_CFG[scale_factor]
    to_nhwc = lambda t: jnp.transpose(t, (0, 2, 3, 1)).astype(ACT_DTYPE)
    x = to_nhwc(x_nchw)
    neigbor = [to_nhwc(t) for t in neigbor_nchw]
    flow = [to_nhwc(t) for t in flow_nchw]
    n = x.shape[0]
    nfr = len(neigbor)

    # Merged feat0: forward+backward RBPN share the same input x -> one call
    # with both weight sets stacked along the output-channel axis.
    f0 = conv2d(x, params['feat0'], 3, 1, 1, True)
    bf = f0.shape[-1] // 2
    f0_f, f0_b = f0[..., :bf], f0[..., bf:]

    # Merged feat1: all (x, neighbour, flow) frames batched along M, forward +
    # backward weights stacked along N -> one call for 2*(nFrames-1) convs.
    stacked = jnp.concatenate(
        [jnp.concatenate([x, nb, fl], axis=-1) for nb, fl in zip(neigbor, flow)],
        axis=0)
    f1 = conv2d(stacked, params['feat1'], 3, 1, 1, True)
    f1_fwd = [f1[i * n:(i + 1) * n, ..., :bf] for i in range(nfr)]
    f1_bwd = [f1[i * n:(i + 1) * n, ..., bf:] for i in range(nfr)][::-1]

    pred_f = rbpn_fwd(params['forward_rbpn'], f0_f, f1_fwd, k, s, pad)
    pred_b = rbpn_fwd(params['backward_rbpn'], f0_b, f1_bwd, k, s, pad)
    out = jnp.concatenate([pred_f, pred_b], axis=-1)        # torch.cat(dim=1)
    out = conv2d(out, params['output'], 3, 1, 1, False)
    return jnp.transpose(out, (0, 3, 1, 2)).astype(jnp.float32)   # NCHW f32


# ----------------------------------------------------------------------------
if __name__ == "__main__":
    # Small deterministic config
    num_channels, base_filter, feat = 3, 16, 16
    nFrames, scale_factor = 3, 2
    N, H, W = 1, 8, 8

    params = init_tounet(KeyGen(42), num_channels, base_filter, feat,
                         nFrames, scale_factor)

    key = jax.random.PRNGKey(0)
    k_x, k_n, k_f = jax.random.split(key, 3)
    x = jax.random.normal(k_x, (N, num_channels, H, W), jnp.float32)
    neigbor = [jax.random.normal(jax.random.fold_in(k_n, i),
                                 (N, num_channels, H, W), jnp.float32)
               for i in range(nFrames - 1)]
    flow = [jax.random.normal(jax.random.fold_in(k_f, i),
                              (N, 2, H, W), jnp.float32)
            for i in range(nFrames - 1)]

    fwd = jax.jit(functools.partial(tounet_fwd, scale_factor=scale_factor))
    out = jax.block_until_ready(fwd(params, x, neigbor, flow))

    expected = (N, num_channels, H * scale_factor, W * scale_factor)
    assert out.shape == expected, (out.shape, expected)
    assert bool(jnp.all(jnp.isfinite(out)))
    print("KERNEL_OK")
</pallas_src>

<mosaic_0001>
module attributes {stable_mosaic.version = 11 : i64} {
  func.func @_mm_kernel(%arg0: i32, %arg1: memref<128x128xbf16, #tpu.memory_space<vmem>>, %arg2: memref<128x128xbf16, #tpu.memory_space<vmem>>, %arg3: memref<1x128xf32, #tpu.memory_space<vmem>>, %arg4: memref<128x32xbf16, #tpu.memory_space<vmem>>) attributes {dimension_semantics = [#tpu.dimension_semantics<parallel>], iteration_bounds = array<i64: 1>, scalar_prefetch = 0 : i64, scratch_operands = 0 : i64, tpu.core_type = #tpu.core_type<tc>, window_params = [{transform_indices = @transform_0, window_bounds = array<i64: 128, 128>}, {pipeline_mode = #tpu.pipeline_mode<synchronous>, transform_indices = @transform_1, window_bounds = array<i64: 128, 128>}, {pipeline_mode = #tpu.pipeline_mode<synchronous>, transform_indices = @transform_2, window_bounds = array<i64: 1, 128>}, {transform_indices = @transform_3, window_bounds = array<i64: 128, 32>}]} {
    %c0 = arith.constant 0 : index
    %c0_0 = arith.constant 0 : index
    %0 = vector.load %arg1[%c0, %c0_0] : memref<128x128xbf16, #tpu.memory_space<vmem>>, vector<128x128xbf16>
    %c0_1 = arith.constant 0 : index
    %c0_2 = arith.constant 0 : index
    %1 = vector.load %arg2[%c0_1, %c0_2] : memref<128x128xbf16, #tpu.memory_space<vmem>>, vector<128x128xbf16>
    %cst = arith.constant dense<0.000000e+00> : vector<128x128xf32>
    %2 = tpu.matmul %0, %1, %cst {dimension_numbers = #tpu.dot_dimension_numbers<[1], [0], [0], [1], [0, 0, 1, 1], [], []>} : vector<128x128xbf16>, vector<128x128xbf16>, vector<128x128xf32> -> vector<128x128xf32>
    %c0_3 = arith.constant 0 : index
    %c0_4 = arith.constant 0 : index
    %3 = vector.load %arg3[%c0_3, %c0_4] : memref<1x128xf32, #tpu.memory_space<vmem>>, vector<1x128xf32>
    %4 = vector.broadcast %3 : vector<1x128xf32> to vector<128x128xf32>
    %5 = arith.addf %2, %4 : vector<128x128xf32>
    %cst_5 = arith.constant 0.000000e+00 : f32
    %6 = vector.broadcast %cst_5 : f32 to vector<128x128xf32>
    %7 = arith.cmpf ogt, %5, %6 : vector<128x128xf32>
    %cst_6 = arith.constant 2.500000e-01 : f32
    %8 = vector.broadcast %cst_6 : f32 to vector<128x128xf32>
    %9 = arith.mulf %8, %5 : vector<128x128xf32>
    %10 = arith.select %7, %5, %9 : vector<128x128xi1>, vector<128x128xf32>
    %11 = vector.extract_strided_slice %10 {offsets = [0, 0], sizes = [128, 32], strides = [1, 1]} : vector<128x128xf32> to vector<128x32xf32>
    %12 = arith.truncf %11 : vector<128x32xf32> to vector<128x32xbf16>
    %c0_7 = arith.constant 0 : index
    %c0_8 = arith.constant 0 : index
    %13 = vector.load %arg4[%c0_7, %c0_8] : memref<128x32xbf16, #tpu.memory_space<vmem>>, vector<128x32xbf16>
    tpu.vector_store %arg4[%c0_7, %c0_8], %12 {strides = array<i32>} : memref<128x32xbf16, #tpu.memory_space<vmem>>, vector<128x32xbf16>,
    return
  }
  func.func @transform_0(%arg0: i32) -> (i32, i32) {
    %c0_i32 = arith.constant 0 : i32
    %c0_i32_0 = arith.constant 0 : i32
    return %arg0, %c0_i32 : i32, i32
  }
  func.func @transform_1(%arg0: i32) -> (i32, i32) {
    %c0_i32 = arith.constant 0 : i32
    %c0_i32_0 = arith.constant 0 : i32
    %c0_i32_1 = arith.constant 0 : i32
    return %c0_i32, %c0_i32_0 : i32, i32
  }
  func.func @transform_2(%arg0: i32) -> (i32, i32) {
    %c0_i32 = arith.constant 0 : i32
    %c0_i32_0 = arith.constant 0 : i32
    %c0_i32_1 = arith.constant 0 : i32
    return %c0_i32, %c0_i32_0 : i32, i32
  }
  func.func @transform_3(%arg0: i32) -> (i32, i32) {
    %c0_i32 = arith.constant 0 : i32
    %c0_i32_0 = arith.constant 0 : i32
    return %arg0, %c0_i32 : i32, i32
  }
}

module attributes {stable_mosaic.version = 11 : i64} {
  func.func @_mm_kernel(%arg0: i32, %arg1: memref<128x256xbf16, #tpu.memory_space<vmem>>, %arg2: memref<256x128xbf16, #tpu.memory_space<vmem>>, %arg3: memref<1x128xf32, #tpu.memory_space<vmem>>, %arg4: memref<128x16xbf16, #tpu.memory_space<vmem>>) attributes {dimension_semantics = [#tpu.dimension_semantics<parallel>], iteration_bounds = array<i64: 1>, scalar_prefetch = 0 : i64, scratch_operands = 0 : i64, tpu.core_type = #tpu.core_type<tc>, window_params = [{transform_indices = @transform_0, window_bounds = array<i64: 128, 256>}, {pipeline_mode = #tpu.pipeline_mode<synchronous>, transform_indices = @transform_1, window_bounds = array<i64: 256, 128>}, {pipeline_mode = #tpu.pipeline_mode<synchronous>, transform_indices = @transform_2, window_bounds = array<i64: 1, 128>}, {transform_indices = @transform_3, window_bounds = array<i64: 128, 16>}]} {
    %c0 = arith.constant 0 : index
    %c0_0 = arith.constant 0 : index
    %0 = vector.load %arg1[%c0, %c0_0] : memref<128x256xbf16, #tpu.memory_space<vmem>>, vector<128x256xbf16>
    %c0_1 = arith.constant 0 : index
    %c0_2 = arith.constant 0 : index
    %1 = vector.load %arg2[%c0_1, %c0_2] : memref<256x128xbf16, #tpu.memory_space<vmem>>, vector<256x128xbf16>
    %cst = arith.constant dense<0.000000e+00> : vector<128x128xf32>
    %2 = tpu.matmul %0, %1, %cst {dimension_numbers = #tpu.dot_dimension_numbers<[1], [0], [0], [1], [0, 0, 1, 1], [], []>} : vector<128x256xbf16>, vector<256x128xbf16>, vector<128x128xf32> -> vector<128x128xf32>
    %c0_3 = arith.constant 0 : index
    %c0_4 = arith.constant 0 : index
    %3 = vector.load %arg3[%c0_3, %c0_4] : memref<1x128xf32, #tpu.memory_space<vmem>>, vector<1x128xf32>
    %4 = vector.broadcast %3 : vector<1x128xf32> to vector<128x128xf32>
    %5 = arith.addf %2, %4 : vector<128x128xf32>
    %cst_5 = arith.constant 0.000000e+00 : f32
    %6 = vector.broadcast %cst_5 : f32 to vector<128x128xf32>
    %7 = arith.cmpf ogt, %5, %6 : vector<128x128xf32>
    %cst_6 = arith.constant 2.500000e-01 : f32
    %8 = vector.broadcast %cst_6 : f32 to vector<128x128xf32>
    %9 = arith.mulf %8, %5 : vector<128x128xf32>
    %10 = arith.select %7, %5, %9 : vector<128x128xi1>, vector<128x128xf32>
    %11 = vector.extract_strided_slice %10 {offsets = [0, 0], sizes = [128, 16], strides = [1, 1]} : vector<128x128xf32> to vector<128x16xf32>
    %12 = arith.truncf %11 : vector<128x16xf32> to vector<128x16xbf16>
    %c0_7 = arith.constant 0 : index
    %c0_8 = arith.constant 0 : index
    %13 = vector.load %arg4[%c0_7, %c0_8] : memref<128x16xbf16, #tpu.memory_space<vmem>>, vector<128x16xbf16>
    tpu.vector_store %arg4[%c0_7, %c0_8], %12 {strides = array<i32>} : memref<128x16xbf16, #tpu.memory_space<vmem>>, vector<128x16xbf16>,
    return
  }
  func.func @transform_0(%arg0: i32) -> (i32, i32) {
    %c0_i32 = arith.constant 0 : i32
    %c0_i32_0 = arith.constant 0 : i32
    return %arg0, %c0_i32 : i32, i32
  }
  func.func @transform_1(%arg0: i32) -> (i32, i32) {
    %c0_i32 = arith.constant 0 : i32
    %c0_i32_0 = arith.constant 0 : i32
    %c0_i32_1 = arith.constant 0 : i32
    return %c0_i32, %c0_i32_0 : i32, i32
  }
  func.func @transform_2(%arg0: i32) -> (i32, i32) {
    %c0_i32 = arith.constant 0 : i32
    %c0_i32_0 = arith.constant 0 : i32
    %c0_i32_1 = arith.constant 0 : i32
    return %c0_i32, %c0_i32_0 : i32, i32
  }
  func.func @transform_3(%arg0: i32) -> (i32, i32) {
    %c0_i32 = arith.constant 0 : i32
    %c0_i32_0 = arith.constant 0 : i32
    return %arg0, %c0_i32 : i32, i32
  }
}

module attributes {stable_mosaic.version = 11 : i64} {
  func.func @_mm_res_kernel(%arg0: i32, %arg1: memref<128x256xbf16, #tpu.memory_space<vmem>>, %arg2: memref<256x128xbf16, #tpu.memory_space<vmem>>, %arg3: memref<1x128xf32, #tpu.memory_space<vmem>>, %arg4: memref<128x16xbf16, #tpu.memory_space<vmem>>, %arg5: memref<128x16xbf16, #tpu.memory_space<vmem>>) attributes {dimension_semantics = [#tpu.dimension_semantics<parallel>], iteration_bounds = array<i64: 1>, scalar_prefetch = 0 : i64, scratch_operands = 0 : i64, tpu.core_type = #tpu.core_type<tc>, window_params = [{transform_indices = @transform_0, window_bounds = array<i64: 128, 256>}, {pipeline_mode = #tpu.pipeline_mode<synchronous>, transform_indices = @transform_1, window_bounds = array<i64: 256, 128>}, {pipeline_mode = #tpu.pipeline_mode<synchronous>, transform_indices = @transform_2, window_bounds = array<i64: 1, 128>}, {transform_indices = @transform_3, window_bounds = array<i64: 128, 16>}, {transform_indices = @transform_4, window_bounds = array<i64: 128, 16>}]} {
    %c0 = arith.constant 0 : index
    %c0_0 = arith.constant 0 : index
    %0 = vector.load %arg1[%c0, %c0_0] : memref<128x256xbf16, #tpu.memory_space<vmem>>, vector<128x256xbf16>
    %c0_1 = arith.constant 0 : index
    %c0_2 = arith.constant 0 : index
    %1 = vector.load %arg2[%c0_1, %c0_2] : memref<256x128xbf16, #tpu.memory_space<vmem>>, vector<256x128xbf16>
    %cst = arith.constant dense<0.000000e+00> : vector<128x128xf32>
    %2 = tpu.matmul %0, %1, %cst {dimension_numbers = #tpu.dot_dimension_numbers<[1], [0], [0], [1], [0, 0, 1, 1], [], []>} : vector<128x256xbf16>, vector<256x128xbf16>, vector<128x128xf32> -> vector<128x128xf32>
    %c0_3 = arith.constant 0 : index
    %c0_4 = arith.constant 0 : index
    %3 = vector.load %arg3[%c0_3, %c0_4] : memref<1x128xf32, #tpu.memory_space<vmem>>, vector<1x128xf32>
    %4 = vector.broadcast %3 : vector<1x128xf32> to vector<128x128xf32>
    %5 = arith.addf %2, %4 : vector<128x128xf32>
    %c0_5 = arith.constant 0 : index
    %c0_6 = arith.constant 0 : index
    %6 = vector.load %arg4[%c0_5, %c0_6] : memref<128x16xbf16, #tpu.memory_space<vmem>>, vector<128x16xbf16>
    %7 = arith.extf %6 : vector<128x16xbf16> to vector<128x16xf32>
    %8 = vector.extract_strided_slice %5 {offsets = [0, 0], sizes = [128, 16], strides = [1, 1]} : vector<128x128xf32> to vector<128x16xf32>
    %9 = arith.addf %8, %7 : vector<128x16xf32>
    %10 = arith.truncf %9 : vector<128x16xf32> to vector<128x16xbf16>
    %c0_7 = arith.constant 0 : index
    %c0_8 = arith.constant 0 : index
    %11 = vector.load %arg5[%c0_7, %c0_8] : memref<128x16xbf16, #tpu.memory_space<vmem>>, vector<128x16xbf16>
    tpu.vector_store %arg5[%c0_7, %c0_8], %10 {strides = array<i32>} : memref<128x16xbf16, #tpu.memory_space<vmem>>, vector<128x16xbf16>,
    return
  }
  func.func @transform_0(%arg0: i32) -> (i32, i32) {
    %c0_i32 = arith.constant 0 : i32
    %c0_i32_0 = arith.constant 0 : i32
    return %arg0, %c0_i32 : i32, i32
  }
  func.func @transform_1(%arg0: i32) -> (i32, i32) {
    %c0_i32 = arith.constant 0 : i32
    %c0_i32_0 = arith.constant 0 : i32
    %c0_i32_1 = arith.constant 0 : i32
    return %c0_i32, %c0_i32_0 : i32, i32
  }
  func.func @transform_2(%arg0: i32) -> (i32, i32) {
    %c0_i32 = arith.constant 0 : i32
    %c0_i32_0 = arith.constant 0 : i32
    %c0_i32_1 = arith.constant 0 : i32
    return %c0_i32, %c0_i32_0 : i32, i32
  }
  func.func @transform_3(%arg0: i32) -> (i32, i32) {
    %c0_i32 = arith.constant 0 : i32
    %c0_i32_0 = arith.constant 0 : i32
    return %arg0, %c0_i32 : i32, i32
  }
  func.func @transform_4(%arg0: i32) -> (i32, i32) {
    %c0_i32 = arith.constant 0 : i32
    %c0_i32_0 = arith.constant 0 : i32
    return %arg0, %c0_i32 : i32, i32
  }
}

module attributes {stable_mosaic.version = 11 : i64} {
  func.func @_mm_kernel(%arg0: i32, %arg1: memref<128x256xbf16, #tpu.memory_space<vmem>>, %arg2: memref<256x128xbf16, #tpu.memory_space<vmem>>, %arg3: memref<1x128xf32, #tpu.memory_space<vmem>>, %arg4: memref<128x64xbf16, #tpu.memory_space<vmem>>) attributes {dimension_semantics = [#tpu.dimension_semantics<parallel>], iteration_bounds = array<i64: 1>, scalar_prefetch = 0 : i64, scratch_operands = 0 : i64, tpu.core_type = #tpu.core_type<tc>, window_params = [{transform_indices = @transform_0, window_bounds = array<i64: 128, 256>}, {pipeline_mode = #tpu.pipeline_mode<synchronous>, transform_indices = @transform_1, window_bounds = array<i64: 256, 128>}, {pipeline_mode = #tpu.pipeline_mode<synchronous>, transform_indices = @transform_2, window_bounds = array<i64: 1, 128>}, {transform_indices = @transform_3, window_bounds = array<i64: 128, 64>}]} {
    %c0 = arith.constant 0 : index
    %c0_0 = arith.constant 0 : index
    %0 = vector.load %arg1[%c0, %c0_0] : memref<128x256xbf16, #tpu.memory_space<vmem>>, vector<128x256xbf16>
    %c0_1 = arith.constant 0 : index
    %c0_2 = arith.constant 0 : index
    %1 = vector.load %arg2[%c0_1, %c0_2] : memref<256x128xbf16, #tpu.memory_space<vmem>>, vector<256x128xbf16>
    %cst = arith.constant dense<0.000000e+00> : vector<128x128xf32>
    %2 = tpu.matmul %0, %1, %cst {dimension_numbers = #tpu.dot_dimension_numbers<[1], [0], [0], [1], [0, 0, 1, 1], [], []>} : vector<128x256xbf16>, vector<256x128xbf16>, vector<128x128xf32> -> vector<128x128xf32>
    %c0_3 = arith.constant 0 : index
    %c0_4 = arith.constant 0 : index
    %3 = vector.load %arg3[%c0_3, %c0_4] : memref<1x128xf32, #tpu.memory_space<vmem>>, vector<1x128xf32>
    %4 = vector.broadcast %3 : vector<1x128xf32> to vector<128x128xf32>
    %5 = arith.addf %2, %4 : vector<128x128xf32>
    %cst_5 = arith.constant 0.000000e+00 : f32
    %6 = vector.broadcast %cst_5 : f32 to vector<128x128xf32>
    %7 = arith.cmpf ogt, %5, %6 : vector<128x128xf32>
    %cst_6 = arith.constant 2.500000e-01 : f32
    %8 = vector.broadcast %cst_6 : f32 to vector<128x128xf32>
    %9 = arith.mulf %8, %5 : vector<128x128xf32>
    %10 = arith.select %7, %5, %9 : vector<128x128xi1>, vector<128x128xf32>
    %11 = vector.extract_strided_slice %10 {offsets = [0, 0], sizes = [128, 64], strides = [1, 1]} : vector<128x128xf32> to vector<128x64xf32>
    %12 = arith.truncf %11 : vector<128x64xf32> to vector<128x64xbf16>
    %c0_7 = arith.constant 0 : index
    %c0_8 = arith.constant 0 : index
    %13 = vector.load %arg4[%c0_7, %c0_8] : memref<128x64xbf16, #tpu.memory_space<vmem>>, vector<128x64xbf16>
    tpu.vector_store %arg4[%c0_7, %c0_8], %12 {strides = array<i32>} : memref<128x64xbf16, #tpu.memory_space<vmem>>, vector<128x64xbf16>,
    return
  }
  func.func @transform_0(%arg0: i32) -> (i32, i32) {
    %c0_i32 = arith.constant 0 : i32
    %c0_i32_0 = arith.constant 0 : i32
    return %arg0, %c0_i32 : i32, i32
  }
  func.func @transform_1(%arg0: i32) -> (i32, i32) {
    %c0_i32 = arith.constant 0 : i32
    %c0_i32_0 = arith.constant 0 : i32
    %c0_i32_1 = arith.constant 0 : i32
    return %c0_i32, %c0_i32_0 : i32, i32
  }
  func.func @transform_2(%arg0: i32) -> (i32, i32) {
    %c0_i32 = arith.constant 0 : i32
    %c0_i32_0 = arith.constant 0 : i32
    %c0_i32_1 = arith.constant 0 : i32
    return %c0_i32, %c0_i32_0 : i32, i32
  }
  func.func @transform_3(%arg0: i32) -> (i32, i32) {
    %c0_i32 = arith.constant 0 : i32
    %c0_i32_0 = arith.constant 0 : i32
    return %arg0, %c0_i32 : i32, i32
  }
}

module attributes {stable_mosaic.version = 11 : i64} {
  func.func @_mm_res_kernel(%arg0: i32, %arg1: memref<128x640xbf16, #tpu.memory_space<vmem>>, %arg2: memref<640x128xbf16, #tpu.memory_space<vmem>>, %arg3: memref<1x128xf32, #tpu.memory_space<vmem>>, %arg4: memref<128x16xbf16, #tpu.memory_space<vmem>>, %arg5: memref<128x16xbf16, #tpu.memory_space<vmem>>) attributes {dimension_semantics = [#tpu.dimension_semantics<parallel>], iteration_bounds = array<i64: 1>, scalar_prefetch = 0 : i64, scratch_operands = 0 : i64, tpu.core_type = #tpu.core_type<tc>, window_params = [{transform_indices = @transform_0, window_bounds = array<i64: 128, 640>}, {pipeline_mode = #tpu.pipeline_mode<synchronous>, transform_indices = @transform_1, window_bounds = array<i64: 640, 128>}, {pipeline_mode = #tpu.pipeline_mode<synchronous>, transform_indices = @transform_2, window_bounds = array<i64: 1, 128>}, {transform_indices = @transform_3, window_bounds = array<i64: 128, 16>}, {transform_indices = @transform_4, window_bounds = array<i64: 128, 16>}]} {
    %c0 = arith.constant 0 : index
    %c0_0 = arith.constant 0 : index
    %0 = vector.load %arg1[%c0, %c0_0] : memref<128x640xbf16, #tpu.memory_space<vmem>>, vector<128x640xbf16>
    %c0_1 = arith.constant 0 : index
    %c0_2 = arith.constant 0 : index
    %1 = vector.load %arg2[%c0_1, %c0_2] : memref<640x128xbf16, #tpu.memory_space<vmem>>, vector<640x128xbf16>
    %cst = arith.constant dense<0.000000e+00> : vector<128x128xf32>
    %2 = tpu.matmul %0, %1, %cst {dimension_numbers = #tpu.dot_dimension_numbers<[1], [0], [0], [1], [0, 0, 1, 1], [], []>} : vector<128x640xbf16>, vector<640x128xbf16>, vector<128x128xf32> -> vector<128x128xf32>
    %c0_3 = arith.constant 0 : index
    %c0_4 = arith.constant 0 : index
    %3 = vector.load %arg3[%c0_3, %c0_4] : memref<1x128xf32, #tpu.memory_space<vmem>>, vector<1x128xf32>
    %4 = vector.broadcast %3 : vector<1x128xf32> to vector<128x128xf32>
    %5 = arith.addf %2, %4 : vector<128x128xf32>
    %cst_5 = arith.constant 0.000000e+00 : f32
    %6 = vector.broadcast %cst_5 : f32 to vector<128x128xf32>
    %7 = arith.cmpf ogt, %5, %6 : vector<128x128xf32>
    %cst_6 = arith.constant 2.500000e-01 : f32
    %8 = vector.broadcast %cst_6 : f32 to vector<128x128xf32>
    %9 = arith.mulf %8, %5 : vector<128x128xf32>
    %10 = arith.select %7, %5, %9 : vector<128x128xi1>, vector<128x128xf32>
    %c0_7 = arith.constant 0 : index
    %c0_8 = arith.constant 0 : index
    %11 = vector.load %arg4[%c0_7, %c0_8] : memref<128x16xbf16, #tpu.memory_space<vmem>>, vector<128x16xbf16>
    %12 = arith.extf %11 : vector<128x16xbf16> to vector<128x16xf32>
    %13 = vector.extract_strided_slice %10 {offsets = [0, 0], sizes = [128, 16], strides = [1, 1]} : vector<128x128xf32> to vector<128x16xf32>
    %cst_9 = arith.constant 0.000000e+00 : f32
    %14 = vector.broadcast %cst_9 : f32 to vector<128x16xf32>
    %15 = arith.subf %14, %12 : vector<128x16xf32>
    %16 = arith.addf %13, %15 : vector<128x16xf32>
    %17 = arith.truncf %16 : vector<128x16xf32> to vector<128x16xbf16>
    %c0_10 = arith.constant 0 : index
    %c0_11 = arith.constant 0 : index
    %18 = vector.load %arg5[%c0_10, %c0_11] : memref<128x16xbf16, #tpu.memory_space<vmem>>, vector<128x16xbf16>
    tpu.vector_store %arg5[%c0_10, %c0_11], %17 {strides = array<i32>} : memref<128x16xbf16, #tpu.memory_space<vmem>>, vector<128x16xbf16>,
    return
  }
  func.func @transform_0(%arg0: i32) -> (i32, i32) {
    %c0_i32 = arith.constant 0 : i32
    %c0_i32_0 = arith.constant 0 : i32
    return %arg0, %c0_i32 : i32, i32
  }
  func.func @transform_1(%arg0: i32) -> (i32, i32) {
    %c0_i32 = arith.constant 0 : i32
    %c0_i32_0 = arith.constant 0 : i32
    %c0_i32_1 = arith.constant 0 : i32
    return %c0_i32, %c0_i32_0 : i32, i32
  }
  func.func @transform_2(%arg0: i32) -> (i32, i32) {
    %c0_i32 = arith.constant 0 : i32
    %c0_i32_0 = arith.constant 0 : i32
    %c0_i32_1 = arith.constant 0 : i32
    return %c0_i32, %c0_i32_0 : i32, i32
  }
  func.func @transform_3(%arg0: i32) -> (i32, i32) {
    %c0_i32 = arith.constant 0 : i32
    %c0_i32_0 = arith.constant 0 : i32
    return %arg0, %c0_i32 : i32, i32
  }
  func.func @transform_4(%arg0: i32) -> (i32, i32) {
    %c0_i32 = arith.constant 0 : i32
    %c0_i32_0 = arith.constant 0 : i32
    return %arg0, %c0_i32 : i32, i32
  }
}

module attributes {stable_mosaic.version = 11 : i64} {
  func.func @_mm_kernel(%arg0: i32, %arg1: memref<128x640xbf16, #tpu.memory_space<vmem>>, %arg2: memref<640x128xbf16, #tpu.memory_space<vmem>>, %arg3: memref<1x128xf32, #tpu.memory_space<vmem>>, %arg4: memref<128x16xbf16, #tpu.memory_space<vmem>>) attributes {dimension_semantics = [#tpu.dimension_semantics<parallel>], iteration_bounds = array<i64: 1>, scalar_prefetch = 0 : i64, scratch_operands = 0 : i64, tpu.core_type = #tpu.core_type<tc>, window_params = [{transform_indices = @transform_0, window_bounds = array<i64: 128, 640>}, {pipeline_mode = #tpu.pipeline_mode<synchronous>, transform_indices = @transform_1, window_bounds = array<i64: 640, 128>}, {pipeline_mode = #tpu.pipeline_mode<synchronous>, transform_indices = @transform_2, window_bounds = array<i64: 1, 128>}, {transform_indices = @transform_3, window_bounds = array<i64: 128, 16>}]} {
    %c0 = arith.constant 0 : index
    %c0_0 = arith.constant 0 : index
    %0 = vector.load %arg1[%c0, %c0_0] : memref<128x640xbf16, #tpu.memory_space<vmem>>, vector<128x640xbf16>
    %c0_1 = arith.constant 0 : index
    %c0_2 = arith.constant 0 : index
    %1 = vector.load %arg2[%c0_1, %c0_2] : memref<640x128xbf16, #tpu.memory_space<vmem>>, vector<640x128xbf16>
    %cst = arith.constant dense<0.000000e+00> : vector<128x128xf32>
    %2 = tpu.matmul %0, %1, %cst {dimension_numbers = #tpu.dot_dimension_numbers<[1], [0], [0], [1], [0, 0, 1, 1], [], []>} : vector<128x640xbf16>, vector<640x128xbf16>, vector<128x128xf32> -> vector<128x128xf32>
    %c0_3 = arith.constant 0 : index
    %c0_4 = arith.constant 0 : index
    %3 = vector.load %arg3[%c0_3, %c0_4] : memref<1x128xf32, #tpu.memory_space<vmem>>, vector<1x128xf32>
    %4 = vector.broadcast %3 : vector<1x128xf32> to vector<128x128xf32>
    %5 = arith.addf %2, %4 : vector<128x128xf32>
    %cst_5 = arith.constant 0.000000e+00 : f32
    %6 = vector.broadcast %cst_5 : f32 to vector<128x128xf32>
    %7 = arith.cmpf ogt, %5, %6 : vector<128x128xf32>
    %cst_6 = arith.constant 2.500000e-01 : f32
    %8 = vector.broadcast %cst_6 : f32 to vector<128x128xf32>
    %9 = arith.mulf %8, %5 : vector<128x128xf32>
    %10 = arith.select %7, %5, %9 : vector<128x128xi1>, vector<128x128xf32>
    %11 = vector.extract_strided_slice %10 {offsets = [0, 0], sizes = [128, 16], strides = [1, 1]} : vector<128x128xf32> to vector<128x16xf32>
    %12 = arith.truncf %11 : vector<128x16xf32> to vector<128x16xbf16>
    %c0_7 = arith.constant 0 : index
    %c0_8 = arith.constant 0 : index
    %13 = vector.load %arg4[%c0_7, %c0_8] : memref<128x16xbf16, #tpu.memory_space<vmem>>, vector<128x16xbf16>
    tpu.vector_store %arg4[%c0_7, %c0_8], %12 {strides = array<i32>} : memref<128x16xbf16, #tpu.memory_space<vmem>>, vector<128x16xbf16>,
    return
  }
  func.func @transform_0(%arg0: i32) -> (i32, i32) {
    %c0_i32 = arith.constant 0 : i32
    %c0_i32_0 = arith.constant 0 : i32
    return %arg0, %c0_i32 : i32, i32
  }
  func.func @transform_1(%arg0: i32) -> (i32, i32) {
    %c0_i32 = arith.constant 0 : i32
    %c0_i32_0 = arith.constant 0 : i32
    %c0_i32_1 = arith.constant 0 : i32
    return %c0_i32, %c0_i32_0 : i32, i32
  }
  func.func @transform_2(%arg0: i32) -> (i32, i32) {
    %c0_i32 = arith.constant 0 : i32
    %c0_i32_0 = arith.constant 0 : i32
    %c0_i32_1 = arith.constant 0 : i32
    return %c0_i32, %c0_i32_0 : i32, i32
  }
  func.func @transform_3(%arg0: i32) -> (i32, i32) {
    %c0_i32 = arith.constant 0 : i32
    %c0_i32_0 = arith.constant 0 : i32
    return %arg0, %c0_i32 : i32, i32
  }
}

module attributes {stable_mosaic.version = 11 : i64} {
  func.func @_mm_res_kernel(%arg0: i32, %arg1: memref<128x640xbf16, #tpu.memory_space<vmem>>, %arg2: memref<640x128xbf16, #tpu.memory_space<vmem>>, %arg3: memref<1x128xf32, #tpu.memory_space<vmem>>, %arg4: memref<128x16xbf16, #tpu.memory_space<vmem>>, %arg5: memref<128x16xbf16, #tpu.memory_space<vmem>>) attributes {dimension_semantics = [#tpu.dimension_semantics<parallel>], iteration_bounds = array<i64: 1>, scalar_prefetch = 0 : i64, scratch_operands = 0 : i64, tpu.core_type = #tpu.core_type<tc>, window_params = [{transform_indices = @transform_0, window_bounds = array<i64: 128, 640>}, {pipeline_mode = #tpu.pipeline_mode<synchronous>, transform_indices = @transform_1, window_bounds = array<i64: 640, 128>}, {pipeline_mode = #tpu.pipeline_mode<synchronous>, transform_indices = @transform_2, window_bounds = array<i64: 1, 128>}, {transform_indices = @transform_3, window_bounds = array<i64: 128, 16>}, {transform_indices = @transform_4, window_bounds = array<i64: 128, 16>}]} {
    %c0 = arith.constant 0 : index
    %c0_0 = arith.constant 0 : index
    %0 = vector.load %arg1[%c0, %c0_0] : memref<128x640xbf16, #tpu.memory_space<vmem>>, vector<128x640xbf16>
    %c0_1 = arith.constant 0 : index
    %c0_2 = arith.constant 0 : index
    %1 = vector.load %arg2[%c0_1, %c0_2] : memref<640x128xbf16, #tpu.memory_space<vmem>>, vector<640x128xbf16>
    %cst = arith.constant dense<0.000000e+00> : vector<128x128xf32>
    %2 = tpu.matmul %0, %1, %cst {dimension_numbers = #tpu.dot_dimension_numbers<[1], [0], [0], [1], [0, 0, 1, 1], [], []>} : vector<128x640xbf16>, vector<640x128xbf16>, vector<128x128xf32> -> vector<128x128xf32>
    %c0_3 = arith.constant 0 : index
    %c0_4 = arith.constant 0 : index
    %3 = vector.load %arg3[%c0_3, %c0_4] : memref<1x128xf32, #tpu.memory_space<vmem>>, vector<1x128xf32>
    %4 = vector.broadcast %3 : vector<1x128xf32> to vector<128x128xf32>
    %5 = arith.addf %2, %4 : vector<128x128xf32>
    %cst_5 = arith.constant 0.000000e+00 : f32
    %6 = vector.broadcast %cst_5 : f32 to vector<128x128xf32>
    %7 = arith.cmpf ogt, %5, %6 : vector<128x128xf32>
    %cst_6 = arith.constant 2.500000e-01 : f32
    %8 = vector.broadcast %cst_6 : f32 to vector<128x128xf32>
    %9 = arith.mulf %8, %5 : vector<128x128xf32>
    %10 = arith.select %7, %5, %9 : vector<128x128xi1>, vector<128x128xf32>
    %c0_7 = arith.constant 0 : index
    %c0_8 = arith.constant 0 : index
    %11 = vector.load %arg4[%c0_7, %c0_8] : memref<128x16xbf16, #tpu.memory_space<vmem>>, vector<128x16xbf16>
    %12 = arith.extf %11 : vector<128x16xbf16> to vector<128x16xf32>
    %13 = vector.extract_strided_slice %10 {offsets = [0, 0], sizes = [128, 16], strides = [1, 1]} : vector<128x128xf32> to vector<128x16xf32>
    %14 = arith.addf %13, %12 : vector<128x16xf32>
    %15 = arith.truncf %14 : vector<128x16xf32> to vector<128x16xbf16>
    %c0_9 = arith.constant 0 : index
    %c0_10 = arith.constant 0 : index
    %16 = vector.load %arg5[%c0_9, %c0_10] : memref<128x16xbf16, #tpu.memory_space<vmem>>, vector<128x16xbf16>
    tpu.vector_store %arg5[%c0_9, %c0_10], %15 {strides = array<i32>} : memref<128x16xbf16, #tpu.memory_space<vmem>>, vector<128x16xbf16>,
    return
  }
  func.func @transform_0(%arg0: i32) -> (i32, i32) {
    %c0_i32 = arith.constant 0 : i32
    %c0_i32_0 = arith.constant 0 : i32
    return %arg0, %c0_i32 : i32, i32
  }
  func.func @transform_1(%arg0: i32) -> (i32, i32) {
    %c0_i32 = arith.constant 0 : i32
    %c0_i32_0 = arith.constant 0 : i32
    %c0_i32_1 = arith.constant 0 : i32
    return %c0_i32, %c0_i32_0 : i32, i32
  }
  func.func @transform_2(%arg0: i32) -> (i32, i32) {
    %c0_i32 = arith.constant 0 : i32
    %c0_i32_0 = arith.constant 0 : i32
    %c0_i32_1 = arith.constant 0 : i32
    return %c0_i32, %c0_i32_0 : i32, i32
  }
  func.func @transform_3(%arg0: i32) -> (i32, i32) {
    %c0_i32 = arith.constant 0 : i32
    %c0_i32_0 = arith.constant 0 : i32
    return %arg0, %c0_i32 : i32, i32
  }
  func.func @transform_4(%arg0: i32) -> (i32, i32) {
    %c0_i32 = arith.constant 0 : i32
    %c0_i32_0 = arith.constant 0 : i32
    return %arg0, %c0_i32 : i32, i32
  }
}

module attributes {stable_mosaic.version = 11 : i64} {
  func.func @_mm_kernel(%arg0: i32, %arg1: memref<128x512xbf16, #tpu.memory_space<vmem>>, %arg2: memref<512x128xbf16, #tpu.memory_space<vmem>>, %arg3: memref<1x128xf32, #tpu.memory_space<vmem>>, %arg4: memref<128x16xbf16, #tpu.memory_space<vmem>>) attributes {dimension_semantics = [#tpu.dimension_semantics<parallel>], iteration_bounds = array<i64: 2>, scalar_prefetch = 0 : i64, scratch_operands = 0 : i64, tpu.core_type = #tpu.core_type<tc>, window_params = [{transform_indices = @transform_0, window_bounds = array<i64: 128, 512>}, {pipeline_mode = #tpu.pipeline_mode<synchronous>, transform_indices = @transform_1, window_bounds = array<i64: 512, 128>}, {pipeline_mode = #tpu.pipeline_mode<synchronous>, transform_indices = @transform_2, window_bounds = array<i64: 1, 128>}, {transform_indices = @transform_3, window_bounds = array<i64: 128, 16>}]} {
    %c0 = arith.constant 0 : index
    %c0_0 = arith.constant 0 : index
    %0 = vector.load %arg1[%c0, %c0_0] : memref<128x512xbf16, #tpu.memory_space<vmem>>, vector<128x512xbf16>
    %c0_1 = arith.constant 0 : index
    %c0_2 = arith.constant 0 : index
    %1 = vector.load %arg2[%c0_1, %c0_2] : memref<512x128xbf16, #tpu.memory_space<vmem>>, vector<512x128xbf16>
    %cst = arith.constant dense<0.000000e+00> : vector<128x128xf32>
    %2 = tpu.matmul %0, %1, %cst {dimension_numbers = #tpu.dot_dimension_numbers<[1], [0], [0], [1], [0, 0, 1, 1], [], []>} : vector<128x512xbf16>, vector<512x128xbf16>, vector<128x128xf32> -> vector<128x128xf32>
    %c0_3 = arith.constant 0 : index
    %c0_4 = arith.constant 0 : index
    %3 = vector.load %arg3[%c0_3, %c0_4] : memref<1x128xf32, #tpu.memory_space<vmem>>, vector<1x128xf32>
    %4 = vector.broadcast %3 : vector<1x128xf32> to vector<128x128xf32>
    %5 = arith.addf %2, %4 : vector<128x128xf32>
    %6 = vector.extract_strided_slice %5 {offsets = [0, 0], sizes = [128, 16], strides = [1, 1]} : vector<128x128xf32> to vector<128x16xf32>
    %7 = arith.truncf %6 : vector<128x16xf32> to vector<128x16xbf16>
    %c0_5 = arith.constant 0 : index
    %c0_6 = arith.constant 0 : index
    %8 = vector.load %arg4[%c0_5, %c0_6] : memref<128x16xbf16, #tpu.memory_space<vmem>>, vector<128x16xbf16>
    tpu.vector_store %arg4[%c0_5, %c0_6], %7 {strides = array<i32>} : memref<128x16xbf16, #tpu.memory_space<vmem>>, vector<128x16xbf16>,
    return
  }
  func.func @transform_0(%arg0: i32) -> (i32, i32) {
    %c0_i32 = arith.constant 0 : i32
    %c0_i32_0 = arith.constant 0 : i32
    return %arg0, %c0_i32 : i32, i32
  }
  func.func @transform_1(%arg0: i32) -> (i32, i32) {
    %c0_i32 = arith.constant 0 : i32
    %c0_i32_0 = arith.constant 0 : i32
    %c0_i32_1 = arith.constant 0 : i32
    return %c0_i32, %c0_i32_0 : i32, i32
  }
  func.func @transform_2(%arg0: i32) -> (i32, i32) {
    %c0_i32 = arith.constant 0 : i32
    %c0_i32_0 = arith.constant 0 : i32
    %c0_i32_1 = arith.constant 0 : i32
    return %c0_i32, %c0_i32_0 : i32, i32
  }
  func.func @transform_3(%arg0: i32) -> (i32, i32) {
    %c0_i32 = arith.constant 0 : i32
    %c0_i32_0 = arith.constant 0 : i32
    return %arg0, %c0_i32 : i32, i32
  }
}

module attributes {stable_mosaic.version = 11 : i64} {
  func.func @_mm_kernel(%arg0: i32, %arg1: memref<128x256xbf16, #tpu.memory_space<vmem>>, %arg2: memref<256x128xbf16, #tpu.memory_space<vmem>>, %arg3: memref<1x128xf32, #tpu.memory_space<vmem>>, %arg4: memref<128x16xbf16, #tpu.memory_space<vmem>>) attributes {dimension_semantics = [#tpu.dimension_semantics<parallel>], iteration_bounds = array<i64: 2>, scalar_prefetch = 0 : i64, scratch_operands = 0 : i64, tpu.core_type = #tpu.core_type<tc>, window_params = [{transform_indices = @transform_0, window_bounds = array<i64: 128, 256>}, {pipeline_mode = #tpu.pipeline_mode<synchronous>, transform_indices = @transform_1, window_bounds = array<i64: 256, 128>}, {pipeline_mode = #tpu.pipeline_mode<synchronous>, transform_indices = @transform_2, window_bounds = array<i64: 1, 128>}, {transform_indices = @transform_3, window_bounds = array<i64: 128, 16>}]} {
    %c0 = arith.constant 0 : index
    %c0_0 = arith.constant 0 : index
    %0 = vector.load %arg1[%c0, %c0_0] : memref<128x256xbf16, #tpu.memory_space<vmem>>, vector<128x256xbf16>
    %c0_1 = arith.constant 0 : index
    %c0_2 = arith.constant 0 : index
    %1 = vector.load %arg2[%c0_1, %c0_2] : memref<256x128xbf16, #tpu.memory_space<vmem>>, vector<256x128xbf16>
    %cst = arith.constant dense<0.000000e+00> : vector<128x128xf32>
    %2 = tpu.matmul %0, %1, %cst {dimension_numbers = #tpu.dot_dimension_numbers<[1], [0], [0], [1], [0, 0, 1, 1], [], []>} : vector<128x256xbf16>, vector<256x128xbf16>, vector<128x128xf32> -> vector<128x128xf32>
    %c0_3 = arith.constant 0 : index
    %c0_4 = arith.constant 0 : index
    %3 = vector.load %arg3[%c0_3, %c0_4] : memref<1x128xf32, #tpu.memory_space<vmem>>, vector<1x128xf32>
    %4 = vector.broadcast %3 : vector<1x128xf32> to vector<128x128xf32>
    %5 = arith.addf %2, %4 : vector<128x128xf32>
    %cst_5 = arith.constant 0.000000e+00 : f32
    %6 = vector.broadcast %cst_5 : f32 to vector<128x128xf32>
    %7 = arith.cmpf ogt, %5, %6 : vector<128x128xf32>
    %cst_6 = arith.constant 2.500000e-01 : f32
    %8 = vector.broadcast %cst_6 : f32 to vector<128x128xf32>
    %9 = arith.mulf %8, %5 : vector<128x128xf32>
    %10 = arith.select %7, %5, %9 : vector<128x128xi1>, vector<128x128xf32>
    %11 = vector.extract_strided_slice %10 {offsets = [0, 0], sizes = [128, 16], strides = [1, 1]} : vector<128x128xf32> to vector<128x16xf32>
    %12 = arith.truncf %11 : vector<128x16xf32> to vector<128x16xbf16>
    %c0_7 = arith.constant 0 : index
    %c0_8 = arith.constant 0 : index
    %13 = vector.load %arg4[%c0_7, %c0_8] : memref<128x16xbf16, #tpu.memory_space<vmem>>, vector<128x16xbf16>
    tpu.vector_store %arg4[%c0_7, %c0_8], %12 {strides = array<i32>} : memref<128x16xbf16, #tpu.memory_space<vmem>>, vector<128x16xbf16>,
    return
  }
  func.func @transform_0(%arg0: i32) -> (i32, i32) {
    %c0_i32 = arith.constant 0 : i32
    %c0_i32_0 = arith.constant 0 : i32
    return %arg0, %c0_i32 : i32, i32
  }
  func.func @transform_1(%arg0: i32) -> (i32, i32) {
    %c0_i32 = arith.constant 0 : i32
    %c0_i32_0 = arith.constant 0 : i32
    %c0_i32_1 = arith.constant 0 : i32
    return %c0_i32, %c0_i32_0 : i32, i32
  }
  func.func @transform_2(%arg0: i32) -> (i32, i32) {
    %c0_i32 = arith.constant 0 : i32
    %c0_i32_0 = arith.constant 0 : i32
    %c0_i32_1 = arith.constant 0 : i32
    return %c0_i32, %c0_i32_0 : i32, i32
  }
  func.func @transform_3(%arg0: i32) -> (i32, i32) {
    %c0_i32 = arith.constant 0 : i32
    %c0_i32_0 = arith.constant 0 : i32
    return %arg0, %c0_i32 : i32, i32
  }
}

module attributes {stable_mosaic.version = 11 : i64} {
  func.func @_mm_res_kernel(%arg0: i32, %arg1: memref<128x256xbf16, #tpu.memory_space<vmem>>, %arg2: memref<256x128xbf16, #tpu.memory_space<vmem>>, %arg3: memref<1x128xf32, #tpu.memory_space<vmem>>, %arg4: memref<128x16xbf16, #tpu.memory_space<vmem>>, %arg5: memref<128x16xbf16, #tpu.memory_space<vmem>>) attributes {dimension_semantics = [#tpu.dimension_semantics<parallel>], iteration_bounds = array<i64: 2>, scalar_prefetch = 0 : i64, scratch_operands = 0 : i64, tpu.core_type = #tpu.core_type<tc>, window_params = [{transform_indices = @transform_0, window_bounds = array<i64: 128, 256>}, {pipeline_mode = #tpu.pipeline_mode<synchronous>, transform_indices = @transform_1, window_bounds = array<i64: 256, 128>}, {pipeline_mode = #tpu.pipeline_mode<synchronous>, transform_indices = @transform_2, window_bounds = array<i64: 1, 128>}, {transform_indices = @transform_3, window_bounds = array<i64: 128, 16>}, {transform_indices = @transform_4, window_bounds = array<i64: 128, 16>}]} {
    %c0 = arith.constant 0 : index
    %c0_0 = arith.constant 0 : index
    %0 = vector.load %arg1[%c0, %c0_0] : memref<128x256xbf16, #tpu.memory_space<vmem>>, vector<128x256xbf16>
    %c0_1 = arith.constant 0 : index
    %c0_2 = arith.constant 0 : index
    %1 = vector.load %arg2[%c0_1, %c0_2] : memref<256x128xbf16, #tpu.memory_space<vmem>>, vector<256x128xbf16>
    %cst = arith.constant dense<0.000000e+00> : vector<128x128xf32>
    %2 = tpu.matmul %0, %1, %cst {dimension_numbers = #tpu.dot_dimension_numbers<[1], [0], [0], [1], [0, 0, 1, 1], [], []>} : vector<128x256xbf16>, vector<256x128xbf16>, vector<128x128xf32> -> vector<128x128xf32>
    %c0_3 = arith.constant 0 : index
    %c0_4 = arith.constant 0 : index
    %3 = vector.load %arg3[%c0_3, %c0_4] : memref<1x128xf32, #tpu.memory_space<vmem>>, vector<1x128xf32>
    %4 = vector.broadcast %3 : vector<1x128xf32> to vector<128x128xf32>
    %5 = arith.addf %2, %4 : vector<128x128xf32>
    %c0_5 = arith.constant 0 : index
    %c0_6 = arith.constant 0 : index
    %6 = vector.load %arg4[%c0_5, %c0_6] : memref<128x16xbf16, #tpu.memory_space<vmem>>, vector<128x16xbf16>
    %7 = arith.extf %6 : vector<128x16xbf16> to vector<128x16xf32>
    %8 = vector.extract_strided_slice %5 {offsets = [0, 0], sizes = [128, 16], strides = [1, 1]} : vector<128x128xf32> to vector<128x16xf32>
    %9 = arith.addf %8, %7 : vector<128x16xf32>
    %10 = arith.truncf %9 : vector<128x16xf32> to vector<128x16xbf16>
    %c0_7 = arith.constant 0 : index
    %c0_8 = arith.constant 0 : index
    %11 = vector.load %arg5[%c0_7, %c0_8] : memref<128x16xbf16, #tpu.memory_space<vmem>>, vector<128x16xbf16>
    tpu.vector_store %arg5[%c0_7, %c0_8], %10 {strides = array<i32>} : memref<128x16xbf16, #tpu.memory_space<vmem>>, vector<128x16xbf16>,
    return
  }
  func.func @transform_0(%arg0: i32) -> (i32, i32) {
    %c0_i32 = arith.constant 0 : i32
    %c0_i32_0 = arith.constant 0 : i32
    return %arg0, %c0_i32 : i32, i32
  }
  func.func @transform_1(%arg0: i32) -> (i32, i32) {
    %c0_i32 = arith.constant 0 : i32
    %c0_i32_0 = arith.constant 0 : i32
    %c0_i32_1 = arith.constant 0 : i32
    return %c0_i32, %c0_i32_0 : i32, i32
  }
  func.func @transform_2(%arg0: i32) -> (i32, i32) {
    %c0_i32 = arith.constant 0 : i32
    %c0_i32_0 = arith.constant 0 : i32
    %c0_i32_1 = arith.constant 0 : i32
    return %c0_i32, %c0_i32_0 : i32, i32
  }
  func.func @transform_3(%arg0: i32) -> (i32, i32) {
    %c0_i32 = arith.constant 0 : i32
    %c0_i32_0 = arith.constant 0 : i32
    return %arg0, %c0_i32 : i32, i32
  }
  func.func @transform_4(%arg0: i32) -> (i32, i32) {
    %c0_i32 = arith.constant 0 : i32
    %c0_i32_0 = arith.constant 0 : i32
    return %arg0, %c0_i32 : i32, i32
  }
}

module attributes {stable_mosaic.version = 11 : i64} {
  func.func @_mm_res_kernel(%arg0: i32, %arg1: memref<128x256xbf16, #tpu.memory_space<vmem>>, %arg2: memref<256x128xbf16, #tpu.memory_space<vmem>>, %arg3: memref<1x128xf32, #tpu.memory_space<vmem>>, %arg4: memref<128x16xbf16, #tpu.memory_space<vmem>>, %arg5: memref<128x16xbf16, #tpu.memory_space<vmem>>) attributes {dimension_semantics = [#tpu.dimension_semantics<parallel>], iteration_bounds = array<i64: 2>, scalar_prefetch = 0 : i64, scratch_operands = 0 : i64, tpu.core_type = #tpu.core_type<tc>, window_params = [{transform_indices = @transform_0, window_bounds = array<i64: 128, 256>}, {pipeline_mode = #tpu.pipeline_mode<synchronous>, transform_indices = @transform_1, window_bounds = array<i64: 256, 128>}, {pipeline_mode = #tpu.pipeline_mode<synchronous>, transform_indices = @transform_2, window_bounds = array<i64: 1, 128>}, {transform_indices = @transform_3, window_bounds = array<i64: 128, 16>}, {transform_indices = @transform_4, window_bounds = array<i64: 128, 16>}]} {
    %c0 = arith.constant 0 : index
    %c0_0 = arith.constant 0 : index
    %0 = vector.load %arg1[%c0, %c0_0] : memref<128x256xbf16, #tpu.memory_space<vmem>>, vector<128x256xbf16>
    %c0_1 = arith.constant 0 : index
    %c0_2 = arith.constant 0 : index
    %1 = vector.load %arg2[%c0_1, %c0_2] : memref<256x128xbf16, #tpu.memory_space<vmem>>, vector<256x128xbf16>
    %cst = arith.constant dense<0.000000e+00> : vector<128x128xf32>
    %2 = tpu.matmul %0, %1, %cst {dimension_numbers = #tpu.dot_dimension_numbers<[1], [0], [0], [1], [0, 0, 1, 1], [], []>} : vector<128x256xbf16>, vector<256x128xbf16>, vector<128x128xf32> -> vector<128x128xf32>
    %c0_3 = arith.constant 0 : index
    %c0_4 = arith.constant 0 : index
    %3 = vector.load %arg3[%c0_3, %c0_4] : memref<1x128xf32, #tpu.memory_space<vmem>>, vector<1x128xf32>
    %4 = vector.broadcast %3 : vector<1x128xf32> to vector<128x128xf32>
    %5 = arith.addf %2, %4 : vector<128x128xf32>
    %cst_5 = arith.constant 0.000000e+00 : f32
    %6 = vector.broadcast %cst_5 : f32 to vector<128x128xf32>
    %7 = arith.cmpf ogt, %5, %6 : vector<128x128xf32>
    %cst_6 = arith.constant 2.500000e-01 : f32
    %8 = vector.broadcast %cst_6 : f32 to vector<128x128xf32>
    %9 = arith.mulf %8, %5 : vector<128x128xf32>
    %10 = arith.select %7, %5, %9 : vector<128x128xi1>, vector<128x128xf32>
    %c0_7 = arith.constant 0 : index
    %c0_8 = arith.constant 0 : index
    %11 = vector.load %arg4[%c0_7, %c0_8] : memref<128x16xbf16, #tpu.memory_space<vmem>>, vector<128x16xbf16>
    %12 = arith.extf %11 : vector<128x16xbf16> to vector<128x16xf32>
    %13 = vector.extract_strided_slice %10 {offsets = [0, 0], sizes = [128, 16], strides = [1, 1]} : vector<128x128xf32> to vector<128x16xf32>
    %14 = arith.addf %13, %12 : vector<128x16xf32>
    %15 = arith.truncf %14 : vector<128x16xf32> to vector<128x16xbf16>
    %c0_9 = arith.constant 0 : index
    %c0_10 = arith.constant 0 : index
    %16 = vector.load %arg5[%c0_9, %c0_10] : memref<128x16xbf16, #tpu.memory_space<vmem>>, vector<128x16xbf16>
    tpu.vector_store %arg5[%c0_9, %c0_10], %15 {strides = array<i32>} : memref<128x16xbf16, #tpu.memory_space<vmem>>, vector<128x16xbf16>,
    return
  }
  func.func @transform_0(%arg0: i32) -> (i32, i32) {
    %c0_i32 = arith.constant 0 : i32
    %c0_i32_0 = arith.constant 0 : i32
    return %arg0, %c0_i32 : i32, i32
  }
  func.func @transform_1(%arg0: i32) -> (i32, i32) {
    %c0_i32 = arith.constant 0 : i32
    %c0_i32_0 = arith.constant 0 : i32
    %c0_i32_1 = arith.constant 0 : i32
    return %c0_i32, %c0_i32_0 : i32, i32
  }
  func.func @transform_2(%arg0: i32) -> (i32, i32) {
    %c0_i32 = arith.constant 0 : i32
    %c0_i32_0 = arith.constant 0 : i32
    %c0_i32_1 = arith.constant 0 : i32
    return %c0_i32, %c0_i32_0 : i32, i32
  }
  func.func @transform_3(%arg0: i32) -> (i32, i32) {
    %c0_i32 = arith.constant 0 : i32
    %c0_i32_0 = arith.constant 0 : i32
    return %arg0, %c0_i32 : i32, i32
  }
  func.func @transform_4(%arg0: i32) -> (i32, i32) {
    %c0_i32 = arith.constant 0 : i32
    %c0_i32_0 = arith.constant 0 : i32
    return %arg0, %c0_i32 : i32, i32
  }
}

module attributes {stable_mosaic.version = 11 : i64} {
  func.func @_mm_kernel(%arg0: i32, %arg1: memref<128x384xbf16, #tpu.memory_space<vmem>>, %arg2: memref<384x128xbf16, #tpu.memory_space<vmem>>, %arg3: memref<1x128xf32, #tpu.memory_space<vmem>>, %arg4: memref<128x3xbf16, #tpu.memory_space<vmem>>) attributes {dimension_semantics = [#tpu.dimension_semantics<parallel>], iteration_bounds = array<i64: 2>, scalar_prefetch = 0 : i64, scratch_operands = 0 : i64, tpu.core_type = #tpu.core_type<tc>, window_params = [{transform_indices = @transform_0, window_bounds = array<i64: 128, 384>}, {pipeline_mode = #tpu.pipeline_mode<synchronous>, transform_indices = @transform_1, window_bounds = array<i64: 384, 128>}, {pipeline_mode = #tpu.pipeline_mode<synchronous>, transform_indices = @transform_2, window_bounds = array<i64: 1, 128>}, {transform_indices = @transform_3, window_bounds = array<i64: 128, 3>}]} {
    %c0 = arith.constant 0 : index
    %c0_0 = arith.constant 0 : index
    %0 = vector.load %arg1[%c0, %c0_0] : memref<128x384xbf16, #tpu.memory_space<vmem>>, vector<128x384xbf16>
    %c0_1 = arith.constant 0 : index
    %c0_2 = arith.constant 0 : index
    %1 = vector.load %arg2[%c0_1, %c0_2] : memref<384x128xbf16, #tpu.memory_space<vmem>>, vector<384x128xbf16>
    %cst = arith.constant dense<0.000000e+00> : vector<128x128xf32>
    %2 = tpu.matmul %0, %1, %cst {dimension_numbers = #tpu.dot_dimension_numbers<[1], [0], [0], [1], [0, 0, 1, 1], [], []>} : vector<128x384xbf16>, vector<384x128xbf16>, vector<128x128xf32> -> vector<128x128xf32>
    %c0_3 = arith.constant 0 : index
    %c0_4 = arith.constant 0 : index
    %3 = vector.load %arg3[%c0_3, %c0_4] : memref<1x128xf32, #tpu.memory_space<vmem>>, vector<1x128xf32>
    %4 = vector.broadcast %3 : vector<1x128xf32> to vector<128x128xf32>
    %5 = arith.addf %2, %4 : vector<128x128xf32>
    %6 = vector.extract_strided_slice %5 {offsets = [0, 0], sizes = [128, 3], strides = [1, 1]} : vector<128x128xf32> to vector<128x3xf32>
    %7 = arith.truncf %6 : vector<128x3xf32> to vector<128x3xbf16>
    %c0_5 = arith.constant 0 : index
    %c0_6 = arith.constant 0 : index
    %8 = vector.load %arg4[%c0_5, %c0_6] : memref<128x3xbf16, #tpu.memory_space<vmem>>, vector<128x3xbf16>
    tpu.vector_store %arg4[%c0_5, %c0_6], %7 {strides = array<i32>} : memref<128x3xbf16, #tpu.memory_space<vmem>>, vector<128x3xbf16>,
    return
  }
  func.func @transform_0(%arg0: i32) -> (i32, i32) {
    %c0_i32 = arith.constant 0 : i32
    %c0_i32_0 = arith.constant 0 : i32
    return %arg0, %c0_i32 : i32, i32
  }
  func.func @transform_1(%arg0: i32) -> (i32, i32) {
    %c0_i32 = arith.constant 0 : i32
    %c0_i32_0 = arith.constant 0 : i32
    %c0_i32_1 = arith.constant 0 : i32
    return %c0_i32, %c0_i32_0 : i32, i32
  }
  func.func @transform_2(%arg0: i32) -> (i32, i32) {
    %c0_i32 = arith.constant 0 : i32
    %c0_i32_0 = arith.constant 0 : i32
    %c0_i32_1 = arith.constant 0 : i32
    return %c0_i32, %c0_i32_0 : i32, i32
  }
  func.func @transform_3(%arg0: i32) -> (i32, i32) {
    %c0_i32 = arith.constant 0 : i32
    %c0_i32_0 = arith.constant 0 : i32
    return %arg0, %c0_i32 : i32, i32
  }
}

module attributes {stable_mosaic.version = 11 : i64} {
  func.func @_mm_kernel(%arg0: i32, %arg1: memref<128x128xbf16, #tpu.memory_space<vmem>>, %arg2: memref<128x128xbf16, #tpu.memory_space<vmem>>, %arg3: memref<1x128xf32, #tpu.memory_space<vmem>>, %arg4: memref<128x3xbf16, #tpu.memory_space<vmem>>) attributes {dimension_semantics = [#tpu.dimension_semantics<parallel>], iteration_bounds = array<i64: 2>, scalar_prefetch = 0 : i64, scratch_operands = 0 : i64, tpu.core_type = #tpu.core_type<tc>, window_params = [{transform_indices = @transform_0, window_bounds = array<i64: 128, 128>}, {pipeline_mode = #tpu.pipeline_mode<synchronous>, transform_indices = @transform_1, window_bounds = array<i64: 128, 128>}, {pipeline_mode = #tpu.pipeline_mode<synchronous>, transform_indices = @transform_2, window_bounds = array<i64: 1, 128>}, {transform_indices = @transform_3, window_bounds = array<i64: 128, 3>}]} {
    %c0 = arith.constant 0 : index
    %c0_0 = arith.constant 0 : index
    %0 = vector.load %arg1[%c0, %c0_0] : memref<128x128xbf16, #tpu.memory_space<vmem>>, vector<128x128xbf16>
    %c0_1 = arith.constant 0 : index
    %c0_2 = arith.constant 0 : index
    %1 = vector.load %arg2[%c0_1, %c0_2] : memref<128x128xbf16, #tpu.memory_space<vmem>>, vector<128x128xbf16>
    %cst = arith.constant dense<0.000000e+00> : vector<128x128xf32>
    %2 = tpu.matmul %0, %1, %cst {dimension_numbers = #tpu.dot_dimension_numbers<[1], [0], [0], [1], [0, 0, 1, 1], [], []>} : vector<128x128xbf16>, vector<128x128xbf16>, vector<128x128xf32> -> vector<128x128xf32>
    %c0_3 = arith.constant 0 : index
    %c0_4 = arith.constant 0 : index
    %3 = vector.load %arg3[%c0_3, %c0_4] : memref<1x128xf32, #tpu.memory_space<vmem>>, vector<1x128xf32>
    %4 = vector.broadcast %3 : vector<1x128xf32> to vector<128x128xf32>
    %5 = arith.addf %2, %4 : vector<128x128xf32>
    %6 = vector.extract_strided_slice %5 {offsets = [0, 0], sizes = [128, 3], strides = [1, 1]} : vector<128x128xf32> to vector<128x3xf32>
    %7 = arith.truncf %6 : vector<128x3xf32> to vector<128x3xbf16>
    %c0_5 = arith.constant 0 : index
    %c0_6 = arith.constant 0 : index
    %8 = vector.load %arg4[%c0_5, %c0_6] : memref<128x3xbf16, #tpu.memory_space<vmem>>, vector<128x3xbf16>
    tpu.vector_store %arg4[%c0_5, %c0_6], %7 {strides = array<i32>} : memref<128x3xbf16, #tpu.memory_space<vmem>>, vector<128x3xbf16>,
    return
  }
  func.func @transform_0(%arg0: i32) -> (i32, i32) {
    %c0_i32 = arith.constant 0 : i32
    %c0_i32_0 = arith.constant 0 : i32
    return %arg0, %c0_i32 : i32, i32
  }
  func.func @transform_1(%arg0: i32) -> (i32, i32) {
    %c0_i32 = arith.constant 0 : i32
    %c0_i32_0 = arith.constant 0 : i32
    %c0_i32_1 = arith.constant 0 : i32
    return %c0_i32, %c0_i32_0 : i32, i32
  }
  func.func @transform_2(%arg0: i32) -> (i32, i32) {
    %c0_i32 = arith.constant 0 : i32
    %c0_i32_0 = arith.constant 0 : i32
    %c0_i32_1 = arith.constant 0 : i32
    return %c0_i32, %c0_i32_0 : i32, i32
  }
  func.func @transform_3(%arg0: i32) -> (i32, i32) {
    %c0_i32 = arith.constant 0 : i32
    %c0_i32_0 = arith.constant 0 : i32
    return %arg0, %c0_i32 : i32, i32
  }
}

</mosaic_0001>

<llo_original>
// kernel: tile.283
$region0: #{tile.283}
  #allocation0 [shape = 's32[1]{0}', space=sflag, size = 0x4, scoped, tag = 'scoped memory for tile.283']
  %s0 = inlined_call_operand.vmem [shape: f32[16], index: 0, kind: input, shape index: {}]
  %s1 = inlined_call_operand.vmem [shape: f32[4,16], index: 1, kind: output, shape index: {}]
  // Predicated region
  $region2: #{tile.283} parent=0 // pred_check
    _
  $region3: #{tile.283} parent=0 // pred_check_branch
    %3 = sbr.rel (0) target = $region5
  $region4: #{tile.283} parent=0 // pred_region
    _
  $region5: #{tile.283} parent=0 // pred_fallthru
    _
  %v4 = vld [vmem:[%s0] ss:$0 sm:$0xff]
  %5 = vst [vmem:[%s1] sm:$0xf] %v4

// kernel: tile.284
$region0: #{tile.284}
  %s0 = inlined_call_operand.vmem [shape: f32[4,16], index: 0, kind: input, shape index: {}]
  %s1 = inlined_call_operand.vmem [shape: f32[64], index: 1, kind: output, shape index: {}]
  $region1: #{tile.284} parent=0
    #allocation0 [shape = 'u8[4096]{0}', space=vmem, size = 0x1000, scoped, tag = 'scoped mem for output reshape']
    #allocation1 [shape = 'u8[4096]{0}', space=vmem, size = 0x1000, scoped, tag = 'scoped mem for input reshape']
    %s3 = sshllo.u32 0, 4
    %v4 = vld [vmem:[%s0] sm:%s3]
    %5 = vst [vmem:[#allocation1] sm:%s3] %v4
    %v6 = vld [vmem:[#allocation1] sm:$0x1]
    %vm7 = vcmask 130048
    %8 = vst.msk [vmem:[#allocation0] sm:$0x1] %vm7, %v6
    %s9 = scalar_lea.vmem [#allocation1], 3
    %v10 = vld [vmem:[%s9] sm:$0x1]
    %11 = vrot.lane.b32.xlu0 %v10, 48
    %v12 = vpop.permute.xlu0 %11
    %vm13 = vcmask 523648
    %14 = vst.msk [vmem:[#allocation0] sm:$0x1] %vm13, %v12
    %s15 = scalar_lea.vmem [#allocation1], 2
    %v16 = vld [vmem:[%s15] sm:$0x1]
    %17 = vrot.lane.b32.xlu0 %v16, 32
    %v18 = vpop.permute.xlu0 %17
    %vm19 = vcmask 392448
    %20 = vst.msk [vmem:[#allocation0] sm:$0x1] %vm19, %v18
    %s21 = scalar_lea.vmem [#allocation1], 1
    %v22 = vld [vmem:[%s21] sm:$0x1]
    %23 = vrot.lane.b32.xlu0 %v22, 16
    %v24 = vpop.permute.xlu0 %23
    %vm25 = vcmask 261248
    %26 = vst.msk [vmem:[#allocation0] sm:$0x1] %vm25, %v24
    %s28 = sshllo.u32 0, 1
    %v30 = vld [vmem:[#allocation0] sm:%s28]
    %s31 = sshllo.u32 0, 1
    %32 = vst [vmem:[%s1] sm:%s31] %v30

// kernel: tounet_fwd.183
$region0: #{tounet_fwd.183}
  #allocation0 [shape = 'u32[]', space=smem, size = 0x4, offset = 0x4, fixed_abs, tag = 'smem constant byte address 0x4 - core index']
  #allocation1 [shape = 'u32[144,128]{1,0:T(1,128)}', space=vmem, size = 0x12000, scoped, tag = 'internal scratch']
  %s0 = inlined_call_operand.vmem [shape: bf16[128,128], index: 0, kind: input, shape index: {}]
  %s1 = inlined_call_operand.vmem [shape: bf16[128,128], index: 1, kind: input, shape index: {}]
  %s2 = inlined_call_operand.vmem [shape: f32[1,128], index: 2, kind: input, shape index: {}]
  %s3 = inlined_call_operand.vmem [shape: bf16[128,32], index: 3, kind: output, shape index: {}]
  %s4 = sld [smem:[#allocation0]]
  $region22: #{tounet_fwd.183} parent=0
    _
  %s6 = ssub.s32 1, %s4
  %s7 = scalar_select 0, %s6, %s4
  // Predicated region
  $region2: #{tounet_fwd.183} parent=0 // pred_check
    _
  $region3: #{tounet_fwd.183} parent=0 // pred_check_branch
    %9 = sbr.rel (0) target = $region5
  $region4: #{tounet_fwd.183} parent=0 // pred_region
    _
  $region5: #{tounet_fwd.183} parent=0 // pred_fallthru
    _
  // Predicated region
  $region6: #{tounet_fwd.183} parent=0 // pred_check
    _
  $region7: #{tounet_fwd.183} parent=0 // pred_check_branch
    %11 = sbr.rel (0) target = $region9
  $region8: #{tounet_fwd.183} parent=0 // pred_region
    _
  $region9: #{tounet_fwd.183} parent=0 // pred_fallthru
    _
  // Predicated region
  $region10: #{tounet_fwd.183} parent=0 // pred_check
    _
  $region11: #{tounet_fwd.183} parent=0 // pred_check_branch
    %13 = sbr.rel (0) target = $region13
  $region12: #{tounet_fwd.183} parent=0 // pred_region
    _
  $region13: #{tounet_fwd.183} parent=0 // pred_fallthru
    _
  %v15 = vld [vmem:[%s0] sm:$0xf]
  %v16 = vld [vmem:[%s0 + $0x4] sm:$0xf]
  %v17 = vld [vmem:[%s0 + $0x8] sm:$0xf]
  %v18 = vld [vmem:[%s0 + $0xc] sm:$0xf]
  %v19 = vld [vmem:[%s0 + $0x10] sm:$0xf]
  %v20 = vld [vmem:[%s0 + $0x14] sm:$0xf]
  %v21 = vld [vmem:[%s0 + $0x18] sm:$0xf]
  %v22 = vld [vmem:[%s0 + $0x1c] sm:$0xf]
  %v23 = vld [vmem:[%s0 + $0x20] sm:$0xf]
  %v24 = vld [vmem:[%s0 + $0x24] sm:$0xf]
  %v25 = vld [vmem:[%s0 + $0x28] sm:$0xf]
  %v26 = vld [vmem:[%s0 + $0x2c] sm:$0xf]
  %v27 = vld [vmem:[%s0 + $0x30] sm:$0xf]
  %v28 = vld [vmem:[%s0 + $0x34] sm:$0xf]
  %v29 = vld [vmem:[%s0 + $0x38] sm:$0xf]
  %v30 = vld [vmem:[%s0 + $0x3c] sm:$0xf]
  %v31 = vld [vmem:[%s1] sm:$0xf]
  %v32 = vld [vmem:[%s1 + $0x4] sm:$0xf]
  %v33 = vld [vmem:[%s1 + $0x8] sm:$0xf]
  %v34 = vld [vmem:[%s1 + $0xc] sm:$0xf]
  %v35 = vld [vmem:[%s1 + $0x10] sm:$0xf]
  %v36 = vld [vmem:[%s1 + $0x14] sm:$0xf]
  %v37 = vld [vmem:[%s1 + $0x18] sm:$0xf]
  %v38 = vld [vmem:[%s1 + $0x1c] sm:$0xf]
  %v39 = vld [vmem:[%s1 + $0x20] sm:$0xf]
  %v40 = vld [vmem:[%s1 + $0x24] sm:$0xf]
  %v41 = vld [vmem:[%s1 + $0x28] sm:$0xf]
  %v42 = vld [vmem:[%s1 + $0x2c] sm:$0xf]
  %v43 = vld [vmem:[%s1 + $0x30] sm:$0xf]
  %v44 = vld [vmem:[%s1 + $0x34] sm:$0xf]
  %v45 = vld [vmem:[%s1 + $0x38] sm:$0xf]
  %v46 = vld [vmem:[%s1 + $0x3c] sm:$0xf]
  %v47 = vld [vmem:[%s2] sm:$0x1]
  %v49 = vlaneseq
  %v50 = vshrl.u32 %v49, 7
  %v51 = vsub.s32 0, %v50
  %v52 = vrot.slane %v47, %v51
  %v70 = vunpack.c.l.b16 %v15
  %v71 = vunpack.c.l.b16 %v16
  %v72 = vunpack.c.l.b16 %v17
  %v73 = vunpack.c.l.b16 %v18
  %v74 = vunpack.c.l.b16 %v19
  %v75 = vunpack.c.l.b16 %v20
  %v76 = vunpack.c.l.b16 %v21
  %v77 = vunpack.c.l.b16 %v22
  %v78 = vunpack.c.l.b16 %v23
  %v79 = vunpack.c.l.b16 %v24
  %v80 = vunpack.c.l.b16 %v25
  %v81 = vunpack.c.l.b16 %v26
  %v82 = vunpack.c.l.b16 %v27
  %v83 = vunpack.c.l.b16 %v28
  %v84 = vunpack.c.l.b16 %v29
  %v85 = vunpack.c.l.b16 %v30
  %v86 = vpack.c.b16 %v71, %v70
  %v87 = vpack.c.b16 %v73, %v72
  %v88 = vpack.c.b16 %v75, %v74
  %v89 = vpack.c.b16 %v77, %v76
  %v90 = vpack.c.b16 %v79, %v78
  %v91 = vpack.c.b16 %v81, %v80
  %v92 = vpack.c.b16 %v83, %v82
  %v93 = vpack.c.b16 %v85, %v84
  %v118 = vunpack.c.l.b16 %v31
  %v119 = vunpack.c.l.b16 %v32
  %v120 = vunpack.c.l.b16 %v33
  %v121 = vunpack.c.l.b16 %v34
  %v122 = vunpack.c.l.b16 %v35
  %v123 = vunpack.c.l.b16 %v36
  %v124 = vunpack.c.l.b16 %v37
  %v125 = vunpack.c.l.b16 %v38
  %v126 = vunpack.c.l.b16 %v39
  %v127 = vunpack.c.l.b16 %v40
  %v128 = vunpack.c.l.b16 %v41
  %v129 = vunpack.c.l.b16 %v42
  %v130 = vunpack.c.l.b16 %v43
  %v131 = vunpack.c.l.b16 %v44
  %v132 = vunpack.c.l.b16 %v45
  %v133 = vunpack.c.l.b16 %v46
  %v134 = vpack.c.b16 %v119, %v118
  %v135 = vpack.c.b16 %v121, %v120
  %v136 = vpack.c.b16 %v123, %v122
  %v137 = vpack.c.b16 %v125, %v124
  %v138 = vpack.c.b16 %v127, %v126
  %v139 = vpack.c.b16 %v129, %v128
  %v140 = vpack.c.b16 %v131, %v130
  %v141 = vpack.c.b16 %v133, %v132
  %150 = vmatprep.subr.bf16.mxu0 0
  %151 = vmatpush1.bf16.msra.mxu0 %v134
  %152 = vmatprep.subr.bf16.mxu0 0
  %153 = vmatpush1.bf16.msra.mxu0 %v135
  %154 = vmatprep.subr.bf16.mxu0 0
  %155 = vmatpush1.bf16.msra.mxu0 %v136
  %156 = vmatprep.subr.bf16.mxu0 0
  %157 = vmatpush1.bf16.msra.mxu0 %v137
  %158 = vmatprep.subr.bf16.mxu0 0
  %159 = vmatpush1.bf16.msra.mxu0 %v138
  %160 = vmatprep.subr.bf16.mxu0 0
  %161 = vmatpush1.bf16.msra.mxu0 %v139
  %162 = vmatprep.subr.bf16.mxu0 0
  %163 = vmatpush1.bf16.msra.mxu0 %v140
  %164 = vmatprep.subr.bf16.mxu0 0
  %165 = vmatpush1.bf16.msra.mxu0 %v141
  %166 = vmatprep.subr.bf16.mxu0 0
  %167 = vmatpush1.bf16.msra.mxu0 0
  %168 = vmatprep.subr.bf16.mxu0 0
  %169 = vmatpush1.bf16.msra.mxu0 0
  %170 = vmatprep.subr.bf16.mxu0 0
  %171 = vmatpush1.bf16.msra.mxu0 0
  %172 = vmatprep.subr.bf16.mxu0 0
  %173 = vmatpush1.bf16.msra.mxu0 0
  %174 = vmatprep.subr.bf16.mxu0 0
  %175 = vmatpush1.bf16.msra.mxu0 0
  %176 = vmatprep.subr.bf16.mxu0 0
  %177 = vmatpush1.bf16.msra.mxu0 0
  %178 = vmatprep.subr.bf16.mxu0 0
  %179 = vmatpush1.bf16.msra.mxu0 0
  %180 = vmatprep.subr.bf16.mxu0 0
  %181 = vmatpush1.bf16.msra.mxu0 0
  %182 = vmatprep.mubr.bf16.mxu0 0
  %183 = vmatmul.mubr.bf16.gmra.mrb[0].mxu0 %v86
  %v184 = vpop.f32.mrb[0].mxu0
  %v185 = vadd.f32 %v52, %v184
  %v186 = vpop.f32.mrb[0].mxu0
  %v187 = vpop.f32.mrb[0].mxu0
  %v188 = vadd.f32 %v52, %v187
  %v189 = vpop.f32.mrb[0].mxu0
  %190 = vmatprep.mubr.bf16.mxu0 0
  %191 = vmatmul.mubr.bf16.gmra.mrb[0].mxu0 %v87
  %v192 = vpop.f32.mrb[0].mxu0
  %v193 = vadd.f32 %v52, %v192
  %v194 = vpop.f32.mrb[0].mxu0
  %v195 = vpop.f32.mrb[0].mxu0
  %v196 = vadd.f32 %v52, %v195
  %v197 = vpop.f32.mrb[0].mxu0
  %198 = vmatprep.mubr.bf16.mxu0 0
  %199 = vmatmul.mubr.bf16.gmra.mrb[0].mxu0 %v88
  %v200 = vpop.f32.mrb[0].mxu0
  %v201 = vadd.f32 %v52, %v200
  %v202 = vpop.f32.mrb[0].mxu0
  %v203 = vpop.f32.mrb[0].mxu0
  %v204 = vadd.f32 %v52, %v203
  %v205 = vpop.f32.mrb[0].mxu0
  %206 = vmatprep.mubr.bf16.mxu0 0
  %207 = vmatmul.mubr.bf16.gmra.mrb[0].mxu0 %v89
  %v208 = vpop.f32.mrb[0].mxu0
  %v209 = vadd.f32 %v52, %v208
  %v210 = vpop.f32.mrb[0].mxu0
  %v211 = vpop.f32.mrb[0].mxu0
  %v212 = vadd.f32 %v52, %v211
  %v213 = vpop.f32.mrb[0].mxu0
  %214 = vmatprep.mubr.bf16.mxu0 0
  %215 = vmatmul.mubr.bf16.gmra.mrb[0].mxu0 %v90
  %v216 = vpop.f32.mrb[0].mxu0
  %v217 = vadd.f32 %v52, %v216
  %v218 = vpop.f32.mrb[0].mxu0
  %v219 = vpop.f32.mrb[0].mxu0
  %v220 = vadd.f32 %v52, %v219
  %v221 = vpop.f32.mrb[0].mxu0
  %222 = vmatprep.mubr.bf16.mxu0 0
  %223 = vmatmul.mubr.bf16.gmra.mrb[0].mxu0 %v91
  %v224 = vpop.f32.mrb[0].mxu0
  %v225 = vadd.f32 %v52, %v224
  %v226 = vpop.f32.mrb[0].mxu0
  %v227 = vpop.f32.mrb[0].mxu0
  %v228 = vadd.f32 %v52, %v227
  %v229 = vpop.f32.mrb[0].mxu0
  %230 = vmatprep.mubr.bf16.mxu0 0
  %231 = vmatmul.mubr.bf16.gmra.mrb[0].mxu0 %v92
  %v232 = vpop.f32.mrb[0].mxu0
  %v233 = vadd.f32 %v52, %v232
  %v234 = vpop.f32.mrb[0].mxu0
  %v235 = vpop.f32.mrb[0].mxu0
  %v236 = vadd.f32 %v52, %v235
  %v237 = vpop.f32.mrb[0].mxu0
  %238 = vmatprep.mubr.bf16.mxu0 0
  %239 = vmatmul.mubr.bf16.gmra.mrb[0].mxu0 %v93
  %v240 = vpop.f32.mrb[0].mxu0
  %v241 = vadd.f32 %v52, %v240
  %v242 = vpop.f32.mrb[0].mxu0
  %v243 = vpop.f32.mrb[0].mxu0
  %v244 = vadd.f32 %v52, %v243
  %v245 = vpop.f32.mrb[0].mxu0
  %246 = vdwg.mxu0
  %vm247 = vcmp.gt.f32.partialorder %v185, 0.0
  %vm248 = vcmp.gt.f32.partialorder %v188, 0.0
  %vm249 = vcmp.gt.f32.partialorder %v193, 0.0
  %vm250 = vcmp.gt.f32.partialorder %v196, 0.0
  %vm251 = vcmp.gt.f32.partialorder %v201, 0.0
  %vm252 = vcmp.gt.f32.partialorder %v204, 0.0
  %vm253 = vcmp.gt.f32.partialorder %v209, 0.0
  %vm254 = vcmp.gt.f32.partialorder %v212, 0.0
  %vm255 = vcmp.gt.f32.partialorder %v217, 0.0
  %vm256 = vcmp.gt.f32.partialorder %v220, 0.0
  %vm257 = vcmp.gt.f32.partialorder %v225, 0.0
  %vm258 = vcmp.gt.f32.partialorder %v228, 0.0
  %vm259 = vcmp.gt.f32.partialorder %v233, 0.0
  %vm260 = vcmp.gt.f32.partialorder %v236, 0.0
  %vm261 = vcmp.gt.f32.partialorder %v241, 0.0
  %vm262 = vcmp.gt.f32.partialorder %v244, 0.0
  %v263 = vmul.f32 %v185, 0.25
  %v264 = vmul.f32 %v188, 0.25
  %v265 = vmul.f32 %v193, 0.25
  %v266 = vmul.f32 %v196, 0.25
  %v267 = vmul.f32 %v201, 0.25
  %v268 = vmul.f32 %v204, 0.25
  %v269 = vmul.f32 %v209, 0.25
  %v270 = vmul.f32 %v212, 0.25
  %v271 = vmul.f32 %v217, 0.25
  %v272 = vmul.f32 %v220, 0.25
  %v273 = vmul.f32 %v225, 0.25
  %v274 = vmul.f32 %v228, 0.25
  %v275 = vmul.f32 %v233, 0.25
  %v276 = vmul.f32 %v236, 0.25
  %v277 = vmul.f32 %v241, 0.25
  %v278 = vmul.f32 %v244, 0.25
  %v279 = vsel %vm247, %v185, %v263
  %v280 = vsel %vm248, %v188, %v264
  %v281 = vsel %vm249, %v193, %v265
  %v282 = vsel %vm250, %v196, %v266
  %v283 = vsel %vm251, %v201, %v267
  %v284 = vsel %vm252, %v204, %v268
  %v285 = vsel %vm253, %v209, %v269
  %v286 = vsel %vm254, %v212, %v270
  %v287 = vsel %vm255, %v217, %v271
  %v288 = vsel %vm256, %v220, %v272
  %v289 = vsel %vm257, %v225, %v273
  %v290 = vsel %vm258, %v228, %v274
  %v291 = vsel %vm259, %v233, %v275
  %v292 = vsel %vm260, %v236, %v276
  %v293 = vsel %vm261, %v241, %v277
  %v294 = vsel %vm262, %v244, %v278
  %v295 = vpack.c.bf16 %v280, %v279
  %v296 = vpack.c.bf16 %v282, %v281
  %v297 = vpack.c.bf16 %v284, %v283
  %v298 = vpack.c.bf16 %v286, %v285
  %v299 = vpack.c.bf16 %v288, %v287
  %v300 = vpack.c.bf16 %v290, %v289
  %v301 = vpack.c.bf16 %v292, %v291
  %v302 = vpack.c.bf16 %v294, %v293
  %v311 = vunpack.c.l.b16 %v295
  %v312 = vunpack.c.h.b16 %v295
  %v313 = vunpack.c.l.b16 %v296
  %v314 = vunpack.c.h.b16 %v296
  %v315 = vunpack.c.l.b16 %v297
  %v316 = vunpack.c.h.b16 %v297
  %v317 = vunpack.c.l.b16 %v298
  %v318 = vunpack.c.h.b16 %v298
  %v319 = vunpack.c.l.b16 %v299
  %v320 = vunpack.c.h.b16 %v299
  %v321 = vunpack.c.l.b16 %v300
  %v322 = vunpack.c.h.b16 %v300
  %v323 = vunpack.c.l.b16 %v301
  %v324 = vunpack.c.h.b16 %v301
  %v325 = vunpack.c.l.b16 %v302
  %v326 = vunpack.c.h.b16 %v302
  %v327 = vpack.c.b16 %v311, %v311
  %v328 = vpack.c.b16 %v312, %v312
  %v329 = vpack.c.b16 %v313, %v313
  %v330 = vpack.c.b16 %v314, %v314
  %v331 = vpack.c.b16 %v315, %v315
  %v332 = vpack.c.b16 %v316, %v316
  %v333 = vpack.c.b16 %v317, %v317
  %v334 = vpack.c.b16 %v318, %v318
  %v335 = vpack.c.b16 %v319, %v319
  %v336 = vpack.c.b16 %v320, %v320
  %v337 = vpack.c.b16 %v321, %v321
  %v338 = vpack.c.b16 %v322, %v322
  %v339 = vpack.c.b16 %v323, %v323
  %v340 = vpack.c.b16 %v324, %v324
  %v341 = vpack.c.b16 %v325, %v325
  %v342 = vpack.c.b16 %v326, %v326
  %vm359 = vcmask 257024
  %360 = vst.msk [vmem:[%s3] sm:$0xf] %vm359, %v327
  %361 = vst.msk [vmem:[%s3 + $0x4] sm:$0xf] %vm359, %v328
  %362 = vst.msk [vmem:[%s3 + $0x8] sm:$0xf] %vm359, %v329
  %363 = vst.msk [vmem:[%s3 + $0xc] sm:$0xf] %vm359, %v330
  %364 = vst.msk [vmem:[%s3 + $0x10] sm:$0xf] %vm359, %v331
  %365 = vst.msk [vmem:[%s3 + $0x14] sm:$0xf] %vm359, %v332
  %366 = vst.msk [vmem:[%s3 + $0x18] sm:$0xf] %vm359, %v333
  %367 = vst.msk [vmem:[%s3 + $0x1c] sm:$0xf] %vm359, %v334
  %368 = vst.msk [vmem:[%s3 + $0x20] sm:$0xf] %vm359, %v335
  %369 = vst.msk [vmem:[%s3 + $0x24] sm:$0xf] %vm359, %v336
  %370 = vst.msk [vmem:[%s3 + $0x28] sm:$0xf] %vm359, %v337
  %371 = vst.msk [vmem:[%s3 + $0x2c] sm:$0xf] %vm359, %v338
  %372 = vst.msk [vmem:[%s3 + $0x30] sm:$0xf] %vm359, %v339
  %373 = vst.msk [vmem:[%s3 + $0x34] sm:$0xf] %vm359, %v340
  %374 = vst.msk [vmem:[%s3 + $0x38] sm:$0xf] %vm359, %v341
  %375 = vst.msk [vmem:[%s3 + $0x3c] sm:$0xf] %vm359, %v342
  // Predicated region
  $region14: #{tounet_fwd.183} parent=0 // pred_check
    _
  $region15: #{tounet_fwd.183} parent=0 // pred_check_branch
    %377 = sbr.rel (0) target = $region17
  $region16: #{tounet_fwd.183} parent=0 // pred_region
    _
  $region17: #{tounet_fwd.183} parent=0 // pred_fallthru
    _
  // Predicated region
  $region18: #{tounet_fwd.183} parent=0 // pred_check
    _
  $region19: #{tounet_fwd.183} parent=0 // pred_check_branch
    %379 = sbr.rel (0) target = $region21
  $region20: #{tounet_fwd.183} parent=0 // pred_region
    _
  $region21: #{tounet_fwd.183} parent=0 // pred_fallthru
    _

// kernel: tounet_fwd.342
$region0: #{tounet_fwd.342}
  #allocation0 [shape = 'u32[]', space=smem, size = 0x4, offset = 0x4, fixed_abs, tag = 'smem constant byte address 0x4 - core index']
  #allocation1 [shape = 'u32[144,128]{1,0:T(1,128)}', space=vmem, size = 0x12000, scoped, tag = 'internal scratch']
  %s0 = inlined_call_operand.vmem [shape: bf16[128,256], index: 0, kind: input, shape index: {}]
  %s1 = inlined_call_operand.vmem [shape: bf16[256,128], index: 1, kind: input, shape index: {}]
  %s2 = inlined_call_operand.vmem [shape: f32[1,128], index: 2, kind: input, shape index: {}]
  %s3 = inlined_call_operand.vmem [shape: bf16[128,16], index: 3, kind: output, shape index: {}]
  %s4 = sld [smem:[#allocation0]]
  $region22: #{tounet_fwd.342} parent=0
    _
  %s6 = ssub.s32 1, %s4
  %s7 = scalar_select 0, %s6, %s4
  // Predicated region
  $region2: #{tounet_fwd.342} parent=0 // pred_check
    _
  $region3: #{tounet_fwd.342} parent=0 // pred_check_branch
    %9 = sbr.rel (0) target = $region5
  $region4: #{tounet_fwd.342} parent=0 // pred_region
    _
  $region5: #{tounet_fwd.342} parent=0 // pred_fallthru
    _
  // Predicated region
  $region6: #{tounet_fwd.342} parent=0 // pred_check
    _
  $region7: #{tounet_fwd.342} parent=0 // pred_check_branch
    %11 = sbr.rel (0) target = $region9
  $region8: #{tounet_fwd.342} parent=0 // pred_region
    _
  $region9: #{tounet_fwd.342} parent=0 // pred_fallthru
    _
  // Predicated region
  $region10: #{tounet_fwd.342} parent=0 // pred_check
    _
  $region11: #{tounet_fwd.342} parent=0 // pred_check_branch
    %13 = sbr.rel (0) target = $region13
  $region12: #{tounet_fwd.342} parent=0 // pred_region
    _
  $region13: #{tounet_fwd.342} parent=0 // pred_fallthru
    _
  %v15 = vld [vmem:[%s0] sm:$0xff]
  %v16 = vld [vmem:[%s0 + $0x8] sm:$0xff]
  %v17 = vld [vmem:[%s0 + $0x10] sm:$0xff]
  %v18 = vld [vmem:[%s0 + $0x18] sm:$0xff]
  %v19 = vld [vmem:[%s0 + $0x20] sm:$0xff]
  %v20 = vld [vmem:[%s0 + $0x28] sm:$0xff]
  %v21 = vld [vmem:[%s0 + $0x30] sm:$0xff]
  %v22 = vld [vmem:[%s0 + $0x38] sm:$0xff]
  %v23 = vld [vmem:[%s0 + $0x40] sm:$0xff]
  %v24 = vld [vmem:[%s0 + $0x48] sm:$0xff]
  %v25 = vld [vmem:[%s0 + $0x50] sm:$0xff]
  %v26 = vld [vmem:[%s0 + $0x58] sm:$0xff]
  %v27 = vld [vmem:[%s0 + $0x60] sm:$0xff]
  %v28 = vld [vmem:[%s0 + $0x68] sm:$0xff]
  %v29 = vld [vmem:[%s0 + $0x70] sm:$0xff]
  %v30 = vld [vmem:[%s0 + $0x78] sm:$0xff]
  %v31 = vld [vmem:[%s1] sm:$0xf]
  %v32 = vld [vmem:[%s1 + $0x4] sm:$0xf]
  %v33 = vld [vmem:[%s1 + $0x8] sm:$0xf]
  %v34 = vld [vmem:[%s1 + $0xc] sm:$0xf]
  %v35 = vld [vmem:[%s1 + $0x10] sm:$0xf]
  %v36 = vld [vmem:[%s1 + $0x14] sm:$0xf]
  %v37 = vld [vmem:[%s1 + $0x18] sm:$0xf]
  %v38 = vld [vmem:[%s1 + $0x1c] sm:$0xf]
  %v39 = vld [vmem:[%s1 + $0x20] sm:$0xf]
  %v40 = vld [vmem:[%s1 + $0x24] sm:$0xf]
  %v41 = vld [vmem:[%s1 + $0x28] sm:$0xf]
  %v42 = vld [vmem:[%s1 + $0x2c] sm:$0xf]
  %v43 = vld [vmem:[%s1 + $0x30] sm:$0xf]
  %v44 = vld [vmem:[%s1 + $0x34] sm:$0xf]
  %v45 = vld [vmem:[%s1 + $0x38] sm:$0xf]
  %v46 = vld [vmem:[%s1 + $0x3c] sm:$0xf]
  %v47 = vld [vmem:[%s1 + $0x40] sm:$0xf]
  %v48 = vld [vmem:[%s1 + $0x44] sm:$0xf]
  %v49 = vld [vmem:[%s1 + $0x48] sm:$0xf]
  %v50 = vld [vmem:[%s1 + $0x4c] sm:$0xf]
  %v51 = vld [vmem:[%s1 + $0x50] sm:$0xf]
  %v52 = vld [vmem:[%s1 + $0x54] sm:$0xf]
  %v53 = vld [vmem:[%s1 + $0x58] sm:$0xf]
  %v54 = vld [vmem:[%s1 + $0x5c] sm:$0xf]
  %v55 = vld [vmem:[%s1 + $0x60] sm:$0xf]
  %v56 = vld [vmem:[%s1 + $0x64] sm:$0xf]
  %v57 = vld [vmem:[%s1 + $0x68] sm:$0xf]
  %v58 = vld [vmem:[%s1 + $0x6c] sm:$0xf]
  %v59 = vld [vmem:[%s1 + $0x70] sm:$0xf]
  %v60 = vld [vmem:[%s1 + $0x74] sm:$0xf]
  %v61 = vld [vmem:[%s1 + $0x78] sm:$0xf]
  %v62 = vld [vmem:[%s1 + $0x7c] sm:$0xf]
  %v63 = vld [vmem:[%s2] sm:$0x1]
  %v65 = vlaneseq
  %v66 = vshrl.u32 %v65, 7
  %v67 = vsub.s32 0, %v66
  %v68 = vrot.slane %v63, %v67
  %v86 = vunpack.c.l.b16 %v15
  %v87 = vunpack.c.h.b16 %v15
  %v88 = vunpack.c.l.b16 %v16
  %v89 = vunpack.c.h.b16 %v16
  %v90 = vunpack.c.l.b16 %v17
  %v91 = vunpack.c.h.b16 %v17
  %v92 = vunpack.c.l.b16 %v18
  %v93 = vunpack.c.h.b16 %v18
  %v94 = vunpack.c.l.b16 %v19
  %v95 = vunpack.c.h.b16 %v19
  %v96 = vunpack.c.l.b16 %v20
  %v97 = vunpack.c.h.b16 %v20
  %v98 = vunpack.c.l.b16 %v21
  %v99 = vunpack.c.h.b16 %v21
  %v100 = vunpack.c.l.b16 %v22
  %v101 = vunpack.c.h.b16 %v22
  %v102 = vunpack.c.l.b16 %v23
  %v103 = vunpack.c.h.b16 %v23
  %v104 = vunpack.c.l.b16 %v24
  %v105 = vunpack.c.h.b16 %v24
  %v106 = vunpack.c.l.b16 %v25
  %v107 = vunpack.c.h.b16 %v25
  %v108 = vunpack.c.l.b16 %v26
  %v109 = vunpack.c.h.b16 %v26
  %v110 = vunpack.c.l.b16 %v27
  %v111 = vunpack.c.h.b16 %v27
  %v112 = vunpack.c.l.b16 %v28
  %v113 = vunpack.c.h.b16 %v28
  %v114 = vunpack.c.l.b16 %v29
  %v115 = vunpack.c.h.b16 %v29
  %v116 = vunpack.c.l.b16 %v30
  %v117 = vunpack.c.h.b16 %v30
  %v118 = vpack.c.b16 %v88, %v86
  %v119 = vpack.c.b16 %v89, %v87
  %v120 = vpack.c.b16 %v92, %v90
  %v121 = vpack.c.b16 %v93, %v91
  %v122 = vpack.c.b16 %v96, %v94
  %v123 = vpack.c.b16 %v97, %v95
  %v124 = vpack.c.b16 %v100, %v98
  %v125 = vpack.c.b16 %v101, %v99
  %v126 = vpack.c.b16 %v104, %v102
  %v127 = vpack.c.b16 %v105, %v103
  %v128 = vpack.c.b16 %v108, %v106
  %v129 = vpack.c.b16 %v109, %v107
  %v130 = vpack.c.b16 %v112, %v110
  %v131 = vpack.c.b16 %v113, %v111
  %v132 = vpack.c.b16 %v116, %v114
  %v133 = vpack.c.b16 %v117, %v115
  %v182 = vunpack.c.l.b16 %v31
  %v183 = vunpack.c.l.b16 %v32
  %v184 = vunpack.c.l.b16 %v33
  %v185 = vunpack.c.l.b16 %v34
  %v186 = vunpack.c.l.b16 %v35
  %v187 = vunpack.c.l.b16 %v36
  %v188 = vunpack.c.l.b16 %v37
  %v189 = vunpack.c.l.b16 %v38
  %v190 = vunpack.c.l.b16 %v39
  %v191 = vunpack.c.l.b16 %v40
  %v192 = vunpack.c.l.b16 %v41
  %v193 = vunpack.c.l.b16 %v42
  %v194 = vunpack.c.l.b16 %v43
  %v195 = vunpack.c.l.b16 %v44
  %v196 = vunpack.c.l.b16 %v45
  %v197 = vunpack.c.l.b16 %v46
  %v198 = vunpack.c.l.b16 %v47
  %v199 = vunpack.c.l.b16 %v48
  %v200 = vunpack.c.l.b16 %v49
  %v201 = vunpack.c.l.b16 %v50
  %v202 = vunpack.c.l.b16 %v51
  %v203 = vunpack.c.l.b16 %v52
  %v204 = vunpack.c.l.b16 %v53
  %v205 = vunpack.c.l.b16 %v54
  %v206 = vunpack.c.l.b16 %v55
  %v207 = vunpack.c.l.b16 %v56
  %v208 = vunpack.c.l.b16 %v57
  %v209 = vunpack.c.l.b16 %v58
  %v210 = vunpack.c.l.b16 %v59
  %v211 = vunpack.c.l.b16 %v60
  %v212 = vunpack.c.l.b16 %v61
  %v213 = vunpack.c.l.b16 %v62
  %v214 = vpack.c.b16 %v183, %v182
  %v215 = vpack.c.b16 %v185, %v184
  %v216 = vpack.c.b16 %v187, %v186
  %v217 = vpack.c.b16 %v189, %v188
  %v218 = vpack.c.b16 %v191, %v190
  %v219 = vpack.c.b16 %v193, %v192
  %v220 = vpack.c.b16 %v195, %v194
  %v221 = vpack.c.b16 %v197, %v196
  %v222 = vpack.c.b16 %v199, %v198
  %v223 = vpack.c.b16 %v201, %v200
  %v224 = vpack.c.b16 %v203, %v202
  %v225 = vpack.c.b16 %v205, %v204
  %v226 = vpack.c.b16 %v207, %v206
  %v227 = vpack.c.b16 %v209, %v208
  %v228 = vpack.c.b16 %v211, %v210
  %v229 = vpack.c.b16 %v213, %v212
  %246 = vmatprep.subr.bf16.mxu0 0
  %247 = vmatpush1.bf16.msra.mxu0 %v214
  %248 = vmatprep.subr.bf16.mxu0 0
  %249 = vmatpush1.bf16.msra.mxu0 %v215
  %250 = vmatprep.subr.bf16.mxu0 0
  %251 = vmatpush1.bf16.msra.mxu0 %v216
  %252 = vmatprep.subr.bf16.mxu0 0
  %253 = vmatpush1.bf16.msra.mxu0 %v217
  %254 = vmatprep.subr.bf16.mxu0 0
  %255 = vmatpush1.bf16.msra.mxu0 %v218
  %256 = vmatprep.subr.bf16.mxu0 0
  %257 = vmatpush1.bf16.msra.mxu0 %v219
  %258 = vmatprep.subr.bf16.mxu0 0
  %259 = vmatpush1.bf16.msra.mxu0 %v220
  %260 = vmatprep.subr.bf16.mxu0 0
  %261 = vmatpush1.bf16.msra.mxu0 %v221
  %262 = vmatprep.subr.bf16.mxu0 0
  %263 = vmatpush1.bf16.msra.mxu0 %v222
  %264 = vmatprep.subr.bf16.mxu0 0
  %265 = vmatpush1.bf16.msra.mxu0 %v223
  %266 = vmatprep.subr.bf16.mxu0 0
  %267 = vmatpush1.bf16.msra.mxu0 %v224
  %268 = vmatprep.subr.bf16.mxu0 0
  %269 = vmatpush1.bf16.msra.mxu0 %v225
  %270 = vmatprep.subr.bf16.mxu0 0
  %271 = vmatpush1.bf16.msra.mxu0 %v226
  %272 = vmatprep.subr.bf16.mxu0 0
  %273 = vmatpush1.bf16.msra.mxu0 %v227
  %274 = vmatprep.subr.bf16.mxu0 0
  %275 = vmatpush1.bf16.msra.mxu0 %v228
  %276 = vmatprep.subr.bf16.mxu0 0
  %277 = vmatpush1.bf16.msra.mxu0 %v229
  %278 = vmatprep.mubr.bf16.mxu0 %v119
  %279 = vmatmul.mubr.bf16.gmra.mrb[0].mxu0 %v118
  %v280 = vpop.f32.mrb[0].mxu0
  %v281 = vadd.f32 %v68, %v280
  %v282 = vpop.f32.mrb[0].mxu0
  %v283 = vpop.f32.mrb[0].mxu0
  %v284 = vadd.f32 %v68, %v283
  %v285 = vpop.f32.mrb[0].mxu0
  %286 = vmatprep.mubr.bf16.mxu0 %v121
  %287 = vmatmul.mubr.bf16.gmra.mrb[0].mxu0 %v120
  %v288 = vpop.f32.mrb[0].mxu0
  %v289 = vadd.f32 %v68, %v288
  %v290 = vpop.f32.mrb[0].mxu0
  %v291 = vpop.f32.mrb[0].mxu0
  %v292 = vadd.f32 %v68, %v291
  %v293 = vpop.f32.mrb[0].mxu0
  %294 = vmatprep.mubr.bf16.mxu0 %v123
  %295 = vmatmul.mubr.bf16.gmra.mrb[0].mxu0 %v122
  %v296 = vpop.f32.mrb[0].mxu0
  %v297 = vadd.f32 %v68, %v296
  %v298 = vpop.f32.mrb[0].mxu0
  %v299 = vpop.f32.mrb[0].mxu0
  %v300 = vadd.f32 %v68, %v299
  %v301 = vpop.f32.mrb[0].mxu0
  %302 = vmatprep.mubr.bf16.mxu0 %v125
  %303 = vmatmul.mubr.bf16.gmra.mrb[0].mxu0 %v124
  %v304 = vpop.f32.mrb[0].mxu0
  %v305 = vadd.f32 %v68, %v304
  %v306 = vpop.f32.mrb[0].mxu0
  %v307 = vpop.f32.mrb[0].mxu0
  %v308 = vadd.f32 %v68, %v307
  %v309 = vpop.f32.mrb[0].mxu0
  %310 = vmatprep.mubr.bf16.mxu0 %v127
  %311 = vmatmul.mubr.bf16.gmra.mrb[0].mxu0 %v126
  %v312 = vpop.f32.mrb[0].mxu0
  %v313 = vadd.f32 %v68, %v312
  %v314 = vpop.f32.mrb[0].mxu0
  %v315 = vpop.f32.mrb[0].mxu0
  %v316 = vadd.f32 %v68, %v315
  %v317 = vpop.f32.mrb[0].mxu0
  %318 = vmatprep.mubr.bf16.mxu0 %v129
  %319 = vmatmul.mubr.bf16.gmra.mrb[0].mxu0 %v128
  %v320 = vpop.f32.mrb[0].mxu0
  %v321 = vadd.f32 %v68, %v320
  %v322 = vpop.f32.mrb[0].mxu0
  %v323 = vpop.f32.mrb[0].mxu0
  %v324 = vadd.f32 %v68, %v323
  %v325 = vpop.f32.mrb[0].mxu0
  %326 = vmatprep.mubr.bf16.mxu0 %v131
  %327 = vmatmul.mubr.bf16.gmra.mrb[0].mxu0 %v130
  %v328 = vpop.f32.mrb[0].mxu0
  %v329 = vadd.f32 %v68, %v328
  %v330 = vpop.f32.mrb[0].mxu0
  %v331 = vpop.f32.mrb[0].mxu0
  %v332 = vadd.f32 %v68, %v331
  %v333 = vpop.f32.mrb[0].mxu0
  %334 = vmatprep.mubr.bf16.mxu0 %v133
  %335 = vmatmul.mubr.bf16.gmra.mrb[0].mxu0 %v132
  %v336 = vpop.f32.mrb[0].mxu0
  %v337 = vadd.f32 %v68, %v336
  %v338 = vpop.f32.mrb[0].mxu0
  %v339 = vpop.f32.mrb[0].mxu0
  %v340 = vadd.f32 %v68, %v339
  %v341 = vpop.f32.mrb[0].mxu0
  %342 = vdwg.mxu0
  %vm343 = vcmp.gt.f32.partialorder %v281, 0.0
  %vm344 = vcmp.gt.f32.partialorder %v284, 0.0
  %vm345 = vcmp.gt.f32.partialorder %v289, 0.0
  %vm346 = vcmp.gt.f32.partialorder %v292, 0.0
  %vm347 = vcmp.gt.f32.partialorder %v297, 0.0
  %vm348 = vcmp.gt.f32.partialorder %v300, 0.0
  %vm349 = vcmp.gt.f32.partialorder %v305, 0.0
  %vm350 = vcmp.gt.f32.partialorder %v308, 0.0
  %vm351 = vcmp.gt.f32.partialorder %v313, 0.0
  %vm352 = vcmp.gt.f32.partialorder %v316, 0.0
  %vm353 = vcmp.gt.f32.partialorder %v321, 0.0
  %vm354 = vcmp.gt.f32.partialorder %v324, 0.0
  %vm355 = vcmp.gt.f32.partialorder %v329, 0.0
  %vm356 = vcmp.gt.f32.partialorder %v332, 0.0
  %vm357 = vcmp.gt.f32.partialorder %v337, 0.0
  %vm358 = vcmp.gt.f32.partialorder %v340, 0.0
  %v359 = vmul.f32 %v281, 0.25
  %v360 = vmul.f32 %v284, 0.25
  %v361 = vmul.f32 %v289, 0.25
  %v362 = vmul.f32 %v292, 0.25
  %v363 = vmul.f32 %v297, 0.25
  %v364 = vmul.f32 %v300, 0.25
  %v365 = vmul.f32 %v305, 0.25
  %v366 = vmul.f32 %v308, 0.25
  %v367 = vmul.f32 %v313, 0.25
  %v368 = vmul.f32 %v316, 0.25
  %v369 = vmul.f32 %v321, 0.25
  %v370 = vmul.f32 %v324, 0.25
  %v371 = vmul.f32 %v329, 0.25
  %v372 = vmul.f32 %v332, 0.25
  %v373 = vmul.f32 %v337, 0.25
  %v374 = vmul.f32 %v340, 0.25
  %v375 = vsel %vm343, %v281, %v359
  %v376 = vsel %vm344, %v284, %v360
  %v377 = vsel %vm345, %v289, %v361
  %v378 = vsel %vm346, %v292, %v362
  %v379 = vsel %vm347, %v297, %v363
  %v380 = vsel %vm348, %v300, %v364
  %v381 = vsel %vm349, %v305, %v365
  %v382 = vsel %vm350, %v308, %v366
  %v383 = vsel %vm351, %v313, %v367
  %v384 = vsel %vm352, %v316, %v368
  %v385 = vsel %vm353, %v321, %v369
  %v386 = vsel %vm354, %v324, %v370
  %v387 = vsel %vm355, %v329, %v371
  %v388 = vsel %vm356, %v332, %v372
  %v389 = vsel %vm357, %v337, %v373
  %v390 = vsel %vm358, %v340, %v374
  %v391 = vpack.c.bf16 %v376, %v375
  %v392 = vpack.c.bf16 %v378, %v377
  %v393 = vpack.c.bf16 %v380, %v379
  %v394 = vpack.c.bf16 %v382, %v381
  %v395 = vpack.c.bf16 %v384, %v383
  %v396 = vpack.c.bf16 %v386, %v385
  %v397 = vpack.c.bf16 %v388, %v387
  %v398 = vpack.c.bf16 %v390, %v389
  %v407 = vunpack.c.l.b16 %v391
  %v408 = vunpack.c.h.b16 %v391
  %v409 = vunpack.c.l.b16 %v392
  %v410 = vunpack.c.h.b16 %v392
  %v411 = vunpack.c.l.b16 %v393
  %v412 = vunpack.c.h.b16 %v393
  %v413 = vunpack.c.l.b16 %v394
  %v414 = vunpack.c.h.b16 %v394
  %v415 = vunpack.c.l.b16 %v395
  %v416 = vunpack.c.h.b16 %v395
  %v417 = vunpack.c.l.b16 %v396
  %v418 = vunpack.c.h.b16 %v396
  %v419 = vunpack.c.l.b16 %v397
  %v420 = vunpack.c.h.b16 %v397
  %v421 = vunpack.c.l.b16 %v398
  %v422 = vunpack.c.h.b16 %v398
  %v423 = vpack.c.b16 %v407, %v407
  %v424 = vpack.c.b16 %v408, %v408
  %v425 = vpack.c.b16 %v409, %v409
  %v426 = vpack.c.b16 %v410, %v410
  %v427 = vpack.c.b16 %v411, %v411
  %v428 = vpack.c.b16 %v412, %v412
  %v429 = vpack.c.b16 %v413, %v413
  %v430 = vpack.c.b16 %v414, %v414
  %v431 = vpack.c.b16 %v415, %v415
  %v432 = vpack.c.b16 %v416, %v416
  %v433 = vpack.c.b16 %v417, %v417
  %v434 = vpack.c.b16 %v418, %v418
  %v435 = vpack.c.b16 %v419, %v419
  %v436 = vpack.c.b16 %v420, %v420
  %v437 = vpack.c.b16 %v421, %v421
  %v438 = vpack.c.b16 %v422, %v422
  %vm455 = vcmask 125952
  %456 = vst.msk [vmem:[%s3] sm:$0xf] %vm455, %v423
  %457 = vst.msk [vmem:[%s3 + $0x4] sm:$0xf] %vm455, %v424
  %458 = vst.msk [vmem:[%s3 + $0x8] sm:$0xf] %vm455, %v425
  %459 = vst.msk [vmem:[%s3 + $0xc] sm:$0xf] %vm455, %v426
  %460 = vst.msk [vmem:[%s3 + $0x10] sm:$0xf] %vm455, %v427
  %461 = vst.msk [vmem:[%s3 + $0x14] sm:$0xf] %vm455, %v428
  %462 = vst.msk [vmem:[%s3 + $0x18] sm:$0xf] %vm455, %v429
  %463 = vst.msk [vmem:[%s3 + $0x1c] sm:$0xf] %vm455, %v430
  %464 = vst.msk [vmem:[%s3 + $0x20] sm:$0xf] %vm455, %v431
  %465 = vst.msk [vmem:[%s3 + $0x24] sm:$0xf] %vm455, %v432
  %466 = vst.msk [vmem:[%s3 + $0x28] sm:$0xf] %vm455, %v433
  %467 = vst.msk [vmem:[%s3 + $0x2c] sm:$0xf] %vm455, %v434
  %468 = vst.msk [vmem:[%s3 + $0x30] sm:$0xf] %vm455, %v435
  %469 = vst.msk [vmem:[%s3 + $0x34] sm:$0xf] %vm455, %v436
  %470 = vst.msk [vmem:[%s3 + $0x38] sm:$0xf] %vm455, %v437
  %471 = vst.msk [vmem:[%s3 + $0x3c] sm:$0xf] %vm455, %v438
  // Predicated region
  $region14: #{tounet_fwd.342} parent=0 // pred_check
    _
  $region15: #{tounet_fwd.342} parent=0 // pred_check_branch
    %473 = sbr.rel (0) target = $region17
  $region16: #{tounet_fwd.342} parent=0 // pred_region
    _
  $region17: #{tounet_fwd.342} parent=0 // pred_fallthru
    _
  // Predicated region
  $region18: #{tounet_fwd.342} parent=0 // pred_check
    _
  $region19: #{tounet_fwd.342} parent=0 // pred_check_branch
    %475 = sbr.rel (0) target = $region21
  $region20: #{tounet_fwd.342} parent=0 // pred_region
    _
  $region21: #{tounet_fwd.342} parent=0 // pred_fallthru
    _

// kernel: tounet_fwd.343
$region0: #{tounet_fwd.343}
  #allocation0 [shape = 'u32[]', space=smem, size = 0x4, offset = 0x4, fixed_abs, tag = 'smem constant byte address 0x4 - core index']
  #allocation1 [shape = 'u32[144,128]{1,0:T(1,128)}', space=vmem, size = 0x12000, scoped, tag = 'internal scratch']
  %s0 = inlined_call_operand.vmem [shape: bf16[128,256], index: 0, kind: input, shape index: {}]
  %s1 = inlined_call_operand.vmem [shape: bf16[256,128], index: 1, kind: input, shape index: {}]
  %s2 = inlined_call_operand.vmem [shape: f32[1,128], index: 2, kind: input, shape index: {}]
  %s3 = inlined_call_operand.vmem [shape: bf16[128,16], index: 3, kind: input, shape index: {}]
  %s4 = inlined_call_operand.vmem [shape: bf16[128,16], index: 4, kind: output, shape index: {}]
  %s5 = sld [smem:[#allocation0]]
  $region26: #{tounet_fwd.343} parent=0
    _
  %s7 = ssub.s32 1, %s5
  %s8 = scalar_select 0, %s7, %s5
  // Predicated region
  $region2: #{tounet_fwd.343} parent=0 // pred_check
    _
  $region3: #{tounet_fwd.343} parent=0 // pred_check_branch
    %10 = sbr.rel (0) target = $region5
  $region4: #{tounet_fwd.343} parent=0 // pred_region
    _
  $region5: #{tounet_fwd.343} parent=0 // pred_fallthru
    _
  // Predicated region
  $region6: #{tounet_fwd.343} parent=0 // pred_check
    _
  $region7: #{tounet_fwd.343} parent=0 // pred_check_branch
    %12 = sbr.rel (0) target = $region9
  $region8: #{tounet_fwd.343} parent=0 // pred_region
    _
  $region9: #{tounet_fwd.343} parent=0 // pred_fallthru
    _
  // Predicated region
  $region10: #{tounet_fwd.343} parent=0 // pred_check
    _
  $region11: #{tounet_fwd.343} parent=0 // pred_check_branch
    %14 = sbr.rel (0) target = $region13
  $region12: #{tounet_fwd.343} parent=0 // pred_region
    _
  $region13: #{tounet_fwd.343} parent=0 // pred_fallthru
    _
  // Predicated region
  $region14: #{tounet_fwd.343} parent=0 // pred_check
    _
  $region15: #{tounet_fwd.343} parent=0 // pred_check_branch
    %16 = sbr.rel (0) target = $region17
  $region16: #{tounet_fwd.343} parent=0 // pred_region
    _
  $region17: #{tounet_fwd.343} parent=0 // pred_fallthru
    _
  %v18 = vld [vmem:[%s0] sm:$0xff]
  %v19 = vld [vmem:[%s0 + $0x8] sm:$0xff]
  %v20 = vld [vmem:[%s0 + $0x10] sm:$0xff]
  %v21 = vld [vmem:[%s0 + $0x18] sm:$0xff]
  %v22 = vld [vmem:[%s0 + $0x20] sm:$0xff]
  %v23 = vld [vmem:[%s0 + $0x28] sm:$0xff]
  %v24 = vld [vmem:[%s0 + $0x30] sm:$0xff]
  %v25 = vld [vmem:[%s0 + $0x38] sm:$0xff]
  %v26 = vld [vmem:[%s0 + $0x40] sm:$0xff]
  %v27 = vld [vmem:[%s0 + $0x48] sm:$0xff]
  %v28 = vld [vmem:[%s0 + $0x50] sm:$0xff]
  %v29 = vld [vmem:[%s0 + $0x58] sm:$0xff]
  %v30 = vld [vmem:[%s0 + $0x60] sm:$0xff]
  %v31 = vld [vmem:[%s0 + $0x68] sm:$0xff]
  %v32 = vld [vmem:[%s0 + $0x70] sm:$0xff]
  %v33 = vld [vmem:[%s0 + $0x78] sm:$0xff]
  %v34 = vld [vmem:[%s1] sm:$0xf]
  %v35 = vld [vmem:[%s1 + $0x4] sm:$0xf]
  %v36 = vld [vmem:[%s1 + $0x8] sm:$0xf]
  %v37 = vld [vmem:[%s1 + $0xc] sm:$0xf]
  %v38 = vld [vmem:[%s1 + $0x10] sm:$0xf]
  %v39 = vld [vmem:[%s1 + $0x14] sm:$0xf]
  %v40 = vld [vmem:[%s1 + $0x18] sm:$0xf]
  %v41 = vld [vmem:[%s1 + $0x1c] sm:$0xf]
  %v42 = vld [vmem:[%s1 + $0x20] sm:$0xf]
  %v43 = vld [vmem:[%s1 + $0x24] sm:$0xf]
  %v44 = vld [vmem:[%s1 + $0x28] sm:$0xf]
  %v45 = vld [vmem:[%s1 + $0x2c] sm:$0xf]
  %v46 = vld [vmem:[%s1 + $0x30] sm:$0xf]
  %v47 = vld [vmem:[%s1 + $0x34] sm:$0xf]
  %v48 = vld [vmem:[%s1 + $0x38] sm:$0xf]
  %v49 = vld [vmem:[%s1 + $0x3c] sm:$0xf]
  %v50 = vld [vmem:[%s1 + $0x40] sm:$0xf]
  %v51 = vld [vmem:[%s1 + $0x44] sm:$0xf]
  %v52 = vld [vmem:[%s1 + $0x48] sm:$0xf]
  %v53 = vld [vmem:[%s1 + $0x4c] sm:$0xf]
  %v54 = vld [vmem:[%s1 + $0x50] sm:$0xf]
  %v55 = vld [vmem:[%s1 + $0x54] sm:$0xf]
  %v56 = vld [vmem:[%s1 + $0x58] sm:$0xf]
  %v57 = vld [vmem:[%s1 + $0x5c] sm:$0xf]
  %v58 = vld [vmem:[%s1 + $0x60] sm:$0xf]
  %v59 = vld [vmem:[%s1 + $0x64] sm:$0xf]
  %v60 = vld [vmem:[%s1 + $0x68] sm:$0xf]
  %v61 = vld [vmem:[%s1 + $0x6c] sm:$0xf]
  %v62 = vld [vmem:[%s1 + $0x70] sm:$0xf]
  %v63 = vld [vmem:[%s1 + $0x74] sm:$0xf]
  %v64 = vld [vmem:[%s1 + $0x78] sm:$0xf]
  %v65 = vld [vmem:[%s1 + $0x7c] sm:$0xf]
  %v66 = vld [vmem:[%s2] sm:$0x1]
  %v68 = vlaneseq
  %v69 = vshrl.u32 %v68, 7
  %v70 = vsub.s32 0, %v69
  %v71 = vrot.slane %v66, %v70
  %v89 = vunpack.c.l.b16 %v18
  %v90 = vunpack.c.h.b16 %v18
  %v91 = vunpack.c.l.b16 %v19
  %v92 = vunpack.c.h.b16 %v19
  %v93 = vunpack.c.l.b16 %v20
  %v94 = vunpack.c.h.b16 %v20
  %v95 = vunpack.c.l.b16 %v21
  %v96 = vunpack.c.h.b16 %v21
  %v97 = vunpack.c.l.b16 %v22
  %v98 = vunpack.c.h.b16 %v22
  %v99 = vunpack.c.l.b16 %v23
  %v100 = vunpack.c.h.b16 %v23
  %v101 = vunpack.c.l.b16 %v24
  %v102 = vunpack.c.h.b16 %v24
  %v103 = vunpack.c.l.b16 %v25
  %v104 = vunpack.c.h.b16 %v25
  %v105 = vunpack.c.l.b16 %v26
  %v106 = vunpack.c.h.b16 %v26
  %v107 = vunpack.c.l.b16 %v27
  %v108 = vunpack.c.h.b16 %v27
  %v109 = vunpack.c.l.b16 %v28
  %v110 = vunpack.c.h.b16 %v28
  %v111 = vunpack.c.l.b16 %v29
  %v112 = vunpack.c.h.b16 %v29
  %v113 = vunpack.c.l.b16 %v30
  %v114 = vunpack.c.h.b16 %v30
  %v115 = vunpack.c.l.b16 %v31
  %v116 = vunpack.c.h.b16 %v31
  %v117 = vunpack.c.l.b16 %v32
  %v118 = vunpack.c.h.b16 %v32
  %v119 = vunpack.c.l.b16 %v33
  %v120 = vunpack.c.h.b16 %v33
  %v121 = vpack.c.b16 %v91, %v89
  %v122 = vpack.c.b16 %v92, %v90
  %v123 = vpack.c.b16 %v95, %v93
  %v124 = vpack.c.b16 %v96, %v94
  %v125 = vpack.c.b16 %v99, %v97
  %v126 = vpack.c.b16 %v100, %v98
  %v127 = vpack.c.b16 %v103, %v101
  %v128 = vpack.c.b16 %v104, %v102
  %v129 = vpack.c.b16 %v107, %v105
  %v130 = vpack.c.b16 %v108, %v106
  %v131 = vpack.c.b16 %v111, %v109
  %v132 = vpack.c.b16 %v112, %v110
  %v133 = vpack.c.b16 %v115, %v113
  %v134 = vpack.c.b16 %v116, %v114
  %v135 = vpack.c.b16 %v119, %v117
  %v136 = vpack.c.b16 %v120, %v118
  %v185 = vunpack.c.l.b16 %v34
  %v186 = vunpack.c.l.b16 %v35
  %v187 = vunpack.c.l.b16 %v36
  %v188 = vunpack.c.l.b16 %v37
  %v189 = vunpack.c.l.b16 %v38
  %v190 = vunpack.c.l.b16 %v39
  %v191 = vunpack.c.l.b16 %v40
  %v192 = vunpack.c.l.b16 %v41
  %v193 = vunpack.c.l.b16 %v42
  %v194 = vunpack.c.l.b16 %v43
  %v195 = vunpack.c.l.b16 %v44
  %v196 = vunpack.c.l.b16 %v45
  %v197 = vunpack.c.l.b16 %v46
  %v198 = vunpack.c.l.b16 %v47
  %v199 = vunpack.c.l.b16 %v48
  %v200 = vunpack.c.l.b16 %v49
  %v201 = vunpack.c.l.b16 %v50
  %v202 = vunpack.c.l.b16 %v51
  %v203 = vunpack.c.l.b16 %v52
  %v204 = vunpack.c.l.b16 %v53
  %v205 = vunpack.c.l.b16 %v54
  %v206 = vunpack.c.l.b16 %v55
  %v207 = vunpack.c.l.b16 %v56
  %v208 = vunpack.c.l.b16 %v57
  %v209 = vunpack.c.l.b16 %v58
  %v210 = vunpack.c.l.b16 %v59
  %v211 = vunpack.c.l.b16 %v60
  %v212 = vunpack.c.l.b16 %v61
  %v213 = vunpack.c.l.b16 %v62
  %v214 = vunpack.c.l.b16 %v63
  %v215 = vunpack.c.l.b16 %v64
  %v216 = vunpack.c.l.b16 %v65
  %v217 = vpack.c.b16 %v186, %v185
  %v218 = vpack.c.b16 %v188, %v187
  %v219 = vpack.c.b16 %v190, %v189
  %v220 = vpack.c.b16 %v192, %v191
  %v221 = vpack.c.b16 %v194, %v193
  %v222 = vpack.c.b16 %v196, %v195
  %v223 = vpack.c.b16 %v198, %v197
  %v224 = vpack.c.b16 %v200, %v199
  %v225 = vpack.c.b16 %v202, %v201
  %v226 = vpack.c.b16 %v204, %v203
  %v227 = vpack.c.b16 %v206, %v205
  %v228 = vpack.c.b16 %v208, %v207
  %v229 = vpack.c.b16 %v210, %v209
  %v230 = vpack.c.b16 %v212, %v211
  %v231 = vpack.c.b16 %v214, %v213
  %v232 = vpack.c.b16 %v216, %v215
  %249 = vmatprep.subr.bf16.mxu0 0
  %250 = vmatpush1.bf16.msra.mxu0 %v217
  %251 = vmatprep.subr.bf16.mxu0 0
  %252 = vmatpush1.bf16.msra.mxu0 %v218
  %253 = vmatprep.subr.bf16.mxu0 0
  %254 = vmatpush1.bf16.msra.mxu0 %v219
  %255 = vmatprep.subr.bf16.mxu0 0
  %256 = vmatpush1.bf16.msra.mxu0 %v220
  %257 = vmatprep.subr.bf16.mxu0 0
  %258 = vmatpush1.bf16.msra.mxu0 %v221
  %259 = vmatprep.subr.bf16.mxu0 0
  %260 = vmatpush1.bf16.msra.mxu0 %v222
  %261 = vmatprep.subr.bf16.mxu0 0
  %262 = vmatpush1.bf16.msra.mxu0 %v223
  %263 = vmatprep.subr.bf16.mxu0 0
  %264 = vmatpush1.bf16.msra.mxu0 %v224
  %265 = vmatprep.subr.bf16.mxu0 0
  %266 = vmatpush1.bf16.msra.mxu0 %v225
  %267 = vmatprep.subr.bf16.mxu0 0
  %268 = vmatpush1.bf16.msra.mxu0 %v226
  %269 = vmatprep.subr.bf16.mxu0 0
  %270 = vmatpush1.bf16.msra.mxu0 %v227
  %271 = vmatprep.subr.bf16.mxu0 0
  %272 = vmatpush1.bf16.msra.mxu0 %v228
  %273 = vmatprep.subr.bf16.mxu0 0
  %274 = vmatpush1.bf16.msra.mxu0 %v229
  %275 = vmatprep.subr.bf16.mxu0 0
  %276 = vmatpush1.bf16.msra.mxu0 %v230
  %277 = vmatprep.subr.bf16.mxu0 0
  %278 = vmatpush1.bf16.msra.mxu0 %v231
  %279 = vmatprep.subr.bf16.mxu0 0
  %280 = vmatpush1.bf16.msra.mxu0 %v232
  %281 = vmatprep.mubr.bf16.mxu0 %v122
  %282 = vmatmul.mubr.bf16.gmra.mrb[0].mxu0 %v121
  %v283 = vpop.f32.mrb[0].mxu0
  %v284 = vadd.f32 %v71, %v283
  %v285 = vpop.f32.mrb[0].mxu0
  %v286 = vpop.f32.mrb[0].mxu0
  %v287 = vadd.f32 %v71, %v286
  %v288 = vpop.f32.mrb[0].mxu0
  %289 = vmatprep.mubr.bf16.mxu0 %v124
  %290 = vmatmul.mubr.bf16.gmra.mrb[0].mxu0 %v123
  %v291 = vpop.f32.mrb[0].mxu0
  %v292 = vadd.f32 %v71, %v291
  %v293 = vpop.f32.mrb[0].mxu0
  %v294 = vpop.f32.mrb[0].mxu0
  %v295 = vadd.f32 %v71, %v294
  %v296 = vpop.f32.mrb[0].mxu0
  %297 = vmatprep.mubr.bf16.mxu0 %v126
  %298 = vmatmul.mubr.bf16.gmra.mrb[0].mxu0 %v125
  %v299 = vpop.f32.mrb[0].mxu0
  %v300 = vadd.f32 %v71, %v299
  %v301 = vpop.f32.mrb[0].mxu0
  %v302 = vpop.f32.mrb[0].mxu0
  %v303 = vadd.f32 %v71, %v302
  %v304 = vpop.f32.mrb[0].mxu0
  %305 = vmatprep.mubr.bf16.mxu0 %v128
  %306 = vmatmul.mubr.bf16.gmra.mrb[0].mxu0 %v127
  %v307 = vpop.f32.mrb[0].mxu0
  %v308 = vadd.f32 %v71, %v307
  %v309 = vpop.f32.mrb[0].mxu0
  %v310 = vpop.f32.mrb[0].mxu0
  %v311 = vadd.f32 %v71, %v310
  %v312 = vpop.f32.mrb[0].mxu0
  %313 = vmatprep.mubr.bf16.mxu0 %v130
  %314 = vmatmul.mubr.bf16.gmra.mrb[0].mxu0 %v129
  %v315 = vpop.f32.mrb[0].mxu0
  %v316 = vadd.f32 %v71, %v315
  %v317 = vpop.f32.mrb[0].mxu0
  %v318 = vpop.f32.mrb[0].mxu0
  %v319 = vadd.f32 %v71, %v318
  %v320 = vpop.f32.mrb[0].mxu0
  %321 = vmatprep.mubr.bf16.mxu0 %v132
  %322 = vmatmul.mubr.bf16.gmra.mrb[0].mxu0 %v131
  %v323 = vpop.f32.mrb[0].mxu0
  %v324 = vadd.f32 %v71, %v323
  %v325 = vpop.f32.mrb[0].mxu0
  %v326 = vpop.f32.mrb[0].mxu0
  %v327 = vadd.f32 %v71, %v326
  %v328 = vpop.f32.mrb[0].mxu0
  %329 = vmatprep.mubr.bf16.mxu0 %v134
  %330 = vmatmul.mubr.bf16.gmra.mrb[0].mxu0 %v133
  %v331 = vpop.f32.mrb[0].mxu0
  %v332 = vadd.f32 %v71, %v331
  %v333 = vpop.f32.mrb[0].mxu0
  %v334 = vpop.f32.mrb[0].mxu0
  %v335 = vadd.f32 %v71, %v334
  %v336 = vpop.f32.mrb[0].mxu0
  %337 = vmatprep.mubr.bf16.mxu0 %v136
  %338 = vmatmul.mubr.bf16.gmra.mrb[0].mxu0 %v135
  %v339 = vpop.f32.mrb[0].mxu0
  %v340 = vadd.f32 %v71, %v339
  %v341 = vpop.f32.mrb[0].mxu0
  %v342 = vpop.f32.mrb[0].mxu0
  %v343 = vadd.f32 %v71, %v342
  %v344 = vpop.f32.mrb[0].mxu0
  %345 = vdwg.mxu0
  %v346 = vld [vmem:[%s3] sm:$0xf]
  %v347 = vld [vmem:[%s3 + $0x4] sm:$0xf]
  %v348 = vld [vmem:[%s3 + $0x8] sm:$0xf]
  %v349 = vld [vmem:[%s3 + $0xc] sm:$0xf]
  %v350 = vld [vmem:[%s3 + $0x10] sm:$0xf]
  %v351 = vld [vmem:[%s3 + $0x14] sm:$0xf]
  %v352 = vld [vmem:[%s3 + $0x18] sm:$0xf]
  %v353 = vld [vmem:[%s3 + $0x1c] sm:$0xf]
  %v354 = vld [vmem:[%s3 + $0x20] sm:$0xf]
  %v355 = vld [vmem:[%s3 + $0x24] sm:$0xf]
  %v356 = vld [vmem:[%s3 + $0x28] sm:$0xf]
  %v357 = vld [vmem:[%s3 + $0x2c] sm:$0xf]
  %v358 = vld [vmem:[%s3 + $0x30] sm:$0xf]
  %v359 = vld [vmem:[%s3 + $0x34] sm:$0xf]
  %v360 = vld [vmem:[%s3 + $0x38] sm:$0xf]
  %v361 = vld [vmem:[%s3 + $0x3c] sm:$0xf]
  %v362 = vunpack.c.l.bf16 %v346
  %v363 = vunpack.c.l.bf16 %v347
  %v364 = vunpack.c.l.bf16 %v348
  %v365 = vunpack.c.l.bf16 %v349
  %v366 = vunpack.c.l.bf16 %v350
  %v367 = vunpack.c.l.bf16 %v351
  %v368 = vunpack.c.l.bf16 %v352
  %v369 = vunpack.c.l.bf16 %v353
  %v370 = vunpack.c.l.bf16 %v354
  %v371 = vunpack.c.l.bf16 %v355
  %v372 = vunpack.c.l.bf16 %v356
  %v373 = vunpack.c.l.bf16 %v357
  %v374 = vunpack.c.l.bf16 %v358
  %v375 = vunpack.c.l.bf16 %v359
  %v376 = vunpack.c.l.bf16 %v360
  %v377 = vunpack.c.l.bf16 %v361
  %v378 = vadd.f32 %v284, %v362
  %v379 = vadd.f32 %v287, %v363
  %v380 = vadd.f32 %v292, %v364
  %v381 = vadd.f32 %v295, %v365
  %v382 = vadd.f32 %v300, %v366
  %v383 = vadd.f32 %v303, %v367
  %v384 = vadd.f32 %v308, %v368
  %v385 = vadd.f32 %v311, %v369
  %v386 = vadd.f32 %v316, %v370
  %v387 = vadd.f32 %v319, %v371
  %v388 = vadd.f32 %v324, %v372
  %v389 = vadd.f32 %v327, %v373
  %v390 = vadd.f32 %v332, %v374
  %v391 = vadd.f32 %v335, %v375
  %v392 = vadd.f32 %v340, %v376
  %v393 = vadd.f32 %v343, %v377
  %v394 = vpack.c.bf16 %v379, %v378
  %v395 = vpack.c.bf16 %v381, %v380
  %v396 = vpack.c.bf16 %v383, %v382
  %v397 = vpack.c.bf16 %v385, %v384
  %v398 = vpack.c.bf16 %v387, %v386
  %v399 = vpack.c.bf16 %v389, %v388
  %v400 = vpack.c.bf16 %v391, %v390
  %v401 = vpack.c.bf16 %v393, %v392
  %v410 = vunpack.c.l.b16 %v394
  %v411 = vunpack.c.h.b16 %v394
  %v412 = vunpack.c.l.b16 %v395
  %v413 = vunpack.c.h.b16 %v395
  %v414 = vunpack.c.l.b16 %v396
  %v415 = vunpack.c.h.b16 %v396
  %v416 = vunpack.c.l.b16 %v397
  %v417 = vunpack.c.h.b16 %v397
  %v418 = vunpack.c.l.b16 %v398
  %v419 = vunpack.c.h.b16 %v398
  %v420 = vunpack.c.l.b16 %v399
  %v421 = vunpack.c.h.b16 %v399
  %v422 = vunpack.c.l.b16 %v400
  %v423 = vunpack.c.h.b16 %v400
  %v424 = vunpack.c.l.b16 %v401
  %v425 = vunpack.c.h.b16 %v401
  %v426 = vpack.c.b16 %v410, %v410
  %v427 = vpack.c.b16 %v411, %v411
  %v428 = vpack.c.b16 %v412, %v412
  %v429 = vpack.c.b16 %v413, %v413
  %v430 = vpack.c.b16 %v414, %v414
  %v431 = vpack.c.b16 %v415, %v415
  %v432 = vpack.c.b16 %v416, %v416
  %v433 = vpack.c.b16 %v417, %v417
  %v434 = vpack.c.b16 %v418, %v418
  %v435 = vpack.c.b16 %v419, %v419
  %v436 = vpack.c.b16 %v420, %v420
  %v437 = vpack.c.b16 %v421, %v421
  %v438 = vpack.c.b16 %v422, %v422
  %v439 = vpack.c.b16 %v423, %v423
  %v440 = vpack.c.b16 %v424, %v424
  %v441 = vpack.c.b16 %v425, %v425
  %vm458 = vcmask 125952
  %459 = vst.msk [vmem:[%s4] sm:$0xf] %vm458, %v426
  %460 = vst.msk [vmem:[%s4 + $0x4] sm:$0xf] %vm458, %v427
  %461 = vst.msk [vmem:[%s4 + $0x8] sm:$0xf] %vm458, %v428
  %462 = vst.msk [vmem:[%s4 + $0xc] sm:$0xf] %vm458, %v429
  %463 = vst.msk [vmem:[%s4 + $0x10] sm:$0xf] %vm458, %v430
  %464 = vst.msk [vmem:[%s4 + $0x14] sm:$0xf] %vm458, %v431
  %465 = vst.msk [vmem:[%s4 + $0x18] sm:$0xf] %vm458, %v432
  %466 = vst.msk [vmem:[%s4 + $0x1c] sm:$0xf] %vm458, %v433
  %467 = vst.msk [vmem:[%s4 + $0x20] sm:$0xf] %vm458, %v434
  %468 = vst.msk [vmem:[%s4 + $0x24] sm:$0xf] %vm458, %v435
  %469 = vst.msk [vmem:[%s4 + $0x28] sm:$0xf] %vm458, %v436
  %470 = vst.msk [vmem:[%s4 + $0x2c] sm:$0xf] %vm458, %v437
  %471 = vst.msk [vmem:[%s4 + $0x30] sm:$0xf] %vm458, %v438
  %472 = vst.msk [vmem:[%s4 + $0x34] sm:$0xf] %vm458, %v439
  %473 = vst.msk [vmem:[%s4 + $0x38] sm:$0xf] %vm458, %v440
  %474 = vst.msk [vmem:[%s4 + $0x3c] sm:$0xf] %vm458, %v441
  // Predicated region
  $region18: #{tounet_fwd.343} parent=0 // pred_check
    _
  $region19: #{tounet_fwd.343} parent=0 // pred_check_branch
    %476 = sbr.rel (0) target = $region21
  $region20: #{tounet_fwd.343} parent=0 // pred_region
    _
  $region21: #{tounet_fwd.343} parent=0 // pred_fallthru
    _
  // Predicated region
  $region22: #{tounet_fwd.343} parent=0 // pred_check
    _
  $region23: #{tounet_fwd.343} parent=0 // pred_check_branch
    %478 = sbr.rel (0) target = $region25
  $region24: #{tounet_fwd.343} parent=0 // pred_region
    _
  $region25: #{tounet_fwd.343} parent=0 // pred_fallthru
    _

// kernel: tounet_fwd.186
$region0: #{tounet_fwd.186}
  #allocation0 [shape = 'u32[]', space=smem, size = 0x4, offset = 0x4, fixed_abs, tag = 'smem constant byte address 0x4 - core index']
  #allocation1 [shape = 'u32[144,128]{1,0:T(1,128)}', space=vmem, size = 0x12000, scoped, tag = 'internal scratch']
  %s0 = inlined_call_operand.vmem [shape: bf16[128,256], index: 0, kind: input, shape index: {}]
  %s1 = inlined_call_operand.vmem [shape: bf16[256,128], index: 1, kind: input, shape index: {}]
  %s2 = inlined_call_operand.vmem [shape: f32[1,128], index: 2, kind: input, shape index: {}]
  %s3 = inlined_call_operand.vmem [shape: bf16[128,64], index: 3, kind: output, shape index: {}]
  %s4 = sld [smem:[#allocation0]]
  $region22: #{tounet_fwd.186} parent=0
    _
  %s6 = ssub.s32 1, %s4
  %s7 = scalar_select 0, %s6, %s4
  // Predicated region
  $region2: #{tounet_fwd.186} parent=0 // pred_check
    _
  $region3: #{tounet_fwd.186} parent=0 // pred_check_branch
    %9 = sbr.rel (0) target = $region5
  $region4: #{tounet_fwd.186} parent=0 // pred_region
    _
  $region5: #{tounet_fwd.186} parent=0 // pred_fallthru
    _
  // Predicated region
  $region6: #{tounet_fwd.186} parent=0 // pred_check
    _
  $region7: #{tounet_fwd.186} parent=0 // pred_check_branch
    %11 = sbr.rel (0) target = $region9
  $region8: #{tounet_fwd.186} parent=0 // pred_region
    _
  $region9: #{tounet_fwd.186} parent=0 // pred_fallthru
    _
  // Predicated region
  $region10: #{tounet_fwd.186} parent=0 // pred_check
    _
  $region11: #{tounet_fwd.186} parent=0 // pred_check_branch
    %13 = sbr.rel (0) target = $region13
  $region12: #{tounet_fwd.186} parent=0 // pred_region
    _
  $region13: #{tounet_fwd.186} parent=0 // pred_fallthru
    _
  %v15 = vld [vmem:[%s0] sm:$0xff]
  %v16 = vld [vmem:[%s0 + $0x8] sm:$0xff]
  %v17 = vld [vmem:[%s0 + $0x10] sm:$0xff]
  %v18 = vld [vmem:[%s0 + $0x18] sm:$0xff]
  %v19 = vld [vmem:[%s0 + $0x20] sm:$0xff]
  %v20 = vld [vmem:[%s0 + $0x28] sm:$0xff]
  %v21 = vld [vmem:[%s0 + $0x30] sm:$0xff]
  %v22 = vld [vmem:[%s0 + $0x38] sm:$0xff]
  %v23 = vld [vmem:[%s0 + $0x40] sm:$0xff]
  %v24 = vld [vmem:[%s0 + $0x48] sm:$0xff]
  %v25 = vld [vmem:[%s0 + $0x50] sm:$0xff]
  %v26 = vld [vmem:[%s0 + $0x58] sm:$0xff]
  %v27 = vld [vmem:[%s0 + $0x60] sm:$0xff]
  %v28 = vld [vmem:[%s0 + $0x68] sm:$0xff]
  %v29 = vld [vmem:[%s0 + $0x70] sm:$0xff]
  %v30 = vld [vmem:[%s0 + $0x78] sm:$0xff]
  %v31 = vld [vmem:[%s1] sm:$0xf]
  %v32 = vld [vmem:[%s1 + $0x4] sm:$0xf]
  %v33 = vld [vmem:[%s1 + $0x8] sm:$0xf]
  %v34 = vld [vmem:[%s1 + $0xc] sm:$0xf]
  %v35 = vld [vmem:[%s1 + $0x10] sm:$0xf]
  %v36 = vld [vmem:[%s1 + $0x14] sm:$0xf]
  %v37 = vld [vmem:[%s1 + $0x18] sm:$0xf]
  %v38 = vld [vmem:[%s1 + $0x1c] sm:$0xf]
  %v39 = vld [vmem:[%s1 + $0x20] sm:$0xf]
  %v40 = vld [vmem:[%s1 + $0x24] sm:$0xf]
  %v41 = vld [vmem:[%s1 + $0x28] sm:$0xf]
  %v42 = vld [vmem:[%s1 + $0x2c] sm:$0xf]
  %v43 = vld [vmem:[%s1 + $0x30] sm:$0xf]
  %v44 = vld [vmem:[%s1 + $0x34] sm:$0xf]
  %v45 = vld [vmem:[%s1 + $0x38] sm:$0xf]
  %v46 = vld [vmem:[%s1 + $0x3c] sm:$0xf]
  %v47 = vld [vmem:[%s1 + $0x40] sm:$0xf]
  %v48 = vld [vmem:[%s1 + $0x44] sm:$0xf]
  %v49 = vld [vmem:[%s1 + $0x48] sm:$0xf]
  %v50 = vld [vmem:[%s1 + $0x4c] sm:$0xf]
  %v51 = vld [vmem:[%s1 + $0x50] sm:$0xf]
  %v52 = vld [vmem:[%s1 + $0x54] sm:$0xf]
  %v53 = vld [vmem:[%s1 + $0x58] sm:$0xf]
  %v54 = vld [vmem:[%s1 + $0x5c] sm:$0xf]
  %v55 = vld [vmem:[%s1 + $0x60] sm:$0xf]
  %v56 = vld [vmem:[%s1 + $0x64] sm:$0xf]
  %v57 = vld [vmem:[%s1 + $0x68] sm:$0xf]
  %v58 = vld [vmem:[%s1 + $0x6c] sm:$0xf]
  %v59 = vld [vmem:[%s1 + $0x70] sm:$0xf]
  %v60 = vld [vmem:[%s1 + $0x74] sm:$0xf]
  %v61 = vld [vmem:[%s1 + $0x78] sm:$0xf]
  %v62 = vld [vmem:[%s1 + $0x7c] sm:$0xf]
  %v63 = vld [vmem:[%s2] sm:$0x1]
  %v65 = vlaneseq
  %v66 = vshrl.u32 %v65, 7
  %v67 = vsub.s32 0, %v66
  %v68 = vrot.slane %v63, %v67
  %v86 = vunpack.c.l.b16 %v15
  %v87 = vunpack.c.h.b16 %v15
  %v88 = vunpack.c.l.b16 %v16
  %v89 = vunpack.c.h.b16 %v16
  %v90 = vunpack.c.l.b16 %v17
  %v91 = vunpack.c.h.b16 %v17
  %v92 = vunpack.c.l.b16 %v18
  %v93 = vunpack.c.h.b16 %v18
  %v94 = vunpack.c.l.b16 %v19
  %v95 = vunpack.c.h.b16 %v19
  %v96 = vunpack.c.l.b16 %v20
  %v97 = vunpack.c.h.b16 %v20
  %v98 = vunpack.c.l.b16 %v21
  %v99 = vunpack.c.h.b16 %v21
  %v100 = vunpack.c.l.b16 %v22
  %v101 = vunpack.c.h.b16 %v22
  %v102 = vunpack.c.l.b16 %v23
  %v103 = vunpack.c.h.b16 %v23
  %v104 = vunpack.c.l.b16 %v24
  %v105 = vunpack.c.h.b16 %v24
  %v106 = vunpack.c.l.b16 %v25
  %v107 = vunpack.c.h.b16 %v25
  %v108 = vunpack.c.l.b16 %v26
  %v109 = vunpack.c.h.b16 %v26
  %v110 = vunpack.c.l.b16 %v27
  %v111 = vunpack.c.h.b16 %v27
  %v112 = vunpack.c.l.b16 %v28
  %v113 = vunpack.c.h.b16 %v28
  %v114 = vunpack.c.l.b16 %v29
  %v115 = vunpack.c.h.b16 %v29
  %v116 = vunpack.c.l.b16 %v30
  %v117 = vunpack.c.h.b16 %v30
  %v118 = vpack.c.b16 %v88, %v86
  %v119 = vpack.c.b16 %v89, %v87
  %v120 = vpack.c.b16 %v92, %v90
  %v121 = vpack.c.b16 %v93, %v91
  %v122 = vpack.c.b16 %v96, %v94
  %v123 = vpack.c.b16 %v97, %v95
  %v124 = vpack.c.b16 %v100, %v98
  %v125 = vpack.c.b16 %v101, %v99
  %v126 = vpack.c.b16 %v104, %v102
  %v127 = vpack.c.b16 %v105, %v103
  %v128 = vpack.c.b16 %v108, %v106
  %v129 = vpack.c.b16 %v109, %v107
  %v130 = vpack.c.b16 %v112, %v110
  %v131 = vpack.c.b16 %v113, %v111
  %v132 = vpack.c.b16 %v116, %v114
  %v133 = vpack.c.b16 %v117, %v115
  %v182 = vunpack.c.l.b16 %v31
  %v183 = vunpack.c.l.b16 %v32
  %v184 = vunpack.c.l.b16 %v33
  %v185 = vunpack.c.l.b16 %v34
  %v186 = vunpack.c.l.b16 %v35
  %v187 = vunpack.c.l.b16 %v36
  %v188 = vunpack.c.l.b16 %v37
  %v189 = vunpack.c.l.b16 %v38
  %v190 = vunpack.c.l.b16 %v39
  %v191 = vunpack.c.l.b16 %v40
  %v192 = vunpack.c.l.b16 %v41
  %v193 = vunpack.c.l.b16 %v42
  %v194 = vunpack.c.l.b16 %v43
  %v195 = vunpack.c.l.b16 %v44
  %v196 = vunpack.c.l.b16 %v45
  %v197 = vunpack.c.l.b16 %v46
  %v198 = vunpack.c.l.b16 %v47
  %v199 = vunpack.c.l.b16 %v48
  %v200 = vunpack.c.l.b16 %v49
  %v201 = vunpack.c.l.b16 %v50
  %v202 = vunpack.c.l.b16 %v51
  %v203 = vunpack.c.l.b16 %v52
  %v204 = vunpack.c.l.b16 %v53
  %v205 = vunpack.c.l.b16 %v54
  %v206 = vunpack.c.l.b16 %v55
  %v207 = vunpack.c.l.b16 %v56
  %v208 = vunpack.c.l.b16 %v57
  %v209 = vunpack.c.l.b16 %v58
  %v210 = vunpack.c.l.b16 %v59
  %v211 = vunpack.c.l.b16 %v60
  %v212 = vunpack.c.l.b16 %v61
  %v213 = vunpack.c.l.b16 %v62
  %v214 = vpack.c.b16 %v183, %v182
  %v215 = vpack.c.b16 %v185, %v184
  %v216 = vpack.c.b16 %v187, %v186
  %v217 = vpack.c.b16 %v189, %v188
  %v218 = vpack.c.b16 %v191, %v190
  %v219 = vpack.c.b16 %v193, %v192
  %v220 = vpack.c.b16 %v195, %v194
  %v221 = vpack.c.b16 %v197, %v196
  %v222 = vpack.c.b16 %v199, %v198
  %v223 = vpack.c.b16 %v201, %v200
  %v224 = vpack.c.b16 %v203, %v202
  %v225 = vpack.c.b16 %v205, %v204
  %v226 = vpack.c.b16 %v207, %v206
  %v227 = vpack.c.b16 %v209, %v208
  %v228 = vpack.c.b16 %v211, %v210
  %v229 = vpack.c.b16 %v213, %v212
  %246 = vmatprep.subr.bf16.mxu0 0
  %247 = vmatpush1.bf16.msra.mxu0 %v214
  %248 = vmatprep.subr.bf16.mxu0 0
  %249 = vmatpush1.bf16.msra.mxu0 %v215
  %250 = vmatprep.subr.bf16.mxu0 0
  %251 = vmatpush1.bf16.msra.mxu0 %v216
  %252 = vmatprep.subr.bf16.mxu0 0
  %253 = vmatpush1.bf16.msra.mxu0 %v217
  %254 = vmatprep.subr.bf16.mxu0 0
  %255 = vmatpush1.bf16.msra.mxu0 %v218
  %256 = vmatprep.subr.bf16.mxu0 0
  %257 = vmatpush1.bf16.msra.mxu0 %v219
  %258 = vmatprep.subr.bf16.mxu0 0
  %259 = vmatpush1.bf16.msra.mxu0 %v220
  %260 = vmatprep.subr.bf16.mxu0 0
  %261 = vmatpush1.bf16.msra.mxu0 %v221
  %262 = vmatprep.subr.bf16.mxu0 0
  %263 = vmatpush1.bf16.msra.mxu0 %v222
  %264 = vmatprep.subr.bf16.mxu0 0
  %265 = vmatpush1.bf16.msra.mxu0 %v223
  %266 = vmatprep.subr.bf16.mxu0 0
  %267 = vmatpush1.bf16.msra.mxu0 %v224
  %268 = vmatprep.subr.bf16.mxu0 0
  %269 = vmatpush1.bf16.msra.mxu0 %v225
  %270 = vmatprep.subr.bf16.mxu0 0
  %271 = vmatpush1.bf16.msra.mxu0 %v226
  %272 = vmatprep.subr.bf16.mxu0 0
  %273 = vmatpush1.bf16.msra.mxu0 %v227
  %274 = vmatprep.subr.bf16.mxu0 0
  %275 = vmatpush1.bf16.msra.mxu0 %v228
  %276 = vmatprep.subr.bf16.mxu0 0
  %277 = vmatpush1.bf16.msra.mxu0 %v229
  %278 = vmatprep.mubr.bf16.mxu0 %v119
  %279 = vmatmul.mubr.bf16.gmra.mrb[0].mxu0 %v118
  %v280 = vpop.f32.mrb[0].mxu0
  %v281 = vadd.f32 %v68, %v280
  %v282 = vpop.f32.mrb[0].mxu0
  %v283 = vpop.f32.mrb[0].mxu0
  %v284 = vadd.f32 %v68, %v283
  %v285 = vpop.f32.mrb[0].mxu0
  %286 = vmatprep.mubr.bf16.mxu0 %v121
  %287 = vmatmul.mubr.bf16.gmra.mrb[0].mxu0 %v120
  %v288 = vpop.f32.mrb[0].mxu0
  %v289 = vadd.f32 %v68, %v288
  %v290 = vpop.f32.mrb[0].mxu0
  %v291 = vpop.f32.mrb[0].mxu0
  %v292 = vadd.f32 %v68, %v291
  %v293 = vpop.f32.mrb[0].mxu0
  %294 = vmatprep.mubr.bf16.mxu0 %v123
  %295 = vmatmul.mubr.bf16.gmra.mrb[0].mxu0 %v122
  %v296 = vpop.f32.mrb[0].mxu0
  %v297 = vadd.f32 %v68, %v296
  %v298 = vpop.f32.mrb[0].mxu0
  %v299 = vpop.f32.mrb[0].mxu0
  %v300 = vadd.f32 %v68, %v299
  %v301 = vpop.f32.mrb[0].mxu0
  %302 = vmatprep.mubr.bf16.mxu0 %v125
  %303 = vmatmul.mubr.bf16.gmra.mrb[0].mxu0 %v124
  %v304 = vpop.f32.mrb[0].mxu0
  %v305 = vadd.f32 %v68, %v304
  %v306 = vpop.f32.mrb[0].mxu0
  %v307 = vpop.f32.mrb[0].mxu0
  %v308 = vadd.f32 %v68, %v307
  %v309 = vpop.f32.mrb[0].mxu0
  %310 = vmatprep.mubr.bf16.mxu0 %v127
  %311 = vmatmul.mubr.bf16.gmra.mrb[0].mxu0 %v126
  %v312 = vpop.f32.mrb[0].mxu0
  %v313 = vadd.f32 %v68, %v312
  %v314 = vpop.f32.mrb[0].mxu0
  %v315 = vpop.f32.mrb[0].mxu0
  %v316 = vadd.f32 %v68, %v315
  %v317 = vpop.f32.mrb[0].mxu0
  %318 = vmatprep.mubr.bf16.mxu0 %v129
  %319 = vmatmul.mubr.bf16.gmra.mrb[0].mxu0 %v128
  %v320 = vpop.f32.mrb[0].mxu0
  %v321 = vadd.f32 %v68, %v320
  %v322 = vpop.f32.mrb[0].mxu0
  %v323 = vpop.f32.mrb[0].mxu0
  %v324 = vadd.f32 %v68, %v323
  %v325 = vpop.f32.mrb[0].mxu0
  %326 = vmatprep.mubr.bf16.mxu0 %v131
  %327 = vmatmul.mubr.bf16.gmra.mrb[0].mxu0 %v130
  %v328 = vpop.f32.mrb[0].mxu0
  %v329 = vadd.f32 %v68, %v328
  %v330 = vpop.f32.mrb[0].mxu0
  %v331 = vpop.f32.mrb[0].mxu0
  %v332 = vadd.f32 %v68, %v331
  %v333 = vpop.f32.mrb[0].mxu0
  %334 = vmatprep.mubr.bf16.mxu0 %v133
  %335 = vmatmul.mubr.bf16.gmra.mrb[0].mxu0 %v132
  %v336 = vpop.f32.mrb[0].mxu0
  %v337 = vadd.f32 %v68, %v336
  %v338 = vpop.f32.mrb[0].mxu0
  %v339 = vpop.f32.mrb[0].mxu0
  %v340 = vadd.f32 %v68, %v339
  %v341 = vpop.f32.mrb[0].mxu0
  %342 = vdwg.mxu0
  %vm343 = vcmp.gt.f32.partialorder %v281, 0.0
  %vm344 = vcmp.gt.f32.partialorder %v284, 0.0
  %vm345 = vcmp.gt.f32.partialorder %v289, 0.0
  %vm346 = vcmp.gt.f32.partialorder %v292, 0.0
  %vm347 = vcmp.gt.f32.partialorder %v297, 0.0
  %vm348 = vcmp.gt.f32.partialorder %v300, 0.0
  %vm349 = vcmp.gt.f32.partialorder %v305, 0.0
  %vm350 = vcmp.gt.f32.partialorder %v308, 0.0
  %vm351 = vcmp.gt.f32.partialorder %v313, 0.0
  %vm352 = vcmp.gt.f32.partialorder %v316, 0.0
  %vm353 = vcmp.gt.f32.partialorder %v321, 0.0
  %vm354 = vcmp.gt.f32.partialorder %v324, 0.0
  %vm355 = vcmp.gt.f32.partialorder %v329, 0.0
  %vm356 = vcmp.gt.f32.partialorder %v332, 0.0
  %vm357 = vcmp.gt.f32.partialorder %v337, 0.0
  %vm358 = vcmp.gt.f32.partialorder %v340, 0.0
  %v359 = vmul.f32 %v281, 0.25
  %v360 = vmul.f32 %v284, 0.25
  %v361 = vmul.f32 %v289, 0.25
  %v362 = vmul.f32 %v292, 0.25
  %v363 = vmul.f32 %v297, 0.25
  %v364 = vmul.f32 %v300, 0.25
  %v365 = vmul.f32 %v305, 0.25
  %v366 = vmul.f32 %v308, 0.25
  %v367 = vmul.f32 %v313, 0.25
  %v368 = vmul.f32 %v316, 0.25
  %v369 = vmul.f32 %v321, 0.25
  %v370 = vmul.f32 %v324, 0.25
  %v371 = vmul.f32 %v329, 0.25
  %v372 = vmul.f32 %v332, 0.25
  %v373 = vmul.f32 %v337, 0.25
  %v374 = vmul.f32 %v340, 0.25
  %v375 = vsel %vm343, %v281, %v359
  %v376 = vsel %vm344, %v284, %v360
  %v377 = vsel %vm345, %v289, %v361
  %v378 = vsel %vm346, %v292, %v362
  %v379 = vsel %vm347, %v297, %v363
  %v380 = vsel %vm348, %v300, %v364
  %v381 = vsel %vm349, %v305, %v365
  %v382 = vsel %vm350, %v308, %v366
  %v383 = vsel %vm351, %v313, %v367
  %v384 = vsel %vm352, %v316, %v368
  %v385 = vsel %vm353, %v321, %v369
  %v386 = vsel %vm354, %v324, %v370
  %v387 = vsel %vm355, %v329, %v371
  %v388 = vsel %vm356, %v332, %v372
  %v389 = vsel %vm357, %v337, %v373
  %v390 = vsel %vm358, %v340, %v374
  %v391 = vpack.c.bf16 %v376, %v375
  %v392 = vpack.c.bf16 %v378, %v377
  %v393 = vpack.c.bf16 %v380, %v379
  %v394 = vpack.c.bf16 %v382, %v381
  %v395 = vpack.c.bf16 %v384, %v383
  %v396 = vpack.c.bf16 %v386, %v385
  %v397 = vpack.c.bf16 %v388, %v387
  %v398 = vpack.c.bf16 %v390, %v389
  %v407 = vunpack.c.l.b16 %v391
  %v408 = vunpack.c.h.b16 %v391
  %v409 = vunpack.c.l.b16 %v392
  %v410 = vunpack.c.h.b16 %v392
  %v411 = vunpack.c.l.b16 %v393
  %v412 = vunpack.c.h.b16 %v393
  %v413 = vunpack.c.l.b16 %v394
  %v414 = vunpack.c.h.b16 %v394
  %v415 = vunpack.c.l.b16 %v395
  %v416 = vunpack.c.h.b16 %v395
  %v417 = vunpack.c.l.b16 %v396
  %v418 = vunpack.c.h.b16 %v396
  %v419 = vunpack.c.l.b16 %v397
  %v420 = vunpack.c.h.b16 %v397
  %v421 = vunpack.c.l.b16 %v398
  %v422 = vunpack.c.h.b16 %v398
  %v423 = vpack.c.b16 %v407, %v407
  %v424 = vpack.c.b16 %v408, %v408
  %v425 = vpack.c.b16 %v409, %v409
  %v426 = vpack.c.b16 %v410, %v410
  %v427 = vpack.c.b16 %v411, %v411
  %v428 = vpack.c.b16 %v412, %v412
  %v429 = vpack.c.b16 %v413, %v413
  %v430 = vpack.c.b16 %v414, %v414
  %v431 = vpack.c.b16 %v415, %v415
  %v432 = vpack.c.b16 %v416, %v416
  %v433 = vpack.c.b16 %v417, %v417
  %v434 = vpack.c.b16 %v418, %v418
  %v435 = vpack.c.b16 %v419, %v419
  %v436 = vpack.c.b16 %v420, %v420
  %v437 = vpack.c.b16 %v421, %v421
  %v438 = vpack.c.b16 %v422, %v422
  %vm455 = vcmask 519168
  %456 = vst.msk [vmem:[%s3] sm:$0xf] %vm455, %v423
  %457 = vst.msk [vmem:[%s3 + $0x4] sm:$0xf] %vm455, %v424
  %458 = vst.msk [vmem:[%s3 + $0x8] sm:$0xf] %vm455, %v425
  %459 = vst.msk [vmem:[%s3 + $0xc] sm:$0xf] %vm455, %v426
  %460 = vst.msk [vmem:[%s3 + $0x10] sm:$0xf] %vm455, %v427
  %461 = vst.msk [vmem:[%s3 + $0x14] sm:$0xf] %vm455, %v428
  %462 = vst.msk [vmem:[%s3 + $0x18] sm:$0xf] %vm455, %v429
  %463 = vst.msk [vmem:[%s3 + $0x1c] sm:$0xf] %vm455, %v430
  %464 = vst.msk [vmem:[%s3 + $0x20] sm:$0xf] %vm455, %v431
  %465 = vst.msk [vmem:[%s3 + $0x24] sm:$0xf] %vm455, %v432
  %466 = vst.msk [vmem:[%s3 + $0x28] sm:$0xf] %vm455, %v433
  %467 = vst.msk [vmem:[%s3 + $0x2c] sm:$0xf] %vm455, %v434
  %468 = vst.msk [vmem:[%s3 + $0x30] sm:$0xf] %vm455, %v435
  %469 = vst.msk [vmem:[%s3 + $0x34] sm:$0xf] %vm455, %v436
  %470 = vst.msk [vmem:[%s3 + $0x38] sm:$0xf] %vm455, %v437
  %471 = vst.msk [vmem:[%s3 + $0x3c] sm:$0xf] %vm455, %v438
  // Predicated region
  $region14: #{tounet_fwd.186} parent=0 // pred_check
    _
  $region15: #{tounet_fwd.186} parent=0 // pred_check_branch
    %473 = sbr.rel (0) target = $region17
  $region16: #{tounet_fwd.186} parent=0 // pred_region
    _
  $region17: #{tounet_fwd.186} parent=0 // pred_fallthru
    _
  // Predicated region
  $region18: #{tounet_fwd.186} parent=0 // pred_check
    _
  $region19: #{tounet_fwd.186} parent=0 // pred_check_branch
    %475 = sbr.rel (0) target = $region21
  $region20: #{tounet_fwd.186} parent=0 // pred_region
    _
  $region21: #{tounet_fwd.186} parent=0 // pred_fallthru
    _

// kernel: sub.104
$region0: #{sub.104}
  #allocation0 [shape = 's32[1]{0}', space=sflag, size = 0x4, scoped, tag = 'scoped memory for sub.104']
  %s0 = inlined_call_operand.vmem [shape: bf16[1,16,16,16], index: 0, kind: input, shape index: {}]
  %s1 = inlined_call_operand.vmem [shape: bf16[1,16,16,16], index: 1, kind: input, shape index: {}]
  %s2 = inlined_call_operand.vmem [shape: bf16[1,16,16,16], index: 2, kind: output, shape index: {}]
  %v3 = vld [vmem:[%s0] sm:$0xf]
  %v4 = vunpack.c.l.bf16 %v3
  %v5 = vunpack.c.h.bf16 %v3
  %v6 = vld [vmem:[%s1] sm:$0xf]
  %v7 = vunpack.c.l.bf16 %v6
  %v8 = vunpack.c.h.bf16 %v6
  %9 = xla_tuple %v4, %v7
  %10 = xla_tuple %9
  %v11 = vsub.f32 %v4, %v7
  %12 = xla_tuple %v11
  %v13 = vpack.c.bf16 0.0, %v11
  %14 = vst [vmem:[%s2] sm:$0xf] %v13
  %s15 = scalar_lea.vmem %s0, 8
  %v16 = vld [vmem:[%s15] sm:$0xf]
  %v17 = vunpack.c.l.bf16 %v16
  %v18 = vunpack.c.h.bf16 %v16
  %s19 = scalar_lea.vmem %s1, 8
  %v20 = vld [vmem:[%s19] sm:$0xf]
  %v21 = vunpack.c.l.bf16 %v20
  %v22 = vunpack.c.h.bf16 %v20
  %23 = xla_tuple %v17, %v21
  %24 = xla_tuple %23
  %v25 = vsub.f32 %v17, %v21
  %26 = xla_tuple %v25
  %s27 = scalar_lea.vmem %s2, 8
  %v28 = vpack.c.bf16 0.0, %v25
  %29 = vst [vmem:[%s27] sm:$0xf] %v28
  %s30 = scalar_lea.vmem %s0, 16
  %v31 = vld [vmem:[%s30] sm:$0xf]
  %v32 = vunpack.c.l.bf16 %v31
  %v33 = vunpack.c.h.bf16 %v31
  %s34 = scalar_lea.vmem %s1, 16
  %v35 = vld [vmem:[%s34] sm:$0xf]
  %v36 = vunpack.c.l.bf16 %v35
  %v37 = vunpack.c.h.bf16 %v35
  %38 = xla_tuple %v32, %v36
  %39 = xla_tuple %38
  %v40 = vsub.f32 %v32, %v36
  %41 = xla_tuple %v40
  %s42 = scalar_lea.vmem %s2, 16
  %v43 = vpack.c.bf16 0.0, %v40
  %44 = vst [vmem:[%s42] sm:$0xf] %v43
  %s45 = scalar_lea.vmem %s0, 24
  %v46 = vld [vmem:[%s45] sm:$0xf]
  %v47 = vunpack.c.l.bf16 %v46
  %v48 = vunpack.c.h.bf16 %v46
  %s49 = scalar_lea.vmem %s1, 24
  %v50 = vld [vmem:[%s49] sm:$0xf]
  %v51 = vunpack.c.l.bf16 %v50
  %v52 = vunpack.c.h.bf16 %v50
  %53 = xla_tuple %v47, %v51
  %54 = xla_tuple %53
  %v55 = vsub.f32 %v47, %v51
  %56 = xla_tuple %v55
  %s57 = scalar_lea.vmem %s2, 24
  %v58 = vpack.c.bf16 0.0, %v55
  %59 = vst [vmem:[%s57] sm:$0xf] %v58
  %s60 = scalar_lea.vmem %s0, 32
  %v61 = vld [vmem:[%s60] sm:$0xf]
  %v62 = vunpack.c.l.bf16 %v61
  %v63 = vunpack.c.h.bf16 %v61
  %s64 = scalar_lea.vmem %s1, 32
  %v65 = vld [vmem:[%s64] sm:$0xf]
  %v66 = vunpack.c.l.bf16 %v65
  %v67 = vunpack.c.h.bf16 %v65
  %68 = xla_tuple %v62, %v66
  %69 = xla_tuple %68
  %v70 = vsub.f32 %v62, %v66
  %71 = xla_tuple %v70
  %s72 = scalar_lea.vmem %s2, 32
  %v73 = vpack.c.bf16 0.0, %v70
  %74 = vst [vmem:[%s72] sm:$0xf] %v73
  %s75 = scalar_lea.vmem %s0, 40
  %v76 = vld [vmem:[%s75] sm:$0xf]
  %v77 = vunpack.c.l.bf16 %v76
  %v78 = vunpack.c.h.bf16 %v76
  %s79 = scalar_lea.vmem %s1, 40
  %v80 = vld [vmem:[%s79] sm:$0xf]
  %v81 = vunpack.c.l.bf16 %v80
  %v82 = vunpack.c.h.bf16 %v80
  %83 = xla_tuple %v77, %v81
  %84 = xla_tuple %83
  %v85 = vsub.f32 %v77, %v81
  %86 = xla_tuple %v85
  %s87 = scalar_lea.vmem %s2, 40
  %v88 = vpack.c.bf16 0.0, %v85
  %89 = vst [vmem:[%s87] sm:$0xf] %v88
  %s90 = scalar_lea.vmem %s0, 48
  %v91 = vld [vmem:[%s90] sm:$0xf]
  %v92 = vunpack.c.l.bf16 %v91
  %v93 = vunpack.c.h.bf16 %v91
  %s94 = scalar_lea.vmem %s1, 48
  %v95 = vld [vmem:[%s94] sm:$0xf]
  %v96 = vunpack.c.l.bf16 %v95
  %v97 = vunpack.c.h.bf16 %v95
  %98 = xla_tuple %v92, %v96
  %99 = xla_tuple %98
  %v100 = vsub.f32 %v92, %v96
  %101 = xla_tuple %v100
  %s102 = scalar_lea.vmem %s2, 48
  %v103 = vpack.c.bf16 0.0, %v100
  %104 = vst [vmem:[%s102] sm:$0xf] %v103
  %s105 = scalar_lea.vmem %s0, 56
  %v106 = vld [vmem:[%s105] sm:$0xf]
  %v107 = vunpack.c.l.bf16 %v106
  %v108 = vunpack.c.h.bf16 %v106
  %s109 = scalar_lea.vmem %s1, 56
  %v110 = vld [vmem:[%s109] sm:$0xf]
  %v111 = vunpack.c.l.bf16 %v110
  %v112 = vunpack.c.h.bf16 %v110
  %113 = xla_tuple %v107, %v111
  %114 = xla_tuple %113
  %v115 = vsub.f32 %v107, %v111
  %116 = xla_tuple %v115
  %s117 = scalar_lea.vmem %s2, 56
  %v118 = vpack.c.bf16 0.0, %v115
  %119 = vst [vmem:[%s117] sm:$0xf] %v118
  %s120 = scalar_lea.vmem %s0, 64
  %v121 = vld [vmem:[%s120] sm:$0xf]
  %v122 = vunpack.c.l.bf16 %v121
  %v123 = vunpack.c.h.bf16 %v121
  %s124 = scalar_lea.vmem %s1, 64
  %v125 = vld [vmem:[%s124] sm:$0xf]
  %v126 = vunpack.c.l.bf16 %v125
  %v127 = vunpack.c.h.bf16 %v125
  %128 = xla_tuple %v122, %v126
  %129 = xla_tuple %128
  %v130 = vsub.f32 %v122, %v126
  %131 = xla_tuple %v130
  %s132 = scalar_lea.vmem %s2, 64
  %v133 = vpack.c.bf16 0.0, %v130
  %134 = vst [vmem:[%s132] sm:$0xf] %v133
  %s135 = scalar_lea.vmem %s0, 72
  %v136 = vld [vmem:[%s135] sm:$0xf]
  %v137 = vunpack.c.l.bf16 %v136
  %v138 = vunpack.c.h.bf16 %v136
  %s139 = scalar_lea.vmem %s1, 72
  %v140 = vld [vmem:[%s139] sm:$0xf]
  %v141 = vunpack.c.l.bf16 %v140
  %v142 = vunpack.c.h.bf16 %v140
  %143 = xla_tuple %v137, %v141
  %144 = xla_tuple %143
  %v145 = vsub.f32 %v137, %v141
  %146 = xla_tuple %v145
  %s147 = scalar_lea.vmem %s2, 72
  %v148 = vpack.c.bf16 0.0, %v145
  %149 = vst [vmem:[%s147] sm:$0xf] %v148
  %s150 = scalar_lea.vmem %s0, 80
  %v151 = vld [vmem:[%s150] sm:$0xf]
  %v152 = vunpack.c.l.bf16 %v151
  %v153 = vunpack.c.h.bf16 %v151
  %s154 = scalar_lea.vmem %s1, 80
  %v155 = vld [vmem:[%s154] sm:$0xf]
  %v156 = vunpack.c.l.bf16 %v155
  %v157 = vunpack.c.h.bf16 %v155
  %158 = xla_tuple %v152, %v156
  %159 = xla_tuple %158
  %v160 = vsub.f32 %v152, %v156
  %161 = xla_tuple %v160
  %s162 = scalar_lea.vmem %s2, 80
  %v163 = vpack.c.bf16 0.0, %v160
  %164 = vst [vmem:[%s162] sm:$0xf] %v163
  %s165 = scalar_lea.vmem %s0, 88
  %v166 = vld [vmem:[%s165] sm:$0xf]
  %v167 = vunpack.c.l.bf16 %v166
  %v168 = vunpack.c.h.bf16 %v166
  %s169 = scalar_lea.vmem %s1, 88
  %v170 = vld [vmem:[%s169] sm:$0xf]
  %v171 = vunpack.c.l.bf16 %v170
  %v172 = vunpack.c.h.bf16 %v170
  %173 = xla_tuple %v167, %v171
  %174 = xla_tuple %173
  %v175 = vsub.f32 %v167, %v171
  %176 = xla_tuple %v175
  %s177 = scalar_lea.vmem %s2, 88
  %v178 = vpack.c.bf16 0.0, %v175
  %179 = vst [vmem:[%s177] sm:$0xf] %v178
  %s180 = scalar_lea.vmem %s0, 96
  %v181 = vld [vmem:[%s180] sm:$0xf]
  %v182 = vunpack.c.l.bf16 %v181
  %v183 = vunpack.c.h.bf16 %v181
  %s184 = scalar_lea.vmem %s1, 96
  %v185 = vld [vmem:[%s184] sm:$0xf]
  %v186 = vunpack.c.l.bf16 %v185
  %v187 = vunpack.c.h.bf16 %v185
  %188 = xla_tuple %v182, %v186
  %189 = xla_tuple %188
  %v190 = vsub.f32 %v182, %v186
  %191 = xla_tuple %v190
  %s192 = scalar_lea.vmem %s2, 96
  %v193 = vpack.c.bf16 0.0, %v190
  %194 = vst [vmem:[%s192] sm:$0xf] %v193
  %s195 = scalar_lea.vmem %s0, 104
  %v196 = vld [vmem:[%s195] sm:$0xf]
  %v197 = vunpack.c.l.bf16 %v196
  %v198 = vunpack.c.h.bf16 %v196
  %s199 = scalar_lea.vmem %s1, 104
  %v200 = vld [vmem:[%s199] sm:$0xf]
  %v201 = vunpack.c.l.bf16 %v200
  %v202 = vunpack.c.h.bf16 %v200
  %203 = xla_tuple %v197, %v201
  %204 = xla_tuple %203
  %v205 = vsub.f32 %v197, %v201
  %206 = xla_tuple %v205
  %s207 = scalar_lea.vmem %s2, 104
  %v208 = vpack.c.bf16 0.0, %v205
  %209 = vst [vmem:[%s207] sm:$0xf] %v208
  %s210 = scalar_lea.vmem %s0, 112
  %v211 = vld [vmem:[%s210] sm:$0xf]
  %v212 = vunpack.c.l.bf16 %v211
  %v213 = vunpack.c.h.bf16 %v211
  %s214 = scalar_lea.vmem %s1, 112
  %v215 = vld [vmem:[%s214] sm:$0xf]
  %v216 = vunpack.c.l.bf16 %v215
  %v217 = vunpack.c.h.bf16 %v215
  %218 = xla_tuple %v212, %v216
  %219 = xla_tuple %218
  %v220 = vsub.f32 %v212, %v216
  %221 = xla_tuple %v220
  %s222 = scalar_lea.vmem %s2, 112
  %v223 = vpack.c.bf16 0.0, %v220
  %224 = vst [vmem:[%s222] sm:$0xf] %v223
  %s225 = scalar_lea.vmem %s0, 120
  %v226 = vld [vmem:[%s225] sm:$0xf]
  %v227 = vunpack.c.l.bf16 %v226
  %v228 = vunpack.c.h.bf16 %v226
  %s229 = scalar_lea.vmem %s1, 120
  %v230 = vld [vmem:[%s229] sm:$0xf]
  %v231 = vunpack.c.l.bf16 %v230
  %v232 = vunpack.c.h.bf16 %v230
  %233 = xla_tuple %v227, %v231
  %234 = xla_tuple %233
  %v235 = vsub.f32 %v227, %v231
  %236 = xla_tuple %v235
  %s237 = scalar_lea.vmem %s2, 120
  %v238 = vpack.c.bf16 0.0, %v235
  %239 = vst [vmem:[%s237] sm:$0xf] %v238
  %s240 = scalar_lea.vmem %s0, 4
  %v241 = vld [vmem:[%s240] sm:$0xf]
  %v242 = vunpack.c.l.bf16 %v241
  %v243 = vunpack.c.h.bf16 %v241
  %s244 = scalar_lea.vmem %s1, 4
  %v245 = vld [vmem:[%s244] sm:$0xf]
  %v246 = vunpack.c.l.bf16 %v245
  %v247 = vunpack.c.h.bf16 %v245
  %248 = xla_tuple %v242, %v246
  %249 = xla_tuple %248
  %v250 = vsub.f32 %v242, %v246
  %251 = xla_tuple %v250
  %s252 = scalar_lea.vmem %s2, 4
  %v253 = vpack.c.bf16 0.0, %v250
  %254 = vst [vmem:[%s252] sm:$0xf] %v253
  %s255 = scalar_lea.vmem %s0, 12
  %v256 = vld [vmem:[%s255] sm:$0xf]
  %v257 = vunpack.c.l.bf16 %v256
  %v258 = vunpack.c.h.bf16 %v256
  %s259 = scalar_lea.vmem %s1, 12
  %v260 = vld [vmem:[%s259] sm:$0xf]
  %v261 = vunpack.c.l.bf16 %v260
  %v262 = vunpack.c.h.bf16 %v260
  %263 = xla_tuple %v257, %v261
  %264 = xla_tuple %263
  %v265 = vsub.f32 %v257, %v261
  %266 = xla_tuple %v265
  %s267 = scalar_lea.vmem %s2, 12
  %v268 = vpack.c.bf16 0.0, %v265
  %269 = vst [vmem:[%s267] sm:$0xf] %v268
  %s270 = scalar_lea.vmem %s0, 20
  %v271 = vld [vmem:[%s270] sm:$0xf]
  %v272 = vunpack.c.l.bf16 %v271
  %v273 = vunpack.c.h.bf16 %v271
  %s274 = scalar_lea.vmem %s1, 20
  %v275 = vld [vmem:[%s274] sm:$0xf]
  %v276 = vunpack.c.l.bf16 %v275
  %v277 = vunpack.c.h.bf16 %v275
  %278 = xla_tuple %v272, %v276
  %279 = xla_tuple %278
  %v280 = vsub.f32 %v272, %v276
  %281 = xla_tuple %v280
  %s282 = scalar_lea.vmem %s2, 20
  %v283 = vpack.c.bf16 0.0, %v280
  %284 = vst [vmem:[%s282] sm:$0xf] %v283
  %s285 = scalar_lea.vmem %s0, 28
  %v286 = vld [vmem:[%s285] sm:$0xf]
  %v287 = vunpack.c.l.bf16 %v286
  %v288 = vunpack.c.h.bf16 %v286
  %s289 = scalar_lea.vmem %s1, 28
  %v290 = vld [vmem:[%s289] sm:$0xf]
  %v291 = vunpack.c.l.bf16 %v290
  %v292 = vunpack.c.h.bf16 %v290
  %293 = xla_tuple %v287, %v291
  %294 = xla_tuple %293
  %v295 = vsub.f32 %v287, %v291
  %296 = xla_tuple %v295
  %s297 = scalar_lea.vmem %s2, 28
  %v298 = vpack.c.bf16 0.0, %v295
  %299 = vst [vmem:[%s297] sm:$0xf] %v298
  %s300 = scalar_lea.vmem %s0, 36
  %v301 = vld [vmem:[%s300] sm:$0xf]
  %v302 = vunpack.c.l.bf16 %v301
  %v303 = vunpack.c.h.bf16 %v301
  %s304 = scalar_lea.vmem %s1, 36
  %v305 = vld [vmem:[%s304] sm:$0xf]
  %v306 = vunpack.c.l.bf16 %v305
  %v307 = vunpack.c.h.bf16 %v305
  %308 = xla_tuple %v302, %v306
  %309 = xla_tuple %308
  %v310 = vsub.f32 %v302, %v306
  %311 = xla_tuple %v310
  %s312 = scalar_lea.vmem %s2, 36
  %v313 = vpack.c.bf16 0.0, %v310
  %314 = vst [vmem:[%s312] sm:$0xf] %v313
  %s315 = scalar_lea.vmem %s0, 44
  %v316 = vld [vmem:[%s315] sm:$0xf]
  %v317 = vunpack.c.l.bf16 %v316
  %v318 = vunpack.c.h.bf16 %v316
  %s319 = scalar_lea.vmem %s1, 44
  %v320 = vld [vmem:[%s319] sm:$0xf]
  %v321 = vunpack.c.l.bf16 %v320
  %v322 = vunpack.c.h.bf16 %v320
  %323 = xla_tuple %v317, %v321
  %324 = xla_tuple %323
  %v325 = vsub.f32 %v317, %v321
  %326 = xla_tuple %v325
  %s327 = scalar_lea.vmem %s2, 44
  %v328 = vpack.c.bf16 0.0, %v325
  %329 = vst [vmem:[%s327] sm:$0xf] %v328
  %s330 = scalar_lea.vmem %s0, 52
  %v331 = vld [vmem:[%s330] sm:$0xf]
  %v332 = vunpack.c.l.bf16 %v331
  %v333 = vunpack.c.h.bf16 %v331
  %s334 = scalar_lea.vmem %s1, 52
  %v335 = vld [vmem:[%s334] sm:$0xf]
  %v336 = vunpack.c.l.bf16 %v335
  %v337 = vunpack.c.h.bf16 %v335
  %338 = xla_tuple %v332, %v336
  %339 = xla_tuple %338
  %v340 = vsub.f32 %v332, %v336
  %341 = xla_tuple %v340
  %s342 = scalar_lea.vmem %s2, 52
  %v343 = vpack.c.bf16 0.0, %v340
  %344 = vst [vmem:[%s342] sm:$0xf] %v343
  %s345 = scalar_lea.vmem %s0, 60
  %v346 = vld [vmem:[%s345] sm:$0xf]
  %v347 = vunpack.c.l.bf16 %v346
  %v348 = vunpack.c.h.bf16 %v346
  %s349 = scalar_lea.vmem %s1, 60
  %v350 = vld [vmem:[%s349] sm:$0xf]
  %v351 = vunpack.c.l.bf16 %v350
  %v352 = vunpack.c.h.bf16 %v350
  %353 = xla_tuple %v347, %v351
  %354 = xla_tuple %353
  %v355 = vsub.f32 %v347, %v351
  %356 = xla_tuple %v355
  %s357 = scalar_lea.vmem %s2, 60
  %v358 = vpack.c.bf16 0.0, %v355
  %359 = vst [vmem:[%s357] sm:$0xf] %v358
  %s360 = scalar_lea.vmem %s0, 68
  %v361 = vld [vmem:[%s360] sm:$0xf]
  %v362 = vunpack.c.l.bf16 %v361
  %v363 = vunpack.c.h.bf16 %v361
  %s364 = scalar_lea.vmem %s1, 68
  %v365 = vld [vmem:[%s364] sm:$0xf]
  %v366 = vunpack.c.l.bf16 %v365
  %v367 = vunpack.c.h.bf16 %v365
  %368 = xla_tuple %v362, %v366
  %369 = xla_tuple %368
  %v370 = vsub.f32 %v362, %v366
  %371 = xla_tuple %v370
  %s372 = scalar_lea.vmem %s2, 68
  %v373 = vpack.c.bf16 0.0, %v370
  %374 = vst [vmem:[%s372] sm:$0xf] %v373
  %s375 = scalar_lea.vmem %s0, 76
  %v376 = vld [vmem:[%s375] sm:$0xf]
  %v377 = vunpack.c.l.bf16 %v376
  %v378 = vunpack.c.h.bf16 %v376
  %s379 = scalar_lea.vmem %s1, 76
  %v380 = vld [vmem:[%s379] sm:$0xf]
  %v381 = vunpack.c.l.bf16 %v380
  %v382 = vunpack.c.h.bf16 %v380
  %383 = xla_tuple %v377, %v381
  %384 = xla_tuple %383
  %v385 = vsub.f32 %v377, %v381
  %386 = xla_tuple %v385
  %s387 = scalar_lea.vmem %s2, 76
  %v388 = vpack.c.bf16 0.0, %v385
  %389 = vst [vmem:[%s387] sm:$0xf] %v388
  %s390 = scalar_lea.vmem %s0, 84
  %v391 = vld [vmem:[%s390] sm:$0xf]
  %v392 = vunpack.c.l.bf16 %v391
  %v393 = vunpack.c.h.bf16 %v391
  %s394 = scalar_lea.vmem %s1, 84
  %v395 = vld [vmem:[%s394] sm:$0xf]
  %v396 = vunpack.c.l.bf16 %v395
  %v397 = vunpack.c.h.bf16 %v395
  %398 = xla_tuple %v392, %v396
  %399 = xla_tuple %398
  %v400 = vsub.f32 %v392, %v396
  %401 = xla_tuple %v400
  %s402 = scalar_lea.vmem %s2, 84
  %v403 = vpack.c.bf16 0.0, %v400
  %404 = vst [vmem:[%s402] sm:$0xf] %v403
  %s405 = scalar_lea.vmem %s0, 92
  %v406 = vld [vmem:[%s405] sm:$0xf]
  %v407 = vunpack.c.l.bf16 %v406
  %v408 = vunpack.c.h.bf16 %v406
  %s409 = scalar_lea.vmem %s1, 92
  %v410 = vld [vmem:[%s409] sm:$0xf]
  %v411 = vunpack.c.l.bf16 %v410
  %v412 = vunpack.c.h.bf16 %v410
  %413 = xla_tuple %v407, %v411
  %414 = xla_tuple %413
  %v415 = vsub.f32 %v407, %v411
  %416 = xla_tuple %v415
  %s417 = scalar_lea.vmem %s2, 92
  %v418 = vpack.c.bf16 0.0, %v415
  %419 = vst [vmem:[%s417] sm:$0xf] %v418
  %s420 = scalar_lea.vmem %s0, 100
  %v421 = vld [vmem:[%s420] sm:$0xf]
  %v422 = vunpack.c.l.bf16 %v421
  %v423 = vunpack.c.h.bf16 %v421
  %s424 = scalar_lea.vmem %s1, 100
  %v425 = vld [vmem:[%s424] sm:$0xf]
  %v426 = vunpack.c.l.bf16 %v425
  %v427 = vunpack.c.h.bf16 %v425
  %428 = xla_tuple %v422, %v426
  %429 = xla_tuple %428
  %v430 = vsub.f32 %v422, %v426
  %431 = xla_tuple %v430
  %s432 = scalar_lea.vmem %s2, 100
  %v433 = vpack.c.bf16 0.0, %v430
  %434 = vst [vmem:[%s432] sm:$0xf] %v433
  %s435 = scalar_lea.vmem %s0, 108
  %v436 = vld [vmem:[%s435] sm:$0xf]
  %v437 = vunpack.c.l.bf16 %v436
  %v438 = vunpack.c.h.bf16 %v436
  %s439 = scalar_lea.vmem %s1, 108
  %v440 = vld [vmem:[%s439] sm:$0xf]
  %v441 = vunpack.c.l.bf16 %v440
  %v442 = vunpack.c.h.bf16 %v440
  %443 = xla_tuple %v437, %v441
  %444 = xla_tuple %443
  %v445 = vsub.f32 %v437, %v441
  %446 = xla_tuple %v445
  %s447 = scalar_lea.vmem %s2, 108
  %v448 = vpack.c.bf16 0.0, %v445
  %449 = vst [vmem:[%s447] sm:$0xf] %v448
  %s450 = scalar_lea.vmem %s0, 116
  %v451 = vld [vmem:[%s450] sm:$0xf]
  %v452 = vunpack.c.l.bf16 %v451
  %v453 = vunpack.c.h.bf16 %v451
  %s454 = scalar_lea.vmem %s1, 116
  %v455 = vld [vmem:[%s454] sm:$0xf]
  %v456 = vunpack.c.l.bf16 %v455
  %v457 = vunpack.c.h.bf16 %v455
  %458 = xla_tuple %v452, %v456
  %459 = xla_tuple %458
  %v460 = vsub.f32 %v452, %v456
  %461 = xla_tuple %v460
  %s462 = scalar_lea.vmem %s2, 116
  %v463 = vpack.c.bf16 0.0, %v460
  %464 = vst [vmem:[%s462] sm:$0xf] %v463
  %s465 = scalar_lea.vmem %s0, 124
  %v466 = vld [vmem:[%s465] sm:$0xf]
  %v467 = vunpack.c.l.bf16 %v466
  %v468 = vunpack.c.h.bf16 %v466
  %s469 = scalar_lea.vmem %s1, 124
  %v470 = vld [vmem:[%s469] sm:$0xf]
  %v471 = vunpack.c.l.bf16 %v470
  %v472 = vunpack.c.h.bf16 %v470
  %473 = xla_tuple %v467, %v471
  %474 = xla_tuple %473
  %v475 = vsub.f32 %v467, %v471
  %476 = xla_tuple %v475
  %s477 = scalar_lea.vmem %s2, 124
  %v478 = vpack.c.bf16 0.0, %v475
  %479 = vst [vmem:[%s477] sm:$0xf] %v478

// kernel: tounet_fwd.187
$region0: #{tounet_fwd.187}
  #allocation0 [shape = 'u32[]', space=smem, size = 0x4, offset = 0x4, fixed_abs, tag = 'smem constant byte address 0x4 - core index']
  #allocation1 [shape = 'u32[144,128]{1,0:T(1,128)}', space=vmem, size = 0x12000, scoped, tag = 'internal scratch']
  %s0 = inlined_call_operand.vmem [shape: bf16[128,640], index: 0, kind: input, shape index: {}]
  %s1 = inlined_call_operand.vmem [shape: bf16[640,128], index: 1, kind: input, shape index: {}]
  %s2 = inlined_call_operand.vmem [shape: f32[1,128], index: 2, kind: input, shape index: {}]
  %s3 = inlined_call_operand.vmem [shape: bf16[128,16], index: 3, kind: input, shape index: {}]
  %s4 = inlined_call_operand.vmem [shape: bf16[128,16], index: 4, kind: output, shape index: {}]
  %s5 = sld [smem:[#allocation0]]
  $region26: #{tounet_fwd.187} parent=0
    _
  %s7 = ssub.s32 1, %s5
  %s8 = scalar_select 0, %s7, %s5
  // Predicated region
  $region2: #{tounet_fwd.187} parent=0 // pred_check
    _
  $region3: #{tounet_fwd.187} parent=0 // pred_check_branch
    %10 = sbr.rel (0) target = $region5
  $region4: #{tounet_fwd.187} parent=0 // pred_region
    _
  $region5: #{tounet_fwd.187} parent=0 // pred_fallthru
    _
  // Predicated region
  $region6: #{tounet_fwd.187} parent=0 // pred_check
    _
  $region7: #{tounet_fwd.187} parent=0 // pred_check_branch
    %12 = sbr.rel (0) target = $region9
  $region8: #{tounet_fwd.187} parent=0 // pred_region
    _
  $region9: #{tounet_fwd.187} parent=0 // pred_fallthru
    _
  // Predicated region
  $region10: #{tounet_fwd.187} parent=0 // pred_check
    _
  $region11: #{tounet_fwd.187} parent=0 // pred_check_branch
    %14 = sbr.rel (0) target = $region13
  $region12: #{tounet_fwd.187} parent=0 // pred_region
    _
  $region13: #{tounet_fwd.187} parent=0 // pred_fallthru
    _
  // Predicated region
  $region14: #{tounet_fwd.187} parent=0 // pred_check
    _
  $region15: #{tounet_fwd.187} parent=0 // pred_check_branch
    %16 = sbr.rel (0) target = $region17
  $region16: #{tounet_fwd.187} parent=0 // pred_region
    _
  $region17: #{tounet_fwd.187} parent=0 // pred_fallthru
    _
  %v18 = vld [vmem:[%s0] sm:$0xff]
  %v19 = vld [vmem:[%s0 + $0x8] sm:$0xff]
  %v20 = vld [vmem:[%s0 + $0x10] sm:$0xf]
  %v21 = vld [vmem:[%s0 + $0x14] sm:$0xff]
  %v22 = vld [vmem:[%s0 + $0x1c] sm:$0xff]
  %v23 = vld [vmem:[%s0 + $0x24] sm:$0xf]
  %v24 = vld [vmem:[%s0 + $0x28] sm:$0xff]
  %v25 = vld [vmem:[%s0 + $0x30] sm:$0xff]
  %v26 = vld [vmem:[%s0 + $0x38] sm:$0xf]
  %v27 = vld [vmem:[%s0 + $0x3c] sm:$0xff]
  %v28 = vld [vmem:[%s0 + $0x44] sm:$0xff]
  %v29 = vld [vmem:[%s0 + $0x4c] sm:$0xf]
  %v30 = vld [vmem:[%s0 + $0x50] sm:$0xff]
  %v31 = vld [vmem:[%s0 + $0x58] sm:$0xff]
  %v32 = vld [vmem:[%s0 + $0x60] sm:$0xf]
  %v33 = vld [vmem:[%s0 + $0x64] sm:$0xff]
  %v34 = vld [vmem:[%s0 + $0x6c] sm:$0xff]
  %v35 = vld [vmem:[%s0 + $0x74] sm:$0xf]
  %v36 = vld [vmem:[%s0 + $0x78] sm:$0xff]
  %v37 = vld [vmem:[%s0 + $0x80] sm:$0xff]
  %v38 = vld [vmem:[%s0 + $0x88] sm:$0xf]
  %v39 = vld [vmem:[%s0 + $0x8c] sm:$0xff]
  %v40 = vld [vmem:[%s0 + $0x94] sm:$0xff]
  %v41 = vld [vmem:[%s0 + $0x9c] sm:$0xf]
  %v42 = vld [vmem:[%s0 + $0xa0] sm:$0xff]
  %v43 = vld [vmem:[%s0 + $0xa8] sm:$0xff]
  %v44 = vld [vmem:[%s0 + $0xb0] sm:$0xf]
  %v45 = vld [vmem:[%s0 + $0xb4] sm:$0xff]
  %v46 = vld [vmem:[%s0 + $0xbc] sm:$0xff]
  %v47 = vld [vmem:[%s0 + $0xc4] sm:$0xf]
  %v48 = vld [vmem:[%s0 + $0xc8] sm:$0xff]
  %v49 = vld [vmem:[%s0 + $0xd0] sm:$0xff]
  %v50 = vld [vmem:[%s0 + $0xd8] sm:$0xf]
  %v51 = vld [vmem:[%s0 + $0xdc] sm:$0xff]
  %v52 = vld [vmem:[%s0 + $0xe4] sm:$0xff]
  %v53 = vld [vmem:[%s0 + $0xec] sm:$0xf]
  %v54 = vld [vmem:[%s0 + $0xf0] sm:$0xff]
  %v55 = vld [vmem:[%s0 + $0xf8] sm:$0xff]
  %v56 = vld [vmem:[%s0 + $0x100] sm:$0xf]
  %v57 = vld [vmem:[%s0 + $0x104] sm:$0xff]
  %v58 = vld [vmem:[%s0 + $0x10c] sm:$0xff]
  %v59 = vld [vmem:[%s0 + $0x114] sm:$0xf]
  %v60 = vld [vmem:[%s0 + $0x118] sm:$0xff]
  %v61 = vld [vmem:[%s0 + $0x120] sm:$0xff]
  %v62 = vld [vmem:[%s0 + $0x128] sm:$0xf]
  %v63 = vld [vmem:[%s0 + $0x12c] sm:$0xff]
  %v64 = vld [vmem:[%s0 + $0x134] sm:$0xff]
  %v65 = vld [vmem:[%s0 + $0x13c] sm:$0xf]
  %v66 = vld [vmem:[%s1] sm:$0xf]
  %v67 = vld [vmem:[%s1 + $0x4] sm:$0xf]
  %v68 = vld [vmem:[%s1 + $0x8] sm:$0xf]
  %v69 = vld [vmem:[%s1 + $0xc] sm:$0xf]
  %v70 = vld [vmem:[%s1 + $0x10] sm:$0xf]
  %v71 = vld [vmem:[%s1 + $0x14] sm:$0xf]
  %v72 = vld [vmem:[%s1 + $0x18] sm:$0xf]
  %v73 = vld [vmem:[%s1 + $0x1c] sm:$0xf]
  %v74 = vld [vmem:[%s1 + $0x20] sm:$0xf]
  %v75 = vld [vmem:[%s1 + $0x24] sm:$0xf]
  %v76 = vld [vmem:[%s1 + $0x28] sm:$0xf]
  %v77 = vld [vmem:[%s1 + $0x2c] sm:$0xf]
  %v78 = vld [vmem:[%s1 + $0x30] sm:$0xf]
  %v79 = vld [vmem:[%s1 + $0x34] sm:$0xf]
  %v80 = vld [vmem:[%s1 + $0x38] sm:$0xf]
  %v81 = vld [vmem:[%s1 + $0x3c] sm:$0xf]
  %v82 = vld [vmem:[%s1 + $0x40] sm:$0xf]
  %v83 = vld [vmem:[%s1 + $0x44] sm:$0xf]
  %v84 = vld [vmem:[%s1 + $0x48] sm:$0xf]
  %v85 = vld [vmem:[%s1 + $0x4c] sm:$0xf]
  %v86 = vld [vmem:[%s1 + $0x50] sm:$0xf]
  %v87 = vld [vmem:[%s1 + $0x54] sm:$0xf]
  %v88 = vld [vmem:[%s1 + $0x58] sm:$0xf]
  %v89 = vld [vmem:[%s1 + $0x5c] sm:$0xf]
  %v90 = vld [vmem:[%s1 + $0x60] sm:$0xf]
  %v91 = vld [vmem:[%s1 + $0x64] sm:$0xf]
  %v92 = vld [vmem:[%s1 + $0x68] sm:$0xf]
  %v93 = vld [vmem:[%s1 + $0x6c] sm:$0xf]
  %v94 = vld [vmem:[%s1 + $0x70] sm:$0xf]
  %v95 = vld [vmem:[%s1 + $0x74] sm:$0xf]
  %v96 = vld [vmem:[%s1 + $0x78] sm:$0xf]
  %v97 = vld [vmem:[%s1 + $0x7c] sm:$0xf]
  %v98 = vld [vmem:[%s1 + $0x80] sm:$0xf]
  %v99 = vld [vmem:[%s1 + $0x84] sm:$0xf]
  %v100 = vld [vmem:[%s1 + $0x88] sm:$0xf]
  %v101 = vld [vmem:[%s1 + $0x8c] sm:$0xf]
  %v102 = vld [vmem:[%s1 + $0x90] sm:$0xf]
  %v103 = vld [vmem:[%s1 + $0x94] sm:$0xf]
  %v104 = vld [vmem:[%s1 + $0x98] sm:$0xf]
  %v105 = vld [vmem:[%s1 + $0x9c] sm:$0xf]
  %v106 = vld [vmem:[%s1 + $0xa0] sm:$0xf]
  %v107 = vld [vmem:[%s1 + $0xa4] sm:$0xf]
  %v108 = vld [vmem:[%s1 + $0xa8] sm:$0xf]
  %v109 = vld [vmem:[%s1 + $0xac] sm:$0xf]
  %v110 = vld [vmem:[%s1 + $0xb0] sm:$0xf]
  %v111 = vld [vmem:[%s1 + $0xb4] sm:$0xf]
  %v112 = vld [vmem:[%s1 + $0xb8] sm:$0xf]
  %v113 = vld [vmem:[%s1 + $0xbc] sm:$0xf]
  %v114 = vld [vmem:[%s1 + $0xc0] sm:$0xf]
  %v115 = vld [vmem:[%s1 + $0xc4] sm:$0xf]
  %v116 = vld [vmem:[%s1 + $0xc8] sm:$0xf]
  %v117 = vld [vmem:[%s1 + $0xcc] sm:$0xf]
  %v118 = vld [vmem:[%s1 + $0xd0] sm:$0xf]
  %v119 = vld [vmem:[%s1 + $0xd4] sm:$0xf]
  %v120 = vld [vmem:[%s1 + $0xd8] sm:$0xf]
  %v121 = vld [vmem:[%s1 + $0xdc] sm:$0xf]
  %v122 = vld [vmem:[%s1 + $0xe0] sm:$0xf]
  %v123 = vld [vmem:[%s1 + $0xe4] sm:$0xf]
  %v124 = vld [vmem:[%s1 + $0xe8] sm:$0xf]
  %v125 = vld [vmem:[%s1 + $0xec] sm:$0xf]
  %v126 = vld [vmem:[%s1 + $0xf0] sm:$0xf]
  %v127 = vld [vmem:[%s1 + $0xf4] sm:$0xf]
  %v128 = vld [vmem:[%s1 + $0xf8] sm:$0xf]
  %v129 = vld [vmem:[%s1 + $0xfc] sm:$0xf]
  %v130 = vld [vmem:[%s1 + $0x100] sm:$0xf]
  %v131 = vld [vmem:[%s1 + $0x104] sm:$0xf]
  %v132 = vld [vmem:[%s1 + $0x108] sm:$0xf]
  %v133 = vld [vmem:[%s1 + $0x10c] sm:$0xf]
  %v134 = vld [vmem:[%s1 + $0x110] sm:$0xf]
  %v135 = vld [vmem:[%s1 + $0x114] sm:$0xf]
  %v136 = vld [vmem:[%s1 + $0x118] sm:$0xf]
  %v137 = vld [vmem:[%s1 + $0x11c] sm:$0xf]
  %v138 = vld [vmem:[%s1 + $0x120] sm:$0xf]
  %v139 = vld [vmem:[%s1 + $0x124] sm:$0xf]
  %v140 = vld [vmem:[%s1 + $0x128] sm:$0xf]
  %v141 = vld [vmem:[%s1 + $0x12c] sm:$0xf]
  %v142 = vld [vmem:[%s1 + $0x130] sm:$0xf]
  %v143 = vld [vmem:[%s1 + $0x134] sm:$0xf]
  %v144 = vld [vmem:[%s1 + $0x138] sm:$0xf]
  %v145 = vld [vmem:[%s1 + $0x13c] sm:$0xf]
  %v146 = vld [vmem:[%s2] sm:$0x1]
  %v148 = vlaneseq
  %v149 = vshrl.u32 %v148, 7
  %v150 = vsub.s32 0, %v149
  %v151 = vrot.slane %v146, %v150
  %v201 = vunpack.c.l.b16 %v18
  %v202 = vunpack.c.h.b16 %v18
  %v203 = vunpack.c.l.b16 %v19
  %v204 = vunpack.c.h.b16 %v19
  %v205 = vunpack.c.l.b16 %v20
  %v206 = vunpack.c.l.b16 %v21
  %v207 = vunpack.c.h.b16 %v21
  %v208 = vunpack.c.l.b16 %v22
  %v209 = vunpack.c.h.b16 %v22
  %v210 = vunpack.c.l.b16 %v23
  %v211 = vunpack.c.l.b16 %v24
  %v212 = vunpack.c.h.b16 %v24
  %v213 = vunpack.c.l.b16 %v25
  %v214 = vunpack.c.h.b16 %v25
  %v215 = vunpack.c.l.b16 %v26
  %v216 = vunpack.c.l.b16 %v27
  %v217 = vunpack.c.h.b16 %v27
  %v218 = vunpack.c.l.b16 %v28
  %v219 = vunpack.c.h.b16 %v28
  %v220 = vunpack.c.l.b16 %v29
  %v221 = vunpack.c.l.b16 %v30
  %v222 = vunpack.c.h.b16 %v30
  %v223 = vunpack.c.l.b16 %v31
  %v224 = vunpack.c.h.b16 %v31
  %v225 = vunpack.c.l.b16 %v32
  %v226 = vunpack.c.l.b16 %v33
  %v227 = vunpack.c.h.b16 %v33
  %v228 = vunpack.c.l.b16 %v34
  %v229 = vunpack.c.h.b16 %v34
  %v230 = vunpack.c.l.b16 %v35
  %v231 = vunpack.c.l.b16 %v36
  %v232 = vunpack.c.h.b16 %v36
  %v233 = vunpack.c.l.b16 %v37
  %v234 = vunpack.c.h.b16 %v37
  %v235 = vunpack.c.l.b16 %v38
  %v236 = vunpack.c.l.b16 %v39
  %v237 = vunpack.c.h.b16 %v39
  %v238 = vunpack.c.l.b16 %v40
  %v239 = vunpack.c.h.b16 %v40
  %v240 = vunpack.c.l.b16 %v41
  %v241 = vunpack.c.l.b16 %v42
  %v242 = vunpack.c.h.b16 %v42
  %v243 = vunpack.c.l.b16 %v43
  %v244 = vunpack.c.h.b16 %v43
  %v245 = vunpack.c.l.b16 %v44
  %v246 = vunpack.c.l.b16 %v45
  %v247 = vunpack.c.h.b16 %v45
  %v248 = vunpack.c.l.b16 %v46
  %v249 = vunpack.c.h.b16 %v46
  %v250 = vunpack.c.l.b16 %v47
  %v251 = vunpack.c.l.b16 %v48
  %v252 = vunpack.c.h.b16 %v48
  %v253 = vunpack.c.l.b16 %v49
  %v254 = vunpack.c.h.b16 %v49
  %v255 = vunpack.c.l.b16 %v50
  %v256 = vunpack.c.l.b16 %v51
  %v257 = vunpack.c.h.b16 %v51
  %v258 = vunpack.c.l.b16 %v52
  %v259 = vunpack.c.h.b16 %v52
  %v260 = vunpack.c.l.b16 %v53
  %v261 = vunpack.c.l.b16 %v54
  %v262 = vunpack.c.h.b16 %v54
  %v263 = vunpack.c.l.b16 %v55
  %v264 = vunpack.c.h.b16 %v55
  %v265 = vunpack.c.l.b16 %v56
  %v266 = vunpack.c.l.b16 %v57
  %v267 = vunpack.c.h.b16 %v57
  %v268 = vunpack.c.l.b16 %v58
  %v269 = vunpack.c.h.b16 %v58
  %v270 = vunpack.c.l.b16 %v59
  %v271 = vunpack.c.l.b16 %v60
  %v272 = vunpack.c.h.b16 %v60
  %v273 = vunpack.c.l.b16 %v61
  %v274 = vunpack.c.h.b16 %v61
  %v275 = vunpack.c.l.b16 %v62
  %v276 = vunpack.c.l.b16 %v63
  %v277 = vunpack.c.h.b16 %v63
  %v278 = vunpack.c.l.b16 %v64
  %v279 = vunpack.c.h.b16 %v64
  %v280 = vunpack.c.l.b16 %v65
  %v281 = vpack.c.b16 %v206, %v201
  %v282 = vpack.c.b16 %v207, %v202
  %v283 = vpack.c.b16 %v208, %v203
  %v284 = vpack.c.b16 %v209, %v204
  %v285 = vpack.c.b16 %v210, %v205
  %v286 = vpack.c.b16 %v216, %v211
  %v287 = vpack.c.b16 %v217, %v212
  %v288 = vpack.c.b16 %v218, %v213
  %v289 = vpack.c.b16 %v219, %v214
  %v290 = vpack.c.b16 %v220, %v215
  %v291 = vpack.c.b16 %v226, %v221
  %v292 = vpack.c.b16 %v227, %v222
  %v293 = vpack.c.b16 %v228, %v223
  %v294 = vpack.c.b16 %v229, %v224
  %v295 = vpack.c.b16 %v230, %v225
  %v296 = vpack.c.b16 %v236, %v231
  %v297 = vpack.c.b16 %v237, %v232
  %v298 = vpack.c.b16 %v238, %v233
  %v299 = vpack.c.b16 %v239, %v234
  %v300 = vpack.c.b16 %v240, %v235
  %v301 = vpack.c.b16 %v246, %v241
  %v302 = vpack.c.b16 %v247, %v242
  %v303 = vpack.c.b16 %v248, %v243
  %v304 = vpack.c.b16 %v249, %v244
  %v305 = vpack.c.b16 %v250, %v245
  %v306 = vpack.c.b16 %v256, %v251
  %v307 = vpack.c.b16 %v257, %v252
  %v308 = vpack.c.b16 %v258, %v253
  %v309 = vpack.c.b16 %v259, %v254
  %v310 = vpack.c.b16 %v260, %v255
  %v311 = vpack.c.b16 %v266, %v261
  %v312 = vpack.c.b16 %v267, %v262
  %v313 = vpack.c.b16 %v268, %v263
  %v314 = vpack.c.b16 %v269, %v264
  %v315 = vpack.c.b16 %v270, %v265
  %v316 = vpack.c.b16 %v276, %v271
  %v317 = vpack.c.b16 %v277, %v272
  %v318 = vpack.c.b16 %v278, %v273
  %v319 = vpack.c.b16 %v279, %v274
  %v320 = vpack.c.b16 %v280, %v275
  %v441 = vunpack.c.l.b16 %v66
  %v442 = vunpack.c.l.b16 %v67
  %v443 = vunpack.c.l.b16 %v68
  %v444 = vunpack.c.l.b16 %v69
  %v445 = vunpack.c.l.b16 %v70
  %v446 = vunpack.c.l.b16 %v71
  %v447 = vunpack.c.l.b16 %v72
  %v448 = vunpack.c.l.b16 %v73
  %v449 = vunpack.c.l.b16 %v74
  %v450 = vunpack.c.l.b16 %v75
  %v451 = vunpack.c.l.b16 %v76
  %v452 = vunpack.c.l.b16 %v77
  %v453 = vunpack.c.l.b16 %v78
  %v454 = vunpack.c.l.b16 %v79
  %v455 = vunpack.c.l.b16 %v80
  %v456 = vunpack.c.l.b16 %v81
  %v457 = vunpack.c.l.b16 %v82
  %v458 = vunpack.c.l.b16 %v83
  %v459 = vunpack.c.l.b16 %v84
  %v460 = vunpack.c.l.b16 %v85
  %v461 = vunpack.c.l.b16 %v86
  %v462 = vunpack.c.l.b16 %v87
  %v463 = vunpack.c.l.b16 %v88
  %v464 = vunpack.c.l.b16 %v89
  %v465 = vunpack.c.l.b16 %v90
  %v466 = vunpack.c.l.b16 %v91
  %v467 = vunpack.c.l.b16 %v92
  %v468 = vunpack.c.l.b16 %v93
  %v469 = vunpack.c.l.b16 %v94
  %v470 = vunpack.c.l.b16 %v95
  %v471 = vunpack.c.l.b16 %v96
  %v472 = vunpack.c.l.b16 %v97
  %v473 = vunpack.c.l.b16 %v98
  %v474 = vunpack.c.l.b16 %v99
  %v475 = vunpack.c.l.b16 %v100
  %v476 = vunpack.c.l.b16 %v101
  %v477 = vunpack.c.l.b16 %v102
  %v478 = vunpack.c.l.b16 %v103
  %v479 = vunpack.c.l.b16 %v104
  %v480 = vunpack.c.l.b16 %v105
  %v481 = vunpack.c.l.b16 %v106
  %v482 = vunpack.c.l.b16 %v107
  %v483 = vunpack.c.l.b16 %v108
  %v484 = vunpack.c.l.b16 %v109
  %v485 = vunpack.c.l.b16 %v110
  %v486 = vunpack.c.l.b16 %v111
  %v487 = vunpack.c.l.b16 %v112
  %v488 = vunpack.c.l.b16 %v113
  %v489 = vunpack.c.l.b16 %v114
  %v490 = vunpack.c.l.b16 %v115
  %v491 = vunpack.c.l.b16 %v116
  %v492 = vunpack.c.l.b16 %v117
  %v493 = vunpack.c.l.b16 %v118
  %v494 = vunpack.c.l.b16 %v119
  %v495 = vunpack.c.l.b16 %v120
  %v496 = vunpack.c.l.b16 %v121
  %v497 = vunpack.c.l.b16 %v122
  %v498 = vunpack.c.l.b16 %v123
  %v499 = vunpack.c.l.b16 %v124
  %v500 = vunpack.c.l.b16 %v125
  %v501 = vunpack.c.l.b16 %v126
  %v502 = vunpack.c.l.b16 %v127
  %v503 = vunpack.c.l.b16 %v128
  %v504 = vunpack.c.l.b16 %v129
  %v505 = vunpack.c.l.b16 %v130
  %v506 = vunpack.c.l.b16 %v131
  %v507 = vunpack.c.l.b16 %v132
  %v508 = vunpack.c.l.b16 %v133
  %v509 = vunpack.c.l.b16 %v134
  %v510 = vunpack.c.l.b16 %v135
  %v511 = vunpack.c.l.b16 %v136
  %v512 = vunpack.c.l.b16 %v137
  %v513 = vunpack.c.l.b16 %v138
  %v514 = vunpack.c.l.b16 %v139
  %v515 = vunpack.c.l.b16 %v140
  %v516 = vunpack.c.l.b16 %v141
  %v517 = vunpack.c.l.b16 %v142
  %v518 = vunpack.c.l.b16 %v143
  %v519 = vunpack.c.l.b16 %v144
  %v520 = vunpack.c.l.b16 %v145
  %v521 = vpack.c.b16 %v442, %v441
  %v522 = vpack.c.b16 %v444, %v443
  %v523 = vpack.c.b16 %v446, %v445
  %v524 = vpack.c.b16 %v448, %v447
  %v525 = vpack.c.b16 %v450, %v449
  %v526 = vpack.c.b16 %v452, %v451
  %v527 = vpack.c.b16 %v454, %v453
  %v528 = vpack.c.b16 %v456, %v455
  %v529 = vpack.c.b16 %v458, %v457
  %v530 = vpack.c.b16 %v460, %v459
  %v531 = vpack.c.b16 %v462, %v461
  %v532 = vpack.c.b16 %v464, %v463
  %v533 = vpack.c.b16 %v466, %v465
  %v534 = vpack.c.b16 %v468, %v467
  %v535 = vpack.c.b16 %v470, %v469
  %v536 = vpack.c.b16 %v472, %v471
  %v537 = vpack.c.b16 %v474, %v473
  %v538 = vpack.c.b16 %v476, %v475
  %v539 = vpack.c.b16 %v478, %v477
  %v540 = vpack.c.b16 %v480, %v479
  %v541 = vpack.c.b16 %v482, %v481
  %v542 = vpack.c.b16 %v484, %v483
  %v543 = vpack.c.b16 %v486, %v485
  %v544 = vpack.c.b16 %v488, %v487
  %v545 = vpack.c.b16 %v490, %v489
  %v546 = vpack.c.b16 %v492, %v491
  %v547 = vpack.c.b16 %v494, %v493
  %v548 = vpack.c.b16 %v496, %v495
  %v549 = vpack.c.b16 %v498, %v497
  %v550 = vpack.c.b16 %v500, %v499
  %v551 = vpack.c.b16 %v502, %v501
  %v552 = vpack.c.b16 %v504, %v503
  %v553 = vpack.c.b16 %v506, %v505
  %v554 = vpack.c.b16 %v508, %v507
  %v555 = vpack.c.b16 %v510, %v509
  %v556 = vpack.c.b16 %v512, %v511
  %v557 = vpack.c.b16 %v514, %v513
  %v558 = vpack.c.b16 %v516, %v515
  %v559 = vpack.c.b16 %v518, %v517
  %v560 = vpack.c.b16 %v520, %v519
  %601 = vmatprep.subr.bf16.mxu0 0
  %602 = vmatpush1.bf16.msra.mxu0 %v521
  %603 = vmatprep.subr.bf16.mxu0 0
  %604 = vmatpush1.bf16.msra.mxu0 %v522
  %605 = vmatprep.subr.bf16.mxu0 0
  %606 = vmatpush1.bf16.msra.mxu0 %v523
  %607 = vmatprep.subr.bf16.mxu0 0
  %608 = vmatpush1.bf16.msra.mxu0 %v524
  %609 = vmatprep.subr.bf16.mxu0 0
  %610 = vmatpush1.bf16.msra.mxu0 %v525
  %611 = vmatprep.subr.bf16.mxu0 0
  %612 = vmatpush1.bf16.msra.mxu0 %v526
  %613 = vmatprep.subr.bf16.mxu0 0
  %614 = vmatpush1.bf16.msra.mxu0 %v527
  %615 = vmatprep.subr.bf16.mxu0 0
  %616 = vmatpush1.bf16.msra.mxu0 %v528
  %617 = vmatprep.subr.bf16.mxu0 0
  %618 = vmatpush1.bf16.msra.mxu0 %v529
  %619 = vmatprep.subr.bf16.mxu0 0
  %620 = vmatpush1.bf16.msra.mxu0 %v530
  %621 = vmatprep.subr.bf16.mxu0 0
  %622 = vmatpush1.bf16.msra.mxu0 %v531
  %623 = vmatprep.subr.bf16.mxu0 0
  %624 = vmatpush1.bf16.msra.mxu0 %v532
  %625 = vmatprep.subr.bf16.mxu0 0
  %626 = vmatpush1.bf16.msra.mxu0 %v533
  %627 = vmatprep.subr.bf16.mxu0 0
  %628 = vmatpush1.bf16.msra.mxu0 %v534
  %629 = vmatprep.subr.bf16.mxu0 0
  %630 = vmatpush1.bf16.msra.mxu0 %v535
  %631 = vmatprep.subr.bf16.mxu0 0
  %632 = vmatpush1.bf16.msra.mxu0 %v536
  %633 = vmatprep.mubr.bf16.mxu0 %v282
  %634 = vmatmul.mubr.bf16.gmra.mrb[0].mxu0 %v281
  %v635 = vpop.f32.mrb[0].mxu0
  %v636 = vadd.f32 %v151, %v635
  %v637 = vpop.f32.mrb[0].mxu0
  %v638 = vpop.f32.mrb[0].mxu0
  %v639 = vadd.f32 %v151, %v638
  %v640 = vpop.f32.mrb[0].mxu0
  %641 = vmatprep.mubr.bf16.mxu0 %v287
  %642 = vmatmul.mubr.bf16.gmra.mrb[0].mxu0 %v286
  %v643 = vpop.f32.mrb[0].mxu0
  %v644 = vadd.f32 %v151, %v643
  %v645 = vpop.f32.mrb[0].mxu0
  %v646 = vpop.f32.mrb[0].mxu0
  %v647 = vadd.f32 %v151, %v646
  %v648 = vpop.f32.mrb[0].mxu0
  %649 = vmatprep.mubr.bf16.mxu0 %v292
  %650 = vmatmul.mubr.bf16.gmra.mrb[0].mxu0 %v291
  %v651 = vpop.f32.mrb[0].mxu0
  %v652 = vadd.f32 %v151, %v651
  %v653 = vpop.f32.mrb[0].mxu0
  %v654 = vpop.f32.mrb[0].mxu0
  %v655 = vadd.f32 %v151, %v654
  %v656 = vpop.f32.mrb[0].mxu0
  %657 = vmatprep.mubr.bf16.mxu0 %v297
  %658 = vmatmul.mubr.bf16.gmra.mrb[0].mxu0 %v296
  %v659 = vpop.f32.mrb[0].mxu0
  %v660 = vadd.f32 %v151, %v659
  %v661 = vpop.f32.mrb[0].mxu0
  %v662 = vpop.f32.mrb[0].mxu0
  %v663 = vadd.f32 %v151, %v662
  %v664 = vpop.f32.mrb[0].mxu0
  %665 = vmatprep.mubr.bf16.mxu0 %v302
  %666 = vmatmul.mubr.bf16.gmra.mrb[0].mxu0 %v301
  %v667 = vpop.f32.mrb[0].mxu0
  %v668 = vadd.f32 %v151, %v667
  %v669 = vpop.f32.mrb[0].mxu0
  %v670 = vpop.f32.mrb[0].mxu0
  %v671 = vadd.f32 %v151, %v670
  %v672 = vpop.f32.mrb[0].mxu0
  %673 = vmatprep.mubr.bf16.mxu0 %v307
  %674 = vmatmul.mubr.bf16.gmra.mrb[0].mxu0 %v306
  %v675 = vpop.f32.mrb[0].mxu0
  %v676 = vadd.f32 %v151, %v675
  %v677 = vpop.f32.mrb[0].mxu0
  %v678 = vpop.f32.mrb[0].mxu0
  %v679 = vadd.f32 %v151, %v678
  %v680 = vpop.f32.mrb[0].mxu0
  %681 = vmatprep.mubr.bf16.mxu0 %v312
  %682 = vmatmul.mubr.bf16.gmra.mrb[0].mxu0 %v311
  %v683 = vpop.f32.mrb[0].mxu0
  %v684 = vadd.f32 %v151, %v683
  %v685 = vpop.f32.mrb[0].mxu0
  %v686 = vpop.f32.mrb[0].mxu0
  %v687 = vadd.f32 %v151, %v686
  %v688 = vpop.f32.mrb[0].mxu0
  %689 = vmatprep.mubr.bf16.mxu0 %v317
  %690 = vmatmul.mubr.bf16.gmra.mrb[0].mxu0 %v316
  %v691 = vpop.f32.mrb[0].mxu0
  %v692 = vadd.f32 %v151, %v691
  %v693 = vpop.f32.mrb[0].mxu0
  %v694 = vpop.f32.mrb[0].mxu0
  %v695 = vadd.f32 %v151, %v694
  %v696 = vpop.f32.mrb[0].mxu0
  %697 = vdwg.mxu0
  %698 = vmatprep.subr.bf16.mxu0 0
  %699 = vmatpush1.bf16.msra.mxu0 %v537
  %700 = vmatprep.subr.bf16.mxu0 0
  %701 = vmatpush1.bf16.msra.mxu0 %v538
  %702 = vmatprep.subr.bf16.mxu0 0
  %703 = vmatpush1.bf16.msra.mxu0 %v539
  %704 = vmatprep.subr.bf16.mxu0 0
  %705 = vmatpush1.bf16.msra.mxu0 %v540
  %706 = vmatprep.subr.bf16.mxu0 0
  %707 = vmatpush1.bf16.msra.mxu0 %v541
  %708 = vmatprep.subr.bf16.mxu0 0
  %709 = vmatpush1.bf16.msra.mxu0 %v542
  %710 = vmatprep.subr.bf16.mxu0 0
  %711 = vmatpush1.bf16.msra.mxu0 %v543
  %712 = vmatprep.subr.bf16.mxu0 0
  %713 = vmatpush1.bf16.msra.mxu0 %v544
  %714 = vmatprep.subr.bf16.mxu0 0
  %715 = vmatpush1.bf16.msra.mxu0 %v545
  %716 = vmatprep.subr.bf16.mxu0 0
  %717 = vmatpush1.bf16.msra.mxu0 %v546
  %718 = vmatprep.subr.bf16.mxu0 0
  %719 = vmatpush1.bf16.msra.mxu0 %v547
  %720 = vmatprep.subr.bf16.mxu0 0
  %721 = vmatpush1.bf16.msra.mxu0 %v548
  %722 = vmatprep.subr.bf16.mxu0 0
  %723 = vmatpush1.bf16.msra.mxu0 %v549
  %724 = vmatprep.subr.bf16.mxu0 0
  %725 = vmatpush1.bf16.msra.mxu0 %v550
  %726 = vmatprep.subr.bf16.mxu0 0
  %727 = vmatpush1.bf16.msra.mxu0 %v551
  %728 = vmatprep.subr.bf16.mxu0 0
  %729 = vmatpush1.bf16.msra.mxu0 %v552
  %730 = vmatprep.mubr.bf16.mxu0 %v284
  %731 = vmatmul.mubr.bf16.gmra.mrb[0].mxu0 %v283
  %v732 = vpop.f32.mrb[0].mxu0
  %v733 = vadd.f32 %v636, %v732
  %v734 = vpop.f32.mrb[0].mxu0
  %v735 = vpop.f32.mrb[0].mxu0
  %v736 = vadd.f32 %v639, %v735
  %v737 = vpop.f32.mrb[0].mxu0
  %738 = vmatprep.mubr.bf16.mxu0 %v289
  %739 = vmatmul.mubr.bf16.gmra.mrb[0].mxu0 %v288
  %v740 = vpop.f32.mrb[0].mxu0
  %v741 = vadd.f32 %v644, %v740
  %v742 = vpop.f32.mrb[0].mxu0
  %v743 = vpop.f32.mrb[0].mxu0
  %v744 = vadd.f32 %v647, %v743
  %v745 = vpop.f32.mrb[0].mxu0
  %746 = vmatprep.mubr.bf16.mxu0 %v294
  %747 = vmatmul.mubr.bf16.gmra.mrb[0].mxu0 %v293
  %v748 = vpop.f32.mrb[0].mxu0
  %v749 = vadd.f32 %v652, %v748
  %v750 = vpop.f32.mrb[0].mxu0
  %v751 = vpop.f32.mrb[0].mxu0
  %v752 = vadd.f32 %v655, %v751
  %v753 = vpop.f32.mrb[0].mxu0
  %754 = vmatprep.mubr.bf16.mxu0 %v299
  %755 = vmatmul.mubr.bf16.gmra.mrb[0].mxu0 %v298
  %v756 = vpop.f32.mrb[0].mxu0
  %v757 = vadd.f32 %v660, %v756
  %v758 = vpop.f32.mrb[0].mxu0
  %v759 = vpop.f32.mrb[0].mxu0
  %v760 = vadd.f32 %v663, %v759
  %v761 = vpop.f32.mrb[0].mxu0
  %762 = vmatprep.mubr.bf16.mxu0 %v304
  %763 = vmatmul.mubr.bf16.gmra.mrb[0].mxu0 %v303
  %v764 = vpop.f32.mrb[0].mxu0
  %v765 = vadd.f32 %v668, %v764
  %v766 = vpop.f32.mrb[0].mxu0
  %v767 = vpop.f32.mrb[0].mxu0
  %v768 = vadd.f32 %v671, %v767
  %v769 = vpop.f32.mrb[0].mxu0
  %770 = vmatprep.mubr.bf16.mxu0 %v309
  %771 = vmatmul.mubr.bf16.gmra.mrb[0].mxu0 %v308
  %v772 = vpop.f32.mrb[0].mxu0
  %v773 = vadd.f32 %v676, %v772
  %v774 = vpop.f32.mrb[0].mxu0
  %v775 = vpop.f32.mrb[0].mxu0
  %v776 = vadd.f32 %v679, %v775
  %v777 = vpop.f32.mrb[0].mxu0
  %778 = vmatprep.mubr.bf16.mxu0 %v314
  %779 = vmatmul.mubr.bf16.gmra.mrb[0].mxu0 %v313
  %v780 = vpop.f32.mrb[0].mxu0
  %v781 = vadd.f32 %v684, %v780
  %v782 = vpop.f32.mrb[0].mxu0
  %v783 = vpop.f32.mrb[0].mxu0
  %v784 = vadd.f32 %v687, %v783
  %v785 = vpop.f32.mrb[0].mxu0
  %786 = vmatprep.mubr.bf16.mxu0 %v319
  %787 = vmatmul.mubr.bf16.gmra.mrb[0].mxu0 %v318
  %v788 = vpop.f32.mrb[0].mxu0
  %v789 = vadd.f32 %v692, %v788
  %v790 = vpop.f32.mrb[0].mxu0
  %v791 = vpop.f32.mrb[0].mxu0
  %v792 = vadd.f32 %v695, %v791
  %v793 = vpop.f32.mrb[0].mxu0
  %794 = vdwg.mxu0
  %795 = vmatprep.subr.bf16.mxu0 0
  %796 = vmatpush1.bf16.msra.mxu0 %v553
  %797 = vmatprep.subr.bf16.mxu0 0
  %798 = vmatpush1.bf16.msra.mxu0 %v554
  %799 = vmatprep.subr.bf16.mxu0 0
  %800 = vmatpush1.bf16.msra.mxu0 %v555
  %801 = vmatprep.subr.bf16.mxu0 0
  %802 = vmatpush1.bf16.msra.mxu0 %v556
  %803 = vmatprep.subr.bf16.mxu0 0
  %804 = vmatpush1.bf16.msra.mxu0 %v557
  %805 = vmatprep.subr.bf16.mxu0 0
  %806 = vmatpush1.bf16.msra.mxu0 %v558
  %807 = vmatprep.subr.bf16.mxu0 0
  %808 = vmatpush1.bf16.msra.mxu0 %v559
  %809 = vmatprep.subr.bf16.mxu0 0
  %810 = vmatpush1.bf16.msra.mxu0 %v560
  %811 = vmatprep.subr.bf16.mxu0 0
  %812 = vmatpush1.bf16.msra.mxu0 0
  %813 = vmatprep.subr.bf16.mxu0 0
  %814 = vmatpush1.bf16.msra.mxu0 0
  %815 = vmatprep.subr.bf16.mxu0 0
  %816 = vmatpush1.bf16.msra.mxu0 0
  %817 = vmatprep.subr.bf16.mxu0 0
  %818 = vmatpush1.bf16.msra.mxu0 0
  %819 = vmatprep.subr.bf16.mxu0 0
  %820 = vmatpush1.bf16.msra.mxu0 0
  %821 = vmatprep.subr.bf16.mxu0 0
  %822 = vmatpush1.bf16.msra.mxu0 0
  %823 = vmatprep.subr.bf16.mxu0 0
  %824 = vmatpush1.bf16.msra.mxu0 0
  %825 = vmatprep.subr.bf16.mxu0 0
  %826 = vmatpush1.bf16.msra.mxu0 0
  %827 = vmatprep.mubr.bf16.mxu0 0
  %828 = vmatmul.mubr.bf16.gmra.mrb[0].mxu0 %v285
  %v829 = vpop.f32.mrb[0].mxu0
  %v830 = vadd.f32 %v733, %v829
  %v831 = vpop.f32.mrb[0].mxu0
  %v832 = vpop.f32.mrb[0].mxu0
  %v833 = vadd.f32 %v736, %v832
  %v834 = vpop.f32.mrb[0].mxu0
  %835 = vmatprep.mubr.bf16.mxu0 0
  %836 = vmatmul.mubr.bf16.gmra.mrb[0].mxu0 %v290
  %v837 = vpop.f32.mrb[0].mxu0
  %v838 = vadd.f32 %v741, %v837
  %v839 = vpop.f32.mrb[0].mxu0
  %v840 = vpop.f32.mrb[0].mxu0
  %v841 = vadd.f32 %v744, %v840
  %v842 = vpop.f32.mrb[0].mxu0
  %843 = vmatprep.mubr.bf16.mxu0 0
  %844 = vmatmul.mubr.bf16.gmra.mrb[0].mxu0 %v295
  %v845 = vpop.f32.mrb[0].mxu0
  %v846 = vadd.f32 %v749, %v845
  %v847 = vpop.f32.mrb[0].mxu0
  %v848 = vpop.f32.mrb[0].mxu0
  %v849 = vadd.f32 %v752, %v848
  %v850 = vpop.f32.mrb[0].mxu0
  %851 = vmatprep.mubr.bf16.mxu0 0
  %852 = vmatmul.mubr.bf16.gmra.mrb[0].mxu0 %v300
  %v853 = vpop.f32.mrb[0].mxu0
  %v854 = vadd.f32 %v757, %v853
  %v855 = vpop.f32.mrb[0].mxu0
  %v856 = vpop.f32.mrb[0].mxu0
  %v857 = vadd.f32 %v760, %v856
  %v858 = vpop.f32.mrb[0].mxu0
  %859 = vmatprep.mubr.bf16.mxu0 0
  %860 = vmatmul.mubr.bf16.gmra.mrb[0].mxu0 %v305
  %v861 = vpop.f32.mrb[0].mxu0
  %v862 = vadd.f32 %v765, %v861
  %v863 = vpop.f32.mrb[0].mxu0
  %v864 = vpop.f32.mrb[0].mxu0
  %v865 = vadd.f32 %v768, %v864
  %v866 = vpop.f32.mrb[0].mxu0
  %867 = vmatprep.mubr.bf16.mxu0 0
  %868 = vmatmul.mubr.bf16.gmra.mrb[0].mxu0 %v310
  %v869 = vpop.f32.mrb[0].mxu0
  %v870 = vadd.f32 %v773, %v869
  %v871 = vpop.f32.mrb[0].mxu0
  %v872 = vpop.f32.mrb[0].mxu0
  %v873 = vadd.f32 %v776, %v872
  %v874 = vpop.f32.mrb[0].mxu0
  %875 = vmatprep.mubr.bf16.mxu0 0
  %876 = vmatmul.mubr.bf16.gmra.mrb[0].mxu0 %v315
  %v877 = vpop.f32.mrb[0].mxu0
  %v878 = vadd.f32 %v781, %v877
  %v879 = vpop.f32.mrb[0].mxu0
  %v880 = vpop.f32.mrb[0].mxu0
  %v881 = vadd.f32 %v784, %v880
  %v882 = vpop.f32.mrb[0].mxu0
  %883 = vmatprep.mubr.bf16.mxu0 0
  %884 = vmatmul.mubr.bf16.gmra.mrb[0].mxu0 %v320
  %v885 = vpop.f32.mrb[0].mxu0
  %v886 = vadd.f32 %v789, %v885
  %v887 = vpop.f32.mrb[0].mxu0
  %v888 = vpop.f32.mrb[0].mxu0
  %v889 = vadd.f32 %v792, %v888
  %v890 = vpop.f32.mrb[0].mxu0
  %891 = vdwg.mxu0
  %vm892 = vcmp.gt.f32.partialorder %v830, 0.0
  %vm893 = vcmp.gt.f32.partialorder %v833, 0.0
  %vm894 = vcmp.gt.f32.partialorder %v838, 0.0
  %vm895 = vcmp.gt.f32.partialorder %v841, 0.0
  %vm896 = vcmp.gt.f32.partialorder %v846, 0.0
  %vm897 = vcmp.gt.f32.partialorder %v849, 0.0
  %vm898 = vcmp.gt.f32.partialorder %v854, 0.0
  %vm899 = vcmp.gt.f32.partialorder %v857, 0.0
  %vm900 = vcmp.gt.f32.partialorder %v862, 0.0
  %vm901 = vcmp.gt.f32.partialorder %v865, 0.0
  %vm902 = vcmp.gt.f32.partialorder %v870, 0.0
  %vm903 = vcmp.gt.f32.partialorder %v873, 0.0
  %vm904 = vcmp.gt.f32.partialorder %v878, 0.0
  %vm905 = vcmp.gt.f32.partialorder %v881, 0.0
  %vm906 = vcmp.gt.f32.partialorder %v886, 0.0
  %vm907 = vcmp.gt.f32.partialorder %v889, 0.0
  %v908 = vmul.f32 %v830, 0.25
  %v909 = vmul.f32 %v833, 0.25
  %v910 = vmul.f32 %v838, 0.25
  %v911 = vmul.f32 %v841, 0.25
  %v912 = vmul.f32 %v846, 0.25
  %v913 = vmul.f32 %v849, 0.25
  %v914 = vmul.f32 %v854, 0.25
  %v915 = vmul.f32 %v857, 0.25
  %v916 = vmul.f32 %v862, 0.25
  %v917 = vmul.f32 %v865, 0.25
  %v918 = vmul.f32 %v870, 0.25
  %v919 = vmul.f32 %v873, 0.25
  %v920 = vmul.f32 %v878, 0.25
  %v921 = vmul.f32 %v881, 0.25
  %v922 = vmul.f32 %v886, 0.25
  %v923 = vmul.f32 %v889, 0.25
  %v924 = vsel %vm892, %v830, %v908
  %v925 = vsel %vm893, %v833, %v909
  %v926 = vsel %vm894, %v838, %v910
  %v927 = vsel %vm895, %v841, %v911
  %v928 = vsel %vm896, %v846, %v912
  %v929 = vsel %vm897, %v849, %v913
  %v930 = vsel %vm898, %v854, %v914
  %v931 = vsel %vm899, %v857, %v915
  %v932 = vsel %vm900, %v862, %v916
  %v933 = vsel %vm901, %v865, %v917
  %v934 = vsel %vm902, %v870, %v918
  %v935 = vsel %vm903, %v873, %v919
  %v936 = vsel %vm904, %v878, %v920
  %v937 = vsel %vm905, %v881, %v921
  %v938 = vsel %vm906, %v886, %v922
  %v939 = vsel %vm907, %v889, %v923
  %v940 = vld [vmem:[%s3] sm:$0xf]
  %v941 = vld [vmem:[%s3 + $0x4] sm:$0xf]
  %v942 = vld [vmem:[%s3 + $0x8] sm:$0xf]
  %v943 = vld [vmem:[%s3 + $0xc] sm:$0xf]
  %v944 = vld [vmem:[%s3 + $0x10] sm:$0xf]
  %v945 = vld [vmem:[%s3 + $0x14] sm:$0xf]
  %v946 = vld [vmem:[%s3 + $0x18] sm:$0xf]
  %v947 = vld [vmem:[%s3 + $0x1c] sm:$0xf]
  %v948 = vld [vmem:[%s3 + $0x20] sm:$0xf]
  %v949 = vld [vmem:[%s3 + $0x24] sm:$0xf]
  %v950 = vld [vmem:[%s3 + $0x28] sm:$0xf]
  %v951 = vld [vmem:[%s3 + $0x2c] sm:$0xf]
  %v952 = vld [vmem:[%s3 + $0x30] sm:$0xf]
  %v953 = vld [vmem:[%s3 + $0x34] sm:$0xf]
  %v954 = vld [vmem:[%s3 + $0x38] sm:$0xf]
  %v955 = vld [vmem:[%s3 + $0x3c] sm:$0xf]
  %v956 = vunpack.c.l.bf16 %v940
  %v957 = vunpack.c.l.bf16 %v941
  %v958 = vunpack.c.l.bf16 %v942
  %v959 = vunpack.c.l.bf16 %v943
  %v960 = vunpack.c.l.bf16 %v944
  %v961 = vunpack.c.l.bf16 %v945
  %v962 = vunpack.c.l.bf16 %v946
  %v963 = vunpack.c.l.bf16 %v947
  %v964 = vunpack.c.l.bf16 %v948
  %v965 = vunpack.c.l.bf16 %v949
  %v966 = vunpack.c.l.bf16 %v950
  %v967 = vunpack.c.l.bf16 %v951
  %v968 = vunpack.c.l.bf16 %v952
  %v969 = vunpack.c.l.bf16 %v953
  %v970 = vunpack.c.l.bf16 %v954
  %v971 = vunpack.c.l.bf16 %v955
  %v972 = vsub.f32 0.0, %v956
  %v973 = vsub.f32 0.0, %v957
  %v974 = vsub.f32 0.0, %v958
  %v975 = vsub.f32 0.0, %v959
  %v976 = vsub.f32 0.0, %v960
  %v977 = vsub.f32 0.0, %v961
  %v978 = vsub.f32 0.0, %v962
  %v979 = vsub.f32 0.0, %v963
  %v980 = vsub.f32 0.0, %v964
  %v981 = vsub.f32 0.0, %v965
  %v982 = vsub.f32 0.0, %v966
  %v983 = vsub.f32 0.0, %v967
  %v984 = vsub.f32 0.0, %v968
  %v985 = vsub.f32 0.0, %v969
  %v986 = vsub.f32 0.0, %v970
  %v987 = vsub.f32 0.0, %v971
  %v988 = vadd.f32 %v924, %v972
  %v989 = vadd.f32 %v925, %v973
  %v990 = vadd.f32 %v926, %v974
  %v991 = vadd.f32 %v927, %v975
  %v992 = vadd.f32 %v928, %v976
  %v993 = vadd.f32 %v929, %v977
  %v994 = vadd.f32 %v930, %v978
  %v995 = vadd.f32 %v931, %v979
  %v996 = vadd.f32 %v932, %v980
  %v997 = vadd.f32 %v933, %v981
  %v998 = vadd.f32 %v934, %v982
  %v999 = vadd.f32 %v935, %v983
  %v1000 = vadd.f32 %v936, %v984
  %v1001 = vadd.f32 %v937, %v985
  %v1002 = vadd.f32 %v938, %v986
  %v1003 = vadd.f32 %v939, %v987
  %v1004 = vpack.c.bf16 %v989, %v988
  %v1005 = vpack.c.bf16 %v991, %v990
  %v1006 = vpack.c.bf16 %v993, %v992
  %v1007 = vpack.c.bf16 %v995, %v994
  %v1008 = vpack.c.bf16 %v997, %v996
  %v1009 = vpack.c.bf16 %v999, %v998
  %v1010 = vpack.c.bf16 %v1001, %v1000
  %v1011 = vpack.c.bf16 %v1003, %v1002
  %v1020 = vunpack.c.l.b16 %v1004
  %v1021 = vunpack.c.h.b16 %v1004
  %v1022 = vunpack.c.l.b16 %v1005
  %v1023 = vunpack.c.h.b16 %v1005
  %v1024 = vunpack.c.l.b16 %v1006
  %v1025 = vunpack.c.h.b16 %v1006
  %v1026 = vunpack.c.l.b16 %v1007
  %v1027 = vunpack.c.h.b16 %v1007
  %v1028 = vunpack.c.l.b16 %v1008
  %v1029 = vunpack.c.h.b16 %v1008
  %v1030 = vunpack.c.l.b16 %v1009
  %v1031 = vunpack.c.h.b16 %v1009
  %v1032 = vunpack.c.l.b16 %v1010
  %v1033 = vunpack.c.h.b16 %v1010
  %v1034 = vunpack.c.l.b16 %v1011
  %v1035 = vunpack.c.h.b16 %v1011
  %v1036 = vpack.c.b16 %v1020, %v1020
  %v1037 = vpack.c.b16 %v1021, %v1021
  %v1038 = vpack.c.b16 %v1022, %v1022
  %v1039 = vpack.c.b16 %v1023, %v1023
  %v1040 = vpack.c.b16 %v1024, %v1024
  %v1041 = vpack.c.b16 %v1025, %v1025
  %v1042 = vpack.c.b16 %v1026, %v1026
  %v1043 = vpack.c.b16 %v1027, %v1027
  %v1044 = vpack.c.b16 %v1028, %v1028
  %v1045 = vpack.c.b16 %v1029, %v1029
  %v1046 = vpack.c.b16 %v1030, %v1030
  %v1047 = vpack.c.b16 %v1031, %v1031
  %v1048 = vpack.c.b16 %v1032, %v1032
  %v1049 = vpack.c.b16 %v1033, %v1033
  %v1050 = vpack.c.b16 %v1034, %v1034
  %v1051 = vpack.c.b16 %v1035, %v1035
  %vm1068 = vcmask 125952
  %1069 = vst.msk [vmem:[%s4] sm:$0xf] %vm1068, %v1036
  %1070 = vst.msk [vmem:[%s4 + $0x4] sm:$0xf] %vm1068, %v1037
  %1071 = vst.msk [vmem:[%s4 + $0x8] sm:$0xf] %vm1068, %v1038
  %1072 = vst.msk [vmem:[%s4 + $0xc] sm:$0xf] %vm1068, %v1039
  %1073 = vst.msk [vmem:[%s4 + $0x10] sm:$0xf] %vm1068, %v1040
  %1074 = vst.msk [vmem:[%s4 + $0x14] sm:$0xf] %vm1068, %v1041
  %1075 = vst.msk [vmem:[%s4 + $0x18] sm:$0xf] %vm1068, %v1042
  %1076 = vst.msk [vmem:[%s4 + $0x1c] sm:$0xf] %vm1068, %v1043
  %1077 = vst.msk [vmem:[%s4 + $0x20] sm:$0xf] %vm1068, %v1044
  %1078 = vst.msk [vmem:[%s4 + $0x24] sm:$0xf] %vm1068, %v1045
  %1079 = vst.msk [vmem:[%s4 + $0x28] sm:$0xf] %vm1068, %v1046
  %1080 = vst.msk [vmem:[%s4 + $0x2c] sm:$0xf] %vm1068, %v1047
  %1081 = vst.msk [vmem:[%s4 + $0x30] sm:$0xf] %vm1068, %v1048
  %1082 = vst.msk [vmem:[%s4 + $0x34] sm:$0xf] %vm1068, %v1049
  %1083 = vst.msk [vmem:[%s4 + $0x38] sm:$0xf] %vm1068, %v1050
  %1084 = vst.msk [vmem:[%s4 + $0x3c] sm:$0xf] %vm1068, %v1051
  // Predicated region
  $region18: #{tounet_fwd.187} parent=0 // pred_check
    _
  $region19: #{tounet_fwd.187} parent=0 // pred_check_branch
    %1086 = sbr.rel (0) target = $region21
  $region20: #{tounet_fwd.187} parent=0 // pred_region
    _
  $region21: #{tounet_fwd.187} parent=0 // pred_fallthru
    _
  // Predicated region
  $region22: #{tounet_fwd.187} parent=0 // pred_check
    _
  $region23: #{tounet_fwd.187} parent=0 // pred_check_branch
    %1088 = sbr.rel (0) target = $region25
  $region24: #{tounet_fwd.187} parent=0 // pred_region
    _
  $region25: #{tounet_fwd.187} parent=0 // pred_fallthru
    _

// kernel: tounet_fwd.189
$region0: #{tounet_fwd.189}
  #allocation0 [shape = 'u32[]', space=smem, size = 0x4, offset = 0x4, fixed_abs, tag = 'smem constant byte address 0x4 - core index']
  #allocation1 [shape = 'u32[144,128]{1,0:T(1,128)}', space=vmem, size = 0x12000, scoped, tag = 'internal scratch']
  %s0 = inlined_call_operand.vmem [shape: bf16[128,640], index: 0, kind: input, shape index: {}]
  %s1 = inlined_call_operand.vmem [shape: bf16[640,128], index: 1, kind: input, shape index: {}]
  %s2 = inlined_call_operand.vmem [shape: f32[1,128], index: 2, kind: input, shape index: {}]
  %s3 = inlined_call_operand.vmem [shape: bf16[128,16], index: 3, kind: output, shape index: {}]
  %s4 = sld [smem:[#allocation0]]
  $region22: #{tounet_fwd.189} parent=0
    _
  %s6 = ssub.s32 1, %s4
  %s7 = scalar_select 0, %s6, %s4
  // Predicated region
  $region2: #{tounet_fwd.189} parent=0 // pred_check
    _
  $region3: #{tounet_fwd.189} parent=0 // pred_check_branch
    %9 = sbr.rel (0) target = $region5
  $region4: #{tounet_fwd.189} parent=0 // pred_region
    _
  $region5: #{tounet_fwd.189} parent=0 // pred_fallthru
    _
  // Predicated region
  $region6: #{tounet_fwd.189} parent=0 // pred_check
    _
  $region7: #{tounet_fwd.189} parent=0 // pred_check_branch
    %11 = sbr.rel (0) target = $region9
  $region8: #{tounet_fwd.189} parent=0 // pred_region
    _
  $region9: #{tounet_fwd.189} parent=0 // pred_fallthru
    _
  // Predicated region
  $region10: #{tounet_fwd.189} parent=0 // pred_check
    _
  $region11: #{tounet_fwd.189} parent=0 // pred_check_branch
    %13 = sbr.rel (0) target = $region13
  $region12: #{tounet_fwd.189} parent=0 // pred_region
    _
  $region13: #{tounet_fwd.189} parent=0 // pred_fallthru
    _
  %v15 = vld [vmem:[%s0] sm:$0xff]
  %v16 = vld [vmem:[%s0 + $0x8] sm:$0xff]
  %v17 = vld [vmem:[%s0 + $0x10] sm:$0xf]
  %v18 = vld [vmem:[%s0 + $0x14] sm:$0xff]
  %v19 = vld [vmem:[%s0 + $0x1c] sm:$0xff]
  %v20 = vld [vmem:[%s0 + $0x24] sm:$0xf]
  %v21 = vld [vmem:[%s0 + $0x28] sm:$0xff]
  %v22 = vld [vmem:[%s0 + $0x30] sm:$0xff]
  %v23 = vld [vmem:[%s0 + $0x38] sm:$0xf]
  %v24 = vld [vmem:[%s0 + $0x3c] sm:$0xff]
  %v25 = vld [vmem:[%s0 + $0x44] sm:$0xff]
  %v26 = vld [vmem:[%s0 + $0x4c] sm:$0xf]
  %v27 = vld [vmem:[%s0 + $0x50] sm:$0xff]
  %v28 = vld [vmem:[%s0 + $0x58] sm:$0xff]
  %v29 = vld [vmem:[%s0 + $0x60] sm:$0xf]
  %v30 = vld [vmem:[%s0 + $0x64] sm:$0xff]
  %v31 = vld [vmem:[%s0 + $0x6c] sm:$0xff]
  %v32 = vld [vmem:[%s0 + $0x74] sm:$0xf]
  %v33 = vld [vmem:[%s0 + $0x78] sm:$0xff]
  %v34 = vld [vmem:[%s0 + $0x80] sm:$0xff]
  %v35 = vld [vmem:[%s0 + $0x88] sm:$0xf]
  %v36 = vld [vmem:[%s0 + $0x8c] sm:$0xff]
  %v37 = vld [vmem:[%s0 + $0x94] sm:$0xff]
  %v38 = vld [vmem:[%s0 + $0x9c] sm:$0xf]
  %v39 = vld [vmem:[%s0 + $0xa0] sm:$0xff]
  %v40 = vld [vmem:[%s0 + $0xa8] sm:$0xff]
  %v41 = vld [vmem:[%s0 + $0xb0] sm:$0xf]
  %v42 = vld [vmem:[%s0 + $0xb4] sm:$0xff]
  %v43 = vld [vmem:[%s0 + $0xbc] sm:$0xff]
  %v44 = vld [vmem:[%s0 + $0xc4] sm:$0xf]
  %v45 = vld [vmem:[%s0 + $0xc8] sm:$0xff]
  %v46 = vld [vmem:[%s0 + $0xd0] sm:$0xff]
  %v47 = vld [vmem:[%s0 + $0xd8] sm:$0xf]
  %v48 = vld [vmem:[%s0 + $0xdc] sm:$0xff]
  %v49 = vld [vmem:[%s0 + $0xe4] sm:$0xff]
  %v50 = vld [vmem:[%s0 + $0xec] sm:$0xf]
  %v51 = vld [vmem:[%s0 + $0xf0] sm:$0xff]
  %v52 = vld [vmem:[%s0 + $0xf8] sm:$0xff]
  %v53 = vld [vmem:[%s0 + $0x100] sm:$0xf]
  %v54 = vld [vmem:[%s0 + $0x104] sm:$0xff]
  %v55 = vld [vmem:[%s0 + $0x10c] sm:$0xff]
  %v56 = vld [vmem:[%s0 + $0x114] sm:$0xf]
  %v57 = vld [vmem:[%s0 + $0x118] sm:$0xff]
  %v58 = vld [vmem:[%s0 + $0x120] sm:$0xff]
  %v59 = vld [vmem:[%s0 + $0x128] sm:$0xf]
  %v60 = vld [vmem:[%s0 + $0x12c] sm:$0xff]
  %v61 = vld [vmem:[%s0 + $0x134] sm:$0xff]
  %v62 = vld [vmem:[%s0 + $0x13c] sm:$0xf]
  %v63 = vld [vmem:[%s1] sm:$0xf]
  %v64 = vld [vmem:[%s1 + $0x4] sm:$0xf]
  %v65 = vld [vmem:[%s1 + $0x8] sm:$0xf]
  %v66 = vld [vmem:[%s1 + $0xc] sm:$0xf]
  %v67 = vld [vmem:[%s1 + $0x10] sm:$0xf]
  %v68 = vld [vmem:[%s1 + $0x14] sm:$0xf]
  %v69 = vld [vmem:[%s1 + $0x18] sm:$0xf]
  %v70 = vld [vmem:[%s1 + $0x1c] sm:$0xf]
  %v71 = vld [vmem:[%s1 + $0x20] sm:$0xf]
  %v72 = vld [vmem:[%s1 + $0x24] sm:$0xf]
  %v73 = vld [vmem:[%s1 + $0x28] sm:$0xf]
  %v74 = vld [vmem:[%s1 + $0x2c] sm:$0xf]
  %v75 = vld [vmem:[%s1 + $0x30] sm:$0xf]
  %v76 = vld [vmem:[%s1 + $0x34] sm:$0xf]
  %v77 = vld [vmem:[%s1 + $0x38] sm:$0xf]
  %v78 = vld [vmem:[%s1 + $0x3c] sm:$0xf]
  %v79 = vld [vmem:[%s1 + $0x40] sm:$0xf]
  %v80 = vld [vmem:[%s1 + $0x44] sm:$0xf]
  %v81 = vld [vmem:[%s1 + $0x48] sm:$0xf]
  %v82 = vld [vmem:[%s1 + $0x4c] sm:$0xf]
  %v83 = vld [vmem:[%s1 + $0x50] sm:$0xf]
  %v84 = vld [vmem:[%s1 + $0x54] sm:$0xf]
  %v85 = vld [vmem:[%s1 + $0x58] sm:$0xf]
  %v86 = vld [vmem:[%s1 + $0x5c] sm:$0xf]
  %v87 = vld [vmem:[%s1 + $0x60] sm:$0xf]
  %v88 = vld [vmem:[%s1 + $0x64] sm:$0xf]
  %v89 = vld [vmem:[%s1 + $0x68] sm:$0xf]
  %v90 = vld [vmem:[%s1 + $0x6c] sm:$0xf]
  %v91 = vld [vmem:[%s1 + $0x70] sm:$0xf]
  %v92 = vld [vmem:[%s1 + $0x74] sm:$0xf]
  %v93 = vld [vmem:[%s1 + $0x78] sm:$0xf]
  %v94 = vld [vmem:[%s1 + $0x7c] sm:$0xf]
  %v95 = vld [vmem:[%s1 + $0x80] sm:$0xf]
  %v96 = vld [vmem:[%s1 + $0x84] sm:$0xf]
  %v97 = vld [vmem:[%s1 + $0x88] sm:$0xf]
  %v98 = vld [vmem:[%s1 + $0x8c] sm:$0xf]
  %v99 = vld [vmem:[%s1 + $0x90] sm:$0xf]
  %v100 = vld [vmem:[%s1 + $0x94] sm:$0xf]
  %v101 = vld [vmem:[%s1 + $0x98] sm:$0xf]
  %v102 = vld [vmem:[%s1 + $0x9c] sm:$0xf]
  %v103 = vld [vmem:[%s1 + $0xa0] sm:$0xf]
  %v104 = vld [vmem:[%s1 + $0xa4] sm:$0xf]
  %v105 = vld [vmem:[%s1 + $0xa8] sm:$0xf]
  %v106 = vld [vmem:[%s1 + $0xac] sm:$0xf]
  %v107 = vld [vmem:[%s1 + $0xb0] sm:$0xf]
  %v108 = vld [vmem:[%s1 + $0xb4] sm:$0xf]
  %v109 = vld [vmem:[%s1 + $0xb8] sm:$0xf]
  %v110 = vld [vmem:[%s1 + $0xbc] sm:$0xf]
  %v111 = vld [vmem:[%s1 + $0xc0] sm:$0xf]
  %v112 = vld [vmem:[%s1 + $0xc4] sm:$0xf]
  %v113 = vld [vmem:[%s1 + $0xc8] sm:$0xf]
  %v114 = vld [vmem:[%s1 + $0xcc] sm:$0xf]
  %v115 = vld [vmem:[%s1 + $0xd0] sm:$0xf]
  %v116 = vld [vmem:[%s1 + $0xd4] sm:$0xf]
  %v117 = vld [vmem:[%s1 + $0xd8] sm:$0xf]
  %v118 = vld [vmem:[%s1 + $0xdc] sm:$0xf]
  %v119 = vld [vmem:[%s1 + $0xe0] sm:$0xf]
  %v120 = vld [vmem:[%s1 + $0xe4] sm:$0xf]
  %v121 = vld [vmem:[%s1 + $0xe8] sm:$0xf]
  %v122 = vld [vmem:[%s1 + $0xec] sm:$0xf]
  %v123 = vld [vmem:[%s1 + $0xf0] sm:$0xf]
  %v124 = vld [vmem:[%s1 + $0xf4] sm:$0xf]
  %v125 = vld [vmem:[%s1 + $0xf8] sm:$0xf]
  %v126 = vld [vmem:[%s1 + $0xfc] sm:$0xf]
  %v127 = vld [vmem:[%s1 + $0x100] sm:$0xf]
  %v128 = vld [vmem:[%s1 + $0x104] sm:$0xf]
  %v129 = vld [vmem:[%s1 + $0x108] sm:$0xf]
  %v130 = vld [vmem:[%s1 + $0x10c] sm:$0xf]
  %v131 = vld [vmem:[%s1 + $0x110] sm:$0xf]
  %v132 = vld [vmem:[%s1 + $0x114] sm:$0xf]
  %v133 = vld [vmem:[%s1 + $0x118] sm:$0xf]
  %v134 = vld [vmem:[%s1 + $0x11c] sm:$0xf]
  %v135 = vld [vmem:[%s1 + $0x120] sm:$0xf]
  %v136 = vld [vmem:[%s1 + $0x124] sm:$0xf]
  %v137 = vld [vmem:[%s1 + $0x128] sm:$0xf]
  %v138 = vld [vmem:[%s1 + $0x12c] sm:$0xf]
  %v139 = vld [vmem:[%s1 + $0x130] sm:$0xf]
  %v140 = vld [vmem:[%s1 + $0x134] sm:$0xf]
  %v141 = vld [vmem:[%s1 + $0x138] sm:$0xf]
  %v142 = vld [vmem:[%s1 + $0x13c] sm:$0xf]
  %v143 = vld [vmem:[%s2] sm:$0x1]
  %v145 = vlaneseq
  %v146 = vshrl.u32 %v145, 7
  %v147 = vsub.s32 0, %v146
  %v148 = vrot.slane %v143, %v147
  %v198 = vunpack.c.l.b16 %v15
  %v199 = vunpack.c.h.b16 %v15
  %v200 = vunpack.c.l.b16 %v16
  %v201 = vunpack.c.h.b16 %v16
  %v202 = vunpack.c.l.b16 %v17
  %v203 = vunpack.c.l.b16 %v18
  %v204 = vunpack.c.h.b16 %v18
  %v205 = vunpack.c.l.b16 %v19
  %v206 = vunpack.c.h.b16 %v19
  %v207 = vunpack.c.l.b16 %v20
  %v208 = vunpack.c.l.b16 %v21
  %v209 = vunpack.c.h.b16 %v21
  %v210 = vunpack.c.l.b16 %v22
  %v211 = vunpack.c.h.b16 %v22
  %v212 = vunpack.c.l.b16 %v23
  %v213 = vunpack.c.l.b16 %v24
  %v214 = vunpack.c.h.b16 %v24
  %v215 = vunpack.c.l.b16 %v25
  %v216 = vunpack.c.h.b16 %v25
  %v217 = vunpack.c.l.b16 %v26
  %v218 = vunpack.c.l.b16 %v27
  %v219 = vunpack.c.h.b16 %v27
  %v220 = vunpack.c.l.b16 %v28
  %v221 = vunpack.c.h.b16 %v28
  %v222 = vunpack.c.l.b16 %v29
  %v223 = vunpack.c.l.b16 %v30
  %v224 = vunpack.c.h.b16 %v30
  %v225 = vunpack.c.l.b16 %v31
  %v226 = vunpack.c.h.b16 %v31
  %v227 = vunpack.c.l.b16 %v32
  %v228 = vunpack.c.l.b16 %v33
  %v229 = vunpack.c.h.b16 %v33
  %v230 = vunpack.c.l.b16 %v34
  %v231 = vunpack.c.h.b16 %v34
  %v232 = vunpack.c.l.b16 %v35
  %v233 = vunpack.c.l.b16 %v36
  %v234 = vunpack.c.h.b16 %v36
  %v235 = vunpack.c.l.b16 %v37
  %v236 = vunpack.c.h.b16 %v37
  %v237 = vunpack.c.l.b16 %v38
  %v238 = vunpack.c.l.b16 %v39
  %v239 = vunpack.c.h.b16 %v39
  %v240 = vunpack.c.l.b16 %v40
  %v241 = vunpack.c.h.b16 %v40
  %v242 = vunpack.c.l.b16 %v41
  %v243 = vunpack.c.l.b16 %v42
  %v244 = vunpack.c.h.b16 %v42
  %v245 = vunpack.c.l.b16 %v43
  %v246 = vunpack.c.h.b16 %v43
  %v247 = vunpack.c.l.b16 %v44
  %v248 = vunpack.c.l.b16 %v45
  %v249 = vunpack.c.h.b16 %v45
  %v250 = vunpack.c.l.b16 %v46
  %v251 = vunpack.c.h.b16 %v46
  %v252 = vunpack.c.l.b16 %v47
  %v253 = vunpack.c.l.b16 %v48
  %v254 = vunpack.c.h.b16 %v48
  %v255 = vunpack.c.l.b16 %v49
  %v256 = vunpack.c.h.b16 %v49
  %v257 = vunpack.c.l.b16 %v50
  %v258 = vunpack.c.l.b16 %v51
  %v259 = vunpack.c.h.b16 %v51
  %v260 = vunpack.c.l.b16 %v52
  %v261 = vunpack.c.h.b16 %v52
  %v262 = vunpack.c.l.b16 %v53
  %v263 = vunpack.c.l.b16 %v54
  %v264 = vunpack.c.h.b16 %v54
  %v265 = vunpack.c.l.b16 %v55
  %v266 = vunpack.c.h.b16 %v55
  %v267 = vunpack.c.l.b16 %v56
  %v268 = vunpack.c.l.b16 %v57
  %v269 = vunpack.c.h.b16 %v57
  %v270 = vunpack.c.l.b16 %v58
  %v271 = vunpack.c.h.b16 %v58
  %v272 = vunpack.c.l.b16 %v59
  %v273 = vunpack.c.l.b16 %v60
  %v274 = vunpack.c.h.b16 %v60
  %v275 = vunpack.c.l.b16 %v61
  %v276 = vunpack.c.h.b16 %v61
  %v277 = vunpack.c.l.b16 %v62
  %v278 = vpack.c.b16 %v203, %v198
  %v279 = vpack.c.b16 %v204, %v199
  %v280 = vpack.c.b16 %v205, %v200
  %v281 = vpack.c.b16 %v206, %v201
  %v282 = vpack.c.b16 %v207, %v202
  %v283 = vpack.c.b16 %v213, %v208
  %v284 = vpack.c.b16 %v214, %v209
  %v285 = vpack.c.b16 %v215, %v210
  %v286 = vpack.c.b16 %v216, %v211
  %v287 = vpack.c.b16 %v217, %v212
  %v288 = vpack.c.b16 %v223, %v218
  %v289 = vpack.c.b16 %v224, %v219
  %v290 = vpack.c.b16 %v225, %v220
  %v291 = vpack.c.b16 %v226, %v221
  %v292 = vpack.c.b16 %v227, %v222
  %v293 = vpack.c.b16 %v233, %v228
  %v294 = vpack.c.b16 %v234, %v229
  %v295 = vpack.c.b16 %v235, %v230
  %v296 = vpack.c.b16 %v236, %v231
  %v297 = vpack.c.b16 %v237, %v232
  %v298 = vpack.c.b16 %v243, %v238
  %v299 = vpack.c.b16 %v244, %v239
  %v300 = vpack.c.b16 %v245, %v240
  %v301 = vpack.c.b16 %v246, %v241
  %v302 = vpack.c.b16 %v247, %v242
  %v303 = vpack.c.b16 %v253, %v248
  %v304 = vpack.c.b16 %v254, %v249
  %v305 = vpack.c.b16 %v255, %v250
  %v306 = vpack.c.b16 %v256, %v251
  %v307 = vpack.c.b16 %v257, %v252
  %v308 = vpack.c.b16 %v263, %v258
  %v309 = vpack.c.b16 %v264, %v259
  %v310 = vpack.c.b16 %v265, %v260
  %v311 = vpack.c.b16 %v266, %v261
  %v312 = vpack.c.b16 %v267, %v262
  %v313 = vpack.c.b16 %v273, %v268
  %v314 = vpack.c.b16 %v274, %v269
  %v315 = vpack.c.b16 %v275, %v270
  %v316 = vpack.c.b16 %v276, %v271
  %v317 = vpack.c.b16 %v277, %v272
  %v438 = vunpack.c.l.b16 %v63
  %v439 = vunpack.c.l.b16 %v64
  %v440 = vunpack.c.l.b16 %v65
  %v441 = vunpack.c.l.b16 %v66
  %v442 = vunpack.c.l.b16 %v67
  %v443 = vunpack.c.l.b16 %v68
  %v444 = vunpack.c.l.b16 %v69
  %v445 = vunpack.c.l.b16 %v70
  %v446 = vunpack.c.l.b16 %v71
  %v447 = vunpack.c.l.b16 %v72
  %v448 = vunpack.c.l.b16 %v73
  %v449 = vunpack.c.l.b16 %v74
  %v450 = vunpack.c.l.b16 %v75
  %v451 = vunpack.c.l.b16 %v76
  %v452 = vunpack.c.l.b16 %v77
  %v453 = vunpack.c.l.b16 %v78
  %v454 = vunpack.c.l.b16 %v79
  %v455 = vunpack.c.l.b16 %v80
  %v456 = vunpack.c.l.b16 %v81
  %v457 = vunpack.c.l.b16 %v82
  %v458 = vunpack.c.l.b16 %v83
  %v459 = vunpack.c.l.b16 %v84
  %v460 = vunpack.c.l.b16 %v85
  %v461 = vunpack.c.l.b16 %v86
  %v462 = vunpack.c.l.b16 %v87
  %v463 = vunpack.c.l.b16 %v88
  %v464 = vunpack.c.l.b16 %v89
  %v465 = vunpack.c.l.b16 %v90
  %v466 = vunpack.c.l.b16 %v91
  %v467 = vunpack.c.l.b16 %v92
  %v468 = vunpack.c.l.b16 %v93
  %v469 = vunpack.c.l.b16 %v94
  %v470 = vunpack.c.l.b16 %v95
  %v471 = vunpack.c.l.b16 %v96
  %v472 = vunpack.c.l.b16 %v97
  %v473 = vunpack.c.l.b16 %v98
  %v474 = vunpack.c.l.b16 %v99
  %v475 = vunpack.c.l.b16 %v100
  %v476 = vunpack.c.l.b16 %v101
  %v477 = vunpack.c.l.b16 %v102
  %v478 = vunpack.c.l.b16 %v103
  %v479 = vunpack.c.l.b16 %v104
  %v480 = vunpack.c.l.b16 %v105
  %v481 = vunpack.c.l.b16 %v106
  %v482 = vunpack.c.l.b16 %v107
  %v483 = vunpack.c.l.b16 %v108
  %v484 = vunpack.c.l.b16 %v109
  %v485 = vunpack.c.l.b16 %v110
  %v486 = vunpack.c.l.b16 %v111
  %v487 = vunpack.c.l.b16 %v112
  %v488 = vunpack.c.l.b16 %v113
  %v489 = vunpack.c.l.b16 %v114
  %v490 = vunpack.c.l.b16 %v115
  %v491 = vunpack.c.l.b16 %v116
  %v492 = vunpack.c.l.b16 %v117
  %v493 = vunpack.c.l.b16 %v118
  %v494 = vunpack.c.l.b16 %v119
  %v495 = vunpack.c.l.b16 %v120
  %v496 = vunpack.c.l.b16 %v121
  %v497 = vunpack.c.l.b16 %v122
  %v498 = vunpack.c.l.b16 %v123
  %v499 = vunpack.c.l.b16 %v124
  %v500 = vunpack.c.l.b16 %v125
  %v501 = vunpack.c.l.b16 %v126
  %v502 = vunpack.c.l.b16 %v127
  %v503 = vunpack.c.l.b16 %v128
  %v504 = vunpack.c.l.b16 %v129
  %v505 = vunpack.c.l.b16 %v130
  %v506 = vunpack.c.l.b16 %v131
  %v507 = vunpack.c.l.b16 %v132
  %v508 = vunpack.c.l.b16 %v133
  %v509 = vunpack.c.l.b16 %v134
  %v510 = vunpack.c.l.b16 %v135
  %v511 = vunpack.c.l.b16 %v136
  %v512 = vunpack.c.l.b16 %v137
  %v513 = vunpack.c.l.b16 %v138
  %v514 = vunpack.c.l.b16 %v139
  %v515 = vunpack.c.l.b16 %v140
  %v516 = vunpack.c.l.b16 %v141
  %v517 = vunpack.c.l.b16 %v142
  %v518 = vpack.c.b16 %v439, %v438
  %v519 = vpack.c.b16 %v441, %v440
  %v520 = vpack.c.b16 %v443, %v442
  %v521 = vpack.c.b16 %v445, %v444
  %v522 = vpack.c.b16 %v447, %v446
  %v523 = vpack.c.b16 %v449, %v448
  %v524 = vpack.c.b16 %v451, %v450
  %v525 = vpack.c.b16 %v453, %v452
  %v526 = vpack.c.b16 %v455, %v454
  %v527 = vpack.c.b16 %v457, %v456
  %v528 = vpack.c.b16 %v459, %v458
  %v529 = vpack.c.b16 %v461, %v460
  %v530 = vpack.c.b16 %v463, %v462
  %v531 = vpack.c.b16 %v465, %v464
  %v532 = vpack.c.b16 %v467, %v466
  %v533 = vpack.c.b16 %v469, %v468
  %v534 = vpack.c.b16 %v471, %v470
  %v535 = vpack.c.b16 %v473, %v472
  %v536 = vpack.c.b16 %v475, %v474
  %v537 = vpack.c.b16 %v477, %v476
  %v538 = vpack.c.b16 %v479, %v478
  %v539 = vpack.c.b16 %v481, %v480
  %v540 = vpack.c.b16 %v483, %v482
  %v541 = vpack.c.b16 %v485, %v484
  %v542 = vpack.c.b16 %v487, %v486
  %v543 = vpack.c.b16 %v489, %v488
  %v544 = vpack.c.b16 %v491, %v490
  %v545 = vpack.c.b16 %v493, %v492
  %v546 = vpack.c.b16 %v495, %v494
  %v547 = vpack.c.b16 %v497, %v496
  %v548 = vpack.c.b16 %v499, %v498
  %v549 = vpack.c.b16 %v501, %v500
  %v550 = vpack.c.b16 %v503, %v502
  %v551 = vpack.c.b16 %v505, %v504
  %v552 = vpack.c.b16 %v507, %v506
  %v553 = vpack.c.b16 %v509, %v508
  %v554 = vpack.c.b16 %v511, %v510
  %v555 = vpack.c.b16 %v513, %v512
  %v556 = vpack.c.b16 %v515, %v514
  %v557 = vpack.c.b16 %v517, %v516
  %598 = vmatprep.subr.bf16.mxu0 0
  %599 = vmatpush1.bf16.msra.mxu0 %v518
  %600 = vmatprep.subr.bf16.mxu0 0
  %601 = vmatpush1.bf16.msra.mxu0 %v519
  %602 = vmatprep.subr.bf16.mxu0 0
  %603 = vmatpush1.bf16.msra.mxu0 %v520
  %604 = vmatprep.subr.bf16.mxu0 0
  %605 = vmatpush1.bf16.msra.mxu0 %v521
  %606 = vmatprep.subr.bf16.mxu0 0
  %607 = vmatpush1.bf16.msra.mxu0 %v522
  %608 = vmatprep.subr.bf16.mxu0 0
  %609 = vmatpush1.bf16.msra.mxu0 %v523
  %610 = vmatprep.subr.bf16.mxu0 0
  %611 = vmatpush1.bf16.msra.mxu0 %v524
  %612 = vmatprep.subr.bf16.mxu0 0
  %613 = vmatpush1.bf16.msra.mxu0 %v525
  %614 = vmatprep.subr.bf16.mxu0 0
  %615 = vmatpush1.bf16.msra.mxu0 %v526
  %616 = vmatprep.subr.bf16.mxu0 0
  %617 = vmatpush1.bf16.msra.mxu0 %v527
  %618 = vmatprep.subr.bf16.mxu0 0
  %619 = vmatpush1.bf16.msra.mxu0 %v528
  %620 = vmatprep.subr.bf16.mxu0 0
  %621 = vmatpush1.bf16.msra.mxu0 %v529
  %622 = vmatprep.subr.bf16.mxu0 0
  %623 = vmatpush1.bf16.msra.mxu0 %v530
  %624 = vmatprep.subr.bf16.mxu0 0
  %625 = vmatpush1.bf16.msra.mxu0 %v531
  %626 = vmatprep.subr.bf16.mxu0 0
  %627 = vmatpush1.bf16.msra.mxu0 %v532
  %628 = vmatprep.subr.bf16.mxu0 0
  %629 = vmatpush1.bf16.msra.mxu0 %v533
  %630 = vmatprep.mubr.bf16.mxu0 %v279
  %631 = vmatmul.mubr.bf16.gmra.mrb[0].mxu0 %v278
  %v632 = vpop.f32.mrb[0].mxu0
  %v633 = vadd.f32 %v148, %v632
  %v634 = vpop.f32.mrb[0].mxu0
  %v635 = vpop.f32.mrb[0].mxu0
  %v636 = vadd.f32 %v148, %v635
  %v637 = vpop.f32.mrb[0].mxu0
  %638 = vmatprep.mubr.bf16.mxu0 %v284
  %639 = vmatmul.mubr.bf16.gmra.mrb[0].mxu0 %v283
  %v640 = vpop.f32.mrb[0].mxu0
  %v641 = vadd.f32 %v148, %v640
  %v642 = vpop.f32.mrb[0].mxu0
  %v643 = vpop.f32.mrb[0].mxu0
  %v644 = vadd.f32 %v148, %v643
  %v645 = vpop.f32.mrb[0].mxu0
  %646 = vmatprep.mubr.bf16.mxu0 %v289
  %647 = vmatmul.mubr.bf16.gmra.mrb[0].mxu0 %v288
  %v648 = vpop.f32.mrb[0].mxu0
  %v649 = vadd.f32 %v148, %v648
  %v650 = vpop.f32.mrb[0].mxu0
  %v651 = vpop.f32.mrb[0].mxu0
  %v652 = vadd.f32 %v148, %v651
  %v653 = vpop.f32.mrb[0].mxu0
  %654 = vmatprep.mubr.bf16.mxu0 %v294
  %655 = vmatmul.mubr.bf16.gmra.mrb[0].mxu0 %v293
  %v656 = vpop.f32.mrb[0].mxu0
  %v657 = vadd.f32 %v148, %v656
  %v658 = vpop.f32.mrb[0].mxu0
  %v659 = vpop.f32.mrb[0].mxu0
  %v660 = vadd.f32 %v148, %v659
  %v661 = vpop.f32.mrb[0].mxu0
  %662 = vmatprep.mubr.bf16.mxu0 %v299
  %663 = vmatmul.mubr.bf16.gmra.mrb[0].mxu0 %v298
  %v664 = vpop.f32.mrb[0].mxu0
  %v665 = vadd.f32 %v148, %v664
  %v666 = vpop.f32.mrb[0].mxu0
  %v667 = vpop.f32.mrb[0].mxu0
  %v668 = vadd.f32 %v148, %v667
  %v669 = vpop.f32.mrb[0].mxu0
  %670 = vmatprep.mubr.bf16.mxu0 %v304
  %671 = vmatmul.mubr.bf16.gmra.mrb[0].mxu0 %v303
  %v672 = vpop.f32.mrb[0].mxu0
  %v673 = vadd.f32 %v148, %v672
  %v674 = vpop.f32.mrb[0].mxu0
  %v675 = vpop.f32.mrb[0].mxu0
  %v676 = vadd.f32 %v148, %v675
  %v677 = vpop.f32.mrb[0].mxu0
  %678 = vmatprep.mubr.bf16.mxu0 %v309
  %679 = vmatmul.mubr.bf16.gmra.mrb[0].mxu0 %v308
  %v680 = vpop.f32.mrb[0].mxu0
  %v681 = vadd.f32 %v148, %v680
  %v682 = vpop.f32.mrb[0].mxu0
  %v683 = vpop.f32.mrb[0].mxu0
  %v684 = vadd.f32 %v148, %v683
  %v685 = vpop.f32.mrb[0].mxu0
  %686 = vmatprep.mubr.bf16.mxu0 %v314
  %687 = vmatmul.mubr.bf16.gmra.mrb[0].mxu0 %v313
  %v688 = vpop.f32.mrb[0].mxu0
  %v689 = vadd.f32 %v148, %v688
  %v690 = vpop.f32.mrb[0].mxu0
  %v691 = vpop.f32.mrb[0].mxu0
  %v692 = vadd.f32 %v148, %v691
  %v693 = vpop.f32.mrb[0].mxu0
  %694 = vdwg.mxu0
  %695 = vmatprep.subr.bf16.mxu0 0
  %696 = vmatpush1.bf16.msra.mxu0 %v534
  %697 = vmatprep.subr.bf16.mxu0 0
  %698 = vmatpush1.bf16.msra.mxu0 %v535
  %699 = vmatprep.subr.bf16.mxu0 0
  %700 = vmatpush1.bf16.msra.mxu0 %v536
  %701 = vmatprep.subr.bf16.mxu0 0
  %702 = vmatpush1.bf16.msra.mxu0 %v537
  %703 = vmatprep.subr.bf16.mxu0 0
  %704 = vmatpush1.bf16.msra.mxu0 %v538
  %705 = vmatprep.subr.bf16.mxu0 0
  %706 = vmatpush1.bf16.msra.mxu0 %v539
  %707 = vmatprep.subr.bf16.mxu0 0
  %708 = vmatpush1.bf16.msra.mxu0 %v540
  %709 = vmatprep.subr.bf16.mxu0 0
  %710 = vmatpush1.bf16.msra.mxu0 %v541
  %711 = vmatprep.subr.bf16.mxu0 0
  %712 = vmatpush1.bf16.msra.mxu0 %v542
  %713 = vmatprep.subr.bf16.mxu0 0
  %714 = vmatpush1.bf16.msra.mxu0 %v543
  %715 = vmatprep.subr.bf16.mxu0 0
  %716 = vmatpush1.bf16.msra.mxu0 %v544
  %717 = vmatprep.subr.bf16.mxu0 0
  %718 = vmatpush1.bf16.msra.mxu0 %v545
  %719 = vmatprep.subr.bf16.mxu0 0
  %720 = vmatpush1.bf16.msra.mxu0 %v546
  %721 = vmatprep.subr.bf16.mxu0 0
  %722 = vmatpush1.bf16.msra.mxu0 %v547
  %723 = vmatprep.subr.bf16.mxu0 0
  %724 = vmatpush1.bf16.msra.mxu0 %v548
  %725 = vmatprep.subr.bf16.mxu0 0
  %726 = vmatpush1.bf16.msra.mxu0 %v549
  %727 = vmatprep.mubr.bf16.mxu0 %v281
  %728 = vmatmul.mubr.bf16.gmra.mrb[0].mxu0 %v280
  %v729 = vpop.f32.mrb[0].mxu0
  %v730 = vadd.f32 %v633, %v729
  %v731 = vpop.f32.mrb[0].mxu0
  %v732 = vpop.f32.mrb[0].mxu0
  %v733 = vadd.f32 %v636, %v732
  %v734 = vpop.f32.mrb[0].mxu0
  %735 = vmatprep.mubr.bf16.mxu0 %v286
  %736 = vmatmul.mubr.bf16.gmra.mrb[0].mxu0 %v285
  %v737 = vpop.f32.mrb[0].mxu0
  %v738 = vadd.f32 %v641, %v737
  %v739 = vpop.f32.mrb[0].mxu0
  %v740 = vpop.f32.mrb[0].mxu0
  %v741 = vadd.f32 %v644, %v740
  %v742 = vpop.f32.mrb[0].mxu0
  %743 = vmatprep.mubr.bf16.mxu0 %v291
  %744 = vmatmul.mubr.bf16.gmra.mrb[0].mxu0 %v290
  %v745 = vpop.f32.mrb[0].mxu0
  %v746 = vadd.f32 %v649, %v745
  %v747 = vpop.f32.mrb[0].mxu0
  %v748 = vpop.f32.mrb[0].mxu0
  %v749 = vadd.f32 %v652, %v748
  %v750 = vpop.f32.mrb[0].mxu0
  %751 = vmatprep.mubr.bf16.mxu0 %v296
  %752 = vmatmul.mubr.bf16.gmra.mrb[0].mxu0 %v295
  %v753 = vpop.f32.mrb[0].mxu0
  %v754 = vadd.f32 %v657, %v753
  %v755 = vpop.f32.mrb[0].mxu0
  %v756 = vpop.f32.mrb[0].mxu0
  %v757 = vadd.f32 %v660, %v756
  %v758 = vpop.f32.mrb[0].mxu0
  %759 = vmatprep.mubr.bf16.mxu0 %v301
  %760 = vmatmul.mubr.bf16.gmra.mrb[0].mxu0 %v300
  %v761 = vpop.f32.mrb[0].mxu0
  %v762 = vadd.f32 %v665, %v761
  %v763 = vpop.f32.mrb[0].mxu0
  %v764 = vpop.f32.mrb[0].mxu0
  %v765 = vadd.f32 %v668, %v764
  %v766 = vpop.f32.mrb[0].mxu0
  %767 = vmatprep.mubr.bf16.mxu0 %v306
  %768 = vmatmul.mubr.bf16.gmra.mrb[0].mxu0 %v305
  %v769 = vpop.f32.mrb[0].mxu0
  %v770 = vadd.f32 %v673, %v769
  %v771 = vpop.f32.mrb[0].mxu0
  %v772 = vpop.f32.mrb[0].mxu0
  %v773 = vadd.f32 %v676, %v772
  %v774 = vpop.f32.mrb[0].mxu0
  %775 = vmatprep.mubr.bf16.mxu0 %v311
  %776 = vmatmul.mubr.bf16.gmra.mrb[0].mxu0 %v310
  %v777 = vpop.f32.mrb[0].mxu0
  %v778 = vadd.f32 %v681, %v777
  %v779 = vpop.f32.mrb[0].mxu0
  %v780 = vpop.f32.mrb[0].mxu0
  %v781 = vadd.f32 %v684, %v780
  %v782 = vpop.f32.mrb[0].mxu0
  %783 = vmatprep.mubr.bf16.mxu0 %v316
  %784 = vmatmul.mubr.bf16.gmra.mrb[0].mxu0 %v315
  %v785 = vpop.f32.mrb[0].mxu0
  %v786 = vadd.f32 %v689, %v785
  %v787 = vpop.f32.mrb[0].mxu0
  %v788 = vpop.f32.mrb[0].mxu0
  %v789 = vadd.f32 %v692, %v788
  %v790 = vpop.f32.mrb[0].mxu0
  %791 = vdwg.mxu0
  %792 = vmatprep.subr.bf16.mxu0 0
  %793 = vmatpush1.bf16.msra.mxu0 %v550
  %794 = vmatprep.subr.bf16.mxu0 0
  %795 = vmatpush1.bf16.msra.mxu0 %v551
  %796 = vmatprep.subr.bf16.mxu0 0
  %797 = vmatpush1.bf16.msra.mxu0 %v552
  %798 = vmatprep.subr.bf16.mxu0 0
  %799 = vmatpush1.bf16.msra.mxu0 %v553
  %800 = vmatprep.subr.bf16.mxu0 0
  %801 = vmatpush1.bf16.msra.mxu0 %v554
  %802 = vmatprep.subr.bf16.mxu0 0
  %803 = vmatpush1.bf16.msra.mxu0 %v555
  %804 = vmatprep.subr.bf16.mxu0 0
  %805 = vmatpush1.bf16.msra.mxu0 %v556
  %806 = vmatprep.subr.bf16.mxu0 0
  %807 = vmatpush1.bf16.msra.mxu0 %v557
  %808 = vmatprep.subr.bf16.mxu0 0
  %809 = vmatpush1.bf16.msra.mxu0 0
  %810 = vmatprep.subr.bf16.mxu0 0
  %811 = vmatpush1.bf16.msra.mxu0 0
  %812 = vmatprep.subr.bf16.mxu0 0
  %813 = vmatpush1.bf16.msra.mxu0 0
  %814 = vmatprep.subr.bf16.mxu0 0
  %815 = vmatpush1.bf16.msra.mxu0 0
  %816 = vmatprep.subr.bf16.mxu0 0
  %817 = vmatpush1.bf16.msra.mxu0 0
  %818 = vmatprep.subr.bf16.mxu0 0
  %819 = vmatpush1.bf16.msra.mxu0 0
  %820 = vmatprep.subr.bf16.mxu0 0
  %821 = vmatpush1.bf16.msra.mxu0 0
  %822 = vmatprep.subr.bf16.mxu0 0
  %823 = vmatpush1.bf16.msra.mxu0 0
  %824 = vmatprep.mubr.bf16.mxu0 0
  %825 = vmatmul.mubr.bf16.gmra.mrb[0].mxu0 %v282
  %v826 = vpop.f32.mrb[0].mxu0
  %v827 = vadd.f32 %v730, %v826
  %v828 = vpop.f32.mrb[0].mxu0
  %v829 = vpop.f32.mrb[0].mxu0
  %v830 = vadd.f32 %v733, %v829
  %v831 = vpop.f32.mrb[0].mxu0
  %832 = vmatprep.mubr.bf16.mxu0 0
  %833 = vmatmul.mubr.bf16.gmra.mrb[0].mxu0 %v287
  %v834 = vpop.f32.mrb[0].mxu0
  %v835 = vadd.f32 %v738, %v834
  %v836 = vpop.f32.mrb[0].mxu0
  %v837 = vpop.f32.mrb[0].mxu0
  %v838 = vadd.f32 %v741, %v837
  %v839 = vpop.f32.mrb[0].mxu0
  %840 = vmatprep.mubr.bf16.mxu0 0
  %841 = vmatmul.mubr.bf16.gmra.mrb[0].mxu0 %v292
  %v842 = vpop.f32.mrb[0].mxu0
  %v843 = vadd.f32 %v746, %v842
  %v844 = vpop.f32.mrb[0].mxu0
  %v845 = vpop.f32.mrb[0].mxu0
  %v846 = vadd.f32 %v749, %v845
  %v847 = vpop.f32.mrb[0].mxu0
  %848 = vmatprep.mubr.bf16.mxu0 0
  %849 = vmatmul.mubr.bf16.gmra.mrb[0].mxu0 %v297
  %v850 = vpop.f32.mrb[0].mxu0
  %v851 = vadd.f32 %v754, %v850
  %v852 = vpop.f32.mrb[0].mxu0
  %v853 = vpop.f32.mrb[0].mxu0
  %v854 = vadd.f32 %v757, %v853
  %v855 = vpop.f32.mrb[0].mxu0
  %856 = vmatprep.mubr.bf16.mxu0 0
  %857 = vmatmul.mubr.bf16.gmra.mrb[0].mxu0 %v302
  %v858 = vpop.f32.mrb[0].mxu0
  %v859 = vadd.f32 %v762, %v858
  %v860 = vpop.f32.mrb[0].mxu0
  %v861 = vpop.f32.mrb[0].mxu0
  %v862 = vadd.f32 %v765, %v861
  %v863 = vpop.f32.mrb[0].mxu0
  %864 = vmatprep.mubr.bf16.mxu0 0
  %865 = vmatmul.mubr.bf16.gmra.mrb[0].mxu0 %v307
  %v866 = vpop.f32.mrb[0].mxu0
  %v867 = vadd.f32 %v770, %v866
  %v868 = vpop.f32.mrb[0].mxu0
  %v869 = vpop.f32.mrb[0].mxu0
  %v870 = vadd.f32 %v773, %v869
  %v871 = vpop.f32.mrb[0].mxu0
  %872 = vmatprep.mubr.bf16.mxu0 0
  %873 = vmatmul.mubr.bf16.gmra.mrb[0].mxu0 %v312
  %v874 = vpop.f32.mrb[0].mxu0
  %v875 = vadd.f32 %v778, %v874
  %v876 = vpop.f32.mrb[0].mxu0
  %v877 = vpop.f32.mrb[0].mxu0
  %v878 = vadd.f32 %v781, %v877
  %v879 = vpop.f32.mrb[0].mxu0
  %880 = vmatprep.mubr.bf16.mxu0 0
  %881 = vmatmul.mubr.bf16.gmra.mrb[0].mxu0 %v317
  %v882 = vpop.f32.mrb[0].mxu0
  %v883 = vadd.f32 %v786, %v882
  %v884 = vpop.f32.mrb[0].mxu0
  %v885 = vpop.f32.mrb[0].mxu0
  %v886 = vadd.f32 %v789, %v885
  %v887 = vpop.f32.mrb[0].mxu0
  %888 = vdwg.mxu0
  %vm889 = vcmp.gt.f32.partialorder %v827, 0.0
  %vm890 = vcmp.gt.f32.partialorder %v830, 0.0
  %vm891 = vcmp.gt.f32.partialorder %v835, 0.0
  %vm892 = vcmp.gt.f32.partialorder %v838, 0.0
  %vm893 = vcmp.gt.f32.partialorder %v843, 0.0
  %vm894 = vcmp.gt.f32.partialorder %v846, 0.0
  %vm895 = vcmp.gt.f32.partialorder %v851, 0.0
  %vm896 = vcmp.gt.f32.partialorder %v854, 0.0
  %vm897 = vcmp.gt.f32.partialorder %v859, 0.0
  %vm898 = vcmp.gt.f32.partialorder %v862, 0.0
  %vm899 = vcmp.gt.f32.partialorder %v867, 0.0
  %vm900 = vcmp.gt.f32.partialorder %v870, 0.0
  %vm901 = vcmp.gt.f32.partialorder %v875, 0.0
  %vm902 = vcmp.gt.f32.partialorder %v878, 0.0
  %vm903 = vcmp.gt.f32.partialorder %v883, 0.0
  %vm904 = vcmp.gt.f32.partialorder %v886, 0.0
  %v905 = vmul.f32 %v827, 0.25
  %v906 = vmul.f32 %v830, 0.25
  %v907 = vmul.f32 %v835, 0.25
  %v908 = vmul.f32 %v838, 0.25
  %v909 = vmul.f32 %v843, 0.25
  %v910 = vmul.f32 %v846, 0.25
  %v911 = vmul.f32 %v851, 0.25
  %v912 = vmul.f32 %v854, 0.25
  %v913 = vmul.f32 %v859, 0.25
  %v914 = vmul.f32 %v862, 0.25
  %v915 = vmul.f32 %v867, 0.25
  %v916 = vmul.f32 %v870, 0.25
  %v917 = vmul.f32 %v875, 0.25
  %v918 = vmul.f32 %v878, 0.25
  %v919 = vmul.f32 %v883, 0.25
  %v920 = vmul.f32 %v886, 0.25
  %v921 = vsel %vm889, %v827, %v905
  %v922 = vsel %vm890, %v830, %v906
  %v923 = vsel %vm891, %v835, %v907
  %v924 = vsel %vm892, %v838, %v908
  %v925 = vsel %vm893, %v843, %v909
  %v926 = vsel %vm894, %v846, %v910
  %v927 = vsel %vm895, %v851, %v911
  %v928 = vsel %vm896, %v854, %v912
  %v929 = vsel %vm897, %v859, %v913
  %v930 = vsel %vm898, %v862, %v914
  %v931 = vsel %vm899, %v867, %v915
  %v932 = vsel %vm900, %v870, %v916
  %v933 = vsel %vm901, %v875, %v917
  %v934 = vsel %vm902, %v878, %v918
  %v935 = vsel %vm903, %v883, %v919
  %v936 = vsel %vm904, %v886, %v920
  %v937 = vpack.c.bf16 %v922, %v921
  %v938 = vpack.c.bf16 %v924, %v923
  %v939 = vpack.c.bf16 %v926, %v925
  %v940 = vpack.c.bf16 %v928, %v927
  %v941 = vpack.c.bf16 %v930, %v929
  %v942 = vpack.c.bf16 %v932, %v931
  %v943 = vpack.c.bf16 %v934, %v933
  %v944 = vpack.c.bf16 %v936, %v935
  %v953 = vunpack.c.l.b16 %v937
  %v954 = vunpack.c.h.b16 %v937
  %v955 = vunpack.c.l.b16 %v938
  %v956 = vunpack.c.h.b16 %v938
  %v957 = vunpack.c.l.b16 %v939
  %v958 = vunpack.c.h.b16 %v939
  %v959 = vunpack.c.l.b16 %v940
  %v960 = vunpack.c.h.b16 %v940
  %v961 = vunpack.c.l.b16 %v941
  %v962 = vunpack.c.h.b16 %v941
  %v963 = vunpack.c.l.b16 %v942
  %v964 = vunpack.c.h.b16 %v942
  %v965 = vunpack.c.l.b16 %v943
  %v966 = vunpack.c.h.b16 %v943
  %v967 = vunpack.c.l.b16 %v944
  %v968 = vunpack.c.h.b16 %v944
  %v969 = vpack.c.b16 %v953, %v953
  %v970 = vpack.c.b16 %v954, %v954
  %v971 = vpack.c.b16 %v955, %v955
  %v972 = vpack.c.b16 %v956, %v956
  %v973 = vpack.c.b16 %v957, %v957
  %v974 = vpack.c.b16 %v958, %v958
  %v975 = vpack.c.b16 %v959, %v959
  %v976 = vpack.c.b16 %v960, %v960
  %v977 = vpack.c.b16 %v961, %v961
  %v978 = vpack.c.b16 %v962, %v962
  %v979 = vpack.c.b16 %v963, %v963
  %v980 = vpack.c.b16 %v964, %v964
  %v981 = vpack.c.b16 %v965, %v965
  %v982 = vpack.c.b16 %v966, %v966
  %v983 = vpack.c.b16 %v967, %v967
  %v984 = vpack.c.b16 %v968, %v968
  %vm1001 = vcmask 125952
  %1002 = vst.msk [vmem:[%s3] sm:$0xf] %vm1001, %v969
  %1003 = vst.msk [vmem:[%s3 + $0x4] sm:$0xf] %vm1001, %v970
  %1004 = vst.msk [vmem:[%s3 + $0x8] sm:$0xf] %vm1001, %v971
  %1005 = vst.msk [vmem:[%s3 + $0xc] sm:$0xf] %vm1001, %v972
  %1006 = vst.msk [vmem:[%s3 + $0x10] sm:$0xf] %vm1001, %v973
  %1007 = vst.msk [vmem:[%s3 + $0x14] sm:$0xf] %vm1001, %v974
  %1008 = vst.msk [vmem:[%s3 + $0x18] sm:$0xf] %vm1001, %v975
  %1009 = vst.msk [vmem:[%s3 + $0x1c] sm:$0xf] %vm1001, %v976
  %1010 = vst.msk [vmem:[%s3 + $0x20] sm:$0xf] %vm1001, %v977
  %1011 = vst.msk [vmem:[%s3 + $0x24] sm:$0xf] %vm1001, %v978
  %1012 = vst.msk [vmem:[%s3 + $0x28] sm:$0xf] %vm1001, %v979
  %1013 = vst.msk [vmem:[%s3 + $0x2c] sm:$0xf] %vm1001, %v980
  %1014 = vst.msk [vmem:[%s3 + $0x30] sm:$0xf] %vm1001, %v981
  %1015 = vst.msk [vmem:[%s3 + $0x34] sm:$0xf] %vm1001, %v982
  %1016 = vst.msk [vmem:[%s3 + $0x38] sm:$0xf] %vm1001, %v983
  %1017 = vst.msk [vmem:[%s3 + $0x3c] sm:$0xf] %vm1001, %v984
  // Predicated region
  $region14: #{tounet_fwd.189} parent=0 // pred_check
    _
  $region15: #{tounet_fwd.189} parent=0 // pred_check_branch
    %1019 = sbr.rel (0) target = $region17
  $region16: #{tounet_fwd.189} parent=0 // pred_region
    _
  $region17: #{tounet_fwd.189} parent=0 // pred_fallthru
    _
  // Predicated region
  $region18: #{tounet_fwd.189} parent=0 // pred_check
    _
  $region19: #{tounet_fwd.189} parent=0 // pred_check_branch
    %1021 = sbr.rel (0) target = $region21
  $region20: #{tounet_fwd.189} parent=0 // pred_region
    _
  $region21: #{tounet_fwd.189} parent=0 // pred_fallthru
    _

// kernel: sub.27
$region0: #{sub.27}
  #allocation0 [shape = 's32[1]{0}', space=sflag, size = 0x4, scoped, tag = 'scoped memory for sub.27']
  %s0 = inlined_call_operand.vmem [shape: bf16[256,16], index: 0, kind: input, shape index: {}]
  %s1 = inlined_call_operand.vmem [shape: bf16[256,16], index: 1, kind: input, shape index: {}]
  %s2 = inlined_call_operand.vmem [shape: bf16[256,16], index: 2, kind: output, shape index: {}]
  %v3 = vld [vmem:[%s0] sm:$0xf]
  %v4 = vunpack.c.l.bf16 %v3
  %v5 = vunpack.c.h.bf16 %v3
  %v6 = vld [vmem:[%s1] sm:$0xf]
  %v7 = vunpack.c.l.bf16 %v6
  %v8 = vunpack.c.h.bf16 %v6
  %9 = xla_tuple %v4, %v7
  %10 = xla_tuple %9
  %v11 = vsub.f32 %v4, %v7
  %12 = xla_tuple %v11
  %v13 = vpack.c.bf16 0.0, %v11
  %14 = vst [vmem:[%s2] sm:$0xf] %v13
  %s15 = scalar_lea.vmem %s0, 4
  %v16 = vld [vmem:[%s15] sm:$0xf]
  %v17 = vunpack.c.l.bf16 %v16
  %v18 = vunpack.c.h.bf16 %v16
  %s19 = scalar_lea.vmem %s1, 4
  %v20 = vld [vmem:[%s19] sm:$0xf]
  %v21 = vunpack.c.l.bf16 %v20
  %v22 = vunpack.c.h.bf16 %v20
  %23 = xla_tuple %v17, %v21
  %24 = xla_tuple %23
  %v25 = vsub.f32 %v17, %v21
  %26 = xla_tuple %v25
  %s27 = scalar_lea.vmem %s2, 4
  %v28 = vpack.c.bf16 0.0, %v25
  %29 = vst [vmem:[%s27] sm:$0xf] %v28
  %s30 = scalar_lea.vmem %s0, 8
  %v31 = vld [vmem:[%s30] sm:$0xf]
  %v32 = vunpack.c.l.bf16 %v31
  %v33 = vunpack.c.h.bf16 %v31
  %s34 = scalar_lea.vmem %s1, 8
  %v35 = vld [vmem:[%s34] sm:$0xf]
  %v36 = vunpack.c.l.bf16 %v35
  %v37 = vunpack.c.h.bf16 %v35
  %38 = xla_tuple %v32, %v36
  %39 = xla_tuple %38
  %v40 = vsub.f32 %v32, %v36
  %41 = xla_tuple %v40
  %s42 = scalar_lea.vmem %s2, 8
  %v43 = vpack.c.bf16 0.0, %v40
  %44 = vst [vmem:[%s42] sm:$0xf] %v43
  %s45 = scalar_lea.vmem %s0, 12
  %v46 = vld [vmem:[%s45] sm:$0xf]
  %v47 = vunpack.c.l.bf16 %v46
  %v48 = vunpack.c.h.bf16 %v46
  %s49 = scalar_lea.vmem %s1, 12
  %v50 = vld [vmem:[%s49] sm:$0xf]
  %v51 = vunpack.c.l.bf16 %v50
  %v52 = vunpack.c.h.bf16 %v50
  %53 = xla_tuple %v47, %v51
  %54 = xla_tuple %53
  %v55 = vsub.f32 %v47, %v51
  %56 = xla_tuple %v55
  %s57 = scalar_lea.vmem %s2, 12
  %v58 = vpack.c.bf16 0.0, %v55
  %59 = vst [vmem:[%s57] sm:$0xf] %v58
  %s60 = scalar_lea.vmem %s0, 16
  %v61 = vld [vmem:[%s60] sm:$0xf]
  %v62 = vunpack.c.l.bf16 %v61
  %v63 = vunpack.c.h.bf16 %v61
  %s64 = scalar_lea.vmem %s1, 16
  %v65 = vld [vmem:[%s64] sm:$0xf]
  %v66 = vunpack.c.l.bf16 %v65
  %v67 = vunpack.c.h.bf16 %v65
  %68 = xla_tuple %v62, %v66
  %69 = xla_tuple %68
  %v70 = vsub.f32 %v62, %v66
  %71 = xla_tuple %v70
  %s72 = scalar_lea.vmem %s2, 16
  %v73 = vpack.c.bf16 0.0, %v70
  %74 = vst [vmem:[%s72] sm:$0xf] %v73
  %s75 = scalar_lea.vmem %s0, 20
  %v76 = vld [vmem:[%s75] sm:$0xf]
  %v77 = vunpack.c.l.bf16 %v76
  %v78 = vunpack.c.h.bf16 %v76
  %s79 = scalar_lea.vmem %s1, 20
  %v80 = vld [vmem:[%s79] sm:$0xf]
  %v81 = vunpack.c.l.bf16 %v80
  %v82 = vunpack.c.h.bf16 %v80
  %83 = xla_tuple %v77, %v81
  %84 = xla_tuple %83
  %v85 = vsub.f32 %v77, %v81
  %86 = xla_tuple %v85
  %s87 = scalar_lea.vmem %s2, 20
  %v88 = vpack.c.bf16 0.0, %v85
  %89 = vst [vmem:[%s87] sm:$0xf] %v88
  %s90 = scalar_lea.vmem %s0, 24
  %v91 = vld [vmem:[%s90] sm:$0xf]
  %v92 = vunpack.c.l.bf16 %v91
  %v93 = vunpack.c.h.bf16 %v91
  %s94 = scalar_lea.vmem %s1, 24
  %v95 = vld [vmem:[%s94] sm:$0xf]
  %v96 = vunpack.c.l.bf16 %v95
  %v97 = vunpack.c.h.bf16 %v95
  %98 = xla_tuple %v92, %v96
  %99 = xla_tuple %98
  %v100 = vsub.f32 %v92, %v96
  %101 = xla_tuple %v100
  %s102 = scalar_lea.vmem %s2, 24
  %v103 = vpack.c.bf16 0.0, %v100
  %104 = vst [vmem:[%s102] sm:$0xf] %v103
  %s105 = scalar_lea.vmem %s0, 28
  %v106 = vld [vmem:[%s105] sm:$0xf]
  %v107 = vunpack.c.l.bf16 %v106
  %v108 = vunpack.c.h.bf16 %v106
  %s109 = scalar_lea.vmem %s1, 28
  %v110 = vld [vmem:[%s109] sm:$0xf]
  %v111 = vunpack.c.l.bf16 %v110
  %v112 = vunpack.c.h.bf16 %v110
  %113 = xla_tuple %v107, %v111
  %114 = xla_tuple %113
  %v115 = vsub.f32 %v107, %v111
  %116 = xla_tuple %v115
  %s117 = scalar_lea.vmem %s2, 28
  %v118 = vpack.c.bf16 0.0, %v115
  %119 = vst [vmem:[%s117] sm:$0xf] %v118
  %s120 = scalar_lea.vmem %s0, 32
  %v121 = vld [vmem:[%s120] sm:$0xf]
  %v122 = vunpack.c.l.bf16 %v121
  %v123 = vunpack.c.h.bf16 %v121
  %s124 = scalar_lea.vmem %s1, 32
  %v125 = vld [vmem:[%s124] sm:$0xf]
  %v126 = vunpack.c.l.bf16 %v125
  %v127 = vunpack.c.h.bf16 %v125
  %128 = xla_tuple %v122, %v126
  %129 = xla_tuple %128
  %v130 = vsub.f32 %v122, %v126
  %131 = xla_tuple %v130
  %s132 = scalar_lea.vmem %s2, 32
  %v133 = vpack.c.bf16 0.0, %v130
  %134 = vst [vmem:[%s132] sm:$0xf] %v133
  %s135 = scalar_lea.vmem %s0, 36
  %v136 = vld [vmem:[%s135] sm:$0xf]
  %v137 = vunpack.c.l.bf16 %v136
  %v138 = vunpack.c.h.bf16 %v136
  %s139 = scalar_lea.vmem %s1, 36
  %v140 = vld [vmem:[%s139] sm:$0xf]
  %v141 = vunpack.c.l.bf16 %v140
  %v142 = vunpack.c.h.bf16 %v140
  %143 = xla_tuple %v137, %v141
  %144 = xla_tuple %143
  %v145 = vsub.f32 %v137, %v141
  %146 = xla_tuple %v145
  %s147 = scalar_lea.vmem %s2, 36
  %v148 = vpack.c.bf16 0.0, %v145
  %149 = vst [vmem:[%s147] sm:$0xf] %v148
  %s150 = scalar_lea.vmem %s0, 40
  %v151 = vld [vmem:[%s150] sm:$0xf]
  %v152 = vunpack.c.l.bf16 %v151
  %v153 = vunpack.c.h.bf16 %v151
  %s154 = scalar_lea.vmem %s1, 40
  %v155 = vld [vmem:[%s154] sm:$0xf]
  %v156 = vunpack.c.l.bf16 %v155
  %v157 = vunpack.c.h.bf16 %v155
  %158 = xla_tuple %v152, %v156
  %159 = xla_tuple %158
  %v160 = vsub.f32 %v152, %v156
  %161 = xla_tuple %v160
  %s162 = scalar_lea.vmem %s2, 40
  %v163 = vpack.c.bf16 0.0, %v160
  %164 = vst [vmem:[%s162] sm:$0xf] %v163
  %s165 = scalar_lea.vmem %s0, 44
  %v166 = vld [vmem:[%s165] sm:$0xf]
  %v167 = vunpack.c.l.bf16 %v166
  %v168 = vunpack.c.h.bf16 %v166
  %s169 = scalar_lea.vmem %s1, 44
  %v170 = vld [vmem:[%s169] sm:$0xf]
  %v171 = vunpack.c.l.bf16 %v170
  %v172 = vunpack.c.h.bf16 %v170
  %173 = xla_tuple %v167, %v171
  %174 = xla_tuple %173
  %v175 = vsub.f32 %v167, %v171
  %176 = xla_tuple %v175
  %s177 = scalar_lea.vmem %s2, 44
  %v178 = vpack.c.bf16 0.0, %v175
  %179 = vst [vmem:[%s177] sm:$0xf] %v178
  %s180 = scalar_lea.vmem %s0, 48
  %v181 = vld [vmem:[%s180] sm:$0xf]
  %v182 = vunpack.c.l.bf16 %v181
  %v183 = vunpack.c.h.bf16 %v181
  %s184 = scalar_lea.vmem %s1, 48
  %v185 = vld [vmem:[%s184] sm:$0xf]
  %v186 = vunpack.c.l.bf16 %v185
  %v187 = vunpack.c.h.bf16 %v185
  %188 = xla_tuple %v182, %v186
  %189 = xla_tuple %188
  %v190 = vsub.f32 %v182, %v186
  %191 = xla_tuple %v190
  %s192 = scalar_lea.vmem %s2, 48
  %v193 = vpack.c.bf16 0.0, %v190
  %194 = vst [vmem:[%s192] sm:$0xf] %v193
  %s195 = scalar_lea.vmem %s0, 52
  %v196 = vld [vmem:[%s195] sm:$0xf]
  %v197 = vunpack.c.l.bf16 %v196
  %v198 = vunpack.c.h.bf16 %v196
  %s199 = scalar_lea.vmem %s1, 52
  %v200 = vld [vmem:[%s199] sm:$0xf]
  %v201 = vunpack.c.l.bf16 %v200
  %v202 = vunpack.c.h.bf16 %v200
  %203 = xla_tuple %v197, %v201
  %204 = xla_tuple %203
  %v205 = vsub.f32 %v197, %v201
  %206 = xla_tuple %v205
  %s207 = scalar_lea.vmem %s2, 52
  %v208 = vpack.c.bf16 0.0, %v205
  %209 = vst [vmem:[%s207] sm:$0xf] %v208
  %s210 = scalar_lea.vmem %s0, 56
  %v211 = vld [vmem:[%s210] sm:$0xf]
  %v212 = vunpack.c.l.bf16 %v211
  %v213 = vunpack.c.h.bf16 %v211
  %s214 = scalar_lea.vmem %s1, 56
  %v215 = vld [vmem:[%s214] sm:$0xf]
  %v216 = vunpack.c.l.bf16 %v215
  %v217 = vunpack.c.h.bf16 %v215
  %218 = xla_tuple %v212, %v216
  %219 = xla_tuple %218
  %v220 = vsub.f32 %v212, %v216
  %221 = xla_tuple %v220
  %s222 = scalar_lea.vmem %s2, 56
  %v223 = vpack.c.bf16 0.0, %v220
  %224 = vst [vmem:[%s222] sm:$0xf] %v223
  %s225 = scalar_lea.vmem %s0, 60
  %v226 = vld [vmem:[%s225] sm:$0xf]
  %v227 = vunpack.c.l.bf16 %v226
  %v228 = vunpack.c.h.bf16 %v226
  %s229 = scalar_lea.vmem %s1, 60
  %v230 = vld [vmem:[%s229] sm:$0xf]
  %v231 = vunpack.c.l.bf16 %v230
  %v232 = vunpack.c.h.bf16 %v230
  %233 = xla_tuple %v227, %v231
  %234 = xla_tuple %233
  %v235 = vsub.f32 %v227, %v231
  %236 = xla_tuple %v235
  %s237 = scalar_lea.vmem %s2, 60
  %v238 = vpack.c.bf16 0.0, %v235
  %239 = vst [vmem:[%s237] sm:$0xf] %v238
  %s240 = scalar_lea.vmem %s0, 64
  %v241 = vld [vmem:[%s240] sm:$0xf]
  %v242 = vunpack.c.l.bf16 %v241
  %v243 = vunpack.c.h.bf16 %v241
  %s244 = scalar_lea.vmem %s1, 64
  %v245 = vld [vmem:[%s244] sm:$0xf]
  %v246 = vunpack.c.l.bf16 %v245
  %v247 = vunpack.c.h.bf16 %v245
  %248 = xla_tuple %v242, %v246
  %249 = xla_tuple %248
  %v250 = vsub.f32 %v242, %v246
  %251 = xla_tuple %v250
  %s252 = scalar_lea.vmem %s2, 64
  %v253 = vpack.c.bf16 0.0, %v250
  %254 = vst [vmem:[%s252] sm:$0xf] %v253
  %s255 = scalar_lea.vmem %s0, 68
  %v256 = vld [vmem:[%s255] sm:$0xf]
  %v257 = vunpack.c.l.bf16 %v256
  %v258 = vunpack.c.h.bf16 %v256
  %s259 = scalar_lea.vmem %s1, 68
  %v260 = vld [vmem:[%s259] sm:$0xf]
  %v261 = vunpack.c.l.bf16 %v260
  %v262 = vunpack.c.h.bf16 %v260
  %263 = xla_tuple %v257, %v261
  %264 = xla_tuple %263
  %v265 = vsub.f32 %v257, %v261
  %266 = xla_tuple %v265
  %s267 = scalar_lea.vmem %s2, 68
  %v268 = vpack.c.bf16 0.0, %v265
  %269 = vst [vmem:[%s267] sm:$0xf] %v268
  %s270 = scalar_lea.vmem %s0, 72
  %v271 = vld [vmem:[%s270] sm:$0xf]
  %v272 = vunpack.c.l.bf16 %v271
  %v273 = vunpack.c.h.bf16 %v271
  %s274 = scalar_lea.vmem %s1, 72
  %v275 = vld [vmem:[%s274] sm:$0xf]
  %v276 = vunpack.c.l.bf16 %v275
  %v277 = vunpack.c.h.bf16 %v275
  %278 = xla_tuple %v272, %v276
  %279 = xla_tuple %278
  %v280 = vsub.f32 %v272, %v276
  %281 = xla_tuple %v280
  %s282 = scalar_lea.vmem %s2, 72
  %v283 = vpack.c.bf16 0.0, %v280
  %284 = vst [vmem:[%s282] sm:$0xf] %v283
  %s285 = scalar_lea.vmem %s0, 76
  %v286 = vld [vmem:[%s285] sm:$0xf]
  %v287 = vunpack.c.l.bf16 %v286
  %v288 = vunpack.c.h.bf16 %v286
  %s289 = scalar_lea.vmem %s1, 76
  %v290 = vld [vmem:[%s289] sm:$0xf]
  %v291 = vunpack.c.l.bf16 %v290
  %v292 = vunpack.c.h.bf16 %v290
  %293 = xla_tuple %v287, %v291
  %294 = xla_tuple %293
  %v295 = vsub.f32 %v287, %v291
  %296 = xla_tuple %v295
  %s297 = scalar_lea.vmem %s2, 76
  %v298 = vpack.c.bf16 0.0, %v295
  %299 = vst [vmem:[%s297] sm:$0xf] %v298
  %s300 = scalar_lea.vmem %s0, 80
  %v301 = vld [vmem:[%s300] sm:$0xf]
  %v302 = vunpack.c.l.bf16 %v301
  %v303 = vunpack.c.h.bf16 %v301
  %s304 = scalar_lea.vmem %s1, 80
  %v305 = vld [vmem:[%s304] sm:$0xf]
  %v306 = vunpack.c.l.bf16 %v305
  %v307 = vunpack.c.h.bf16 %v305
  %308 = xla_tuple %v302, %v306
  %309 = xla_tuple %308
  %v310 = vsub.f32 %v302, %v306
  %311 = xla_tuple %v310
  %s312 = scalar_lea.vmem %s2, 80
  %v313 = vpack.c.bf16 0.0, %v310
  %314 = vst [vmem:[%s312] sm:$0xf] %v313
  %s315 = scalar_lea.vmem %s0, 84
  %v316 = vld [vmem:[%s315] sm:$0xf]
  %v317 = vunpack.c.l.bf16 %v316
  %v318 = vunpack.c.h.bf16 %v316
  %s319 = scalar_lea.vmem %s1, 84
  %v320 = vld [vmem:[%s319] sm:$0xf]
  %v321 = vunpack.c.l.bf16 %v320
  %v322 = vunpack.c.h.bf16 %v320
  %323 = xla_tuple %v317, %v321
  %324 = xla_tuple %323
  %v325 = vsub.f32 %v317, %v321
  %326 = xla_tuple %v325
  %s327 = scalar_lea.vmem %s2, 84
  %v328 = vpack.c.bf16 0.0, %v325
  %329 = vst [vmem:[%s327] sm:$0xf] %v328
  %s330 = scalar_lea.vmem %s0, 88
  %v331 = vld [vmem:[%s330] sm:$0xf]
  %v332 = vunpack.c.l.bf16 %v331
  %v333 = vunpack.c.h.bf16 %v331
  %s334 = scalar_lea.vmem %s1, 88
  %v335 = vld [vmem:[%s334] sm:$0xf]
  %v336 = vunpack.c.l.bf16 %v335
  %v337 = vunpack.c.h.bf16 %v335
  %338 = xla_tuple %v332, %v336
  %339 = xla_tuple %338
  %v340 = vsub.f32 %v332, %v336
  %341 = xla_tuple %v340
  %s342 = scalar_lea.vmem %s2, 88
  %v343 = vpack.c.bf16 0.0, %v340
  %344 = vst [vmem:[%s342] sm:$0xf] %v343
  %s345 = scalar_lea.vmem %s0, 92
  %v346 = vld [vmem:[%s345] sm:$0xf]
  %v347 = vunpack.c.l.bf16 %v346
  %v348 = vunpack.c.h.bf16 %v346
  %s349 = scalar_lea.vmem %s1, 92
  %v350 = vld [vmem:[%s349] sm:$0xf]
  %v351 = vunpack.c.l.bf16 %v350
  %v352 = vunpack.c.h.bf16 %v350
  %353 = xla_tuple %v347, %v351
  %354 = xla_tuple %353
  %v355 = vsub.f32 %v347, %v351
  %356 = xla_tuple %v355
  %s357 = scalar_lea.vmem %s2, 92
  %v358 = vpack.c.bf16 0.0, %v355
  %359 = vst [vmem:[%s357] sm:$0xf] %v358
  %s360 = scalar_lea.vmem %s0, 96
  %v361 = vld [vmem:[%s360] sm:$0xf]
  %v362 = vunpack.c.l.bf16 %v361
  %v363 = vunpack.c.h.bf16 %v361
  %s364 = scalar_lea.vmem %s1, 96
  %v365 = vld [vmem:[%s364] sm:$0xf]
  %v366 = vunpack.c.l.bf16 %v365
  %v367 = vunpack.c.h.bf16 %v365
  %368 = xla_tuple %v362, %v366
  %369 = xla_tuple %368
  %v370 = vsub.f32 %v362, %v366
  %371 = xla_tuple %v370
  %s372 = scalar_lea.vmem %s2, 96
  %v373 = vpack.c.bf16 0.0, %v370
  %374 = vst [vmem:[%s372] sm:$0xf] %v373
  %s375 = scalar_lea.vmem %s0, 100
  %v376 = vld [vmem:[%s375] sm:$0xf]
  %v377 = vunpack.c.l.bf16 %v376
  %v378 = vunpack.c.h.bf16 %v376
  %s379 = scalar_lea.vmem %s1, 100
  %v380 = vld [vmem:[%s379] sm:$0xf]
  %v381 = vunpack.c.l.bf16 %v380
  %v382 = vunpack.c.h.bf16 %v380
  %383 = xla_tuple %v377, %v381
  %384 = xla_tuple %383
  %v385 = vsub.f32 %v377, %v381
  %386 = xla_tuple %v385
  %s387 = scalar_lea.vmem %s2, 100
  %v388 = vpack.c.bf16 0.0, %v385
  %389 = vst [vmem:[%s387] sm:$0xf] %v388
  %s390 = scalar_lea.vmem %s0, 104
  %v391 = vld [vmem:[%s390] sm:$0xf]
  %v392 = vunpack.c.l.bf16 %v391
  %v393 = vunpack.c.h.bf16 %v391
  %s394 = scalar_lea.vmem %s1, 104
  %v395 = vld [vmem:[%s394] sm:$0xf]
  %v396 = vunpack.c.l.bf16 %v395
  %v397 = vunpack.c.h.bf16 %v395
  %398 = xla_tuple %v392, %v396
  %399 = xla_tuple %398
  %v400 = vsub.f32 %v392, %v396
  %401 = xla_tuple %v400
  %s402 = scalar_lea.vmem %s2, 104
  %v403 = vpack.c.bf16 0.0, %v400
  %404 = vst [vmem:[%s402] sm:$0xf] %v403
  %s405 = scalar_lea.vmem %s0, 108
  %v406 = vld [vmem:[%s405] sm:$0xf]
  %v407 = vunpack.c.l.bf16 %v406
  %v408 = vunpack.c.h.bf16 %v406
  %s409 = scalar_lea.vmem %s1, 108
  %v410 = vld [vmem:[%s409] sm:$0xf]
  %v411 = vunpack.c.l.bf16 %v410
  %v412 = vunpack.c.h.bf16 %v410
  %413 = xla_tuple %v407, %v411
  %414 = xla_tuple %413
  %v415 = vsub.f32 %v407, %v411
  %416 = xla_tuple %v415
  %s417 = scalar_lea.vmem %s2, 108
  %v418 = vpack.c.bf16 0.0, %v415
  %419 = vst [vmem:[%s417] sm:$0xf] %v418
  %s420 = scalar_lea.vmem %s0, 112
  %v421 = vld [vmem:[%s420] sm:$0xf]
  %v422 = vunpack.c.l.bf16 %v421
  %v423 = vunpack.c.h.bf16 %v421
  %s424 = scalar_lea.vmem %s1, 112
  %v425 = vld [vmem:[%s424] sm:$0xf]
  %v426 = vunpack.c.l.bf16 %v425
  %v427 = vunpack.c.h.bf16 %v425
  %428 = xla_tuple %v422, %v426
  %429 = xla_tuple %428
  %v430 = vsub.f32 %v422, %v426
  %431 = xla_tuple %v430
  %s432 = scalar_lea.vmem %s2, 112
  %v433 = vpack.c.bf16 0.0, %v430
  %434 = vst [vmem:[%s432] sm:$0xf] %v433
  %s435 = scalar_lea.vmem %s0, 116
  %v436 = vld [vmem:[%s435] sm:$0xf]
  %v437 = vunpack.c.l.bf16 %v436
  %v438 = vunpack.c.h.bf16 %v436
  %s439 = scalar_lea.vmem %s1, 116
  %v440 = vld [vmem:[%s439] sm:$0xf]
  %v441 = vunpack.c.l.bf16 %v440
  %v442 = vunpack.c.h.bf16 %v440
  %443 = xla_tuple %v437, %v441
  %444 = xla_tuple %443
  %v445 = vsub.f32 %v437, %v441
  %446 = xla_tuple %v445
  %s447 = scalar_lea.vmem %s2, 116
  %v448 = vpack.c.bf16 0.0, %v445
  %449 = vst [vmem:[%s447] sm:$0xf] %v448
  %s450 = scalar_lea.vmem %s0, 120
  %v451 = vld [vmem:[%s450] sm:$0xf]
  %v452 = vunpack.c.l.bf16 %v451
  %v453 = vunpack.c.h.bf16 %v451
  %s454 = scalar_lea.vmem %s1, 120
  %v455 = vld [vmem:[%s454] sm:$0xf]
  %v456 = vunpack.c.l.bf16 %v455
  %v457 = vunpack.c.h.bf16 %v455
  %458 = xla_tuple %v452, %v456
  %459 = xla_tuple %458
  %v460 = vsub.f32 %v452, %v456
  %461 = xla_tuple %v460
  %s462 = scalar_lea.vmem %s2, 120
  %v463 = vpack.c.bf16 0.0, %v460
  %464 = vst [vmem:[%s462] sm:$0xf] %v463
  %s465 = scalar_lea.vmem %s0, 124
  %v466 = vld [vmem:[%s465] sm:$0xf]
  %v467 = vunpack.c.l.bf16 %v466
  %v468 = vunpack.c.h.bf16 %v466
  %s469 = scalar_lea.vmem %s1, 124
  %v470 = vld [vmem:[%s469] sm:$0xf]
  %v471 = vunpack.c.l.bf16 %v470
  %v472 = vunpack.c.h.bf16 %v470
  %473 = xla_tuple %v467, %v471
  %474 = xla_tuple %473
  %v475 = vsub.f32 %v467, %v471
  %476 = xla_tuple %v475
  %s477 = scalar_lea.vmem %s2, 124
  %v478 = vpack.c.bf16 0.0, %v475
  %479 = vst [vmem:[%s477] sm:$0xf] %v478

// kernel: tounet_fwd.191
$region0: #{tounet_fwd.191}
  #allocation0 [shape = 'u32[]', space=smem, size = 0x4, offset = 0x4, fixed_abs, tag = 'smem constant byte address 0x4 - core index']
  #allocation1 [shape = 'u32[144,128]{1,0:T(1,128)}', space=vmem, size = 0x12000, scoped, tag = 'internal scratch']
  %s0 = inlined_call_operand.vmem [shape: bf16[128,640], index: 0, kind: input, shape index: {}]
  %s1 = inlined_call_operand.vmem [shape: bf16[640,128], index: 1, kind: input, shape index: {}]
  %s2 = inlined_call_operand.vmem [shape: f32[1,128], index: 2, kind: input, shape index: {}]
  %s3 = inlined_call_operand.vmem [shape: bf16[128,16], index: 3, kind: input, shape index: {}]
  %s4 = inlined_call_operand.vmem [shape: bf16[128,16], index: 4, kind: output, shape index: {}]
  %s5 = sld [smem:[#allocation0]]
  $region26: #{tounet_fwd.191} parent=0
    _
  %s7 = ssub.s32 1, %s5
  %s8 = scalar_select 0, %s7, %s5
  // Predicated region
  $region2: #{tounet_fwd.191} parent=0 // pred_check
    _
  $region3: #{tounet_fwd.191} parent=0 // pred_check_branch
    %10 = sbr.rel (0) target = $region5
  $region4: #{tounet_fwd.191} parent=0 // pred_region
    _
  $region5: #{tounet_fwd.191} parent=0 // pred_fallthru
    _
  // Predicated region
  $region6: #{tounet_fwd.191} parent=0 // pred_check
    _
  $region7: #{tounet_fwd.191} parent=0 // pred_check_branch
    %12 = sbr.rel (0) target = $region9
  $region8: #{tounet_fwd.191} parent=0 // pred_region
    _
  $region9: #{tounet_fwd.191} parent=0 // pred_fallthru
    _
  // Predicated region
  $region10: #{tounet_fwd.191} parent=0 // pred_check
    _
  $region11: #{tounet_fwd.191} parent=0 // pred_check_branch
    %14 = sbr.rel (0) target = $region13
  $region12: #{tounet_fwd.191} parent=0 // pred_region
    _
  $region13: #{tounet_fwd.191} parent=0 // pred_fallthru
    _
  // Predicated region
  $region14: #{tounet_fwd.191} parent=0 // pred_check
    _
  $region15: #{tounet_fwd.191} parent=0 // pred_check_branch
    %16 = sbr.rel (0) target = $region17
  $region16: #{tounet_fwd.191} parent=0 // pred_region
    _
  $region17: #{tounet_fwd.191} parent=0 // pred_fallthru
    _
  %v18 = vld [vmem:[%s0] sm:$0xff]
  %v19 = vld [vmem:[%s0 + $0x8] sm:$0xff]
  %v20 = vld [vmem:[%s0 + $0x10] sm:$0xf]
  %v21 = vld [vmem:[%s0 + $0x14] sm:$0xff]
  %v22 = vld [vmem:[%s0 + $0x1c] sm:$0xff]
  %v23 = vld [vmem:[%s0 + $0x24] sm:$0xf]
  %v24 = vld [vmem:[%s0 + $0x28] sm:$0xff]
  %v25 = vld [vmem:[%s0 + $0x30] sm:$0xff]
  %v26 = vld [vmem:[%s0 + $0x38] sm:$0xf]
  %v27 = vld [vmem:[%s0 + $0x3c] sm:$0xff]
  %v28 = vld [vmem:[%s0 + $0x44] sm:$0xff]
  %v29 = vld [vmem:[%s0 + $0x4c] sm:$0xf]
  %v30 = vld [vmem:[%s0 + $0x50] sm:$0xff]
  %v31 = vld [vmem:[%s0 + $0x58] sm:$0xff]
  %v32 = vld [vmem:[%s0 + $0x60] sm:$0xf]
  %v33 = vld [vmem:[%s0 + $0x64] sm:$0xff]
  %v34 = vld [vmem:[%s0 + $0x6c] sm:$0xff]
  %v35 = vld [vmem:[%s0 + $0x74] sm:$0xf]
  %v36 = vld [vmem:[%s0 + $0x78] sm:$0xff]
  %v37 = vld [vmem:[%s0 + $0x80] sm:$0xff]
  %v38 = vld [vmem:[%s0 + $0x88] sm:$0xf]
  %v39 = vld [vmem:[%s0 + $0x8c] sm:$0xff]
  %v40 = vld [vmem:[%s0 + $0x94] sm:$0xff]
  %v41 = vld [vmem:[%s0 + $0x9c] sm:$0xf]
  %v42 = vld [vmem:[%s0 + $0xa0] sm:$0xff]
  %v43 = vld [vmem:[%s0 + $0xa8] sm:$0xff]
  %v44 = vld [vmem:[%s0 + $0xb0] sm:$0xf]
  %v45 = vld [vmem:[%s0 + $0xb4] sm:$0xff]
  %v46 = vld [vmem:[%s0 + $0xbc] sm:$0xff]
  %v47 = vld [vmem:[%s0 + $0xc4] sm:$0xf]
  %v48 = vld [vmem:[%s0 + $0xc8] sm:$0xff]
  %v49 = vld [vmem:[%s0 + $0xd0] sm:$0xff]
  %v50 = vld [vmem:[%s0 + $0xd8] sm:$0xf]
  %v51 = vld [vmem:[%s0 + $0xdc] sm:$0xff]
  %v52 = vld [vmem:[%s0 + $0xe4] sm:$0xff]
  %v53 = vld [vmem:[%s0 + $0xec] sm:$0xf]
  %v54 = vld [vmem:[%s0 + $0xf0] sm:$0xff]
  %v55 = vld [vmem:[%s0 + $0xf8] sm:$0xff]
  %v56 = vld [vmem:[%s0 + $0x100] sm:$0xf]
  %v57 = vld [vmem:[%s0 + $0x104] sm:$0xff]
  %v58 = vld [vmem:[%s0 + $0x10c] sm:$0xff]
  %v59 = vld [vmem:[%s0 + $0x114] sm:$0xf]
  %v60 = vld [vmem:[%s0 + $0x118] sm:$0xff]
  %v61 = vld [vmem:[%s0 + $0x120] sm:$0xff]
  %v62 = vld [vmem:[%s0 + $0x128] sm:$0xf]
  %v63 = vld [vmem:[%s0 + $0x12c] sm:$0xff]
  %v64 = vld [vmem:[%s0 + $0x134] sm:$0xff]
  %v65 = vld [vmem:[%s0 + $0x13c] sm:$0xf]
  %v66 = vld [vmem:[%s1] sm:$0xf]
  %v67 = vld [vmem:[%s1 + $0x4] sm:$0xf]
  %v68 = vld [vmem:[%s1 + $0x8] sm:$0xf]
  %v69 = vld [vmem:[%s1 + $0xc] sm:$0xf]
  %v70 = vld [vmem:[%s1 + $0x10] sm:$0xf]
  %v71 = vld [vmem:[%s1 + $0x14] sm:$0xf]
  %v72 = vld [vmem:[%s1 + $0x18] sm:$0xf]
  %v73 = vld [vmem:[%s1 + $0x1c] sm:$0xf]
  %v74 = vld [vmem:[%s1 + $0x20] sm:$0xf]
  %v75 = vld [vmem:[%s1 + $0x24] sm:$0xf]
  %v76 = vld [vmem:[%s1 + $0x28] sm:$0xf]
  %v77 = vld [vmem:[%s1 + $0x2c] sm:$0xf]
  %v78 = vld [vmem:[%s1 + $0x30] sm:$0xf]
  %v79 = vld [vmem:[%s1 + $0x34] sm:$0xf]
  %v80 = vld [vmem:[%s1 + $0x38] sm:$0xf]
  %v81 = vld [vmem:[%s1 + $0x3c] sm:$0xf]
  %v82 = vld [vmem:[%s1 + $0x40] sm:$0xf]
  %v83 = vld [vmem:[%s1 + $0x44] sm:$0xf]
  %v84 = vld [vmem:[%s1 + $0x48] sm:$0xf]
  %v85 = vld [vmem:[%s1 + $0x4c] sm:$0xf]
  %v86 = vld [vmem:[%s1 + $0x50] sm:$0xf]
  %v87 = vld [vmem:[%s1 + $0x54] sm:$0xf]
  %v88 = vld [vmem:[%s1 + $0x58] sm:$0xf]
  %v89 = vld [vmem:[%s1 + $0x5c] sm:$0xf]
  %v90 = vld [vmem:[%s1 + $0x60] sm:$0xf]
  %v91 = vld [vmem:[%s1 + $0x64] sm:$0xf]
  %v92 = vld [vmem:[%s1 + $0x68] sm:$0xf]
  %v93 = vld [vmem:[%s1 + $0x6c] sm:$0xf]
  %v94 = vld [vmem:[%s1 + $0x70] sm:$0xf]
  %v95 = vld [vmem:[%s1 + $0x74] sm:$0xf]
  %v96 = vld [vmem:[%s1 + $0x78] sm:$0xf]
  %v97 = vld [vmem:[%s1 + $0x7c] sm:$0xf]
  %v98 = vld [vmem:[%s1 + $0x80] sm:$0xf]
  %v99 = vld [vmem:[%s1 + $0x84] sm:$0xf]
  %v100 = vld [vmem:[%s1 + $0x88] sm:$0xf]
  %v101 = vld [vmem:[%s1 + $0x8c] sm:$0xf]
  %v102 = vld [vmem:[%s1 + $0x90] sm:$0xf]
  %v103 = vld [vmem:[%s1 + $0x94] sm:$0xf]
  %v104 = vld [vmem:[%s1 + $0x98] sm:$0xf]
  %v105 = vld [vmem:[%s1 + $0x9c] sm:$0xf]
  %v106 = vld [vmem:[%s1 + $0xa0] sm:$0xf]
  %v107 = vld [vmem:[%s1 + $0xa4] sm:$0xf]
  %v108 = vld [vmem:[%s1 + $0xa8] sm:$0xf]
  %v109 = vld [vmem:[%s1 + $0xac] sm:$0xf]
  %v110 = vld [vmem:[%s1 + $0xb0] sm:$0xf]
  %v111 = vld [vmem:[%s1 + $0xb4] sm:$0xf]
  %v112 = vld [vmem:[%s1 + $0xb8] sm:$0xf]
  %v113 = vld [vmem:[%s1 + $0xbc] sm:$0xf]
  %v114 = vld [vmem:[%s1 + $0xc0] sm:$0xf]
  %v115 = vld [vmem:[%s1 + $0xc4] sm:$0xf]
  %v116 = vld [vmem:[%s1 + $0xc8] sm:$0xf]
  %v117 = vld [vmem:[%s1 + $0xcc] sm:$0xf]
  %v118 = vld [vmem:[%s1 + $0xd0] sm:$0xf]
  %v119 = vld [vmem:[%s1 + $0xd4] sm:$0xf]
  %v120 = vld [vmem:[%s1 + $0xd8] sm:$0xf]
  %v121 = vld [vmem:[%s1 + $0xdc] sm:$0xf]
  %v122 = vld [vmem:[%s1 + $0xe0] sm:$0xf]
  %v123 = vld [vmem:[%s1 + $0xe4] sm:$0xf]
  %v124 = vld [vmem:[%s1 + $0xe8] sm:$0xf]
  %v125 = vld [vmem:[%s1 + $0xec] sm:$0xf]
  %v126 = vld [vmem:[%s1 + $0xf0] sm:$0xf]
  %v127 = vld [vmem:[%s1 + $0xf4] sm:$0xf]
  %v128 = vld [vmem:[%s1 + $0xf8] sm:$0xf]
  %v129 = vld [vmem:[%s1 + $0xfc] sm:$0xf]
  %v130 = vld [vmem:[%s1 + $0x100] sm:$0xf]
  %v131 = vld [vmem:[%s1 + $0x104] sm:$0xf]
  %v132 = vld [vmem:[%s1 + $0x108] sm:$0xf]
  %v133 = vld [vmem:[%s1 + $0x10c] sm:$0xf]
  %v134 = vld [vmem:[%s1 + $0x110] sm:$0xf]
  %v135 = vld [vmem:[%s1 + $0x114] sm:$0xf]
  %v136 = vld [vmem:[%s1 + $0x118] sm:$0xf]
  %v137 = vld [vmem:[%s1 + $0x11c] sm:$0xf]
  %v138 = vld [vmem:[%s1 + $0x120] sm:$0xf]
  %v139 = vld [vmem:[%s1 + $0x124] sm:$0xf]
  %v140 = vld [vmem:[%s1 + $0x128] sm:$0xf]
  %v141 = vld [vmem:[%s1 + $0x12c] sm:$0xf]
  %v142 = vld [vmem:[%s1 + $0x130] sm:$0xf]
  %v143 = vld [vmem:[%s1 + $0x134] sm:$0xf]
  %v144 = vld [vmem:[%s1 + $0x138] sm:$0xf]
  %v145 = vld [vmem:[%s1 + $0x13c] sm:$0xf]
  %v146 = vld [vmem:[%s2] sm:$0x1]
  %v148 = vlaneseq
  %v149 = vshrl.u32 %v148, 7
  %v150 = vsub.s32 0, %v149
  %v151 = vrot.slane %v146, %v150
  %v201 = vunpack.c.l.b16 %v18
  %v202 = vunpack.c.h.b16 %v18
  %v203 = vunpack.c.l.b16 %v19
  %v204 = vunpack.c.h.b16 %v19
  %v205 = vunpack.c.l.b16 %v20
  %v206 = vunpack.c.l.b16 %v21
  %v207 = vunpack.c.h.b16 %v21
  %v208 = vunpack.c.l.b16 %v22
  %v209 = vunpack.c.h.b16 %v22
  %v210 = vunpack.c.l.b16 %v23
  %v211 = vunpack.c.l.b16 %v24
  %v212 = vunpack.c.h.b16 %v24
  %v213 = vunpack.c.l.b16 %v25
  %v214 = vunpack.c.h.b16 %v25
  %v215 = vunpack.c.l.b16 %v26
  %v216 = vunpack.c.l.b16 %v27
  %v217 = vunpack.c.h.b16 %v27
  %v218 = vunpack.c.l.b16 %v28
  %v219 = vunpack.c.h.b16 %v28
  %v220 = vunpack.c.l.b16 %v29
  %v221 = vunpack.c.l.b16 %v30
  %v222 = vunpack.c.h.b16 %v30
  %v223 = vunpack.c.l.b16 %v31
  %v224 = vunpack.c.h.b16 %v31
  %v225 = vunpack.c.l.b16 %v32
  %v226 = vunpack.c.l.b16 %v33
  %v227 = vunpack.c.h.b16 %v33
  %v228 = vunpack.c.l.b16 %v34
  %v229 = vunpack.c.h.b16 %v34
  %v230 = vunpack.c.l.b16 %v35
  %v231 = vunpack.c.l.b16 %v36
  %v232 = vunpack.c.h.b16 %v36
  %v233 = vunpack.c.l.b16 %v37
  %v234 = vunpack.c.h.b16 %v37
  %v235 = vunpack.c.l.b16 %v38
  %v236 = vunpack.c.l.b16 %v39
  %v237 = vunpack.c.h.b16 %v39
  %v238 = vunpack.c.l.b16 %v40
  %v239 = vunpack.c.h.b16 %v40
  %v240 = vunpack.c.l.b16 %v41
  %v241 = vunpack.c.l.b16 %v42
  %v242 = vunpack.c.h.b16 %v42
  %v243 = vunpack.c.l.b16 %v43
  %v244 = vunpack.c.h.b16 %v43
  %v245 = vunpack.c.l.b16 %v44
  %v246 = vunpack.c.l.b16 %v45
  %v247 = vunpack.c.h.b16 %v45
  %v248 = vunpack.c.l.b16 %v46
  %v249 = vunpack.c.h.b16 %v46
  %v250 = vunpack.c.l.b16 %v47
  %v251 = vunpack.c.l.b16 %v48
  %v252 = vunpack.c.h.b16 %v48
  %v253 = vunpack.c.l.b16 %v49
  %v254 = vunpack.c.h.b16 %v49
  %v255 = vunpack.c.l.b16 %v50
  %v256 = vunpack.c.l.b16 %v51
  %v257 = vunpack.c.h.b16 %v51
  %v258 = vunpack.c.l.b16 %v52
  %v259 = vunpack.c.h.b16 %v52
  %v260 = vunpack.c.l.b16 %v53
  %v261 = vunpack.c.l.b16 %v54
  %v262 = vunpack.c.h.b16 %v54
  %v263 = vunpack.c.l.b16 %v55
  %v264 = vunpack.c.h.b16 %v55
  %v265 = vunpack.c.l.b16 %v56
  %v266 = vunpack.c.l.b16 %v57
  %v267 = vunpack.c.h.b16 %v57
  %v268 = vunpack.c.l.b16 %v58
  %v269 = vunpack.c.h.b16 %v58
  %v270 = vunpack.c.l.b16 %v59
  %v271 = vunpack.c.l.b16 %v60
  %v272 = vunpack.c.h.b16 %v60
  %v273 = vunpack.c.l.b16 %v61
  %v274 = vunpack.c.h.b16 %v61
  %v275 = vunpack.c.l.b16 %v62
  %v276 = vunpack.c.l.b16 %v63
  %v277 = vunpack.c.h.b16 %v63
  %v278 = vunpack.c.l.b16 %v64
  %v279 = vunpack.c.h.b16 %v64
  %v280 = vunpack.c.l.b16 %v65
  %v281 = vpack.c.b16 %v206, %v201
  %v282 = vpack.c.b16 %v207, %v202
  %v283 = vpack.c.b16 %v208, %v203
  %v284 = vpack.c.b16 %v209, %v204
  %v285 = vpack.c.b16 %v210, %v205
  %v286 = vpack.c.b16 %v216, %v211
  %v287 = vpack.c.b16 %v217, %v212
  %v288 = vpack.c.b16 %v218, %v213
  %v289 = vpack.c.b16 %v219, %v214
  %v290 = vpack.c.b16 %v220, %v215
  %v291 = vpack.c.b16 %v226, %v221
  %v292 = vpack.c.b16 %v227, %v222
  %v293 = vpack.c.b16 %v228, %v223
  %v294 = vpack.c.b16 %v229, %v224
  %v295 = vpack.c.b16 %v230, %v225
  %v296 = vpack.c.b16 %v236, %v231
  %v297 = vpack.c.b16 %v237, %v232
  %v298 = vpack.c.b16 %v238, %v233
  %v299 = vpack.c.b16 %v239, %v234
  %v300 = vpack.c.b16 %v240, %v235
  %v301 = vpack.c.b16 %v246, %v241
  %v302 = vpack.c.b16 %v247, %v242
  %v303 = vpack.c.b16 %v248, %v243
  %v304 = vpack.c.b16 %v249, %v244
  %v305 = vpack.c.b16 %v250, %v245
  %v306 = vpack.c.b16 %v256, %v251
  %v307 = vpack.c.b16 %v257, %v252
  %v308 = vpack.c.b16 %v258, %v253
  %v309 = vpack.c.b16 %v259, %v254
  %v310 = vpack.c.b16 %v260, %v255
  %v311 = vpack.c.b16 %v266, %v261
  %v312 = vpack.c.b16 %v267, %v262
  %v313 = vpack.c.b16 %v268, %v263
  %v314 = vpack.c.b16 %v269, %v264
  %v315 = vpack.c.b16 %v270, %v265
  %v316 = vpack.c.b16 %v276, %v271
  %v317 = vpack.c.b16 %v277, %v272
  %v318 = vpack.c.b16 %v278, %v273
  %v319 = vpack.c.b16 %v279, %v274
  %v320 = vpack.c.b16 %v280, %v275
  %v441 = vunpack.c.l.b16 %v66
  %v442 = vunpack.c.l.b16 %v67
  %v443 = vunpack.c.l.b16 %v68
  %v444 = vunpack.c.l.b16 %v69
  %v445 = vunpack.c.l.b16 %v70
  %v446 = vunpack.c.l.b16 %v71
  %v447 = vunpack.c.l.b16 %v72
  %v448 = vunpack.c.l.b16 %v73
  %v449 = vunpack.c.l.b16 %v74
  %v450 = vunpack.c.l.b16 %v75
  %v451 = vunpack.c.l.b16 %v76
  %v452 = vunpack.c.l.b16 %v77
  %v453 = vunpack.c.l.b16 %v78
  %v454 = vunpack.c.l.b16 %v79
  %v455 = vunpack.c.l.b16 %v80
  %v456 = vunpack.c.l.b16 %v81
  %v457 = vunpack.c.l.b16 %v82
  %v458 = vunpack.c.l.b16 %v83
  %v459 = vunpack.c.l.b16 %v84
  %v460 = vunpack.c.l.b16 %v85
  %v461 = vunpack.c.l.b16 %v86
  %v462 = vunpack.c.l.b16 %v87
  %v463 = vunpack.c.l.b16 %v88
  %v464 = vunpack.c.l.b16 %v89
  %v465 = vunpack.c.l.b16 %v90
  %v466 = vunpack.c.l.b16 %v91
  %v467 = vunpack.c.l.b16 %v92
  %v468 = vunpack.c.l.b16 %v93
  %v469 = vunpack.c.l.b16 %v94
  %v470 = vunpack.c.l.b16 %v95
  %v471 = vunpack.c.l.b16 %v96
  %v472 = vunpack.c.l.b16 %v97
  %v473 = vunpack.c.l.b16 %v98
  %v474 = vunpack.c.l.b16 %v99
  %v475 = vunpack.c.l.b16 %v100
  %v476 = vunpack.c.l.b16 %v101
  %v477 = vunpack.c.l.b16 %v102
  %v478 = vunpack.c.l.b16 %v103
  %v479 = vunpack.c.l.b16 %v104
  %v480 = vunpack.c.l.b16 %v105
  %v481 = vunpack.c.l.b16 %v106
  %v482 = vunpack.c.l.b16 %v107
  %v483 = vunpack.c.l.b16 %v108
  %v484 = vunpack.c.l.b16 %v109
  %v485 = vunpack.c.l.b16 %v110
  %v486 = vunpack.c.l.b16 %v111
  %v487 = vunpack.c.l.b16 %v112
  %v488 = vunpack.c.l.b16 %v113
  %v489 = vunpack.c.l.b16 %v114
  %v490 = vunpack.c.l.b16 %v115
  %v491 = vunpack.c.l.b16 %v116
  %v492 = vunpack.c.l.b16 %v117
  %v493 = vunpack.c.l.b16 %v118
  %v494 = vunpack.c.l.b16 %v119
  %v495 = vunpack.c.l.b16 %v120
  %v496 = vunpack.c.l.b16 %v121
  %v497 = vunpack.c.l.b16 %v122
  %v498 = vunpack.c.l.b16 %v123
  %v499 = vunpack.c.l.b16 %v124
  %v500 = vunpack.c.l.b16 %v125
  %v501 = vunpack.c.l.b16 %v126
  %v502 = vunpack.c.l.b16 %v127
  %v503 = vunpack.c.l.b16 %v128
  %v504 = vunpack.c.l.b16 %v129
  %v505 = vunpack.c.l.b16 %v130
  %v506 = vunpack.c.l.b16 %v131
  %v507 = vunpack.c.l.b16 %v132
  %v508 = vunpack.c.l.b16 %v133
  %v509 = vunpack.c.l.b16 %v134
  %v510 = vunpack.c.l.b16 %v135
  %v511 = vunpack.c.l.b16 %v136
  %v512 = vunpack.c.l.b16 %v137
  %v513 = vunpack.c.l.b16 %v138
  %v514 = vunpack.c.l.b16 %v139
  %v515 = vunpack.c.l.b16 %v140
  %v516 = vunpack.c.l.b16 %v141
  %v517 = vunpack.c.l.b16 %v142
  %v518 = vunpack.c.l.b16 %v143
  %v519 = vunpack.c.l.b16 %v144
  %v520 = vunpack.c.l.b16 %v145
  %v521 = vpack.c.b16 %v442, %v441
  %v522 = vpack.c.b16 %v444, %v443
  %v523 = vpack.c.b16 %v446, %v445
  %v524 = vpack.c.b16 %v448, %v447
  %v525 = vpack.c.b16 %v450, %v449
  %v526 = vpack.c.b16 %v452, %v451
  %v527 = vpack.c.b16 %v454, %v453
  %v528 = vpack.c.b16 %v456, %v455
  %v529 = vpack.c.b16 %v458, %v457
  %v530 = vpack.c.b16 %v460, %v459
  %v531 = vpack.c.b16 %v462, %v461
  %v532 = vpack.c.b16 %v464, %v463
  %v533 = vpack.c.b16 %v466, %v465
  %v534 = vpack.c.b16 %v468, %v467
  %v535 = vpack.c.b16 %v470, %v469
  %v536 = vpack.c.b16 %v472, %v471
  %v537 = vpack.c.b16 %v474, %v473
  %v538 = vpack.c.b16 %v476, %v475
  %v539 = vpack.c.b16 %v478, %v477
  %v540 = vpack.c.b16 %v480, %v479
  %v541 = vpack.c.b16 %v482, %v481
  %v542 = vpack.c.b16 %v484, %v483
  %v543 = vpack.c.b16 %v486, %v485
  %v544 = vpack.c.b16 %v488, %v487
  %v545 = vpack.c.b16 %v490, %v489
  %v546 = vpack.c.b16 %v492, %v491
  %v547 = vpack.c.b16 %v494, %v493
  %v548 = vpack.c.b16 %v496, %v495
  %v549 = vpack.c.b16 %v498, %v497
  %v550 = vpack.c.b16 %v500, %v499
  %v551 = vpack.c.b16 %v502, %v501
  %v552 = vpack.c.b16 %v504, %v503
  %v553 = vpack.c.b16 %v506, %v505
  %v554 = vpack.c.b16 %v508, %v507
  %v555 = vpack.c.b16 %v510, %v509
  %v556 = vpack.c.b16 %v512, %v511
  %v557 = vpack.c.b16 %v514, %v513
  %v558 = vpack.c.b16 %v516, %v515
  %v559 = vpack.c.b16 %v518, %v517
  %v560 = vpack.c.b16 %v520, %v519
  %601 = vmatprep.subr.bf16.mxu0 0
  %602 = vmatpush1.bf16.msra.mxu0 %v521
  %603 = vmatprep.subr.bf16.mxu0 0
  %604 = vmatpush1.bf16.msra.mxu0 %v522
  %605 = vmatprep.subr.bf16.mxu0 0
  %606 = vmatpush1.bf16.msra.mxu0 %v523
  %607 = vmatprep.subr.bf16.mxu0 0
  %608 = vmatpush1.bf16.msra.mxu0 %v524
  %609 = vmatprep.subr.bf16.mxu0 0
  %610 = vmatpush1.bf16.msra.mxu0 %v525
  %611 = vmatprep.subr.bf16.mxu0 0
  %612 = vmatpush1.bf16.msra.mxu0 %v526
  %613 = vmatprep.subr.bf16.mxu0 0
  %614 = vmatpush1.bf16.msra.mxu0 %v527
  %615 = vmatprep.subr.bf16.mxu0 0
  %616 = vmatpush1.bf16.msra.mxu0 %v528
  %617 = vmatprep.subr.bf16.mxu0 0
  %618 = vmatpush1.bf16.msra.mxu0 %v529
  %619 = vmatprep.subr.bf16.mxu0 0
  %620 = vmatpush1.bf16.msra.mxu0 %v530
  %621 = vmatprep.subr.bf16.mxu0 0
  %622 = vmatpush1.bf16.msra.mxu0 %v531
  %623 = vmatprep.subr.bf16.mxu0 0
  %624 = vmatpush1.bf16.msra.mxu0 %v532
  %625 = vmatprep.subr.bf16.mxu0 0
  %626 = vmatpush1.bf16.msra.mxu0 %v533
  %627 = vmatprep.subr.bf16.mxu0 0
  %628 = vmatpush1.bf16.msra.mxu0 %v534
  %629 = vmatprep.subr.bf16.mxu0 0
  %630 = vmatpush1.bf16.msra.mxu0 %v535
  %631 = vmatprep.subr.bf16.mxu0 0
  %632 = vmatpush1.bf16.msra.mxu0 %v536
  %633 = vmatprep.mubr.bf16.mxu0 %v282
  %634 = vmatmul.mubr.bf16.gmra.mrb[0].mxu0 %v281
  %v635 = vpop.f32.mrb[0].mxu0
  %v636 = vadd.f32 %v151, %v635
  %v637 = vpop.f32.mrb[0].mxu0
  %v638 = vpop.f32.mrb[0].mxu0
  %v639 = vadd.f32 %v151, %v638
  %v640 = vpop.f32.mrb[0].mxu0
  %641 = vmatprep.mubr.bf16.mxu0 %v287
  %642 = vmatmul.mubr.bf16.gmra.mrb[0].mxu0 %v286
  %v643 = vpop.f32.mrb[0].mxu0
  %v644 = vadd.f32 %v151, %v643
  %v645 = vpop.f32.mrb[0].mxu0
  %v646 = vpop.f32.mrb[0].mxu0
  %v647 = vadd.f32 %v151, %v646
  %v648 = vpop.f32.mrb[0].mxu0
  %649 = vmatprep.mubr.bf16.mxu0 %v292
  %650 = vmatmul.mubr.bf16.gmra.mrb[0].mxu0 %v291
  %v651 = vpop.f32.mrb[0].mxu0
  %v652 = vadd.f32 %v151, %v651
  %v653 = vpop.f32.mrb[0].mxu0
  %v654 = vpop.f32.mrb[0].mxu0
  %v655 = vadd.f32 %v151, %v654
  %v656 = vpop.f32.mrb[0].mxu0
  %657 = vmatprep.mubr.bf16.mxu0 %v297
  %658 = vmatmul.mubr.bf16.gmra.mrb[0].mxu0 %v296
  %v659 = vpop.f32.mrb[0].mxu0
  %v660 = vadd.f32 %v151, %v659
  %v661 = vpop.f32.mrb[0].mxu0
  %v662 = vpop.f32.mrb[0].mxu0
  %v663 = vadd.f32 %v151, %v662
  %v664 = vpop.f32.mrb[0].mxu0
  %665 = vmatprep.mubr.bf16.mxu0 %v302
  %666 = vmatmul.mubr.bf16.gmra.mrb[0].mxu0 %v301
  %v667 = vpop.f32.mrb[0].mxu0
  %v668 = vadd.f32 %v151, %v667
  %v669 = vpop.f32.mrb[0].mxu0
  %v670 = vpop.f32.mrb[0].mxu0
  %v671 = vadd.f32 %v151, %v670
  %v672 = vpop.f32.mrb[0].mxu0
  %673 = vmatprep.mubr.bf16.mxu0 %v307
  %674 = vmatmul.mubr.bf16.gmra.mrb[0].mxu0 %v306
  %v675 = vpop.f32.mrb[0].mxu0
  %v676 = vadd.f32 %v151, %v675
  %v677 = vpop.f32.mrb[0].mxu0
  %v678 = vpop.f32.mrb[0].mxu0
  %v679 = vadd.f32 %v151, %v678
  %v680 = vpop.f32.mrb[0].mxu0
  %681 = vmatprep.mubr.bf16.mxu0 %v312
  %682 = vmatmul.mubr.bf16.gmra.mrb[0].mxu0 %v311
  %v683 = vpop.f32.mrb[0].mxu0
  %v684 = vadd.f32 %v151, %v683
  %v685 = vpop.f32.mrb[0].mxu0
  %v686 = vpop.f32.mrb[0].mxu0
  %v687 = vadd.f32 %v151, %v686
  %v688 = vpop.f32.mrb[0].mxu0
  %689 = vmatprep.mubr.bf16.mxu0 %v317
  %690 = vmatmul.mubr.bf16.gmra.mrb[0].mxu0 %v316
  %v691 = vpop.f32.mrb[0].mxu0
  %v692 = vadd.f32 %v151, %v691
  %v693 = vpop.f32.mrb[0].mxu0
  %v694 = vpop.f32.mrb[0].mxu0
  %v695 = vadd.f32 %v151, %v694
  %v696 = vpop.f32.mrb[0].mxu0
  %697 = vdwg.mxu0
  %698 = vmatprep.subr.bf16.mxu0 0
  %699 = vmatpush1.bf16.msra.mxu0 %v537
  %700 = vmatprep.subr.bf16.mxu0 0
  %701 = vmatpush1.bf16.msra.mxu0 %v538
  %702 = vmatprep.subr.bf16.mxu0 0
  %703 = vmatpush1.bf16.msra.mxu0 %v539
  %704 = vmatprep.subr.bf16.mxu0 0
  %705 = vmatpush1.bf16.msra.mxu0 %v540
  %706 = vmatprep.subr.bf16.mxu0 0
  %707 = vmatpush1.bf16.msra.mxu0 %v541
  %708 = vmatprep.subr.bf16.mxu0 0
  %709 = vmatpush1.bf16.msra.mxu0 %v542
  %710 = vmatprep.subr.bf16.mxu0 0
  %711 = vmatpush1.bf16.msra.mxu0 %v543
  %712 = vmatprep.subr.bf16.mxu0 0
  %713 = vmatpush1.bf16.msra.mxu0 %v544
  %714 = vmatprep.subr.bf16.mxu0 0
  %715 = vmatpush1.bf16.msra.mxu0 %v545
  %716 = vmatprep.subr.bf16.mxu0 0
  %717 = vmatpush1.bf16.msra.mxu0 %v546
  %718 = vmatprep.subr.bf16.mxu0 0
  %719 = vmatpush1.bf16.msra.mxu0 %v547
  %720 = vmatprep.subr.bf16.mxu0 0
  %721 = vmatpush1.bf16.msra.mxu0 %v548
  %722 = vmatprep.subr.bf16.mxu0 0
  %723 = vmatpush1.bf16.msra.mxu0 %v549
  %724 = vmatprep.subr.bf16.mxu0 0
  %725 = vmatpush1.bf16.msra.mxu0 %v550
  %726 = vmatprep.subr.bf16.mxu0 0
  %727 = vmatpush1.bf16.msra.mxu0 %v551
  %728 = vmatprep.subr.bf16.mxu0 0
  %729 = vmatpush1.bf16.msra.mxu0 %v552
  %730 = vmatprep.mubr.bf16.mxu0 %v284
  %731 = vmatmul.mubr.bf16.gmra.mrb[0].mxu0 %v283
  %v732 = vpop.f32.mrb[0].mxu0
  %v733 = vadd.f32 %v636, %v732
  %v734 = vpop.f32.mrb[0].mxu0
  %v735 = vpop.f32.mrb[0].mxu0
  %v736 = vadd.f32 %v639, %v735
  %v737 = vpop.f32.mrb[0].mxu0
  %738 = vmatprep.mubr.bf16.mxu0 %v289
  %739 = vmatmul.mubr.bf16.gmra.mrb[0].mxu0 %v288
  %v740 = vpop.f32.mrb[0].mxu0
  %v741 = vadd.f32 %v644, %v740
  %v742 = vpop.f32.mrb[0].mxu0
  %v743 = vpop.f32.mrb[0].mxu0
  %v744 = vadd.f32 %v647, %v743
  %v745 = vpop.f32.mrb[0].mxu0
  %746 = vmatprep.mubr.bf16.mxu0 %v294
  %747 = vmatmul.mubr.bf16.gmra.mrb[0].mxu0 %v293
  %v748 = vpop.f32.mrb[0].mxu0
  %v749 = vadd.f32 %v652, %v748
  %v750 = vpop.f32.mrb[0].mxu0
  %v751 = vpop.f32.mrb[0].mxu0
  %v752 = vadd.f32 %v655, %v751
  %v753 = vpop.f32.mrb[0].mxu0
  %754 = vmatprep.mubr.bf16.mxu0 %v299
  %755 = vmatmul.mubr.bf16.gmra.mrb[0].mxu0 %v298
  %v756 = vpop.f32.mrb[0].mxu0
  %v757 = vadd.f32 %v660, %v756
  %v758 = vpop.f32.mrb[0].mxu0
  %v759 = vpop.f32.mrb[0].mxu0
  %v760 = vadd.f32 %v663, %v759
  %v761 = vpop.f32.mrb[0].mxu0
  %762 = vmatprep.mubr.bf16.mxu0 %v304
  %763 = vmatmul.mubr.bf16.gmra.mrb[0].mxu0 %v303
  %v764 = vpop.f32.mrb[0].mxu0
  %v765 = vadd.f32 %v668, %v764
  %v766 = vpop.f32.mrb[0].mxu0
  %v767 = vpop.f32.mrb[0].mxu0
  %v768 = vadd.f32 %v671, %v767
  %v769 = vpop.f32.mrb[0].mxu0
  %770 = vmatprep.mubr.bf16.mxu0 %v309
  %771 = vmatmul.mubr.bf16.gmra.mrb[0].mxu0 %v308
  %v772 = vpop.f32.mrb[0].mxu0
  %v773 = vadd.f32 %v676, %v772
  %v774 = vpop.f32.mrb[0].mxu0
  %v775 = vpop.f32.mrb[0].mxu0
  %v776 = vadd.f32 %v679, %v775
  %v777 = vpop.f32.mrb[0].mxu0
  %778 = vmatprep.mubr.bf16.mxu0 %v314
  %779 = vmatmul.mubr.bf16.gmra.mrb[0].mxu0 %v313
  %v780 = vpop.f32.mrb[0].mxu0
  %v781 = vadd.f32 %v684, %v780
  %v782 = vpop.f32.mrb[0].mxu0
  %v783 = vpop.f32.mrb[0].mxu0
  %v784 = vadd.f32 %v687, %v783
  %v785 = vpop.f32.mrb[0].mxu0
  %786 = vmatprep.mubr.bf16.mxu0 %v319
  %787 = vmatmul.mubr.bf16.gmra.mrb[0].mxu0 %v318
  %v788 = vpop.f32.mrb[0].mxu0
  %v789 = vadd.f32 %v692, %v788
  %v790 = vpop.f32.mrb[0].mxu0
  %v791 = vpop.f32.mrb[0].mxu0
  %v792 = vadd.f32 %v695, %v791
  %v793 = vpop.f32.mrb[0].mxu0
  %794 = vdwg.mxu0
  %795 = vmatprep.subr.bf16.mxu0 0
  %796 = vmatpush1.bf16.msra.mxu0 %v553
  %797 = vmatprep.subr.bf16.mxu0 0
  %798 = vmatpush1.bf16.msra.mxu0 %v554
  %799 = vmatprep.subr.bf16.mxu0 0
  %800 = vmatpush1.bf16.msra.mxu0 %v555
  %801 = vmatprep.subr.bf16.mxu0 0
  %802 = vmatpush1.bf16.msra.mxu0 %v556
  %803 = vmatprep.subr.bf16.mxu0 0
  %804 = vmatpush1.bf16.msra.mxu0 %v557
  %805 = vmatprep.subr.bf16.mxu0 0
  %806 = vmatpush1.bf16.msra.mxu0 %v558
  %807 = vmatprep.subr.bf16.mxu0 0
  %808 = vmatpush1.bf16.msra.mxu0 %v559
  %809 = vmatprep.subr.bf16.mxu0 0
  %810 = vmatpush1.bf16.msra.mxu0 %v560
  %811 = vmatprep.subr.bf16.mxu0 0
  %812 = vmatpush1.bf16.msra.mxu0 0
  %813 = vmatprep.subr.bf16.mxu0 0
  %814 = vmatpush1.bf16.msra.mxu0 0
  %815 = vmatprep.subr.bf16.mxu0 0
  %816 = vmatpush1.bf16.msra.mxu0 0
  %817 = vmatprep.subr.bf16.mxu0 0
  %818 = vmatpush1.bf16.msra.mxu0 0
  %819 = vmatprep.subr.bf16.mxu0 0
  %820 = vmatpush1.bf16.msra.mxu0 0
  %821 = vmatprep.subr.bf16.mxu0 0
  %822 = vmatpush1.bf16.msra.mxu0 0
  %823 = vmatprep.subr.bf16.mxu0 0
  %824 = vmatpush1.bf16.msra.mxu0 0
  %825 = vmatprep.subr.bf16.mxu0 0
  %826 = vmatpush1.bf16.msra.mxu0 0
  %827 = vmatprep.mubr.bf16.mxu0 0
  %828 = vmatmul.mubr.bf16.gmra.mrb[0].mxu0 %v285
  %v829 = vpop.f32.mrb[0].mxu0
  %v830 = vadd.f32 %v733, %v829
  %v831 = vpop.f32.mrb[0].mxu0
  %v832 = vpop.f32.mrb[0].mxu0
  %v833 = vadd.f32 %v736, %v832
  %v834 = vpop.f32.mrb[0].mxu0
  %835 = vmatprep.mubr.bf16.mxu0 0
  %836 = vmatmul.mubr.bf16.gmra.mrb[0].mxu0 %v290
  %v837 = vpop.f32.mrb[0].mxu0
  %v838 = vadd.f32 %v741, %v837
  %v839 = vpop.f32.mrb[0].mxu0
  %v840 = vpop.f32.mrb[0].mxu0
  %v841 = vadd.f32 %v744, %v840
  %v842 = vpop.f32.mrb[0].mxu0
  %843 = vmatprep.mubr.bf16.mxu0 0
  %844 = vmatmul.mubr.bf16.gmra.mrb[0].mxu0 %v295
  %v845 = vpop.f32.mrb[0].mxu0
  %v846 = vadd.f32 %v749, %v845
  %v847 = vpop.f32.mrb[0].mxu0
  %v848 = vpop.f32.mrb[0].mxu0
  %v849 = vadd.f32 %v752, %v848
  %v850 = vpop.f32.mrb[0].mxu0
  %851 = vmatprep.mubr.bf16.mxu0 0
  %852 = vmatmul.mubr.bf16.gmra.mrb[0].mxu0 %v300
  %v853 = vpop.f32.mrb[0].mxu0
  %v854 = vadd.f32 %v757, %v853
  %v855 = vpop.f32.mrb[0].mxu0
  %v856 = vpop.f32.mrb[0].mxu0
  %v857 = vadd.f32 %v760, %v856
  %v858 = vpop.f32.mrb[0].mxu0
  %859 = vmatprep.mubr.bf16.mxu0 0
  %860 = vmatmul.mubr.bf16.gmra.mrb[0].mxu0 %v305
  %v861 = vpop.f32.mrb[0].mxu0
  %v862 = vadd.f32 %v765, %v861
  %v863 = vpop.f32.mrb[0].mxu0
  %v864 = vpop.f32.mrb[0].mxu0
  %v865 = vadd.f32 %v768, %v864
  %v866 = vpop.f32.mrb[0].mxu0
  %867 = vmatprep.mubr.bf16.mxu0 0
  %868 = vmatmul.mubr.bf16.gmra.mrb[0].mxu0 %v310
  %v869 = vpop.f32.mrb[0].mxu0
  %v870 = vadd.f32 %v773, %v869
  %v871 = vpop.f32.mrb[0].mxu0
  %v872 = vpop.f32.mrb[0].mxu0
  %v873 = vadd.f32 %v776, %v872
  %v874 = vpop.f32.mrb[0].mxu0
  %875 = vmatprep.mubr.bf16.mxu0 0
  %876 = vmatmul.mubr.bf16.gmra.mrb[0].mxu0 %v315
  %v877 = vpop.f32.mrb[0].mxu0
  %v878 = vadd.f32 %v781, %v877
  %v879 = vpop.f32.mrb[0].mxu0
  %v880 = vpop.f32.mrb[0].mxu0
  %v881 = vadd.f32 %v784, %v880
  %v882 = vpop.f32.mrb[0].mxu0
  %883 = vmatprep.mubr.bf16.mxu0 0
  %884 = vmatmul.mubr.bf16.gmra.mrb[0].mxu0 %v320
  %v885 = vpop.f32.mrb[0].mxu0
  %v886 = vadd.f32 %v789, %v885
  %v887 = vpop.f32.mrb[0].mxu0
  %v888 = vpop.f32.mrb[0].mxu0
  %v889 = vadd.f32 %v792, %v888
  %v890 = vpop.f32.mrb[0].mxu0
  %891 = vdwg.mxu0
  %vm892 = vcmp.gt.f32.partialorder %v830, 0.0
  %vm893 = vcmp.gt.f32.partialorder %v833, 0.0
  %vm894 = vcmp.gt.f32.partialorder %v838, 0.0
  %vm895 = vcmp.gt.f32.partialorder %v841, 0.0
  %vm896 = vcmp.gt.f32.partialorder %v846, 0.0
  %vm897 = vcmp.gt.f32.partialorder %v849, 0.0
  %vm898 = vcmp.gt.f32.partialorder %v854, 0.0
  %vm899 = vcmp.gt.f32.partialorder %v857, 0.0
  %vm900 = vcmp.gt.f32.partialorder %v862, 0.0
  %vm901 = vcmp.gt.f32.partialorder %v865, 0.0
  %vm902 = vcmp.gt.f32.partialorder %v870, 0.0
  %vm903 = vcmp.gt.f32.partialorder %v873, 0.0
  %vm904 = vcmp.gt.f32.partialorder %v878, 0.0
  %vm905 = vcmp.gt.f32.partialorder %v881, 0.0
  %vm906 = vcmp.gt.f32.partialorder %v886, 0.0
  %vm907 = vcmp.gt.f32.partialorder %v889, 0.0
  %v908 = vmul.f32 %v830, 0.25
  %v909 = vmul.f32 %v833, 0.25
  %v910 = vmul.f32 %v838, 0.25
  %v911 = vmul.f32 %v841, 0.25
  %v912 = vmul.f32 %v846, 0.25
  %v913 = vmul.f32 %v849, 0.25
  %v914 = vmul.f32 %v854, 0.25
  %v915 = vmul.f32 %v857, 0.25
  %v916 = vmul.f32 %v862, 0.25
  %v917 = vmul.f32 %v865, 0.25
  %v918 = vmul.f32 %v870, 0.25
  %v919 = vmul.f32 %v873, 0.25
  %v920 = vmul.f32 %v878, 0.25
  %v921 = vmul.f32 %v881, 0.25
  %v922 = vmul.f32 %v886, 0.25
  %v923 = vmul.f32 %v889, 0.25
  %v924 = vsel %vm892, %v830, %v908
  %v925 = vsel %vm893, %v833, %v909
  %v926 = vsel %vm894, %v838, %v910
  %v927 = vsel %vm895, %v841, %v911
  %v928 = vsel %vm896, %v846, %v912
  %v929 = vsel %vm897, %v849, %v913
  %v930 = vsel %vm898, %v854, %v914
  %v931 = vsel %vm899, %v857, %v915
  %v932 = vsel %vm900, %v862, %v916
  %v933 = vsel %vm901, %v865, %v917
  %v934 = vsel %vm902, %v870, %v918
  %v935 = vsel %vm903, %v873, %v919
  %v936 = vsel %vm904, %v878, %v920
  %v937 = vsel %vm905, %v881, %v921
  %v938 = vsel %vm906, %v886, %v922
  %v939 = vsel %vm907, %v889, %v923
  %v940 = vld [vmem:[%s3] sm:$0xf]
  %v941 = vld [vmem:[%s3 + $0x4] sm:$0xf]
  %v942 = vld [vmem:[%s3 + $0x8] sm:$0xf]
  %v943 = vld [vmem:[%s3 + $0xc] sm:$0xf]
  %v944 = vld [vmem:[%s3 + $0x10] sm:$0xf]
  %v945 = vld [vmem:[%s3 + $0x14] sm:$0xf]
  %v946 = vld [vmem:[%s3 + $0x18] sm:$0xf]
  %v947 = vld [vmem:[%s3 + $0x1c] sm:$0xf]
  %v948 = vld [vmem:[%s3 + $0x20] sm:$0xf]
  %v949 = vld [vmem:[%s3 + $0x24] sm:$0xf]
  %v950 = vld [vmem:[%s3 + $0x28] sm:$0xf]
  %v951 = vld [vmem:[%s3 + $0x2c] sm:$0xf]
  %v952 = vld [vmem:[%s3 + $0x30] sm:$0xf]
  %v953 = vld [vmem:[%s3 + $0x34] sm:$0xf]
  %v954 = vld [vmem:[%s3 + $0x38] sm:$0xf]
  %v955 = vld [vmem:[%s3 + $0x3c] sm:$0xf]
  %v956 = vunpack.c.l.bf16 %v940
  %v957 = vunpack.c.l.bf16 %v941
  %v958 = vunpack.c.l.bf16 %v942
  %v959 = vunpack.c.l.bf16 %v943
  %v960 = vunpack.c.l.bf16 %v944
  %v961 = vunpack.c.l.bf16 %v945
  %v962 = vunpack.c.l.bf16 %v946
  %v963 = vunpack.c.l.bf16 %v947
  %v964 = vunpack.c.l.bf16 %v948
  %v965 = vunpack.c.l.bf16 %v949
  %v966 = vunpack.c.l.bf16 %v950
  %v967 = vunpack.c.l.bf16 %v951
  %v968 = vunpack.c.l.bf16 %v952
  %v969 = vunpack.c.l.bf16 %v953
  %v970 = vunpack.c.l.bf16 %v954
  %v971 = vunpack.c.l.bf16 %v955
  %v972 = vadd.f32 %v924, %v956
  %v973 = vadd.f32 %v925, %v957
  %v974 = vadd.f32 %v926, %v958
  %v975 = vadd.f32 %v927, %v959
  %v976 = vadd.f32 %v928, %v960
  %v977 = vadd.f32 %v929, %v961
  %v978 = vadd.f32 %v930, %v962
  %v979 = vadd.f32 %v931, %v963
  %v980 = vadd.f32 %v932, %v964
  %v981 = vadd.f32 %v933, %v965
  %v982 = vadd.f32 %v934, %v966
  %v983 = vadd.f32 %v935, %v967
  %v984 = vadd.f32 %v936, %v968
  %v985 = vadd.f32 %v937, %v969
  %v986 = vadd.f32 %v938, %v970
  %v987 = vadd.f32 %v939, %v971
  %v988 = vpack.c.bf16 %v973, %v972
  %v989 = vpack.c.bf16 %v975, %v974
  %v990 = vpack.c.bf16 %v977, %v976
  %v991 = vpack.c.bf16 %v979, %v978
  %v992 = vpack.c.bf16 %v981, %v980
  %v993 = vpack.c.bf16 %v983, %v982
  %v994 = vpack.c.bf16 %v985, %v984
  %v995 = vpack.c.bf16 %v987, %v986
  %v1004 = vunpack.c.l.b16 %v988
  %v1005 = vunpack.c.h.b16 %v988
  %v1006 = vunpack.c.l.b16 %v989
  %v1007 = vunpack.c.h.b16 %v989
  %v1008 = vunpack.c.l.b16 %v990
  %v1009 = vunpack.c.h.b16 %v990
  %v1010 = vunpack.c.l.b16 %v991
  %v1011 = vunpack.c.h.b16 %v991
  %v1012 = vunpack.c.l.b16 %v992
  %v1013 = vunpack.c.h.b16 %v992
  %v1014 = vunpack.c.l.b16 %v993
  %v1015 = vunpack.c.h.b16 %v993
  %v1016 = vunpack.c.l.b16 %v994
  %v1017 = vunpack.c.h.b16 %v994
  %v1018 = vunpack.c.l.b16 %v995
  %v1019 = vunpack.c.h.b16 %v995
  %v1020 = vpack.c.b16 %v1004, %v1004
  %v1021 = vpack.c.b16 %v1005, %v1005
  %v1022 = vpack.c.b16 %v1006, %v1006
  %v1023 = vpack.c.b16 %v1007, %v1007
  %v1024 = vpack.c.b16 %v1008, %v1008
  %v1025 = vpack.c.b16 %v1009, %v1009
  %v1026 = vpack.c.b16 %v1010, %v1010
  %v1027 = vpack.c.b16 %v1011, %v1011
  %v1028 = vpack.c.b16 %v1012, %v1012
  %v1029 = vpack.c.b16 %v1013, %v1013
  %v1030 = vpack.c.b16 %v1014, %v1014
  %v1031 = vpack.c.b16 %v1015, %v1015
  %v1032 = vpack.c.b16 %v1016, %v1016
  %v1033 = vpack.c.b16 %v1017, %v1017
  %v1034 = vpack.c.b16 %v1018, %v1018
  %v1035 = vpack.c.b16 %v1019, %v1019
  %vm1052 = vcmask 125952
  %1053 = vst.msk [vmem:[%s4] sm:$0xf] %vm1052, %v1020
  %1054 = vst.msk [vmem:[%s4 + $0x4] sm:$0xf] %vm1052, %v1021
  %1055 = vst.msk [vmem:[%s4 + $0x8] sm:$0xf] %vm1052, %v1022
  %1056 = vst.msk [vmem:[%s4 + $0xc] sm:$0xf] %vm1052, %v1023
  %1057 = vst.msk [vmem:[%s4 + $0x10] sm:$0xf] %vm1052, %v1024
  %1058 = vst.msk [vmem:[%s4 + $0x14] sm:$0xf] %vm1052, %v1025
  %1059 = vst.msk [vmem:[%s4 + $0x18] sm:$0xf] %vm1052, %v1026
  %1060 = vst.msk [vmem:[%s4 + $0x1c] sm:$0xf] %vm1052, %v1027
  %1061 = vst.msk [vmem:[%s4 + $0x20] sm:$0xf] %vm1052, %v1028
  %1062 = vst.msk [vmem:[%s4 + $0x24] sm:$0xf] %vm1052, %v1029
  %1063 = vst.msk [vmem:[%s4 + $0x28] sm:$0xf] %vm1052, %v1030
  %1064 = vst.msk [vmem:[%s4 + $0x2c] sm:$0xf] %vm1052, %v1031
  %1065 = vst.msk [vmem:[%s4 + $0x30] sm:$0xf] %vm1052, %v1032
  %1066 = vst.msk [vmem:[%s4 + $0x34] sm:$0xf] %vm1052, %v1033
  %1067 = vst.msk [vmem:[%s4 + $0x38] sm:$0xf] %vm1052, %v1034
  %1068 = vst.msk [vmem:[%s4 + $0x3c] sm:$0xf] %vm1052, %v1035
  // Predicated region
  $region18: #{tounet_fwd.191} parent=0 // pred_check
    _
  $region19: #{tounet_fwd.191} parent=0 // pred_check_branch
    %1070 = sbr.rel (0) target = $region21
  $region20: #{tounet_fwd.191} parent=0 // pred_region
    _
  $region21: #{tounet_fwd.191} parent=0 // pred_fallthru
    _
  // Predicated region
  $region22: #{tounet_fwd.191} parent=0 // pred_check
    _
  $region23: #{tounet_fwd.191} parent=0 // pred_check_branch
    %1072 = sbr.rel (0) target = $region25
  $region24: #{tounet_fwd.191} parent=0 // pred_region
    _
  $region25: #{tounet_fwd.191} parent=0 // pred_fallthru
    _

// kernel: tounet_fwd.201
$region0: #{tounet_fwd.201}
  #allocation0 [shape = 'u32[]', space=smem, size = 0x4, offset = 0x4, fixed_abs, tag = 'smem constant byte address 0x4 - core index']
  #allocation1 [shape = 'u32[144,128]{1,0:T(1,128)}', space=vmem, size = 0x12000, scoped, tag = 'internal scratch']
  %s0 = inlined_call_operand.vmem [shape: bf16[256,512], index: 0, kind: input, shape index: {}]
  %s1 = inlined_call_operand.vmem [shape: bf16[512,128], index: 1, kind: input, shape index: {}]
  %s2 = inlined_call_operand.vmem [shape: f32[1,128], index: 2, kind: input, shape index: {}]
  %s3 = inlined_call_operand.vmem [shape: bf16[256,16], index: 3, kind: output, shape index: {}]
  %s4 = sld [smem:[#allocation0]]
  $region45: #{tounet_fwd.201} parent=0
    _
  %s6 = ssub.s32 1, %s4
  %s7 = scalar_select 0, %s6, %s4
  loop: start=0, step=1, limit=4
  $region2: #{tounet_fwd.201} parent=0 // loop_pre_header
    _
  $region3: #{tounet_fwd.201} parent=0 // loop_header
    %s9 = sphi 0, %s13
    %p10 = scmp.ge.s32.totalorder %s9, 4
    %s19 = sphi 0, %s21
    %s22 = sphi 0, %s19
    %s23 = sphi 0, %s22
    %s39 = sphi 0, %s23
    %s43 = sphi 0, %s43
    %s45 = sphi 0, %s43
    %s46 = sphi 0, %s45
    %s60 = sphi 0, %s46
    %s64 = sphi 0, %s64
    %s66 = sphi 0, %s64
    %s67 = sphi 0, %s66
    %s81 = sphi 0, %s67
    %s87 = sphi 0, %s89
    %s90 = sphi 0, %s87
    %s91 = sphi 0, %s90
    %s107 = sphi 0, %s91
  $region4: #{tounet_fwd.201} parent=0 // loop_header_branch
    %12 = sbr.rel (%p10) target = $region8
  $region5: #{tounet_fwd.201} parent=0 // loop_body
    %s14 = ssub.s32 %s9, 1
    %s15 = ssub.s32 %s9, 2
    %s16 = sadd.s32 %s9, 1
    %s17 = ssub.s32 %s9, %s16
    %p18 = scmp.eq.s32.totalorder %s17, 0
    %s20 = sadd.s32 %s19, 1
    %s21 = scalar_select %p18, %s19, %s20
    %p24 = pneg %p18
    %p25 = scmp.eq.s32.totalorder %s9, 1
    %p26 = por %p24, %p25
    %p27 = scmp.ne.s32.totalorder %s19, %s22
    %p28 = scmp.eq.s32.totalorder %s9, 0
    %p29 = por %p27, %p28
    %p30 = scmp.ne.s32.totalorder %s19, %s22
    %p31 = scmp.eq.s32.totalorder %s14, 1
    %p32 = por %p30, %p31
    %p33 = scmp.ne.s32.totalorder %s22, %s23
    %p34 = scmp.eq.s32.totalorder %s14, 0
    %p35 = por %p33, %p34
    %p36 = scmp.ne.s32.totalorder %s22, %s23
    %p37 = scmp.eq.s32.totalorder %s15, 1
    %p38 = por %p36, %p37
    %p40 = scmp.ne.s32.totalorder %s23, %s39
    %p41 = scmp.eq.s32.totalorder %s15, 0
    %p42 = por %p40, %p41
    %s44 = sadd.s32 %s43, 1
    %p47 = scmp.eq.s32.totalorder %s9, 1
    %p48 = scmp.ne.s32.totalorder %s43, %s45
    %p49 = scmp.eq.s32.totalorder %s9, 0
    %p50 = por %p48, %p49
    %p51 = scmp.ne.s32.totalorder %s43, %s45
    %p52 = scmp.eq.s32.totalorder %s14, 1
    %p53 = por %p51, %p52
    %p54 = scmp.ne.s32.totalorder %s45, %s46
    %p55 = scmp.eq.s32.totalorder %s14, 0
    %p56 = por %p54, %p55
    %p57 = scmp.ne.s32.totalorder %s45, %s46
    %p58 = scmp.eq.s32.totalorder %s15, 1
    %p59 = por %p57, %p58
    %p61 = scmp.ne.s32.totalorder %s46, %s60
    %p62 = scmp.eq.s32.totalorder %s15, 0
    %p63 = por %p61, %p62
    %s65 = sadd.s32 %s64, 1
    %p68 = scmp.eq.s32.totalorder %s9, 1
    %p69 = scmp.ne.s32.totalorder %s64, %s66
    %p70 = scmp.eq.s32.totalorder %s9, 0
    %p71 = por %p69, %p70
    %p72 = scmp.ne.s32.totalorder %s64, %s66
    %p73 = scmp.eq.s32.totalorder %s14, 1
    %p74 = por %p72, %p73
    %p75 = scmp.ne.s32.totalorder %s66, %s67
    %p76 = scmp.eq.s32.totalorder %s14, 0
    %p77 = por %p75, %p76
    %p78 = scmp.ne.s32.totalorder %s66, %s67
    %p79 = scmp.eq.s32.totalorder %s15, 1
    %p80 = por %p78, %p79
    %p82 = scmp.ne.s32.totalorder %s67, %s81
    %p83 = scmp.eq.s32.totalorder %s15, 0
    %p84 = por %p82, %p83
    %s85 = ssub.s32 %s9, %s16
    %p86 = scmp.eq.s32.totalorder %s85, 0
    %s88 = sadd.s32 %s87, 1
    %s89 = scalar_select %p86, %s87, %s88
    %p92 = pneg %p86
    %p93 = scmp.eq.s32.totalorder %s9, 1
    %p94 = por %p92, %p93
    %p95 = scmp.ne.s32.totalorder %s87, %s90
    %p96 = scmp.eq.s32.totalorder %s9, 0
    %p97 = por %p95, %p96
    %p98 = scmp.ne.s32.totalorder %s87, %s90
    %p99 = scmp.eq.s32.totalorder %s14, 1
    %p100 = por %p98, %p99
    %p101 = scmp.ne.s32.totalorder %s90, %s91
    %p102 = scmp.eq.s32.totalorder %s14, 0
    %p103 = por %p101, %p102
    %p104 = scmp.ne.s32.totalorder %s90, %s91
    %p105 = scmp.eq.s32.totalorder %s15, 1
    %p106 = por %p104, %p105
    %p108 = scmp.ne.s32.totalorder %s91, %s107
    %p109 = scmp.eq.s32.totalorder %s15, 0
    %p110 = por %p108, %p109
    %p111 = scmp.le.s32.totalorder 1, %s9
    %p112 = scmp.lt.s32.totalorder %s9, 3
    %p113 = pnand %p111, %p112
    %p114 = pneg %p113
    // Predicated region
    $region9: #{tounet_fwd.201} parent=5 // pred_check
      _
    $region10: #{tounet_fwd.201} parent=5 // pred_check_branch
      %116 = sbr.rel (%p113) target = $region12
    $region11: #{tounet_fwd.201} parent=5 // pred_region
      %s117 = ssub.s32 %s9, 1
      // Predicated region
      $region13: #{tounet_fwd.201} parent=11 // pred_check
        %p118 = pneg %p56
      $region14: #{tounet_fwd.201} parent=11 // pred_check_branch
        %120 = sbr.rel (%p118) target = $region16
      $region15: #{tounet_fwd.201} parent=11 // pred_region
        _
      $region16: #{tounet_fwd.201} parent=11 // pred_fallthru
        _
      // Predicated region
      $region17: #{tounet_fwd.201} parent=11 // pred_check
        %p121 = pneg %p77
      $region18: #{tounet_fwd.201} parent=11 // pred_check_branch
        %123 = sbr.rel (%p121) target = $region20
      $region19: #{tounet_fwd.201} parent=11 // pred_region
        _
      $region20: #{tounet_fwd.201} parent=11 // pred_fallthru
        _
    $region12: #{tounet_fwd.201} parent=5 // pred_fallthru
      _
    %p124 = scmp.lt.s32.totalorder %s9, 2
    // Predicated region
    $region21: #{tounet_fwd.201} parent=5 // pred_check
      %p125 = pneg %p124
    $region22: #{tounet_fwd.201} parent=5 // pred_check_branch
      %127 = sbr.rel (%p125) target = $region24
    $region23: #{tounet_fwd.201} parent=5 // pred_region
      // Predicated region
      $region25: #{tounet_fwd.201} parent=23 // pred_check
        %p128 = pneg %p29
      $region26: #{tounet_fwd.201} parent=23 // pred_check_branch
        %130 = sbr.rel (%p128) target = $region28
      $region27: #{tounet_fwd.201} parent=23 // pred_region
        %s131 = smul.u32 16, %s9
        %p132 = scmp.lt.s32.totalorder %s131, 31
        %s133 = scalar_select %p132, %s131, 31
        %s134 = smul.addr %s133, 4
        %s135 = smul.addr %s134, 4
        %s136 = scalar_lea.vmem %s0, %s135
        %s137 = smul.u32 16, %s9
      $region28: #{tounet_fwd.201} parent=23 // pred_fallthru
        _
    $region24: #{tounet_fwd.201} parent=5 // pred_fallthru
      _
    %p138 = scmp.le.s32.totalorder 1, %s9
    %p139 = scmp.lt.s32.totalorder %s9, 3
    %p140 = pnand %p138, %p139
    %p141 = pneg %p140
    // Predicated region
    $region29: #{tounet_fwd.201} parent=5 // pred_check
      _
    $region30: #{tounet_fwd.201} parent=5 // pred_check_branch
      %143 = sbr.rel (%p140) target = $region32
    $region31: #{tounet_fwd.201} parent=5 // pred_region
      %s144 = ssub.s32 %s9, 1
      %s145 = smul.u32 16, %s14
      %p146 = scmp.lt.s32.totalorder %s145, 31
      %s147 = scalar_select %p146, %s145, 31
      %s148 = smul.addr %s147, 4
      %s149 = smul.addr %s148, 4
      %s150 = scalar_lea.vmem %s0, %s149
      %p151 = pneg %p35
      %p152 = pneg %p32
      %p153 = pneg %p56
      %p154 = pneg %p53
      %p155 = pneg %p77
      %p156 = pneg %p74
      %p157 = pneg %p103
      %p158 = pneg %p100
      %s159 = smul.u32 16, %s14
      %p160 = scmp.lt.s32.totalorder %s159, 31
      %s161 = scalar_select %p160, %s159, 31
      %s162 = smul.addr %s161, 4
      %s163 = scalar_lea.vmem %s3, %s162
      %s164 = smul.u32 16, %s14
      %p165 = scmp.lt.s32.totalorder %s164, 31
      %s166 = scalar_select %p165, %s164, 31
      %s167 = smul.addr %s166, 4
      %s168 = smul.addr %s167, 4
      %s169 = scalar_lea.vmem %s0, %s168
      %s170 = smul.u32 16, %s14
      %s171 = smul.u32 16, %s14
      %p172 = scmp.lt.s32.totalorder %s171, 31
      %s173 = scalar_select %p172, %s171, 31
      %s174 = smul.addr %s173, 4
      %s175 = scalar_lea.vmem %s3, %s174
      %s176 = smul.u32 16, %s14
      %v178 = vld [vmem:[%s169] sm:$0xff]
      %v179 = vld [vmem:[%s169 + $0x8] sm:$0xff]
      %v180 = vld [vmem:[%s169 + $0x10] sm:$0xff]
      %v181 = vld [vmem:[%s169 + $0x18] sm:$0xff]
      %v182 = vld [vmem:[%s169 + $0x20] sm:$0xff]
      %v183 = vld [vmem:[%s169 + $0x28] sm:$0xff]
      %v184 = vld [vmem:[%s169 + $0x30] sm:$0xff]
      %v185 = vld [vmem:[%s169 + $0x38] sm:$0xff]
      %v186 = vld [vmem:[%s169 + $0x40] sm:$0xff]
      %v187 = vld [vmem:[%s169 + $0x48] sm:$0xff]
      %v188 = vld [vmem:[%s169 + $0x50] sm:$0xff]
      %v189 = vld [vmem:[%s169 + $0x58] sm:$0xff]
      %v190 = vld [vmem:[%s169 + $0x60] sm:$0xff]
      %v191 = vld [vmem:[%s169 + $0x68] sm:$0xff]
      %v192 = vld [vmem:[%s169 + $0x70] sm:$0xff]
      %v193 = vld [vmem:[%s169 + $0x78] sm:$0xff]
      %v194 = vld [vmem:[%s169 + $0x80] sm:$0xff]
      %v195 = vld [vmem:[%s169 + $0x88] sm:$0xff]
      %v196 = vld [vmem:[%s169 + $0x90] sm:$0xff]
      %v197 = vld [vmem:[%s169 + $0x98] sm:$0xff]
      %v198 = vld [vmem:[%s169 + $0xa0] sm:$0xff]
      %v199 = vld [vmem:[%s169 + $0xa8] sm:$0xff]
      %v200 = vld [vmem:[%s169 + $0xb0] sm:$0xff]
      %v201 = vld [vmem:[%s169 + $0xb8] sm:$0xff]
      %v202 = vld [vmem:[%s169 + $0xc0] sm:$0xff]
      %v203 = vld [vmem:[%s169 + $0xc8] sm:$0xff]
      %v204 = vld [vmem:[%s169 + $0xd0] sm:$0xff]
      %v205 = vld [vmem:[%s169 + $0xd8] sm:$0xff]
      %v206 = vld [vmem:[%s169 + $0xe0] sm:$0xff]
      %v207 = vld [vmem:[%s169 + $0xe8] sm:$0xff]
      %v208 = vld [vmem:[%s169 + $0xf0] sm:$0xff]
      %v209 = vld [vmem:[%s169 + $0xf8] sm:$0xff]
      %v210 = vld [vmem:[%s1] sm:$0xf]
      %v211 = vld [vmem:[%s1 + $0x4] sm:$0xf]
      %v212 = vld [vmem:[%s1 + $0x8] sm:$0xf]
      %v213 = vld [vmem:[%s1 + $0xc] sm:$0xf]
      %v214 = vld [vmem:[%s1 + $0x10] sm:$0xf]
      %v215 = vld [vmem:[%s1 + $0x14] sm:$0xf]
      %v216 = vld [vmem:[%s1 + $0x18] sm:$0xf]
      %v217 = vld [vmem:[%s1 + $0x1c] sm:$0xf]
      %v218 = vld [vmem:[%s1 + $0x20] sm:$0xf]
      %v219 = vld [vmem:[%s1 + $0x24] sm:$0xf]
      %v220 = vld [vmem:[%s1 + $0x28] sm:$0xf]
      %v221 = vld [vmem:[%s1 + $0x2c] sm:$0xf]
      %v222 = vld [vmem:[%s1 + $0x30] sm:$0xf]
      %v223 = vld [vmem:[%s1 + $0x34] sm:$0xf]
      %v224 = vld [vmem:[%s1 + $0x38] sm:$0xf]
      %v225 = vld [vmem:[%s1 + $0x3c] sm:$0xf]
      %v226 = vld [vmem:[%s1 + $0x40] sm:$0xf]
      %v227 = vld [vmem:[%s1 + $0x44] sm:$0xf]
      %v228 = vld [vmem:[%s1 + $0x48] sm:$0xf]
      %v229 = vld [vmem:[%s1 + $0x4c] sm:$0xf]
      %v230 = vld [vmem:[%s1 + $0x50] sm:$0xf]
      %v231 = vld [vmem:[%s1 + $0x54] sm:$0xf]
      %v232 = vld [vmem:[%s1 + $0x58] sm:$0xf]
      %v233 = vld [vmem:[%s1 + $0x5c] sm:$0xf]
      %v234 = vld [vmem:[%s1 + $0x60] sm:$0xf]
      %v235 = vld [vmem:[%s1 + $0x64] sm:$0xf]
      %v236 = vld [vmem:[%s1 + $0x68] sm:$0xf]
      %v237 = vld [vmem:[%s1 + $0x6c] sm:$0xf]
      %v238 = vld [vmem:[%s1 + $0x70] sm:$0xf]
      %v239 = vld [vmem:[%s1 + $0x74] sm:$0xf]
      %v240 = vld [vmem:[%s1 + $0x78] sm:$0xf]
      %v241 = vld [vmem:[%s1 + $0x7c] sm:$0xf]
      %v242 = vld [vmem:[%s1 + $0x80] sm:$0xf]
      %v243 = vld [vmem:[%s1 + $0x84] sm:$0xf]
      %v244 = vld [vmem:[%s1 + $0x88] sm:$0xf]
      %v245 = vld [vmem:[%s1 + $0x8c] sm:$0xf]
      %v246 = vld [vmem:[%s1 + $0x90] sm:$0xf]
      %v247 = vld [vmem:[%s1 + $0x94] sm:$0xf]
      %v248 = vld [vmem:[%s1 + $0x98] sm:$0xf]
      %v249 = vld [vmem:[%s1 + $0x9c] sm:$0xf]
      %v250 = vld [vmem:[%s1 + $0xa0] sm:$0xf]
      %v251 = vld [vmem:[%s1 + $0xa4] sm:$0xf]
      %v252 = vld [vmem:[%s1 + $0xa8] sm:$0xf]
      %v253 = vld [vmem:[%s1 + $0xac] sm:$0xf]
      %v254 = vld [vmem:[%s1 + $0xb0] sm:$0xf]
      %v255 = vld [vmem:[%s1 + $0xb4] sm:$0xf]
      %v256 = vld [vmem:[%s1 + $0xb8] sm:$0xf]
      %v257 = vld [vmem:[%s1 + $0xbc] sm:$0xf]
      %v258 = vld [vmem:[%s1 + $0xc0] sm:$0xf]
      %v259 = vld [vmem:[%s1 + $0xc4] sm:$0xf]
      %v260 = vld [vmem:[%s1 + $0xc8] sm:$0xf]
      %v261 = vld [vmem:[%s1 + $0xcc] sm:$0xf]
      %v262 = vld [vmem:[%s1 + $0xd0] sm:$0xf]
      %v263 = vld [vmem:[%s1 + $0xd4] sm:$0xf]
      %v264 = vld [vmem:[%s1 + $0xd8] sm:$0xf]
      %v265 = vld [vmem:[%s1 + $0xdc] sm:$0xf]
      %v266 = vld [vmem:[%s1 + $0xe0] sm:$0xf]
      %v267 = vld [vmem:[%s1 + $0xe4] sm:$0xf]
      %v268 = vld [vmem:[%s1 + $0xe8] sm:$0xf]
      %v269 = vld [vmem:[%s1 + $0xec] sm:$0xf]
      %v270 = vld [vmem:[%s1 + $0xf0] sm:$0xf]
      %v271 = vld [vmem:[%s1 + $0xf4] sm:$0xf]
      %v272 = vld [vmem:[%s1 + $0xf8] sm:$0xf]
      %v273 = vld [vmem:[%s1 + $0xfc] sm:$0xf]
      %v274 = vld [vmem:[%s2] sm:$0x1]
      %v276 = vlaneseq
      %v277 = vshrl.u32 %v276, 7
      %v278 = vsub.s32 0, %v277
      %v279 = vrot.slane %v274, %v278
      %v313 = vunpack.c.l.b16 %v178
      %v314 = vunpack.c.h.b16 %v178
      %v315 = vunpack.c.l.b16 %v179
      %v316 = vunpack.c.h.b16 %v179
      %v317 = vunpack.c.l.b16 %v180
      %v318 = vunpack.c.h.b16 %v180
      %v319 = vunpack.c.l.b16 %v181
      %v320 = vunpack.c.h.b16 %v181
      %v321 = vunpack.c.l.b16 %v182
      %v322 = vunpack.c.h.b16 %v182
      %v323 = vunpack.c.l.b16 %v183
      %v324 = vunpack.c.h.b16 %v183
      %v325 = vunpack.c.l.b16 %v184
      %v326 = vunpack.c.h.b16 %v184
      %v327 = vunpack.c.l.b16 %v185
      %v328 = vunpack.c.h.b16 %v185
      %v329 = vunpack.c.l.b16 %v186
      %v330 = vunpack.c.h.b16 %v186
      %v331 = vunpack.c.l.b16 %v187
      %v332 = vunpack.c.h.b16 %v187
      %v333 = vunpack.c.l.b16 %v188
      %v334 = vunpack.c.h.b16 %v188
      %v335 = vunpack.c.l.b16 %v189
      %v336 = vunpack.c.h.b16 %v189
      %v337 = vunpack.c.l.b16 %v190
      %v338 = vunpack.c.h.b16 %v190
      %v339 = vunpack.c.l.b16 %v191
      %v340 = vunpack.c.h.b16 %v191
      %v341 = vunpack.c.l.b16 %v192
      %v342 = vunpack.c.h.b16 %v192
      %v343 = vunpack.c.l.b16 %v193
      %v344 = vunpack.c.h.b16 %v193
      %v345 = vunpack.c.l.b16 %v194
      %v346 = vunpack.c.h.b16 %v194
      %v347 = vunpack.c.l.b16 %v195
      %v348 = vunpack.c.h.b16 %v195
      %v349 = vunpack.c.l.b16 %v196
      %v350 = vunpack.c.h.b16 %v196
      %v351 = vunpack.c.l.b16 %v197
      %v352 = vunpack.c.h.b16 %v197
      %v353 = vunpack.c.l.b16 %v198
      %v354 = vunpack.c.h.b16 %v198
      %v355 = vunpack.c.l.b16 %v199
      %v356 = vunpack.c.h.b16 %v199
      %v357 = vunpack.c.l.b16 %v200
      %v358 = vunpack.c.h.b16 %v200
      %v359 = vunpack.c.l.b16 %v201
      %v360 = vunpack.c.h.b16 %v201
      %v361 = vunpack.c.l.b16 %v202
      %v362 = vunpack.c.h.b16 %v202
      %v363 = vunpack.c.l.b16 %v203
      %v364 = vunpack.c.h.b16 %v203
      %v365 = vunpack.c.l.b16 %v204
      %v366 = vunpack.c.h.b16 %v204
      %v367 = vunpack.c.l.b16 %v205
      %v368 = vunpack.c.h.b16 %v205
      %v369 = vunpack.c.l.b16 %v206
      %v370 = vunpack.c.h.b16 %v206
      %v371 = vunpack.c.l.b16 %v207
      %v372 = vunpack.c.h.b16 %v207
      %v373 = vunpack.c.l.b16 %v208
      %v374 = vunpack.c.h.b16 %v208
      %v375 = vunpack.c.l.b16 %v209
      %v376 = vunpack.c.h.b16 %v209
      %v377 = vpack.c.b16 %v317, %v313
      %v378 = vpack.c.b16 %v318, %v314
      %v379 = vpack.c.b16 %v319, %v315
      %v380 = vpack.c.b16 %v320, %v316
      %v381 = vpack.c.b16 %v325, %v321
      %v382 = vpack.c.b16 %v326, %v322
      %v383 = vpack.c.b16 %v327, %v323
      %v384 = vpack.c.b16 %v328, %v324
      %v385 = vpack.c.b16 %v333, %v329
      %v386 = vpack.c.b16 %v334, %v330
      %v387 = vpack.c.b16 %v335, %v331
      %v388 = vpack.c.b16 %v336, %v332
      %v389 = vpack.c.b16 %v341, %v337
      %v390 = vpack.c.b16 %v342, %v338
      %v391 = vpack.c.b16 %v343, %v339
      %v392 = vpack.c.b16 %v344, %v340
      %v393 = vpack.c.b16 %v349, %v345
      %v394 = vpack.c.b16 %v350, %v346
      %v395 = vpack.c.b16 %v351, %v347
      %v396 = vpack.c.b16 %v352, %v348
      %v397 = vpack.c.b16 %v357, %v353
      %v398 = vpack.c.b16 %v358, %v354
      %v399 = vpack.c.b16 %v359, %v355
      %v400 = vpack.c.b16 %v360, %v356
      %v401 = vpack.c.b16 %v365, %v361
      %v402 = vpack.c.b16 %v366, %v362
      %v403 = vpack.c.b16 %v367, %v363
      %v404 = vpack.c.b16 %v368, %v364
      %v405 = vpack.c.b16 %v373, %v369
      %v406 = vpack.c.b16 %v374, %v370
      %v407 = vpack.c.b16 %v375, %v371
      %v408 = vpack.c.b16 %v376, %v372
      %v505 = vunpack.c.l.b16 %v210
      %v506 = vunpack.c.l.b16 %v211
      %v507 = vunpack.c.l.b16 %v212
      %v508 = vunpack.c.l.b16 %v213
      %v509 = vunpack.c.l.b16 %v214
      %v510 = vunpack.c.l.b16 %v215
      %v511 = vunpack.c.l.b16 %v216
      %v512 = vunpack.c.l.b16 %v217
      %v513 = vunpack.c.l.b16 %v218
      %v514 = vunpack.c.l.b16 %v219
      %v515 = vunpack.c.l.b16 %v220
      %v516 = vunpack.c.l.b16 %v221
      %v517 = vunpack.c.l.b16 %v222
      %v518 = vunpack.c.l.b16 %v223
      %v519 = vunpack.c.l.b16 %v224
      %v520 = vunpack.c.l.b16 %v225
      %v521 = vunpack.c.l.b16 %v226
      %v522 = vunpack.c.l.b16 %v227
      %v523 = vunpack.c.l.b16 %v228
      %v524 = vunpack.c.l.b16 %v229
      %v525 = vunpack.c.l.b16 %v230
      %v526 = vunpack.c.l.b16 %v231
      %v527 = vunpack.c.l.b16 %v232
      %v528 = vunpack.c.l.b16 %v233
      %v529 = vunpack.c.l.b16 %v234
      %v530 = vunpack.c.l.b16 %v235
      %v531 = vunpack.c.l.b16 %v236
      %v532 = vunpack.c.l.b16 %v237
      %v533 = vunpack.c.l.b16 %v238
      %v534 = vunpack.c.l.b16 %v239
      %v535 = vunpack.c.l.b16 %v240
      %v536 = vunpack.c.l.b16 %v241
      %v537 = vunpack.c.l.b16 %v242
      %v538 = vunpack.c.l.b16 %v243
      %v539 = vunpack.c.l.b16 %v244
      %v540 = vunpack.c.l.b16 %v245
      %v541 = vunpack.c.l.b16 %v246
      %v542 = vunpack.c.l.b16 %v247
      %v543 = vunpack.c.l.b16 %v248
      %v544 = vunpack.c.l.b16 %v249
      %v545 = vunpack.c.l.b16 %v250
      %v546 = vunpack.c.l.b16 %v251
      %v547 = vunpack.c.l.b16 %v252
      %v548 = vunpack.c.l.b16 %v253
      %v549 = vunpack.c.l.b16 %v254
      %v550 = vunpack.c.l.b16 %v255
      %v551 = vunpack.c.l.b16 %v256
      %v552 = vunpack.c.l.b16 %v257
      %v553 = vunpack.c.l.b16 %v258
      %v554 = vunpack.c.l.b16 %v259
      %v555 = vunpack.c.l.b16 %v260
      %v556 = vunpack.c.l.b16 %v261
      %v557 = vunpack.c.l.b16 %v262
      %v558 = vunpack.c.l.b16 %v263
      %v559 = vunpack.c.l.b16 %v264
      %v560 = vunpack.c.l.b16 %v265
      %v561 = vunpack.c.l.b16 %v266
      %v562 = vunpack.c.l.b16 %v267
      %v563 = vunpack.c.l.b16 %v268
      %v564 = vunpack.c.l.b16 %v269
      %v565 = vunpack.c.l.b16 %v270
      %v566 = vunpack.c.l.b16 %v271
      %v567 = vunpack.c.l.b16 %v272
      %v568 = vunpack.c.l.b16 %v273
      %v569 = vpack.c.b16 %v506, %v505
      %v570 = vpack.c.b16 %v508, %v507
      %v571 = vpack.c.b16 %v510, %v509
      %v572 = vpack.c.b16 %v512, %v511
      %v573 = vpack.c.b16 %v514, %v513
      %v574 = vpack.c.b16 %v516, %v515
      %v575 = vpack.c.b16 %v518, %v517
      %v576 = vpack.c.b16 %v520, %v519
      %v577 = vpack.c.b16 %v522, %v521
      %v578 = vpack.c.b16 %v524, %v523
      %v579 = vpack.c.b16 %v526, %v525
      %v580 = vpack.c.b16 %v528, %v527
      %v581 = vpack.c.b16 %v530, %v529
      %v582 = vpack.c.b16 %v532, %v531
      %v583 = vpack.c.b16 %v534, %v533
      %v584 = vpack.c.b16 %v536, %v535
      %v585 = vpack.c.b16 %v538, %v537
      %v586 = vpack.c.b16 %v540, %v539
      %v587 = vpack.c.b16 %v542, %v541
      %v588 = vpack.c.b16 %v544, %v543
      %v589 = vpack.c.b16 %v546, %v545
      %v590 = vpack.c.b16 %v548, %v547
      %v591 = vpack.c.b16 %v550, %v549
      %v592 = vpack.c.b16 %v552, %v551
      %v593 = vpack.c.b16 %v554, %v553
      %v594 = vpack.c.b16 %v556, %v555
      %v595 = vpack.c.b16 %v558, %v557
      %v596 = vpack.c.b16 %v560, %v559
      %v597 = vpack.c.b16 %v562, %v561
      %v598 = vpack.c.b16 %v564, %v563
      %v599 = vpack.c.b16 %v566, %v565
      %v600 = vpack.c.b16 %v568, %v567
      %633 = vmatprep.subr.bf16.mxu0 0
      %634 = vmatpush1.bf16.msra.mxu0 %v569
      %635 = vmatprep.subr.bf16.mxu0 0
      %636 = vmatpush1.bf16.msra.mxu0 %v570
      %637 = vmatprep.subr.bf16.mxu0 0
      %638 = vmatpush1.bf16.msra.mxu0 %v571
      %639 = vmatprep.subr.bf16.mxu0 0
      %640 = vmatpush1.bf16.msra.mxu0 %v572
      %641 = vmatprep.subr.bf16.mxu0 0
      %642 = vmatpush1.bf16.msra.mxu0 %v573
      %643 = vmatprep.subr.bf16.mxu0 0
      %644 = vmatpush1.bf16.msra.mxu0 %v574
      %645 = vmatprep.subr.bf16.mxu0 0
      %646 = vmatpush1.bf16.msra.mxu0 %v575
      %647 = vmatprep.subr.bf16.mxu0 0
      %648 = vmatpush1.bf16.msra.mxu0 %v576
      %649 = vmatprep.subr.bf16.mxu0 0
      %650 = vmatpush1.bf16.msra.mxu0 %v577
      %651 = vmatprep.subr.bf16.mxu0 0
      %652 = vmatpush1.bf16.msra.mxu0 %v578
      %653 = vmatprep.subr.bf16.mxu0 0
      %654 = vmatpush1.bf16.msra.mxu0 %v579
      %655 = vmatprep.subr.bf16.mxu0 0
      %656 = vmatpush1.bf16.msra.mxu0 %v580
      %657 = vmatprep.subr.bf16.mxu0 0
      %658 = vmatpush1.bf16.msra.mxu0 %v581
      %659 = vmatprep.subr.bf16.mxu0 0
      %660 = vmatpush1.bf16.msra.mxu0 %v582
      %661 = vmatprep.subr.bf16.mxu0 0
      %662 = vmatpush1.bf16.msra.mxu0 %v583
      %663 = vmatprep.subr.bf16.mxu0 0
      %664 = vmatpush1.bf16.msra.mxu0 %v584
      %665 = vmatprep.mubr.bf16.mxu0 %v378
      %666 = vmatmul.mubr.bf16.gmra.mrb[0].mxu0 %v377
      %v667 = vpop.f32.mrb[0].mxu0
      %v668 = vadd.f32 %v279, %v667
      %v669 = vpop.f32.mrb[0].mxu0
      %v670 = vpop.f32.mrb[0].mxu0
      %v671 = vadd.f32 %v279, %v670
      %v672 = vpop.f32.mrb[0].mxu0
      %673 = vmatprep.mubr.bf16.mxu0 %v382
      %674 = vmatmul.mubr.bf16.gmra.mrb[0].mxu0 %v381
      %v675 = vpop.f32.mrb[0].mxu0
      %v676 = vadd.f32 %v279, %v675
      %v677 = vpop.f32.mrb[0].mxu0
      %v678 = vpop.f32.mrb[0].mxu0
      %v679 = vadd.f32 %v279, %v678
      %v680 = vpop.f32.mrb[0].mxu0
      %681 = vmatprep.mubr.bf16.mxu0 %v386
      %682 = vmatmul.mubr.bf16.gmra.mrb[0].mxu0 %v385
      %v683 = vpop.f32.mrb[0].mxu0
      %v684 = vadd.f32 %v279, %v683
      %v685 = vpop.f32.mrb[0].mxu0
      %v686 = vpop.f32.mrb[0].mxu0
      %v687 = vadd.f32 %v279, %v686
      %v688 = vpop.f32.mrb[0].mxu0
      %689 = vmatprep.mubr.bf16.mxu0 %v390
      %690 = vmatmul.mubr.bf16.gmra.mrb[0].mxu0 %v389
      %v691 = vpop.f32.mrb[0].mxu0
      %v692 = vadd.f32 %v279, %v691
      %v693 = vpop.f32.mrb[0].mxu0
      %v694 = vpop.f32.mrb[0].mxu0
      %v695 = vadd.f32 %v279, %v694
      %v696 = vpop.f32.mrb[0].mxu0
      %697 = vmatprep.mubr.bf16.mxu0 %v394
      %698 = vmatmul.mubr.bf16.gmra.mrb[0].mxu0 %v393
      %v699 = vpop.f32.mrb[0].mxu0
      %v700 = vadd.f32 %v279, %v699
      %v701 = vpop.f32.mrb[0].mxu0
      %v702 = vpop.f32.mrb[0].mxu0
      %v703 = vadd.f32 %v279, %v702
      %v704 = vpop.f32.mrb[0].mxu0
      %705 = vmatprep.mubr.bf16.mxu0 %v398
      %706 = vmatmul.mubr.bf16.gmra.mrb[0].mxu0 %v397
      %v707 = vpop.f32.mrb[0].mxu0
      %v708 = vadd.f32 %v279, %v707
      %v709 = vpop.f32.mrb[0].mxu0
      %v710 = vpop.f32.mrb[0].mxu0
      %v711 = vadd.f32 %v279, %v710
      %v712 = vpop.f32.mrb[0].mxu0
      %713 = vmatprep.mubr.bf16.mxu0 %v402
      %714 = vmatmul.mubr.bf16.gmra.mrb[0].mxu0 %v401
      %v715 = vpop.f32.mrb[0].mxu0
      %v716 = vadd.f32 %v279, %v715
      %v717 = vpop.f32.mrb[0].mxu0
      %v718 = vpop.f32.mrb[0].mxu0
      %v719 = vadd.f32 %v279, %v718
      %v720 = vpop.f32.mrb[0].mxu0
      %721 = vmatprep.mubr.bf16.mxu0 %v406
      %722 = vmatmul.mubr.bf16.gmra.mrb[0].mxu0 %v405
      %v723 = vpop.f32.mrb[0].mxu0
      %v724 = vadd.f32 %v279, %v723
      %v725 = vpop.f32.mrb[0].mxu0
      %v726 = vpop.f32.mrb[0].mxu0
      %v727 = vadd.f32 %v279, %v726
      %v728 = vpop.f32.mrb[0].mxu0
      %729 = vdwg.mxu0
      %730 = vmatprep.subr.bf16.mxu0 0
      %731 = vmatpush1.bf16.msra.mxu0 %v585
      %732 = vmatprep.subr.bf16.mxu0 0
      %733 = vmatpush1.bf16.msra.mxu0 %v586
      %734 = vmatprep.subr.bf16.mxu0 0
      %735 = vmatpush1.bf16.msra.mxu0 %v587
      %736 = vmatprep.subr.bf16.mxu0 0
      %737 = vmatpush1.bf16.msra.mxu0 %v588
      %738 = vmatprep.subr.bf16.mxu0 0
      %739 = vmatpush1.bf16.msra.mxu0 %v589
      %740 = vmatprep.subr.bf16.mxu0 0
      %741 = vmatpush1.bf16.msra.mxu0 %v590
      %742 = vmatprep.subr.bf16.mxu0 0
      %743 = vmatpush1.bf16.msra.mxu0 %v591
      %744 = vmatprep.subr.bf16.mxu0 0
      %745 = vmatpush1.bf16.msra.mxu0 %v592
      %746 = vmatprep.subr.bf16.mxu0 0
      %747 = vmatpush1.bf16.msra.mxu0 %v593
      %748 = vmatprep.subr.bf16.mxu0 0
      %749 = vmatpush1.bf16.msra.mxu0 %v594
      %750 = vmatprep.subr.bf16.mxu0 0
      %751 = vmatpush1.bf16.msra.mxu0 %v595
      %752 = vmatprep.subr.bf16.mxu0 0
      %753 = vmatpush1.bf16.msra.mxu0 %v596
      %754 = vmatprep.subr.bf16.mxu0 0
      %755 = vmatpush1.bf16.msra.mxu0 %v597
      %756 = vmatprep.subr.bf16.mxu0 0
      %757 = vmatpush1.bf16.msra.mxu0 %v598
      %758 = vmatprep.subr.bf16.mxu0 0
      %759 = vmatpush1.bf16.msra.mxu0 %v599
      %760 = vmatprep.subr.bf16.mxu0 0
      %761 = vmatpush1.bf16.msra.mxu0 %v600
      %762 = vmatprep.mubr.bf16.mxu0 %v380
      %763 = vmatmul.mubr.bf16.gmra.mrb[0].mxu0 %v379
      %v764 = vpop.f32.mrb[0].mxu0
      %v765 = vadd.f32 %v668, %v764
      %v766 = vpop.f32.mrb[0].mxu0
      %v767 = vpop.f32.mrb[0].mxu0
      %v768 = vadd.f32 %v671, %v767
      %v769 = vpop.f32.mrb[0].mxu0
      %770 = vmatprep.mubr.bf16.mxu0 %v384
      %771 = vmatmul.mubr.bf16.gmra.mrb[0].mxu0 %v383
      %v772 = vpop.f32.mrb[0].mxu0
      %v773 = vadd.f32 %v676, %v772
      %v774 = vpop.f32.mrb[0].mxu0
      %v775 = vpop.f32.mrb[0].mxu0
      %v776 = vadd.f32 %v679, %v775
      %v777 = vpop.f32.mrb[0].mxu0
      %778 = vmatprep.mubr.bf16.mxu0 %v388
      %779 = vmatmul.mubr.bf16.gmra.mrb[0].mxu0 %v387
      %v780 = vpop.f32.mrb[0].mxu0
      %v781 = vadd.f32 %v684, %v780
      %v782 = vpop.f32.mrb[0].mxu0
      %v783 = vpop.f32.mrb[0].mxu0
      %v784 = vadd.f32 %v687, %v783
      %v785 = vpop.f32.mrb[0].mxu0
      %786 = vmatprep.mubr.bf16.mxu0 %v392
      %787 = vmatmul.mubr.bf16.gmra.mrb[0].mxu0 %v391
      %v788 = vpop.f32.mrb[0].mxu0
      %v789 = vadd.f32 %v692, %v788
      %v790 = vpop.f32.mrb[0].mxu0
      %v791 = vpop.f32.mrb[0].mxu0
      %v792 = vadd.f32 %v695, %v791
      %v793 = vpop.f32.mrb[0].mxu0
      %794 = vmatprep.mubr.bf16.mxu0 %v396
      %795 = vmatmul.mubr.bf16.gmra.mrb[0].mxu0 %v395
      %v796 = vpop.f32.mrb[0].mxu0
      %v797 = vadd.f32 %v700, %v796
      %v798 = vpop.f32.mrb[0].mxu0
      %v799 = vpop.f32.mrb[0].mxu0
      %v800 = vadd.f32 %v703, %v799
      %v801 = vpop.f32.mrb[0].mxu0
      %802 = vmatprep.mubr.bf16.mxu0 %v400
      %803 = vmatmul.mubr.bf16.gmra.mrb[0].mxu0 %v399
      %v804 = vpop.f32.mrb[0].mxu0
      %v805 = vadd.f32 %v708, %v804
      %v806 = vpop.f32.mrb[0].mxu0
      %v807 = vpop.f32.mrb[0].mxu0
      %v808 = vadd.f32 %v711, %v807
      %v809 = vpop.f32.mrb[0].mxu0
      %810 = vmatprep.mubr.bf16.mxu0 %v404
      %811 = vmatmul.mubr.bf16.gmra.mrb[0].mxu0 %v403
      %v812 = vpop.f32.mrb[0].mxu0
      %v813 = vadd.f32 %v716, %v812
      %v814 = vpop.f32.mrb[0].mxu0
      %v815 = vpop.f32.mrb[0].mxu0
      %v816 = vadd.f32 %v719, %v815
      %v817 = vpop.f32.mrb[0].mxu0
      %818 = vmatprep.mubr.bf16.mxu0 %v408
      %819 = vmatmul.mubr.bf16.gmra.mrb[0].mxu0 %v407
      %v820 = vpop.f32.mrb[0].mxu0
      %v821 = vadd.f32 %v724, %v820
      %v822 = vpop.f32.mrb[0].mxu0
      %v823 = vpop.f32.mrb[0].mxu0
      %v824 = vadd.f32 %v727, %v823
      %v825 = vpop.f32.mrb[0].mxu0
      %826 = vdwg.mxu0
      %v827 = vpack.c.bf16 %v768, %v765
      %v828 = vpack.c.bf16 %v776, %v773
      %v829 = vpack.c.bf16 %v784, %v781
      %v830 = vpack.c.bf16 %v792, %v789
      %v831 = vpack.c.bf16 %v800, %v797
      %v832 = vpack.c.bf16 %v808, %v805
      %v833 = vpack.c.bf16 %v816, %v813
      %v834 = vpack.c.bf16 %v824, %v821
      %v843 = vunpack.c.l.b16 %v827
      %v844 = vunpack.c.h.b16 %v827
      %v845 = vunpack.c.l.b16 %v828
      %v846 = vunpack.c.h.b16 %v828
      %v847 = vunpack.c.l.b16 %v829
      %v848 = vunpack.c.h.b16 %v829
      %v849 = vunpack.c.l.b16 %v830
      %v850 = vunpack.c.h.b16 %v830
      %v851 = vunpack.c.l.b16 %v831
      %v852 = vunpack.c.h.b16 %v831
      %v853 = vunpack.c.l.b16 %v832
      %v854 = vunpack.c.h.b16 %v832
      %v855 = vunpack.c.l.b16 %v833
      %v856 = vunpack.c.h.b16 %v833
      %v857 = vunpack.c.l.b16 %v834
      %v858 = vunpack.c.h.b16 %v834
      %v859 = vpack.c.b16 %v843, %v843
      %v860 = vpack.c.b16 %v844, %v844
      %v861 = vpack.c.b16 %v845, %v845
      %v862 = vpack.c.b16 %v846, %v846
      %v863 = vpack.c.b16 %v847, %v847
      %v864 = vpack.c.b16 %v848, %v848
      %v865 = vpack.c.b16 %v849, %v849
      %v866 = vpack.c.b16 %v850, %v850
      %v867 = vpack.c.b16 %v851, %v851
      %v868 = vpack.c.b16 %v852, %v852
      %v869 = vpack.c.b16 %v853, %v853
      %v870 = vpack.c.b16 %v854, %v854
      %v871 = vpack.c.b16 %v855, %v855
      %v872 = vpack.c.b16 %v856, %v856
      %v873 = vpack.c.b16 %v857, %v857
      %v874 = vpack.c.b16 %v858, %v858
      %vm891 = vcmask 125952
      %892 = vst.msk [vmem:[%s175] sm:$0xf] %vm891, %v859
      %893 = vst.msk [vmem:[%s175 + $0x4] sm:$0xf] %vm891, %v860
      %894 = vst.msk [vmem:[%s175 + $0x8] sm:$0xf] %vm891, %v861
      %895 = vst.msk [vmem:[%s175 + $0xc] sm:$0xf] %vm891, %v862
      %896 = vst.msk [vmem:[%s175 + $0x10] sm:$0xf] %vm891, %v863
      %897 = vst.msk [vmem:[%s175 + $0x14] sm:$0xf] %vm891, %v864
      %898 = vst.msk [vmem:[%s175 + $0x18] sm:$0xf] %vm891, %v865
      %899 = vst.msk [vmem:[%s175 + $0x1c] sm:$0xf] %vm891, %v866
      %900 = vst.msk [vmem:[%s175 + $0x20] sm:$0xf] %vm891, %v867
      %901 = vst.msk [vmem:[%s175 + $0x24] sm:$0xf] %vm891, %v868
      %902 = vst.msk [vmem:[%s175 + $0x28] sm:$0xf] %vm891, %v869
      %903 = vst.msk [vmem:[%s175 + $0x2c] sm:$0xf] %vm891, %v870
      %904 = vst.msk [vmem:[%s175 + $0x30] sm:$0xf] %vm891, %v871
      %905 = vst.msk [vmem:[%s175 + $0x34] sm:$0xf] %vm891, %v872
      %906 = vst.msk [vmem:[%s175 + $0x38] sm:$0xf] %vm891, %v873
      %907 = vst.msk [vmem:[%s175 + $0x3c] sm:$0xf] %vm891, %v874
      %s908 = smul.u32 16, %s14
      %p909 = scmp.lt.s32.totalorder %s908, 31
      %s910 = scalar_select %p909, %s908, 31
      %s911 = smul.addr %s910, 4
      %s912 = scalar_lea.vmem %s3, %s911
      // Predicated region
      $region33: #{tounet_fwd.201} parent=31 // pred_check
        %p913 = pneg %p100
      $region34: #{tounet_fwd.201} parent=31 // pred_check_branch
        %915 = sbr.rel (%p913) target = $region36
      $region35: #{tounet_fwd.201} parent=31 // pred_region
        %s916 = smul.u32 16, %s14
      $region36: #{tounet_fwd.201} parent=31 // pred_fallthru
        _
    $region32: #{tounet_fwd.201} parent=5 // pred_fallthru
      _
    %p917 = scmp.le.s32.totalorder 2, %s9
    // Predicated region
    $region37: #{tounet_fwd.201} parent=5 // pred_check
      %p918 = pneg %p917
    $region38: #{tounet_fwd.201} parent=5 // pred_check_branch
      %920 = sbr.rel (%p918) target = $region40
    $region39: #{tounet_fwd.201} parent=5 // pred_region
      %s921 = ssub.s32 %s9, 2
      // Predicated region
      $region41: #{tounet_fwd.201} parent=39 // pred_check
        %p922 = pneg %p106
      $region42: #{tounet_fwd.201} parent=39 // pred_check_branch
        %924 = sbr.rel (%p922) target = $region44
      $region43: #{tounet_fwd.201} parent=39 // pred_region
        %s925 = smul.u32 16, %s15
        %p926 = scmp.lt.s32.totalorder %s925, 31
        %s927 = scalar_select %p926, %s925, 31
        %s928 = smul.addr %s927, 4
        %s929 = scalar_lea.vmem %s3, %s928
      $region44: #{tounet_fwd.201} parent=39 // pred_fallthru
        _
    $region40: #{tounet_fwd.201} parent=5 // pred_fallthru
      _
  $region6: #{tounet_fwd.201} parent=0 // loop_footer
    %s13 = sadd.s32 1, %s9
  $region7: #{tounet_fwd.201} parent=0 // loop_footer_branch
    %8 = sbr.rel target = $region3
  $region8: #{tounet_fwd.201} parent=0 // loop_exit
    _

// kernel: tounet_fwd.213
$region0: #{tounet_fwd.213}
  #allocation0 [shape = 'u32[]', space=smem, size = 0x4, offset = 0x4, fixed_abs, tag = 'smem constant byte address 0x4 - core index']
  #allocation1 [shape = 'u32[144,128]{1,0:T(1,128)}', space=vmem, size = 0x12000, scoped, tag = 'internal scratch']
  %s0 = inlined_call_operand.vmem [shape: bf16[256,256], index: 0, kind: input, shape index: {}]
  %s1 = inlined_call_operand.vmem [shape: bf16[256,128], index: 1, kind: input, shape index: {}]
  %s2 = inlined_call_operand.vmem [shape: f32[1,128], index: 2, kind: input, shape index: {}]
  %s3 = inlined_call_operand.vmem [shape: bf16[256,16], index: 3, kind: output, shape index: {}]
  %s4 = sld [smem:[#allocation0]]
  $region45: #{tounet_fwd.213} parent=0
    _
  %s6 = ssub.s32 1, %s4
  %s7 = scalar_select 0, %s6, %s4
  loop: start=0, step=1, limit=4
  $region2: #{tounet_fwd.213} parent=0 // loop_pre_header
    _
  $region3: #{tounet_fwd.213} parent=0 // loop_header
    %s9 = sphi 0, %s13
    %p10 = scmp.ge.s32.totalorder %s9, 4
    %s19 = sphi 0, %s21
    %s22 = sphi 0, %s19
    %s23 = sphi 0, %s22
    %s39 = sphi 0, %s23
    %s43 = sphi 0, %s43
    %s45 = sphi 0, %s43
    %s46 = sphi 0, %s45
    %s60 = sphi 0, %s46
    %s64 = sphi 0, %s64
    %s66 = sphi 0, %s64
    %s67 = sphi 0, %s66
    %s81 = sphi 0, %s67
    %s87 = sphi 0, %s89
    %s90 = sphi 0, %s87
    %s91 = sphi 0, %s90
    %s107 = sphi 0, %s91
  $region4: #{tounet_fwd.213} parent=0 // loop_header_branch
    %12 = sbr.rel (%p10) target = $region8
  $region5: #{tounet_fwd.213} parent=0 // loop_body
    %s14 = ssub.s32 %s9, 1
    %s15 = ssub.s32 %s9, 2
    %s16 = sadd.s32 %s9, 1
    %s17 = ssub.s32 %s9, %s16
    %p18 = scmp.eq.s32.totalorder %s17, 0
    %s20 = sadd.s32 %s19, 1
    %s21 = scalar_select %p18, %s19, %s20
    %p24 = pneg %p18
    %p25 = scmp.eq.s32.totalorder %s9, 1
    %p26 = por %p24, %p25
    %p27 = scmp.ne.s32.totalorder %s19, %s22
    %p28 = scmp.eq.s32.totalorder %s9, 0
    %p29 = por %p27, %p28
    %p30 = scmp.ne.s32.totalorder %s19, %s22
    %p31 = scmp.eq.s32.totalorder %s14, 1
    %p32 = por %p30, %p31
    %p33 = scmp.ne.s32.totalorder %s22, %s23
    %p34 = scmp.eq.s32.totalorder %s14, 0
    %p35 = por %p33, %p34
    %p36 = scmp.ne.s32.totalorder %s22, %s23
    %p37 = scmp.eq.s32.totalorder %s15, 1
    %p38 = por %p36, %p37
    %p40 = scmp.ne.s32.totalorder %s23, %s39
    %p41 = scmp.eq.s32.totalorder %s15, 0
    %p42 = por %p40, %p41
    %s44 = sadd.s32 %s43, 1
    %p47 = scmp.eq.s32.totalorder %s9, 1
    %p48 = scmp.ne.s32.totalorder %s43, %s45
    %p49 = scmp.eq.s32.totalorder %s9, 0
    %p50 = por %p48, %p49
    %p51 = scmp.ne.s32.totalorder %s43, %s45
    %p52 = scmp.eq.s32.totalorder %s14, 1
    %p53 = por %p51, %p52
    %p54 = scmp.ne.s32.totalorder %s45, %s46
    %p55 = scmp.eq.s32.totalorder %s14, 0
    %p56 = por %p54, %p55
    %p57 = scmp.ne.s32.totalorder %s45, %s46
    %p58 = scmp.eq.s32.totalorder %s15, 1
    %p59 = por %p57, %p58
    %p61 = scmp.ne.s32.totalorder %s46, %s60
    %p62 = scmp.eq.s32.totalorder %s15, 0
    %p63 = por %p61, %p62
    %s65 = sadd.s32 %s64, 1
    %p68 = scmp.eq.s32.totalorder %s9, 1
    %p69 = scmp.ne.s32.totalorder %s64, %s66
    %p70 = scmp.eq.s32.totalorder %s9, 0
    %p71 = por %p69, %p70
    %p72 = scmp.ne.s32.totalorder %s64, %s66
    %p73 = scmp.eq.s32.totalorder %s14, 1
    %p74 = por %p72, %p73
    %p75 = scmp.ne.s32.totalorder %s66, %s67
    %p76 = scmp.eq.s32.totalorder %s14, 0
    %p77 = por %p75, %p76
    %p78 = scmp.ne.s32.totalorder %s66, %s67
    %p79 = scmp.eq.s32.totalorder %s15, 1
    %p80 = por %p78, %p79
    %p82 = scmp.ne.s32.totalorder %s67, %s81
    %p83 = scmp.eq.s32.totalorder %s15, 0
    %p84 = por %p82, %p83
    %s85 = ssub.s32 %s9, %s16
    %p86 = scmp.eq.s32.totalorder %s85, 0
    %s88 = sadd.s32 %s87, 1
    %s89 = scalar_select %p86, %s87, %s88
    %p92 = pneg %p86
    %p93 = scmp.eq.s32.totalorder %s9, 1
    %p94 = por %p92, %p93
    %p95 = scmp.ne.s32.totalorder %s87, %s90
    %p96 = scmp.eq.s32.totalorder %s9, 0
    %p97 = por %p95, %p96
    %p98 = scmp.ne.s32.totalorder %s87, %s90
    %p99 = scmp.eq.s32.totalorder %s14, 1
    %p100 = por %p98, %p99
    %p101 = scmp.ne.s32.totalorder %s90, %s91
    %p102 = scmp.eq.s32.totalorder %s14, 0
    %p103 = por %p101, %p102
    %p104 = scmp.ne.s32.totalorder %s90, %s91
    %p105 = scmp.eq.s32.totalorder %s15, 1
    %p106 = por %p104, %p105
    %p108 = scmp.ne.s32.totalorder %s91, %s107
    %p109 = scmp.eq.s32.totalorder %s15, 0
    %p110 = por %p108, %p109
    %p111 = scmp.le.s32.totalorder 1, %s9
    %p112 = scmp.lt.s32.totalorder %s9, 3
    %p113 = pnand %p111, %p112
    %p114 = pneg %p113
    // Predicated region
    $region9: #{tounet_fwd.213} parent=5 // pred_check
      _
    $region10: #{tounet_fwd.213} parent=5 // pred_check_branch
      %116 = sbr.rel (%p113) target = $region12
    $region11: #{tounet_fwd.213} parent=5 // pred_region
      %s117 = ssub.s32 %s9, 1
      // Predicated region
      $region13: #{tounet_fwd.213} parent=11 // pred_check
        %p118 = pneg %p56
      $region14: #{tounet_fwd.213} parent=11 // pred_check_branch
        %120 = sbr.rel (%p118) target = $region16
      $region15: #{tounet_fwd.213} parent=11 // pred_region
        _
      $region16: #{tounet_fwd.213} parent=11 // pred_fallthru
        _
      // Predicated region
      $region17: #{tounet_fwd.213} parent=11 // pred_check
        %p121 = pneg %p77
      $region18: #{tounet_fwd.213} parent=11 // pred_check_branch
        %123 = sbr.rel (%p121) target = $region20
      $region19: #{tounet_fwd.213} parent=11 // pred_region
        _
      $region20: #{tounet_fwd.213} parent=11 // pred_fallthru
        _
    $region12: #{tounet_fwd.213} parent=5 // pred_fallthru
      _
    %p124 = scmp.lt.s32.totalorder %s9, 2
    // Predicated region
    $region21: #{tounet_fwd.213} parent=5 // pred_check
      %p125 = pneg %p124
    $region22: #{tounet_fwd.213} parent=5 // pred_check_branch
      %127 = sbr.rel (%p125) target = $region24
    $region23: #{tounet_fwd.213} parent=5 // pred_region
      // Predicated region
      $region25: #{tounet_fwd.213} parent=23 // pred_check
        %p128 = pneg %p29
      $region26: #{tounet_fwd.213} parent=23 // pred_check_branch
        %130 = sbr.rel (%p128) target = $region28
      $region27: #{tounet_fwd.213} parent=23 // pred_region
        %s131 = smul.u32 16, %s9
        %p132 = scmp.lt.s32.totalorder %s131, 31
        %s133 = scalar_select %p132, %s131, 31
        %s134 = smul.addr %s133, 2
        %s135 = smul.addr %s134, 4
        %s136 = scalar_lea.vmem %s0, %s135
        %s137 = smul.u32 16, %s9
      $region28: #{tounet_fwd.213} parent=23 // pred_fallthru
        _
    $region24: #{tounet_fwd.213} parent=5 // pred_fallthru
      _
    %p138 = scmp.le.s32.totalorder 1, %s9
    %p139 = scmp.lt.s32.totalorder %s9, 3
    %p140 = pnand %p138, %p139
    %p141 = pneg %p140
    // Predicated region
    $region29: #{tounet_fwd.213} parent=5 // pred_check
      _
    $region30: #{tounet_fwd.213} parent=5 // pred_check_branch
      %143 = sbr.rel (%p140) target = $region32
    $region31: #{tounet_fwd.213} parent=5 // pred_region
      %s144 = ssub.s32 %s9, 1
      %s145 = smul.u32 16, %s14
      %p146 = scmp.lt.s32.totalorder %s145, 31
      %s147 = scalar_select %p146, %s145, 31
      %s148 = smul.addr %s147, 2
      %s149 = smul.addr %s148, 4
      %s150 = scalar_lea.vmem %s0, %s149
      %p151 = pneg %p35
      %p152 = pneg %p32
      %p153 = pneg %p56
      %p154 = pneg %p53
      %p155 = pneg %p77
      %p156 = pneg %p74
      %p157 = pneg %p103
      %p158 = pneg %p100
      %s159 = smul.u32 16, %s14
      %p160 = scmp.lt.s32.totalorder %s159, 31
      %s161 = scalar_select %p160, %s159, 31
      %s162 = smul.addr %s161, 4
      %s163 = scalar_lea.vmem %s3, %s162
      %s164 = smul.u32 16, %s14
      %p165 = scmp.lt.s32.totalorder %s164, 31
      %s166 = scalar_select %p165, %s164, 31
      %s167 = smul.addr %s166, 2
      %s168 = smul.addr %s167, 4
      %s169 = scalar_lea.vmem %s0, %s168
      %s170 = smul.u32 16, %s14
      %s171 = smul.u32 16, %s14
      %p172 = scmp.lt.s32.totalorder %s171, 31
      %s173 = scalar_select %p172, %s171, 31
      %s174 = smul.addr %s173, 4
      %s175 = scalar_lea.vmem %s3, %s174
      %s176 = smul.u32 16, %s14
      %v178 = vld [vmem:[%s169] sm:$0xff]
      %v179 = vld [vmem:[%s169 + $0x8] sm:$0xff]
      %v180 = vld [vmem:[%s169 + $0x10] sm:$0xff]
      %v181 = vld [vmem:[%s169 + $0x18] sm:$0xff]
      %v182 = vld [vmem:[%s169 + $0x20] sm:$0xff]
      %v183 = vld [vmem:[%s169 + $0x28] sm:$0xff]
      %v184 = vld [vmem:[%s169 + $0x30] sm:$0xff]
      %v185 = vld [vmem:[%s169 + $0x38] sm:$0xff]
      %v186 = vld [vmem:[%s169 + $0x40] sm:$0xff]
      %v187 = vld [vmem:[%s169 + $0x48] sm:$0xff]
      %v188 = vld [vmem:[%s169 + $0x50] sm:$0xff]
      %v189 = vld [vmem:[%s169 + $0x58] sm:$0xff]
      %v190 = vld [vmem:[%s169 + $0x60] sm:$0xff]
      %v191 = vld [vmem:[%s169 + $0x68] sm:$0xff]
      %v192 = vld [vmem:[%s169 + $0x70] sm:$0xff]
      %v193 = vld [vmem:[%s169 + $0x78] sm:$0xff]
      %v194 = vld [vmem:[%s1] sm:$0xf]
      %v195 = vld [vmem:[%s1 + $0x4] sm:$0xf]
      %v196 = vld [vmem:[%s1 + $0x8] sm:$0xf]
      %v197 = vld [vmem:[%s1 + $0xc] sm:$0xf]
      %v198 = vld [vmem:[%s1 + $0x10] sm:$0xf]
      %v199 = vld [vmem:[%s1 + $0x14] sm:$0xf]
      %v200 = vld [vmem:[%s1 + $0x18] sm:$0xf]
      %v201 = vld [vmem:[%s1 + $0x1c] sm:$0xf]
      %v202 = vld [vmem:[%s1 + $0x20] sm:$0xf]
      %v203 = vld [vmem:[%s1 + $0x24] sm:$0xf]
      %v204 = vld [vmem:[%s1 + $0x28] sm:$0xf]
      %v205 = vld [vmem:[%s1 + $0x2c] sm:$0xf]
      %v206 = vld [vmem:[%s1 + $0x30] sm:$0xf]
      %v207 = vld [vmem:[%s1 + $0x34] sm:$0xf]
      %v208 = vld [vmem:[%s1 + $0x38] sm:$0xf]
      %v209 = vld [vmem:[%s1 + $0x3c] sm:$0xf]
      %v210 = vld [vmem:[%s1 + $0x40] sm:$0xf]
      %v211 = vld [vmem:[%s1 + $0x44] sm:$0xf]
      %v212 = vld [vmem:[%s1 + $0x48] sm:$0xf]
      %v213 = vld [vmem:[%s1 + $0x4c] sm:$0xf]
      %v214 = vld [vmem:[%s1 + $0x50] sm:$0xf]
      %v215 = vld [vmem:[%s1 + $0x54] sm:$0xf]
      %v216 = vld [vmem:[%s1 + $0x58] sm:$0xf]
      %v217 = vld [vmem:[%s1 + $0x5c] sm:$0xf]
      %v218 = vld [vmem:[%s1 + $0x60] sm:$0xf]
      %v219 = vld [vmem:[%s1 + $0x64] sm:$0xf]
      %v220 = vld [vmem:[%s1 + $0x68] sm:$0xf]
      %v221 = vld [vmem:[%s1 + $0x6c] sm:$0xf]
      %v222 = vld [vmem:[%s1 + $0x70] sm:$0xf]
      %v223 = vld [vmem:[%s1 + $0x74] sm:$0xf]
      %v224 = vld [vmem:[%s1 + $0x78] sm:$0xf]
      %v225 = vld [vmem:[%s1 + $0x7c] sm:$0xf]
      %v226 = vld [vmem:[%s2] sm:$0x1]
      %v228 = vlaneseq
      %v229 = vshrl.u32 %v228, 7
      %v230 = vsub.s32 0, %v229
      %v231 = vrot.slane %v226, %v230
      %v249 = vunpack.c.l.b16 %v178
      %v250 = vunpack.c.h.b16 %v178
      %v251 = vunpack.c.l.b16 %v179
      %v252 = vunpack.c.h.b16 %v179
      %v253 = vunpack.c.l.b16 %v180
      %v254 = vunpack.c.h.b16 %v180
      %v255 = vunpack.c.l.b16 %v181
      %v256 = vunpack.c.h.b16 %v181
      %v257 = vunpack.c.l.b16 %v182
      %v258 = vunpack.c.h.b16 %v182
      %v259 = vunpack.c.l.b16 %v183
      %v260 = vunpack.c.h.b16 %v183
      %v261 = vunpack.c.l.b16 %v184
      %v262 = vunpack.c.h.b16 %v184
      %v263 = vunpack.c.l.b16 %v185
      %v264 = vunpack.c.h.b16 %v185
      %v265 = vunpack.c.l.b16 %v186
      %v266 = vunpack.c.h.b16 %v186
      %v267 = vunpack.c.l.b16 %v187
      %v268 = vunpack.c.h.b16 %v187
      %v269 = vunpack.c.l.b16 %v188
      %v270 = vunpack.c.h.b16 %v188
      %v271 = vunpack.c.l.b16 %v189
      %v272 = vunpack.c.h.b16 %v189
      %v273 = vunpack.c.l.b16 %v190
      %v274 = vunpack.c.h.b16 %v190
      %v275 = vunpack.c.l.b16 %v191
      %v276 = vunpack.c.h.b16 %v191
      %v277 = vunpack.c.l.b16 %v192
      %v278 = vunpack.c.h.b16 %v192
      %v279 = vunpack.c.l.b16 %v193
      %v280 = vunpack.c.h.b16 %v193
      %v281 = vpack.c.b16 %v251, %v249
      %v282 = vpack.c.b16 %v252, %v250
      %v283 = vpack.c.b16 %v255, %v253
      %v284 = vpack.c.b16 %v256, %v254
      %v285 = vpack.c.b16 %v259, %v257
      %v286 = vpack.c.b16 %v260, %v258
      %v287 = vpack.c.b16 %v263, %v261
      %v288 = vpack.c.b16 %v264, %v262
      %v289 = vpack.c.b16 %v267, %v265
      %v290 = vpack.c.b16 %v268, %v266
      %v291 = vpack.c.b16 %v271, %v269
      %v292 = vpack.c.b16 %v272, %v270
      %v293 = vpack.c.b16 %v275, %v273
      %v294 = vpack.c.b16 %v276, %v274
      %v295 = vpack.c.b16 %v279, %v277
      %v296 = vpack.c.b16 %v280, %v278
      %v345 = vunpack.c.l.b16 %v194
      %v346 = vunpack.c.l.b16 %v195
      %v347 = vunpack.c.l.b16 %v196
      %v348 = vunpack.c.l.b16 %v197
      %v349 = vunpack.c.l.b16 %v198
      %v350 = vunpack.c.l.b16 %v199
      %v351 = vunpack.c.l.b16 %v200
      %v352 = vunpack.c.l.b16 %v201
      %v353 = vunpack.c.l.b16 %v202
      %v354 = vunpack.c.l.b16 %v203
      %v355 = vunpack.c.l.b16 %v204
      %v356 = vunpack.c.l.b16 %v205
      %v357 = vunpack.c.l.b16 %v206
      %v358 = vunpack.c.l.b16 %v207
      %v359 = vunpack.c.l.b16 %v208
      %v360 = vunpack.c.l.b16 %v209
      %v361 = vunpack.c.l.b16 %v210
      %v362 = vunpack.c.l.b16 %v211
      %v363 = vunpack.c.l.b16 %v212
      %v364 = vunpack.c.l.b16 %v213
      %v365 = vunpack.c.l.b16 %v214
      %v366 = vunpack.c.l.b16 %v215
      %v367 = vunpack.c.l.b16 %v216
      %v368 = vunpack.c.l.b16 %v217
      %v369 = vunpack.c.l.b16 %v218
      %v370 = vunpack.c.l.b16 %v219
      %v371 = vunpack.c.l.b16 %v220
      %v372 = vunpack.c.l.b16 %v221
      %v373 = vunpack.c.l.b16 %v222
      %v374 = vunpack.c.l.b16 %v223
      %v375 = vunpack.c.l.b16 %v224
      %v376 = vunpack.c.l.b16 %v225
      %v377 = vpack.c.b16 %v346, %v345
      %v378 = vpack.c.b16 %v348, %v347
      %v379 = vpack.c.b16 %v350, %v349
      %v380 = vpack.c.b16 %v352, %v351
      %v381 = vpack.c.b16 %v354, %v353
      %v382 = vpack.c.b16 %v356, %v355
      %v383 = vpack.c.b16 %v358, %v357
      %v384 = vpack.c.b16 %v360, %v359
      %v385 = vpack.c.b16 %v362, %v361
      %v386 = vpack.c.b16 %v364, %v363
      %v387 = vpack.c.b16 %v366, %v365
      %v388 = vpack.c.b16 %v368, %v367
      %v389 = vpack.c.b16 %v370, %v369
      %v390 = vpack.c.b16 %v372, %v371
      %v391 = vpack.c.b16 %v374, %v373
      %v392 = vpack.c.b16 %v376, %v375
      %409 = vmatprep.subr.bf16.mxu0 0
      %410 = vmatpush1.bf16.msra.mxu0 %v377
      %411 = vmatprep.subr.bf16.mxu0 0
      %412 = vmatpush1.bf16.msra.mxu0 %v378
      %413 = vmatprep.subr.bf16.mxu0 0
      %414 = vmatpush1.bf16.msra.mxu0 %v379
      %415 = vmatprep.subr.bf16.mxu0 0
      %416 = vmatpush1.bf16.msra.mxu0 %v380
      %417 = vmatprep.subr.bf16.mxu0 0
      %418 = vmatpush1.bf16.msra.mxu0 %v381
      %419 = vmatprep.subr.bf16.mxu0 0
      %420 = vmatpush1.bf16.msra.mxu0 %v382
      %421 = vmatprep.subr.bf16.mxu0 0
      %422 = vmatpush1.bf16.msra.mxu0 %v383
      %423 = vmatprep.subr.bf16.mxu0 0
      %424 = vmatpush1.bf16.msra.mxu0 %v384
      %425 = vmatprep.subr.bf16.mxu0 0
      %426 = vmatpush1.bf16.msra.mxu0 %v385
      %427 = vmatprep.subr.bf16.mxu0 0
      %428 = vmatpush1.bf16.msra.mxu0 %v386
      %429 = vmatprep.subr.bf16.mxu0 0
      %430 = vmatpush1.bf16.msra.mxu0 %v387
      %431 = vmatprep.subr.bf16.mxu0 0
      %432 = vmatpush1.bf16.msra.mxu0 %v388
      %433 = vmatprep.subr.bf16.mxu0 0
      %434 = vmatpush1.bf16.msra.mxu0 %v389
      %435 = vmatprep.subr.bf16.mxu0 0
      %436 = vmatpush1.bf16.msra.mxu0 %v390
      %437 = vmatprep.subr.bf16.mxu0 0
      %438 = vmatpush1.bf16.msra.mxu0 %v391
      %439 = vmatprep.subr.bf16.mxu0 0
      %440 = vmatpush1.bf16.msra.mxu0 %v392
      %441 = vmatprep.mubr.bf16.mxu0 %v282
      %442 = vmatmul.mubr.bf16.gmra.mrb[0].mxu0 %v281
      %v443 = vpop.f32.mrb[0].mxu0
      %v444 = vadd.f32 %v231, %v443
      %v445 = vpop.f32.mrb[0].mxu0
      %v446 = vpop.f32.mrb[0].mxu0
      %v447 = vadd.f32 %v231, %v446
      %v448 = vpop.f32.mrb[0].mxu0
      %449 = vmatprep.mubr.bf16.mxu0 %v284
      %450 = vmatmul.mubr.bf16.gmra.mrb[0].mxu0 %v283
      %v451 = vpop.f32.mrb[0].mxu0
      %v452 = vadd.f32 %v231, %v451
      %v453 = vpop.f32.mrb[0].mxu0
      %v454 = vpop.f32.mrb[0].mxu0
      %v455 = vadd.f32 %v231, %v454
      %v456 = vpop.f32.mrb[0].mxu0
      %457 = vmatprep.mubr.bf16.mxu0 %v286
      %458 = vmatmul.mubr.bf16.gmra.mrb[0].mxu0 %v285
      %v459 = vpop.f32.mrb[0].mxu0
      %v460 = vadd.f32 %v231, %v459
      %v461 = vpop.f32.mrb[0].mxu0
      %v462 = vpop.f32.mrb[0].mxu0
      %v463 = vadd.f32 %v231, %v462
      %v464 = vpop.f32.mrb[0].mxu0
      %465 = vmatprep.mubr.bf16.mxu0 %v288
      %466 = vmatmul.mubr.bf16.gmra.mrb[0].mxu0 %v287
      %v467 = vpop.f32.mrb[0].mxu0
      %v468 = vadd.f32 %v231, %v467
      %v469 = vpop.f32.mrb[0].mxu0
      %v470 = vpop.f32.mrb[0].mxu0
      %v471 = vadd.f32 %v231, %v470
      %v472 = vpop.f32.mrb[0].mxu0
      %473 = vmatprep.mubr.bf16.mxu0 %v290
      %474 = vmatmul.mubr.bf16.gmra.mrb[0].mxu0 %v289
      %v475 = vpop.f32.mrb[0].mxu0
      %v476 = vadd.f32 %v231, %v475
      %v477 = vpop.f32.mrb[0].mxu0
      %v478 = vpop.f32.mrb[0].mxu0
      %v479 = vadd.f32 %v231, %v478
      %v480 = vpop.f32.mrb[0].mxu0
      %481 = vmatprep.mubr.bf16.mxu0 %v292
      %482 = vmatmul.mubr.bf16.gmra.mrb[0].mxu0 %v291
      %v483 = vpop.f32.mrb[0].mxu0
      %v484 = vadd.f32 %v231, %v483
      %v485 = vpop.f32.mrb[0].mxu0
      %v486 = vpop.f32.mrb[0].mxu0
      %v487 = vadd.f32 %v231, %v486
      %v488 = vpop.f32.mrb[0].mxu0
      %489 = vmatprep.mubr.bf16.mxu0 %v294
      %490 = vmatmul.mubr.bf16.gmra.mrb[0].mxu0 %v293
      %v491 = vpop.f32.mrb[0].mxu0
      %v492 = vadd.f32 %v231, %v491
      %v493 = vpop.f32.mrb[0].mxu0
      %v494 = vpop.f32.mrb[0].mxu0
      %v495 = vadd.f32 %v231, %v494
      %v496 = vpop.f32.mrb[0].mxu0
      %497 = vmatprep.mubr.bf16.mxu0 %v296
      %498 = vmatmul.mubr.bf16.gmra.mrb[0].mxu0 %v295
      %v499 = vpop.f32.mrb[0].mxu0
      %v500 = vadd.f32 %v231, %v499
      %v501 = vpop.f32.mrb[0].mxu0
      %v502 = vpop.f32.mrb[0].mxu0
      %v503 = vadd.f32 %v231, %v502
      %v504 = vpop.f32.mrb[0].mxu0
      %505 = vdwg.mxu0
      %vm506 = vcmp.gt.f32.partialorder %v444, 0.0
      %vm507 = vcmp.gt.f32.partialorder %v447, 0.0
      %vm508 = vcmp.gt.f32.partialorder %v452, 0.0
      %vm509 = vcmp.gt.f32.partialorder %v455, 0.0
      %vm510 = vcmp.gt.f32.partialorder %v460, 0.0
      %vm511 = vcmp.gt.f32.partialorder %v463, 0.0
      %vm512 = vcmp.gt.f32.partialorder %v468, 0.0
      %vm513 = vcmp.gt.f32.partialorder %v471, 0.0
      %vm514 = vcmp.gt.f32.partialorder %v476, 0.0
      %vm515 = vcmp.gt.f32.partialorder %v479, 0.0
      %vm516 = vcmp.gt.f32.partialorder %v484, 0.0
      %vm517 = vcmp.gt.f32.partialorder %v487, 0.0
      %vm518 = vcmp.gt.f32.partialorder %v492, 0.0
      %vm519 = vcmp.gt.f32.partialorder %v495, 0.0
      %vm520 = vcmp.gt.f32.partialorder %v500, 0.0
      %vm521 = vcmp.gt.f32.partialorder %v503, 0.0
      %v522 = vmul.f32 %v444, 0.25
      %v523 = vmul.f32 %v447, 0.25
      %v524 = vmul.f32 %v452, 0.25
      %v525 = vmul.f32 %v455, 0.25
      %v526 = vmul.f32 %v460, 0.25
      %v527 = vmul.f32 %v463, 0.25
      %v528 = vmul.f32 %v468, 0.25
      %v529 = vmul.f32 %v471, 0.25
      %v530 = vmul.f32 %v476, 0.25
      %v531 = vmul.f32 %v479, 0.25
      %v532 = vmul.f32 %v484, 0.25
      %v533 = vmul.f32 %v487, 0.25
      %v534 = vmul.f32 %v492, 0.25
      %v535 = vmul.f32 %v495, 0.25
      %v536 = vmul.f32 %v500, 0.25
      %v537 = vmul.f32 %v503, 0.25
      %v538 = vsel %vm506, %v444, %v522
      %v539 = vsel %vm507, %v447, %v523
      %v540 = vsel %vm508, %v452, %v524
      %v541 = vsel %vm509, %v455, %v525
      %v542 = vsel %vm510, %v460, %v526
      %v543 = vsel %vm511, %v463, %v527
      %v544 = vsel %vm512, %v468, %v528
      %v545 = vsel %vm513, %v471, %v529
      %v546 = vsel %vm514, %v476, %v530
      %v547 = vsel %vm515, %v479, %v531
      %v548 = vsel %vm516, %v484, %v532
      %v549 = vsel %vm517, %v487, %v533
      %v550 = vsel %vm518, %v492, %v534
      %v551 = vsel %vm519, %v495, %v535
      %v552 = vsel %vm520, %v500, %v536
      %v553 = vsel %vm521, %v503, %v537
      %v554 = vpack.c.bf16 %v539, %v538
      %v555 = vpack.c.bf16 %v541, %v540
      %v556 = vpack.c.bf16 %v543, %v542
      %v557 = vpack.c.bf16 %v545, %v544
      %v558 = vpack.c.bf16 %v547, %v546
      %v559 = vpack.c.bf16 %v549, %v548
      %v560 = vpack.c.bf16 %v551, %v550
      %v561 = vpack.c.bf16 %v553, %v552
      %v570 = vunpack.c.l.b16 %v554
      %v571 = vunpack.c.h.b16 %v554
      %v572 = vunpack.c.l.b16 %v555
      %v573 = vunpack.c.h.b16 %v555
      %v574 = vunpack.c.l.b16 %v556
      %v575 = vunpack.c.h.b16 %v556
      %v576 = vunpack.c.l.b16 %v557
      %v577 = vunpack.c.h.b16 %v557
      %v578 = vunpack.c.l.b16 %v558
      %v579 = vunpack.c.h.b16 %v558
      %v580 = vunpack.c.l.b16 %v559
      %v581 = vunpack.c.h.b16 %v559
      %v582 = vunpack.c.l.b16 %v560
      %v583 = vunpack.c.h.b16 %v560
      %v584 = vunpack.c.l.b16 %v561
      %v585 = vunpack.c.h.b16 %v561
      %v586 = vpack.c.b16 %v570, %v570
      %v587 = vpack.c.b16 %v571, %v571
      %v588 = vpack.c.b16 %v572, %v572
      %v589 = vpack.c.b16 %v573, %v573
      %v590 = vpack.c.b16 %v574, %v574
      %v591 = vpack.c.b16 %v575, %v575
      %v592 = vpack.c.b16 %v576, %v576
      %v593 = vpack.c.b16 %v577, %v577
      %v594 = vpack.c.b16 %v578, %v578
      %v595 = vpack.c.b16 %v579, %v579
      %v596 = vpack.c.b16 %v580, %v580
      %v597 = vpack.c.b16 %v581, %v581
      %v598 = vpack.c.b16 %v582, %v582
      %v599 = vpack.c.b16 %v583, %v583
      %v600 = vpack.c.b16 %v584, %v584
      %v601 = vpack.c.b16 %v585, %v585
      %vm618 = vcmask 125952
      %619 = vst.msk [vmem:[%s175] sm:$0xf] %vm618, %v586
      %620 = vst.msk [vmem:[%s175 + $0x4] sm:$0xf] %vm618, %v587
      %621 = vst.msk [vmem:[%s175 + $0x8] sm:$0xf] %vm618, %v588
      %622 = vst.msk [vmem:[%s175 + $0xc] sm:$0xf] %vm618, %v589
      %623 = vst.msk [vmem:[%s175 + $0x10] sm:$0xf] %vm618, %v590
      %624 = vst.msk [vmem:[%s175 + $0x14] sm:$0xf] %vm618, %v591
      %625 = vst.msk [vmem:[%s175 + $0x18] sm:$0xf] %vm618, %v592
      %626 = vst.msk [vmem:[%s175 + $0x1c] sm:$0xf] %vm618, %v593
      %627 = vst.msk [vmem:[%s175 + $0x20] sm:$0xf] %vm618, %v594
      %628 = vst.msk [vmem:[%s175 + $0x24] sm:$0xf] %vm618, %v595
      %629 = vst.msk [vmem:[%s175 + $0x28] sm:$0xf] %vm618, %v596
      %630 = vst.msk [vmem:[%s175 + $0x2c] sm:$0xf] %vm618, %v597
      %631 = vst.msk [vmem:[%s175 + $0x30] sm:$0xf] %vm618, %v598
      %632 = vst.msk [vmem:[%s175 + $0x34] sm:$0xf] %vm618, %v599
      %633 = vst.msk [vmem:[%s175 + $0x38] sm:$0xf] %vm618, %v600
      %634 = vst.msk [vmem:[%s175 + $0x3c] sm:$0xf] %vm618, %v601
      %s635 = smul.u32 16, %s14
      %p636 = scmp.lt.s32.totalorder %s635, 31
      %s637 = scalar_select %p636, %s635, 31
      %s638 = smul.addr %s637, 4
      %s639 = scalar_lea.vmem %s3, %s638
      // Predicated region
      $region33: #{tounet_fwd.213} parent=31 // pred_check
        %p640 = pneg %p100
      $region34: #{tounet_fwd.213} parent=31 // pred_check_branch
        %642 = sbr.rel (%p640) target = $region36
      $region35: #{tounet_fwd.213} parent=31 // pred_region
        %s643 = smul.u32 16, %s14
      $region36: #{tounet_fwd.213} parent=31 // pred_fallthru
        _
    $region32: #{tounet_fwd.213} parent=5 // pred_fallthru
      _
    %p644 = scmp.le.s32.totalorder 2, %s9
    // Predicated region
    $region37: #{tounet_fwd.213} parent=5 // pred_check
      %p645 = pneg %p644
    $region38: #{tounet_fwd.213} parent=5 // pred_check_branch
      %647 = sbr.rel (%p645) target = $region40
    $region39: #{tounet_fwd.213} parent=5 // pred_region
      %s648 = ssub.s32 %s9, 2
      // Predicated region
      $region41: #{tounet_fwd.213} parent=39 // pred_check
        %p649 = pneg %p106
      $region42: #{tounet_fwd.213} parent=39 // pred_check_branch
        %651 = sbr.rel (%p649) target = $region44
      $region43: #{tounet_fwd.213} parent=39 // pred_region
        %s652 = smul.u32 16, %s15
        %p653 = scmp.lt.s32.totalorder %s652, 31
        %s654 = scalar_select %p653, %s652, 31
        %s655 = smul.addr %s654, 4
        %s656 = scalar_lea.vmem %s3, %s655
      $region44: #{tounet_fwd.213} parent=39 // pred_fallthru
        _
    $region40: #{tounet_fwd.213} parent=5 // pred_fallthru
      _
  $region6: #{tounet_fwd.213} parent=0 // loop_footer
    %s13 = sadd.s32 1, %s9
  $region7: #{tounet_fwd.213} parent=0 // loop_footer_branch
    %8 = sbr.rel target = $region3
  $region8: #{tounet_fwd.213} parent=0 // loop_exit
    _

// kernel: tounet_fwd.214
$region0: #{tounet_fwd.214}
  #allocation0 [shape = 'u32[]', space=smem, size = 0x4, offset = 0x4, fixed_abs, tag = 'smem constant byte address 0x4 - core index']
  #allocation1 [shape = 'u32[144,128]{1,0:T(1,128)}', space=vmem, size = 0x12000, scoped, tag = 'internal scratch']
  %s0 = inlined_call_operand.vmem [shape: bf16[256,256], index: 0, kind: input, shape index: {}]
  %s1 = inlined_call_operand.vmem [shape: bf16[256,128], index: 1, kind: input, shape index: {}]
  %s2 = inlined_call_operand.vmem [shape: f32[1,128], index: 2, kind: input, shape index: {}]
  %s3 = inlined_call_operand.vmem [shape: bf16[256,16], index: 3, kind: input, shape index: {}]
  %s4 = inlined_call_operand.vmem [shape: bf16[256,16], index: 4, kind: output, shape index: {}]
  %s5 = sld [smem:[#allocation0]]
  $region49: #{tounet_fwd.214} parent=0
    _
  %s7 = ssub.s32 1, %s5
  %s8 = scalar_select 0, %s7, %s5
  loop: start=0, step=1, limit=4
  $region2: #{tounet_fwd.214} parent=0 // loop_pre_header
    _
  $region3: #{tounet_fwd.214} parent=0 // loop_header
    %s10 = sphi 0, %s14
    %p11 = scmp.ge.s32.totalorder %s10, 4
    %s20 = sphi 0, %s22
    %s23 = sphi 0, %s20
    %s24 = sphi 0, %s23
    %s40 = sphi 0, %s24
    %s44 = sphi 0, %s44
    %s46 = sphi 0, %s44
    %s47 = sphi 0, %s46
    %s61 = sphi 0, %s47
    %s65 = sphi 0, %s65
    %s67 = sphi 0, %s65
    %s68 = sphi 0, %s67
    %s82 = sphi 0, %s68
    %s88 = sphi 0, %s90
    %s91 = sphi 0, %s88
    %s92 = sphi 0, %s91
    %s108 = sphi 0, %s92
    %s114 = sphi 0, %s116
    %s117 = sphi 0, %s114
    %s118 = sphi 0, %s117
    %s134 = sphi 0, %s118
  $region4: #{tounet_fwd.214} parent=0 // loop_header_branch
    %13 = sbr.rel (%p11) target = $region8
  $region5: #{tounet_fwd.214} parent=0 // loop_body
    %s15 = ssub.s32 %s10, 1
    %s16 = ssub.s32 %s10, 2
    %s17 = sadd.s32 %s10, 1
    %s18 = ssub.s32 %s10, %s17
    %p19 = scmp.eq.s32.totalorder %s18, 0
    %s21 = sadd.s32 %s20, 1
    %s22 = scalar_select %p19, %s20, %s21
    %p25 = pneg %p19
    %p26 = scmp.eq.s32.totalorder %s10, 1
    %p27 = por %p25, %p26
    %p28 = scmp.ne.s32.totalorder %s20, %s23
    %p29 = scmp.eq.s32.totalorder %s10, 0
    %p30 = por %p28, %p29
    %p31 = scmp.ne.s32.totalorder %s20, %s23
    %p32 = scmp.eq.s32.totalorder %s15, 1
    %p33 = por %p31, %p32
    %p34 = scmp.ne.s32.totalorder %s23, %s24
    %p35 = scmp.eq.s32.totalorder %s15, 0
    %p36 = por %p34, %p35
    %p37 = scmp.ne.s32.totalorder %s23, %s24
    %p38 = scmp.eq.s32.totalorder %s16, 1
    %p39 = por %p37, %p38
    %p41 = scmp.ne.s32.totalorder %s24, %s40
    %p42 = scmp.eq.s32.totalorder %s16, 0
    %p43 = por %p41, %p42
    %s45 = sadd.s32 %s44, 1
    %p48 = scmp.eq.s32.totalorder %s10, 1
    %p49 = scmp.ne.s32.totalorder %s44, %s46
    %p50 = scmp.eq.s32.totalorder %s10, 0
    %p51 = por %p49, %p50
    %p52 = scmp.ne.s32.totalorder %s44, %s46
    %p53 = scmp.eq.s32.totalorder %s15, 1
    %p54 = por %p52, %p53
    %p55 = scmp.ne.s32.totalorder %s46, %s47
    %p56 = scmp.eq.s32.totalorder %s15, 0
    %p57 = por %p55, %p56
    %p58 = scmp.ne.s32.totalorder %s46, %s47
    %p59 = scmp.eq.s32.totalorder %s16, 1
    %p60 = por %p58, %p59
    %p62 = scmp.ne.s32.totalorder %s47, %s61
    %p63 = scmp.eq.s32.totalorder %s16, 0
    %p64 = por %p62, %p63
    %s66 = sadd.s32 %s65, 1
    %p69 = scmp.eq.s32.totalorder %s10, 1
    %p70 = scmp.ne.s32.totalorder %s65, %s67
    %p71 = scmp.eq.s32.totalorder %s10, 0
    %p72 = por %p70, %p71
    %p73 = scmp.ne.s32.totalorder %s65, %s67
    %p74 = scmp.eq.s32.totalorder %s15, 1
    %p75 = por %p73, %p74
    %p76 = scmp.ne.s32.totalorder %s67, %s68
    %p77 = scmp.eq.s32.totalorder %s15, 0
    %p78 = por %p76, %p77
    %p79 = scmp.ne.s32.totalorder %s67, %s68
    %p80 = scmp.eq.s32.totalorder %s16, 1
    %p81 = por %p79, %p80
    %p83 = scmp.ne.s32.totalorder %s68, %s82
    %p84 = scmp.eq.s32.totalorder %s16, 0
    %p85 = por %p83, %p84
    %s86 = ssub.s32 %s10, %s17
    %p87 = scmp.eq.s32.totalorder %s86, 0
    %s89 = sadd.s32 %s88, 1
    %s90 = scalar_select %p87, %s88, %s89
    %p93 = pneg %p87
    %p94 = scmp.eq.s32.totalorder %s10, 1
    %p95 = por %p93, %p94
    %p96 = scmp.ne.s32.totalorder %s88, %s91
    %p97 = scmp.eq.s32.totalorder %s10, 0
    %p98 = por %p96, %p97
    %p99 = scmp.ne.s32.totalorder %s88, %s91
    %p100 = scmp.eq.s32.totalorder %s15, 1
    %p101 = por %p99, %p100
    %p102 = scmp.ne.s32.totalorder %s91, %s92
    %p103 = scmp.eq.s32.totalorder %s15, 0
    %p104 = por %p102, %p103
    %p105 = scmp.ne.s32.totalorder %s91, %s92
    %p106 = scmp.eq.s32.totalorder %s16, 1
    %p107 = por %p105, %p106
    %p109 = scmp.ne.s32.totalorder %s92, %s108
    %p110 = scmp.eq.s32.totalorder %s16, 0
    %p111 = por %p109, %p110
    %s112 = ssub.s32 %s10, %s17
    %p113 = scmp.eq.s32.totalorder %s112, 0
    %s115 = sadd.s32 %s114, 1
    %s116 = scalar_select %p113, %s114, %s115
    %p119 = pneg %p113
    %p120 = scmp.eq.s32.totalorder %s10, 1
    %p121 = por %p119, %p120
    %p122 = scmp.ne.s32.totalorder %s114, %s117
    %p123 = scmp.eq.s32.totalorder %s10, 0
    %p124 = por %p122, %p123
    %p125 = scmp.ne.s32.totalorder %s114, %s117
    %p126 = scmp.eq.s32.totalorder %s15, 1
    %p127 = por %p125, %p126
    %p128 = scmp.ne.s32.totalorder %s117, %s118
    %p129 = scmp.eq.s32.totalorder %s15, 0
    %p130 = por %p128, %p129
    %p131 = scmp.ne.s32.totalorder %s117, %s118
    %p132 = scmp.eq.s32.totalorder %s16, 1
    %p133 = por %p131, %p132
    %p135 = scmp.ne.s32.totalorder %s118, %s134
    %p136 = scmp.eq.s32.totalorder %s16, 0
    %p137 = por %p135, %p136
    %p138 = scmp.le.s32.totalorder 1, %s10
    %p139 = scmp.lt.s32.totalorder %s10, 3
    %p140 = pnand %p138, %p139
    %p141 = pneg %p140
    // Predicated region
    $region9: #{tounet_fwd.214} parent=5 // pred_check
      _
    $region10: #{tounet_fwd.214} parent=5 // pred_check_branch
      %143 = sbr.rel (%p140) target = $region12
    $region11: #{tounet_fwd.214} parent=5 // pred_region
      %s144 = ssub.s32 %s10, 1
      // Predicated region
      $region13: #{tounet_fwd.214} parent=11 // pred_check
        %p145 = pneg %p57
      $region14: #{tounet_fwd.214} parent=11 // pred_check_branch
        %147 = sbr.rel (%p145) target = $region16
      $region15: #{tounet_fwd.214} parent=11 // pred_region
        _
      $region16: #{tounet_fwd.214} parent=11 // pred_fallthru
        _
      // Predicated region
      $region17: #{tounet_fwd.214} parent=11 // pred_check
        %p148 = pneg %p78
      $region18: #{tounet_fwd.214} parent=11 // pred_check_branch
        %150 = sbr.rel (%p148) target = $region20
      $region19: #{tounet_fwd.214} parent=11 // pred_region
        _
      $region20: #{tounet_fwd.214} parent=11 // pred_fallthru
        _
    $region12: #{tounet_fwd.214} parent=5 // pred_fallthru
      _
    %p151 = scmp.lt.s32.totalorder %s10, 2
    // Predicated region
    $region21: #{tounet_fwd.214} parent=5 // pred_check
      %p152 = pneg %p151
    $region22: #{tounet_fwd.214} parent=5 // pred_check_branch
      %154 = sbr.rel (%p152) target = $region24
    $region23: #{tounet_fwd.214} parent=5 // pred_region
      // Predicated region
      $region25: #{tounet_fwd.214} parent=23 // pred_check
        %p155 = pneg %p30
      $region26: #{tounet_fwd.214} parent=23 // pred_check_branch
        %157 = sbr.rel (%p155) target = $region28
      $region27: #{tounet_fwd.214} parent=23 // pred_region
        %s158 = smul.u32 16, %s10
        %p159 = scmp.lt.s32.totalorder %s158, 31
        %s160 = scalar_select %p159, %s158, 31
        %s161 = smul.addr %s160, 2
        %s162 = smul.addr %s161, 4
        %s163 = scalar_lea.vmem %s0, %s162
        %s164 = smul.u32 16, %s10
      $region28: #{tounet_fwd.214} parent=23 // pred_fallthru
        _
      // Predicated region
      $region29: #{tounet_fwd.214} parent=23 // pred_check
        %p165 = pneg %p98
      $region30: #{tounet_fwd.214} parent=23 // pred_check_branch
        %167 = sbr.rel (%p165) target = $region32
      $region31: #{tounet_fwd.214} parent=23 // pred_region
        %s168 = smul.u32 16, %s10
        %p169 = scmp.lt.s32.totalorder %s168, 31
        %s170 = scalar_select %p169, %s168, 31
        %s171 = smul.addr %s170, 4
        %s172 = scalar_lea.vmem %s3, %s171
        %s173 = smul.u32 16, %s10
      $region32: #{tounet_fwd.214} parent=23 // pred_fallthru
        _
    $region24: #{tounet_fwd.214} parent=5 // pred_fallthru
      _
    %p174 = scmp.le.s32.totalorder 1, %s10
    %p175 = scmp.lt.s32.totalorder %s10, 3
    %p176 = pnand %p174, %p175
    %p177 = pneg %p176
    // Predicated region
    $region33: #{tounet_fwd.214} parent=5 // pred_check
      _
    $region34: #{tounet_fwd.214} parent=5 // pred_check_branch
      %179 = sbr.rel (%p176) target = $region36
    $region35: #{tounet_fwd.214} parent=5 // pred_region
      %s180 = ssub.s32 %s10, 1
      %s181 = smul.u32 16, %s15
      %p182 = scmp.lt.s32.totalorder %s181, 31
      %s183 = scalar_select %p182, %s181, 31
      %s184 = smul.addr %s183, 2
      %s185 = smul.addr %s184, 4
      %s186 = scalar_lea.vmem %s0, %s185
      %p187 = pneg %p36
      %p188 = pneg %p33
      %p189 = pneg %p57
      %p190 = pneg %p54
      %p191 = pneg %p78
      %p192 = pneg %p75
      %s193 = smul.u32 16, %s15
      %p194 = scmp.lt.s32.totalorder %s193, 31
      %s195 = scalar_select %p194, %s193, 31
      %s196 = smul.addr %s195, 4
      %s197 = scalar_lea.vmem %s3, %s196
      %p198 = pneg %p104
      %p199 = pneg %p101
      %p200 = pneg %p130
      %p201 = pneg %p127
      %s202 = smul.u32 16, %s15
      %p203 = scmp.lt.s32.totalorder %s202, 31
      %s204 = scalar_select %p203, %s202, 31
      %s205 = smul.addr %s204, 4
      %s206 = scalar_lea.vmem %s4, %s205
      %s207 = smul.u32 16, %s15
      %p208 = scmp.lt.s32.totalorder %s207, 31
      %s209 = scalar_select %p208, %s207, 31
      %s210 = smul.addr %s209, 2
      %s211 = smul.addr %s210, 4
      %s212 = scalar_lea.vmem %s0, %s211
      %s213 = smul.u32 16, %s15
      %s214 = smul.u32 16, %s15
      %p215 = scmp.lt.s32.totalorder %s214, 31
      %s216 = scalar_select %p215, %s214, 31
      %s217 = smul.addr %s216, 4
      %s218 = scalar_lea.vmem %s3, %s217
      %s219 = smul.u32 16, %s15
      %s220 = smul.u32 16, %s15
      %p221 = scmp.lt.s32.totalorder %s220, 31
      %s222 = scalar_select %p221, %s220, 31
      %s223 = smul.addr %s222, 4
      %s224 = scalar_lea.vmem %s4, %s223
      %s225 = smul.u32 16, %s15
      %v227 = vld [vmem:[%s212] sm:$0xff]
      %v228 = vld [vmem:[%s212 + $0x8] sm:$0xff]
      %v229 = vld [vmem:[%s212 + $0x10] sm:$0xff]
      %v230 = vld [vmem:[%s212 + $0x18] sm:$0xff]
      %v231 = vld [vmem:[%s212 + $0x20] sm:$0xff]
      %v232 = vld [vmem:[%s212 + $0x28] sm:$0xff]
      %v233 = vld [vmem:[%s212 + $0x30] sm:$0xff]
      %v234 = vld [vmem:[%s212 + $0x38] sm:$0xff]
      %v235 = vld [vmem:[%s212 + $0x40] sm:$0xff]
      %v236 = vld [vmem:[%s212 + $0x48] sm:$0xff]
      %v237 = vld [vmem:[%s212 + $0x50] sm:$0xff]
      %v238 = vld [vmem:[%s212 + $0x58] sm:$0xff]
      %v239 = vld [vmem:[%s212 + $0x60] sm:$0xff]
      %v240 = vld [vmem:[%s212 + $0x68] sm:$0xff]
      %v241 = vld [vmem:[%s212 + $0x70] sm:$0xff]
      %v242 = vld [vmem:[%s212 + $0x78] sm:$0xff]
      %v243 = vld [vmem:[%s1] sm:$0xf]
      %v244 = vld [vmem:[%s1 + $0x4] sm:$0xf]
      %v245 = vld [vmem:[%s1 + $0x8] sm:$0xf]
      %v246 = vld [vmem:[%s1 + $0xc] sm:$0xf]
      %v247 = vld [vmem:[%s1 + $0x10] sm:$0xf]
      %v248 = vld [vmem:[%s1 + $0x14] sm:$0xf]
      %v249 = vld [vmem:[%s1 + $0x18] sm:$0xf]
      %v250 = vld [vmem:[%s1 + $0x1c] sm:$0xf]
      %v251 = vld [vmem:[%s1 + $0x20] sm:$0xf]
      %v252 = vld [vmem:[%s1 + $0x24] sm:$0xf]
      %v253 = vld [vmem:[%s1 + $0x28] sm:$0xf]
      %v254 = vld [vmem:[%s1 + $0x2c] sm:$0xf]
      %v255 = vld [vmem:[%s1 + $0x30] sm:$0xf]
      %v256 = vld [vmem:[%s1 + $0x34] sm:$0xf]
      %v257 = vld [vmem:[%s1 + $0x38] sm:$0xf]
      %v258 = vld [vmem:[%s1 + $0x3c] sm:$0xf]
      %v259 = vld [vmem:[%s1 + $0x40] sm:$0xf]
      %v260 = vld [vmem:[%s1 + $0x44] sm:$0xf]
      %v261 = vld [vmem:[%s1 + $0x48] sm:$0xf]
      %v262 = vld [vmem:[%s1 + $0x4c] sm:$0xf]
      %v263 = vld [vmem:[%s1 + $0x50] sm:$0xf]
      %v264 = vld [vmem:[%s1 + $0x54] sm:$0xf]
      %v265 = vld [vmem:[%s1 + $0x58] sm:$0xf]
      %v266 = vld [vmem:[%s1 + $0x5c] sm:$0xf]
      %v267 = vld [vmem:[%s1 + $0x60] sm:$0xf]
      %v268 = vld [vmem:[%s1 + $0x64] sm:$0xf]
      %v269 = vld [vmem:[%s1 + $0x68] sm:$0xf]
      %v270 = vld [vmem:[%s1 + $0x6c] sm:$0xf]
      %v271 = vld [vmem:[%s1 + $0x70] sm:$0xf]
      %v272 = vld [vmem:[%s1 + $0x74] sm:$0xf]
      %v273 = vld [vmem:[%s1 + $0x78] sm:$0xf]
      %v274 = vld [vmem:[%s1 + $0x7c] sm:$0xf]
      %v275 = vld [vmem:[%s2] sm:$0x1]
      %v277 = vlaneseq
      %v278 = vshrl.u32 %v277, 7
      %v279 = vsub.s32 0, %v278
      %v280 = vrot.slane %v275, %v279
      %v298 = vunpack.c.l.b16 %v227
      %v299 = vunpack.c.h.b16 %v227
      %v300 = vunpack.c.l.b16 %v228
      %v301 = vunpack.c.h.b16 %v228
      %v302 = vunpack.c.l.b16 %v229
      %v303 = vunpack.c.h.b16 %v229
      %v304 = vunpack.c.l.b16 %v230
      %v305 = vunpack.c.h.b16 %v230
      %v306 = vunpack.c.l.b16 %v231
      %v307 = vunpack.c.h.b16 %v231
      %v308 = vunpack.c.l.b16 %v232
      %v309 = vunpack.c.h.b16 %v232
      %v310 = vunpack.c.l.b16 %v233
      %v311 = vunpack.c.h.b16 %v233
      %v312 = vunpack.c.l.b16 %v234
      %v313 = vunpack.c.h.b16 %v234
      %v314 = vunpack.c.l.b16 %v235
      %v315 = vunpack.c.h.b16 %v235
      %v316 = vunpack.c.l.b16 %v236
      %v317 = vunpack.c.h.b16 %v236
      %v318 = vunpack.c.l.b16 %v237
      %v319 = vunpack.c.h.b16 %v237
      %v320 = vunpack.c.l.b16 %v238
      %v321 = vunpack.c.h.b16 %v238
      %v322 = vunpack.c.l.b16 %v239
      %v323 = vunpack.c.h.b16 %v239
      %v324 = vunpack.c.l.b16 %v240
      %v325 = vunpack.c.h.b16 %v240
      %v326 = vunpack.c.l.b16 %v241
      %v327 = vunpack.c.h.b16 %v241
      %v328 = vunpack.c.l.b16 %v242
      %v329 = vunpack.c.h.b16 %v242
      %v330 = vpack.c.b16 %v300, %v298
      %v331 = vpack.c.b16 %v301, %v299
      %v332 = vpack.c.b16 %v304, %v302
      %v333 = vpack.c.b16 %v305, %v303
      %v334 = vpack.c.b16 %v308, %v306
      %v335 = vpack.c.b16 %v309, %v307
      %v336 = vpack.c.b16 %v312, %v310
      %v337 = vpack.c.b16 %v313, %v311
      %v338 = vpack.c.b16 %v316, %v314
      %v339 = vpack.c.b16 %v317, %v315
      %v340 = vpack.c.b16 %v320, %v318
      %v341 = vpack.c.b16 %v321, %v319
      %v342 = vpack.c.b16 %v324, %v322
      %v343 = vpack.c.b16 %v325, %v323
      %v344 = vpack.c.b16 %v328, %v326
      %v345 = vpack.c.b16 %v329, %v327
      %v394 = vunpack.c.l.b16 %v243
      %v395 = vunpack.c.l.b16 %v244
      %v396 = vunpack.c.l.b16 %v245
      %v397 = vunpack.c.l.b16 %v246
      %v398 = vunpack.c.l.b16 %v247
      %v399 = vunpack.c.l.b16 %v248
      %v400 = vunpack.c.l.b16 %v249
      %v401 = vunpack.c.l.b16 %v250
      %v402 = vunpack.c.l.b16 %v251
      %v403 = vunpack.c.l.b16 %v252
      %v404 = vunpack.c.l.b16 %v253
      %v405 = vunpack.c.l.b16 %v254
      %v406 = vunpack.c.l.b16 %v255
      %v407 = vunpack.c.l.b16 %v256
      %v408 = vunpack.c.l.b16 %v257
      %v409 = vunpack.c.l.b16 %v258
      %v410 = vunpack.c.l.b16 %v259
      %v411 = vunpack.c.l.b16 %v260
      %v412 = vunpack.c.l.b16 %v261
      %v413 = vunpack.c.l.b16 %v262
      %v414 = vunpack.c.l.b16 %v263
      %v415 = vunpack.c.l.b16 %v264
      %v416 = vunpack.c.l.b16 %v265
      %v417 = vunpack.c.l.b16 %v266
      %v418 = vunpack.c.l.b16 %v267
      %v419 = vunpack.c.l.b16 %v268
      %v420 = vunpack.c.l.b16 %v269
      %v421 = vunpack.c.l.b16 %v270
      %v422 = vunpack.c.l.b16 %v271
      %v423 = vunpack.c.l.b16 %v272
      %v424 = vunpack.c.l.b16 %v273
      %v425 = vunpack.c.l.b16 %v274
      %v426 = vpack.c.b16 %v395, %v394
      %v427 = vpack.c.b16 %v397, %v396
      %v428 = vpack.c.b16 %v399, %v398
      %v429 = vpack.c.b16 %v401, %v400
      %v430 = vpack.c.b16 %v403, %v402
      %v431 = vpack.c.b16 %v405, %v404
      %v432 = vpack.c.b16 %v407, %v406
      %v433 = vpack.c.b16 %v409, %v408
      %v434 = vpack.c.b16 %v411, %v410
      %v435 = vpack.c.b16 %v413, %v412
      %v436 = vpack.c.b16 %v415, %v414
      %v437 = vpack.c.b16 %v417, %v416
      %v438 = vpack.c.b16 %v419, %v418
      %v439 = vpack.c.b16 %v421, %v420
      %v440 = vpack.c.b16 %v423, %v422
      %v441 = vpack.c.b16 %v425, %v424
      %458 = vmatprep.subr.bf16.mxu0 0
      %459 = vmatpush1.bf16.msra.mxu0 %v426
      %460 = vmatprep.subr.bf16.mxu0 0
      %461 = vmatpush1.bf16.msra.mxu0 %v427
      %462 = vmatprep.subr.bf16.mxu0 0
      %463 = vmatpush1.bf16.msra.mxu0 %v428
      %464 = vmatprep.subr.bf16.mxu0 0
      %465 = vmatpush1.bf16.msra.mxu0 %v429
      %466 = vmatprep.subr.bf16.mxu0 0
      %467 = vmatpush1.bf16.msra.mxu0 %v430
      %468 = vmatprep.subr.bf16.mxu0 0
      %469 = vmatpush1.bf16.msra.mxu0 %v431
      %470 = vmatprep.subr.bf16.mxu0 0
      %471 = vmatpush1.bf16.msra.mxu0 %v432
      %472 = vmatprep.subr.bf16.mxu0 0
      %473 = vmatpush1.bf16.msra.mxu0 %v433
      %474 = vmatprep.subr.bf16.mxu0 0
      %475 = vmatpush1.bf16.msra.mxu0 %v434
      %476 = vmatprep.subr.bf16.mxu0 0
      %477 = vmatpush1.bf16.msra.mxu0 %v435
      %478 = vmatprep.subr.bf16.mxu0 0
      %479 = vmatpush1.bf16.msra.mxu0 %v436
      %480 = vmatprep.subr.bf16.mxu0 0
      %481 = vmatpush1.bf16.msra.mxu0 %v437
      %482 = vmatprep.subr.bf16.mxu0 0
      %483 = vmatpush1.bf16.msra.mxu0 %v438
      %484 = vmatprep.subr.bf16.mxu0 0
      %485 = vmatpush1.bf16.msra.mxu0 %v439
      %486 = vmatprep.subr.bf16.mxu0 0
      %487 = vmatpush1.bf16.msra.mxu0 %v440
      %488 = vmatprep.subr.bf16.mxu0 0
      %489 = vmatpush1.bf16.msra.mxu0 %v441
      %490 = vmatprep.mubr.bf16.mxu0 %v331
      %491 = vmatmul.mubr.bf16.gmra.mrb[0].mxu0 %v330
      %v492 = vpop.f32.mrb[0].mxu0
      %v493 = vadd.f32 %v280, %v492
      %v494 = vpop.f32.mrb[0].mxu0
      %v495 = vpop.f32.mrb[0].mxu0
      %v496 = vadd.f32 %v280, %v495
      %v497 = vpop.f32.mrb[0].mxu0
      %498 = vmatprep.mubr.bf16.mxu0 %v333
      %499 = vmatmul.mubr.bf16.gmra.mrb[0].mxu0 %v332
      %v500 = vpop.f32.mrb[0].mxu0
      %v501 = vadd.f32 %v280, %v500
      %v502 = vpop.f32.mrb[0].mxu0
      %v503 = vpop.f32.mrb[0].mxu0
      %v504 = vadd.f32 %v280, %v503
      %v505 = vpop.f32.mrb[0].mxu0
      %506 = vmatprep.mubr.bf16.mxu0 %v335
      %507 = vmatmul.mubr.bf16.gmra.mrb[0].mxu0 %v334
      %v508 = vpop.f32.mrb[0].mxu0
      %v509 = vadd.f32 %v280, %v508
      %v510 = vpop.f32.mrb[0].mxu0
      %v511 = vpop.f32.mrb[0].mxu0
      %v512 = vadd.f32 %v280, %v511
      %v513 = vpop.f32.mrb[0].mxu0
      %514 = vmatprep.mubr.bf16.mxu0 %v337
      %515 = vmatmul.mubr.bf16.gmra.mrb[0].mxu0 %v336
      %v516 = vpop.f32.mrb[0].mxu0
      %v517 = vadd.f32 %v280, %v516
      %v518 = vpop.f32.mrb[0].mxu0
      %v519 = vpop.f32.mrb[0].mxu0
      %v520 = vadd.f32 %v280, %v519
      %v521 = vpop.f32.mrb[0].mxu0
      %522 = vmatprep.mubr.bf16.mxu0 %v339
      %523 = vmatmul.mubr.bf16.gmra.mrb[0].mxu0 %v338
      %v524 = vpop.f32.mrb[0].mxu0
      %v525 = vadd.f32 %v280, %v524
      %v526 = vpop.f32.mrb[0].mxu0
      %v527 = vpop.f32.mrb[0].mxu0
      %v528 = vadd.f32 %v280, %v527
      %v529 = vpop.f32.mrb[0].mxu0
      %530 = vmatprep.mubr.bf16.mxu0 %v341
      %531 = vmatmul.mubr.bf16.gmra.mrb[0].mxu0 %v340
      %v532 = vpop.f32.mrb[0].mxu0
      %v533 = vadd.f32 %v280, %v532
      %v534 = vpop.f32.mrb[0].mxu0
      %v535 = vpop.f32.mrb[0].mxu0
      %v536 = vadd.f32 %v280, %v535
      %v537 = vpop.f32.mrb[0].mxu0
      %538 = vmatprep.mubr.bf16.mxu0 %v343
      %539 = vmatmul.mubr.bf16.gmra.mrb[0].mxu0 %v342
      %v540 = vpop.f32.mrb[0].mxu0
      %v541 = vadd.f32 %v280, %v540
      %v542 = vpop.f32.mrb[0].mxu0
      %v543 = vpop.f32.mrb[0].mxu0
      %v544 = vadd.f32 %v280, %v543
      %v545 = vpop.f32.mrb[0].mxu0
      %546 = vmatprep.mubr.bf16.mxu0 %v345
      %547 = vmatmul.mubr.bf16.gmra.mrb[0].mxu0 %v344
      %v548 = vpop.f32.mrb[0].mxu0
      %v549 = vadd.f32 %v280, %v548
      %v550 = vpop.f32.mrb[0].mxu0
      %v551 = vpop.f32.mrb[0].mxu0
      %v552 = vadd.f32 %v280, %v551
      %v553 = vpop.f32.mrb[0].mxu0
      %554 = vdwg.mxu0
      %v555 = vld [vmem:[%s218] sm:$0xf]
      %v556 = vld [vmem:[%s218 + $0x4] sm:$0xf]
      %v557 = vld [vmem:[%s218 + $0x8] sm:$0xf]
      %v558 = vld [vmem:[%s218 + $0xc] sm:$0xf]
      %v559 = vld [vmem:[%s218 + $0x10] sm:$0xf]
      %v560 = vld [vmem:[%s218 + $0x14] sm:$0xf]
      %v561 = vld [vmem:[%s218 + $0x18] sm:$0xf]
      %v562 = vld [vmem:[%s218 + $0x1c] sm:$0xf]
      %v563 = vld [vmem:[%s218 + $0x20] sm:$0xf]
      %v564 = vld [vmem:[%s218 + $0x24] sm:$0xf]
      %v565 = vld [vmem:[%s218 + $0x28] sm:$0xf]
      %v566 = vld [vmem:[%s218 + $0x2c] sm:$0xf]
      %v567 = vld [vmem:[%s218 + $0x30] sm:$0xf]
      %v568 = vld [vmem:[%s218 + $0x34] sm:$0xf]
      %v569 = vld [vmem:[%s218 + $0x38] sm:$0xf]
      %v570 = vld [vmem:[%s218 + $0x3c] sm:$0xf]
      %v571 = vunpack.c.l.bf16 %v555
      %v572 = vunpack.c.l.bf16 %v556
      %v573 = vunpack.c.l.bf16 %v557
      %v574 = vunpack.c.l.bf16 %v558
      %v575 = vunpack.c.l.bf16 %v559
      %v576 = vunpack.c.l.bf16 %v560
      %v577 = vunpack.c.l.bf16 %v561
      %v578 = vunpack.c.l.bf16 %v562
      %v579 = vunpack.c.l.bf16 %v563
      %v580 = vunpack.c.l.bf16 %v564
      %v581 = vunpack.c.l.bf16 %v565
      %v582 = vunpack.c.l.bf16 %v566
      %v583 = vunpack.c.l.bf16 %v567
      %v584 = vunpack.c.l.bf16 %v568
      %v585 = vunpack.c.l.bf16 %v569
      %v586 = vunpack.c.l.bf16 %v570
      %v587 = vadd.f32 %v493, %v571
      %v588 = vadd.f32 %v496, %v572
      %v589 = vadd.f32 %v501, %v573
      %v590 = vadd.f32 %v504, %v574
      %v591 = vadd.f32 %v509, %v575
      %v592 = vadd.f32 %v512, %v576
      %v593 = vadd.f32 %v517, %v577
      %v594 = vadd.f32 %v520, %v578
      %v595 = vadd.f32 %v525, %v579
      %v596 = vadd.f32 %v528, %v580
      %v597 = vadd.f32 %v533, %v581
      %v598 = vadd.f32 %v536, %v582
      %v599 = vadd.f32 %v541, %v583
      %v600 = vadd.f32 %v544, %v584
      %v601 = vadd.f32 %v549, %v585
      %v602 = vadd.f32 %v552, %v586
      %v603 = vpack.c.bf16 %v588, %v587
      %v604 = vpack.c.bf16 %v590, %v589
      %v605 = vpack.c.bf16 %v592, %v591
      %v606 = vpack.c.bf16 %v594, %v593
      %v607 = vpack.c.bf16 %v596, %v595
      %v608 = vpack.c.bf16 %v598, %v597
      %v609 = vpack.c.bf16 %v600, %v599
      %v610 = vpack.c.bf16 %v602, %v601
      %v619 = vunpack.c.l.b16 %v603
      %v620 = vunpack.c.h.b16 %v603
      %v621 = vunpack.c.l.b16 %v604
      %v622 = vunpack.c.h.b16 %v604
      %v623 = vunpack.c.l.b16 %v605
      %v624 = vunpack.c.h.b16 %v605
      %v625 = vunpack.c.l.b16 %v606
      %v626 = vunpack.c.h.b16 %v606
      %v627 = vunpack.c.l.b16 %v607
      %v628 = vunpack.c.h.b16 %v607
      %v629 = vunpack.c.l.b16 %v608
      %v630 = vunpack.c.h.b16 %v608
      %v631 = vunpack.c.l.b16 %v609
      %v632 = vunpack.c.h.b16 %v609
      %v633 = vunpack.c.l.b16 %v610
      %v634 = vunpack.c.h.b16 %v610
      %v635 = vpack.c.b16 %v619, %v619
      %v636 = vpack.c.b16 %v620, %v620
      %v637 = vpack.c.b16 %v621, %v621
      %v638 = vpack.c.b16 %v622, %v622
      %v639 = vpack.c.b16 %v623, %v623
      %v640 = vpack.c.b16 %v624, %v624
      %v641 = vpack.c.b16 %v625, %v625
      %v642 = vpack.c.b16 %v626, %v626
      %v643 = vpack.c.b16 %v627, %v627
      %v644 = vpack.c.b16 %v628, %v628
      %v645 = vpack.c.b16 %v629, %v629
      %v646 = vpack.c.b16 %v630, %v630
      %v647 = vpack.c.b16 %v631, %v631
      %v648 = vpack.c.b16 %v632, %v632
      %v649 = vpack.c.b16 %v633, %v633
      %v650 = vpack.c.b16 %v634, %v634
      %vm667 = vcmask 125952
      %668 = vst.msk [vmem:[%s224] sm:$0xf] %vm667, %v635
      %669 = vst.msk [vmem:[%s224 + $0x4] sm:$0xf] %vm667, %v636
      %670 = vst.msk [vmem:[%s224 + $0x8] sm:$0xf] %vm667, %v637
      %671 = vst.msk [vmem:[%s224 + $0xc] sm:$0xf] %vm667, %v638
      %672 = vst.msk [vmem:[%s224 + $0x10] sm:$0xf] %vm667, %v639
      %673 = vst.msk [vmem:[%s224 + $0x14] sm:$0xf] %vm667, %v640
      %674 = vst.msk [vmem:[%s224 + $0x18] sm:$0xf] %vm667, %v641
      %675 = vst.msk [vmem:[%s224 + $0x1c] sm:$0xf] %vm667, %v642
      %676 = vst.msk [vmem:[%s224 + $0x20] sm:$0xf] %vm667, %v643
      %677 = vst.msk [vmem:[%s224 + $0x24] sm:$0xf] %vm667, %v644
      %678 = vst.msk [vmem:[%s224 + $0x28] sm:$0xf] %vm667, %v645
      %679 = vst.msk [vmem:[%s224 + $0x2c] sm:$0xf] %vm667, %v646
      %680 = vst.msk [vmem:[%s224 + $0x30] sm:$0xf] %vm667, %v647
      %681 = vst.msk [vmem:[%s224 + $0x34] sm:$0xf] %vm667, %v648
      %682 = vst.msk [vmem:[%s224 + $0x38] sm:$0xf] %vm667, %v649
      %683 = vst.msk [vmem:[%s224 + $0x3c] sm:$0xf] %vm667, %v650
      %s684 = smul.u32 16, %s15
      %p685 = scmp.lt.s32.totalorder %s684, 31
      %s686 = scalar_select %p685, %s684, 31
      %s687 = smul.addr %s686, 4
      %s688 = scalar_lea.vmem %s4, %s687
      // Predicated region
      $region37: #{tounet_fwd.214} parent=35 // pred_check
        %p689 = pneg %p127
      $region38: #{tounet_fwd.214} parent=35 // pred_check_branch
        %691 = sbr.rel (%p689) target = $region40
      $region39: #{tounet_fwd.214} parent=35 // pred_region
        %s692 = smul.u32 16, %s15
      $region40: #{tounet_fwd.214} parent=35 // pred_fallthru
        _
    $region36: #{tounet_fwd.214} parent=5 // pred_fallthru
      _
    %p693 = scmp.le.s32.totalorder 2, %s10
    // Predicated region
    $region41: #{tounet_fwd.214} parent=5 // pred_check
      %p694 = pneg %p693
    $region42: #{tounet_fwd.214} parent=5 // pred_check_branch
      %696 = sbr.rel (%p694) target = $region44
    $region43: #{tounet_fwd.214} parent=5 // pred_region
      %s697 = ssub.s32 %s10, 2
      // Predicated region
      $region45: #{tounet_fwd.214} parent=43 // pred_check
        %p698 = pneg %p133
      $region46: #{tounet_fwd.214} parent=43 // pred_check_branch
        %700 = sbr.rel (%p698) target = $region48
      $region47: #{tounet_fwd.214} parent=43 // pred_region
        %s701 = smul.u32 16, %s16
        %p702 = scmp.lt.s32.totalorder %s701, 31
        %s703 = scalar_select %p702, %s701, 31
        %s704 = smul.addr %s703, 4
        %s705 = scalar_lea.vmem %s4, %s704
      $region48: #{tounet_fwd.214} parent=43 // pred_fallthru
        _
    $region44: #{tounet_fwd.214} parent=5 // pred_fallthru
      _
  $region6: #{tounet_fwd.214} parent=0 // loop_footer
    %s14 = sadd.s32 1, %s10
  $region7: #{tounet_fwd.214} parent=0 // loop_footer_branch
    %9 = sbr.rel target = $region3
  $region8: #{tounet_fwd.214} parent=0 // loop_exit
    _

// kernel: tounet_fwd.223
$region0: #{tounet_fwd.223}
  #allocation0 [shape = 'u32[]', space=smem, size = 0x4, offset = 0x4, fixed_abs, tag = 'smem constant byte address 0x4 - core index']
  #allocation1 [shape = 'u32[144,128]{1,0:T(1,128)}', space=vmem, size = 0x12000, scoped, tag = 'internal scratch']
  %s0 = inlined_call_operand.vmem [shape: bf16[256,256], index: 0, kind: input, shape index: {}]
  %s1 = inlined_call_operand.vmem [shape: bf16[256,128], index: 1, kind: input, shape index: {}]
  %s2 = inlined_call_operand.vmem [shape: f32[1,128], index: 2, kind: input, shape index: {}]
  %s3 = inlined_call_operand.vmem [shape: bf16[256,16], index: 3, kind: input, shape index: {}]
  %s4 = inlined_call_operand.vmem [shape: bf16[256,16], index: 4, kind: output, shape index: {}]
  %s5 = sld [smem:[#allocation0]]
  $region49: #{tounet_fwd.223} parent=0
    _
  %s7 = ssub.s32 1, %s5
  %s8 = scalar_select 0, %s7, %s5
  loop: start=0, step=1, limit=4
  $region2: #{tounet_fwd.223} parent=0 // loop_pre_header
    _
  $region3: #{tounet_fwd.223} parent=0 // loop_header
    %s10 = sphi 0, %s14
    %p11 = scmp.ge.s32.totalorder %s10, 4
    %s20 = sphi 0, %s22
    %s23 = sphi 0, %s20
    %s24 = sphi 0, %s23
    %s40 = sphi 0, %s24
    %s44 = sphi 0, %s44
    %s46 = sphi 0, %s44
    %s47 = sphi 0, %s46
    %s61 = sphi 0, %s47
    %s65 = sphi 0, %s65
    %s67 = sphi 0, %s65
    %s68 = sphi 0, %s67
    %s82 = sphi 0, %s68
    %s88 = sphi 0, %s90
    %s91 = sphi 0, %s88
    %s92 = sphi 0, %s91
    %s108 = sphi 0, %s92
    %s114 = sphi 0, %s116
    %s117 = sphi 0, %s114
    %s118 = sphi 0, %s117
    %s134 = sphi 0, %s118
  $region4: #{tounet_fwd.223} parent=0 // loop_header_branch
    %13 = sbr.rel (%p11) target = $region8
  $region5: #{tounet_fwd.223} parent=0 // loop_body
    %s15 = ssub.s32 %s10, 1
    %s16 = ssub.s32 %s10, 2
    %s17 = sadd.s32 %s10, 1
    %s18 = ssub.s32 %s10, %s17
    %p19 = scmp.eq.s32.totalorder %s18, 0
    %s21 = sadd.s32 %s20, 1
    %s22 = scalar_select %p19, %s20, %s21
    %p25 = pneg %p19
    %p26 = scmp.eq.s32.totalorder %s10, 1
    %p27 = por %p25, %p26
    %p28 = scmp.ne.s32.totalorder %s20, %s23
    %p29 = scmp.eq.s32.totalorder %s10, 0
    %p30 = por %p28, %p29
    %p31 = scmp.ne.s32.totalorder %s20, %s23
    %p32 = scmp.eq.s32.totalorder %s15, 1
    %p33 = por %p31, %p32
    %p34 = scmp.ne.s32.totalorder %s23, %s24
    %p35 = scmp.eq.s32.totalorder %s15, 0
    %p36 = por %p34, %p35
    %p37 = scmp.ne.s32.totalorder %s23, %s24
    %p38 = scmp.eq.s32.totalorder %s16, 1
    %p39 = por %p37, %p38
    %p41 = scmp.ne.s32.totalorder %s24, %s40
    %p42 = scmp.eq.s32.totalorder %s16, 0
    %p43 = por %p41, %p42
    %s45 = sadd.s32 %s44, 1
    %p48 = scmp.eq.s32.totalorder %s10, 1
    %p49 = scmp.ne.s32.totalorder %s44, %s46
    %p50 = scmp.eq.s32.totalorder %s10, 0
    %p51 = por %p49, %p50
    %p52 = scmp.ne.s32.totalorder %s44, %s46
    %p53 = scmp.eq.s32.totalorder %s15, 1
    %p54 = por %p52, %p53
    %p55 = scmp.ne.s32.totalorder %s46, %s47
    %p56 = scmp.eq.s32.totalorder %s15, 0
    %p57 = por %p55, %p56
    %p58 = scmp.ne.s32.totalorder %s46, %s47
    %p59 = scmp.eq.s32.totalorder %s16, 1
    %p60 = por %p58, %p59
    %p62 = scmp.ne.s32.totalorder %s47, %s61
    %p63 = scmp.eq.s32.totalorder %s16, 0
    %p64 = por %p62, %p63
    %s66 = sadd.s32 %s65, 1
    %p69 = scmp.eq.s32.totalorder %s10, 1
    %p70 = scmp.ne.s32.totalorder %s65, %s67
    %p71 = scmp.eq.s32.totalorder %s10, 0
    %p72 = por %p70, %p71
    %p73 = scmp.ne.s32.totalorder %s65, %s67
    %p74 = scmp.eq.s32.totalorder %s15, 1
    %p75 = por %p73, %p74
    %p76 = scmp.ne.s32.totalorder %s67, %s68
    %p77 = scmp.eq.s32.totalorder %s15, 0
    %p78 = por %p76, %p77
    %p79 = scmp.ne.s32.totalorder %s67, %s68
    %p80 = scmp.eq.s32.totalorder %s16, 1
    %p81 = por %p79, %p80
    %p83 = scmp.ne.s32.totalorder %s68, %s82
    %p84 = scmp.eq.s32.totalorder %s16, 0
    %p85 = por %p83, %p84
    %s86 = ssub.s32 %s10, %s17
    %p87 = scmp.eq.s32.totalorder %s86, 0
    %s89 = sadd.s32 %s88, 1
    %s90 = scalar_select %p87, %s88, %s89
    %p93 = pneg %p87
    %p94 = scmp.eq.s32.totalorder %s10, 1
    %p95 = por %p93, %p94
    %p96 = scmp.ne.s32.totalorder %s88, %s91
    %p97 = scmp.eq.s32.totalorder %s10, 0
    %p98 = por %p96, %p97
    %p99 = scmp.ne.s32.totalorder %s88, %s91
    %p100 = scmp.eq.s32.totalorder %s15, 1
    %p101 = por %p99, %p100
    %p102 = scmp.ne.s32.totalorder %s91, %s92
    %p103 = scmp.eq.s32.totalorder %s15, 0
    %p104 = por %p102, %p103
    %p105 = scmp.ne.s32.totalorder %s91, %s92
    %p106 = scmp.eq.s32.totalorder %s16, 1
    %p107 = por %p105, %p106
    %p109 = scmp.ne.s32.totalorder %s92, %s108
    %p110 = scmp.eq.s32.totalorder %s16, 0
    %p111 = por %p109, %p110
    %s112 = ssub.s32 %s10, %s17
    %p113 = scmp.eq.s32.totalorder %s112, 0
    %s115 = sadd.s32 %s114, 1
    %s116 = scalar_select %p113, %s114, %s115
    %p119 = pneg %p113
    %p120 = scmp.eq.s32.totalorder %s10, 1
    %p121 = por %p119, %p120
    %p122 = scmp.ne.s32.totalorder %s114, %s117
    %p123 = scmp.eq.s32.totalorder %s10, 0
    %p124 = por %p122, %p123
    %p125 = scmp.ne.s32.totalorder %s114, %s117
    %p126 = scmp.eq.s32.totalorder %s15, 1
    %p127 = por %p125, %p126
    %p128 = scmp.ne.s32.totalorder %s117, %s118
    %p129 = scmp.eq.s32.totalorder %s15, 0
    %p130 = por %p128, %p129
    %p131 = scmp.ne.s32.totalorder %s117, %s118
    %p132 = scmp.eq.s32.totalorder %s16, 1
    %p133 = por %p131, %p132
    %p135 = scmp.ne.s32.totalorder %s118, %s134
    %p136 = scmp.eq.s32.totalorder %s16, 0
    %p137 = por %p135, %p136
    %p138 = scmp.le.s32.totalorder 1, %s10
    %p139 = scmp.lt.s32.totalorder %s10, 3
    %p140 = pnand %p138, %p139
    %p141 = pneg %p140
    // Predicated region
    $region9: #{tounet_fwd.223} parent=5 // pred_check
      _
    $region10: #{tounet_fwd.223} parent=5 // pred_check_branch
      %143 = sbr.rel (%p140) target = $region12
    $region11: #{tounet_fwd.223} parent=5 // pred_region
      %s144 = ssub.s32 %s10, 1
      // Predicated region
      $region13: #{tounet_fwd.223} parent=11 // pred_check
        %p145 = pneg %p57
      $region14: #{tounet_fwd.223} parent=11 // pred_check_branch
        %147 = sbr.rel (%p145) target = $region16
      $region15: #{tounet_fwd.223} parent=11 // pred_region
        _
      $region16: #{tounet_fwd.223} parent=11 // pred_fallthru
        _
      // Predicated region
      $region17: #{tounet_fwd.223} parent=11 // pred_check
        %p148 = pneg %p78
      $region18: #{tounet_fwd.223} parent=11 // pred_check_branch
        %150 = sbr.rel (%p148) target = $region20
      $region19: #{tounet_fwd.223} parent=11 // pred_region
        _
      $region20: #{tounet_fwd.223} parent=11 // pred_fallthru
        _
    $region12: #{tounet_fwd.223} parent=5 // pred_fallthru
      _
    %p151 = scmp.lt.s32.totalorder %s10, 2
    // Predicated region
    $region21: #{tounet_fwd.223} parent=5 // pred_check
      %p152 = pneg %p151
    $region22: #{tounet_fwd.223} parent=5 // pred_check_branch
      %154 = sbr.rel (%p152) target = $region24
    $region23: #{tounet_fwd.223} parent=5 // pred_region
      // Predicated region
      $region25: #{tounet_fwd.223} parent=23 // pred_check
        %p155 = pneg %p30
      $region26: #{tounet_fwd.223} parent=23 // pred_check_branch
        %157 = sbr.rel (%p155) target = $region28
      $region27: #{tounet_fwd.223} parent=23 // pred_region
        %s158 = smul.u32 16, %s10
        %p159 = scmp.lt.s32.totalorder %s158, 31
        %s160 = scalar_select %p159, %s158, 31
        %s161 = smul.addr %s160, 2
        %s162 = smul.addr %s161, 4
        %s163 = scalar_lea.vmem %s0, %s162
        %s164 = smul.u32 16, %s10
      $region28: #{tounet_fwd.223} parent=23 // pred_fallthru
        _
      // Predicated region
      $region29: #{tounet_fwd.223} parent=23 // pred_check
        %p165 = pneg %p98
      $region30: #{tounet_fwd.223} parent=23 // pred_check_branch
        %167 = sbr.rel (%p165) target = $region32
      $region31: #{tounet_fwd.223} parent=23 // pred_region
        %s168 = smul.u32 16, %s10
        %p169 = scmp.lt.s32.totalorder %s168, 31
        %s170 = scalar_select %p169, %s168, 31
        %s171 = smul.addr %s170, 4
        %s172 = scalar_lea.vmem %s3, %s171
        %s173 = smul.u32 16, %s10
      $region32: #{tounet_fwd.223} parent=23 // pred_fallthru
        _
    $region24: #{tounet_fwd.223} parent=5 // pred_fallthru
      _
    %p174 = scmp.le.s32.totalorder 1, %s10
    %p175 = scmp.lt.s32.totalorder %s10, 3
    %p176 = pnand %p174, %p175
    %p177 = pneg %p176
    // Predicated region
    $region33: #{tounet_fwd.223} parent=5 // pred_check
      _
    $region34: #{tounet_fwd.223} parent=5 // pred_check_branch
      %179 = sbr.rel (%p176) target = $region36
    $region35: #{tounet_fwd.223} parent=5 // pred_region
      %s180 = ssub.s32 %s10, 1
      %s181 = smul.u32 16, %s15
      %p182 = scmp.lt.s32.totalorder %s181, 31
      %s183 = scalar_select %p182, %s181, 31
      %s184 = smul.addr %s183, 2
      %s185 = smul.addr %s184, 4
      %s186 = scalar_lea.vmem %s0, %s185
      %p187 = pneg %p36
      %p188 = pneg %p33
      %p189 = pneg %p57
      %p190 = pneg %p54
      %p191 = pneg %p78
      %p192 = pneg %p75
      %s193 = smul.u32 16, %s15
      %p194 = scmp.lt.s32.totalorder %s193, 31
      %s195 = scalar_select %p194, %s193, 31
      %s196 = smul.addr %s195, 4
      %s197 = scalar_lea.vmem %s3, %s196
      %p198 = pneg %p104
      %p199 = pneg %p101
      %p200 = pneg %p130
      %p201 = pneg %p127
      %s202 = smul.u32 16, %s15
      %p203 = scmp.lt.s32.totalorder %s202, 31
      %s204 = scalar_select %p203, %s202, 31
      %s205 = smul.addr %s204, 4
      %s206 = scalar_lea.vmem %s4, %s205
      %s207 = smul.u32 16, %s15
      %p208 = scmp.lt.s32.totalorder %s207, 31
      %s209 = scalar_select %p208, %s207, 31
      %s210 = smul.addr %s209, 2
      %s211 = smul.addr %s210, 4
      %s212 = scalar_lea.vmem %s0, %s211
      %s213 = smul.u32 16, %s15
      %s214 = smul.u32 16, %s15
      %p215 = scmp.lt.s32.totalorder %s214, 31
      %s216 = scalar_select %p215, %s214, 31
      %s217 = smul.addr %s216, 4
      %s218 = scalar_lea.vmem %s3, %s217
      %s219 = smul.u32 16, %s15
      %s220 = smul.u32 16, %s15
      %p221 = scmp.lt.s32.totalorder %s220, 31
      %s222 = scalar_select %p221, %s220, 31
      %s223 = smul.addr %s222, 4
      %s224 = scalar_lea.vmem %s4, %s223
      %s225 = smul.u32 16, %s15
      %v227 = vld [vmem:[%s212] sm:$0xff]
      %v228 = vld [vmem:[%s212 + $0x8] sm:$0xff]
      %v229 = vld [vmem:[%s212 + $0x10] sm:$0xff]
      %v230 = vld [vmem:[%s212 + $0x18] sm:$0xff]
      %v231 = vld [vmem:[%s212 + $0x20] sm:$0xff]
      %v232 = vld [vmem:[%s212 + $0x28] sm:$0xff]
      %v233 = vld [vmem:[%s212 + $0x30] sm:$0xff]
      %v234 = vld [vmem:[%s212 + $0x38] sm:$0xff]
      %v235 = vld [vmem:[%s212 + $0x40] sm:$0xff]
      %v236 = vld [vmem:[%s212 + $0x48] sm:$0xff]
      %v237 = vld [vmem:[%s212 + $0x50] sm:$0xff]
      %v238 = vld [vmem:[%s212 + $0x58] sm:$0xff]
      %v239 = vld [vmem:[%s212 + $0x60] sm:$0xff]
      %v240 = vld [vmem:[%s212 + $0x68] sm:$0xff]
      %v241 = vld [vmem:[%s212 + $0x70] sm:$0xff]
      %v242 = vld [vmem:[%s212 + $0x78] sm:$0xff]
      %v243 = vld [vmem:[%s1] sm:$0xf]
      %v244 = vld [vmem:[%s1 + $0x4] sm:$0xf]
      %v245 = vld [vmem:[%s1 + $0x8] sm:$0xf]
      %v246 = vld [vmem:[%s1 + $0xc] sm:$0xf]
      %v247 = vld [vmem:[%s1 + $0x10] sm:$0xf]
      %v248 = vld [vmem:[%s1 + $0x14] sm:$0xf]
      %v249 = vld [vmem:[%s1 + $0x18] sm:$0xf]
      %v250 = vld [vmem:[%s1 + $0x1c] sm:$0xf]
      %v251 = vld [vmem:[%s1 + $0x20] sm:$0xf]
      %v252 = vld [vmem:[%s1 + $0x24] sm:$0xf]
      %v253 = vld [vmem:[%s1 + $0x28] sm:$0xf]
      %v254 = vld [vmem:[%s1 + $0x2c] sm:$0xf]
      %v255 = vld [vmem:[%s1 + $0x30] sm:$0xf]
      %v256 = vld [vmem:[%s1 + $0x34] sm:$0xf]
      %v257 = vld [vmem:[%s1 + $0x38] sm:$0xf]
      %v258 = vld [vmem:[%s1 + $0x3c] sm:$0xf]
      %v259 = vld [vmem:[%s1 + $0x40] sm:$0xf]
      %v260 = vld [vmem:[%s1 + $0x44] sm:$0xf]
      %v261 = vld [vmem:[%s1 + $0x48] sm:$0xf]
      %v262 = vld [vmem:[%s1 + $0x4c] sm:$0xf]
      %v263 = vld [vmem:[%s1 + $0x50] sm:$0xf]
      %v264 = vld [vmem:[%s1 + $0x54] sm:$0xf]
      %v265 = vld [vmem:[%s1 + $0x58] sm:$0xf]
      %v266 = vld [vmem:[%s1 + $0x5c] sm:$0xf]
      %v267 = vld [vmem:[%s1 + $0x60] sm:$0xf]
      %v268 = vld [vmem:[%s1 + $0x64] sm:$0xf]
      %v269 = vld [vmem:[%s1 + $0x68] sm:$0xf]
      %v270 = vld [vmem:[%s1 + $0x6c] sm:$0xf]
      %v271 = vld [vmem:[%s1 + $0x70] sm:$0xf]
      %v272 = vld [vmem:[%s1 + $0x74] sm:$0xf]
      %v273 = vld [vmem:[%s1 + $0x78] sm:$0xf]
      %v274 = vld [vmem:[%s1 + $0x7c] sm:$0xf]
      %v275 = vld [vmem:[%s2] sm:$0x1]
      %v277 = vlaneseq
      %v278 = vshrl.u32 %v277, 7
      %v279 = vsub.s32 0, %v278
      %v280 = vrot.slane %v275, %v279
      %v298 = vunpack.c.l.b16 %v227
      %v299 = vunpack.c.h.b16 %v227
      %v300 = vunpack.c.l.b16 %v228
      %v301 = vunpack.c.h.b16 %v228
      %v302 = vunpack.c.l.b16 %v229
      %v303 = vunpack.c.h.b16 %v229
      %v304 = vunpack.c.l.b16 %v230
      %v305 = vunpack.c.h.b16 %v230
      %v306 = vunpack.c.l.b16 %v231
      %v307 = vunpack.c.h.b16 %v231
      %v308 = vunpack.c.l.b16 %v232
      %v309 = vunpack.c.h.b16 %v232
      %v310 = vunpack.c.l.b16 %v233
      %v311 = vunpack.c.h.b16 %v233
      %v312 = vunpack.c.l.b16 %v234
      %v313 = vunpack.c.h.b16 %v234
      %v314 = vunpack.c.l.b16 %v235
      %v315 = vunpack.c.h.b16 %v235
      %v316 = vunpack.c.l.b16 %v236
      %v317 = vunpack.c.h.b16 %v236
      %v318 = vunpack.c.l.b16 %v237
      %v319 = vunpack.c.h.b16 %v237
      %v320 = vunpack.c.l.b16 %v238
      %v321 = vunpack.c.h.b16 %v238
      %v322 = vunpack.c.l.b16 %v239
      %v323 = vunpack.c.h.b16 %v239
      %v324 = vunpack.c.l.b16 %v240
      %v325 = vunpack.c.h.b16 %v240
      %v326 = vunpack.c.l.b16 %v241
      %v327 = vunpack.c.h.b16 %v241
      %v328 = vunpack.c.l.b16 %v242
      %v329 = vunpack.c.h.b16 %v242
      %v330 = vpack.c.b16 %v300, %v298
      %v331 = vpack.c.b16 %v301, %v299
      %v332 = vpack.c.b16 %v304, %v302
      %v333 = vpack.c.b16 %v305, %v303
      %v334 = vpack.c.b16 %v308, %v306
      %v335 = vpack.c.b16 %v309, %v307
      %v336 = vpack.c.b16 %v312, %v310
      %v337 = vpack.c.b16 %v313, %v311
      %v338 = vpack.c.b16 %v316, %v314
      %v339 = vpack.c.b16 %v317, %v315
      %v340 = vpack.c.b16 %v320, %v318
      %v341 = vpack.c.b16 %v321, %v319
      %v342 = vpack.c.b16 %v324, %v322
      %v343 = vpack.c.b16 %v325, %v323
      %v344 = vpack.c.b16 %v328, %v326
      %v345 = vpack.c.b16 %v329, %v327
      %v394 = vunpack.c.l.b16 %v243
      %v395 = vunpack.c.l.b16 %v244
      %v396 = vunpack.c.l.b16 %v245
      %v397 = vunpack.c.l.b16 %v246
      %v398 = vunpack.c.l.b16 %v247
      %v399 = vunpack.c.l.b16 %v248
      %v400 = vunpack.c.l.b16 %v249
      %v401 = vunpack.c.l.b16 %v250
      %v402 = vunpack.c.l.b16 %v251
      %v403 = vunpack.c.l.b16 %v252
      %v404 = vunpack.c.l.b16 %v253
      %v405 = vunpack.c.l.b16 %v254
      %v406 = vunpack.c.l.b16 %v255
      %v407 = vunpack.c.l.b16 %v256
      %v408 = vunpack.c.l.b16 %v257
      %v409 = vunpack.c.l.b16 %v258
      %v410 = vunpack.c.l.b16 %v259
      %v411 = vunpack.c.l.b16 %v260
      %v412 = vunpack.c.l.b16 %v261
      %v413 = vunpack.c.l.b16 %v262
      %v414 = vunpack.c.l.b16 %v263
      %v415 = vunpack.c.l.b16 %v264
      %v416 = vunpack.c.l.b16 %v265
      %v417 = vunpack.c.l.b16 %v266
      %v418 = vunpack.c.l.b16 %v267
      %v419 = vunpack.c.l.b16 %v268
      %v420 = vunpack.c.l.b16 %v269
      %v421 = vunpack.c.l.b16 %v270
      %v422 = vunpack.c.l.b16 %v271
      %v423 = vunpack.c.l.b16 %v272
      %v424 = vunpack.c.l.b16 %v273
      %v425 = vunpack.c.l.b16 %v274
      %v426 = vpack.c.b16 %v395, %v394
      %v427 = vpack.c.b16 %v397, %v396
      %v428 = vpack.c.b16 %v399, %v398
      %v429 = vpack.c.b16 %v401, %v400
      %v430 = vpack.c.b16 %v403, %v402
      %v431 = vpack.c.b16 %v405, %v404
      %v432 = vpack.c.b16 %v407, %v406
      %v433 = vpack.c.b16 %v409, %v408
      %v434 = vpack.c.b16 %v411, %v410
      %v435 = vpack.c.b16 %v413, %v412
      %v436 = vpack.c.b16 %v415, %v414
      %v437 = vpack.c.b16 %v417, %v416
      %v438 = vpack.c.b16 %v419, %v418
      %v439 = vpack.c.b16 %v421, %v420
      %v440 = vpack.c.b16 %v423, %v422
      %v441 = vpack.c.b16 %v425, %v424
      %458 = vmatprep.subr.bf16.mxu0 0
      %459 = vmatpush1.bf16.msra.mxu0 %v426
      %460 = vmatprep.subr.bf16.mxu0 0
      %461 = vmatpush1.bf16.msra.mxu0 %v427
      %462 = vmatprep.subr.bf16.mxu0 0
      %463 = vmatpush1.bf16.msra.mxu0 %v428
      %464 = vmatprep.subr.bf16.mxu0 0
      %465 = vmatpush1.bf16.msra.mxu0 %v429
      %466 = vmatprep.subr.bf16.mxu0 0
      %467 = vmatpush1.bf16.msra.mxu0 %v430
      %468 = vmatprep.subr.bf16.mxu0 0
      %469 = vmatpush1.bf16.msra.mxu0 %v431
      %470 = vmatprep.subr.bf16.mxu0 0
      %471 = vmatpush1.bf16.msra.mxu0 %v432
      %472 = vmatprep.subr.bf16.mxu0 0
      %473 = vmatpush1.bf16.msra.mxu0 %v433
      %474 = vmatprep.subr.bf16.mxu0 0
      %475 = vmatpush1.bf16.msra.mxu0 %v434
      %476 = vmatprep.subr.bf16.mxu0 0
      %477 = vmatpush1.bf16.msra.mxu0 %v435
      %478 = vmatprep.subr.bf16.mxu0 0
      %479 = vmatpush1.bf16.msra.mxu0 %v436
      %480 = vmatprep.subr.bf16.mxu0 0
      %481 = vmatpush1.bf16.msra.mxu0 %v437
      %482 = vmatprep.subr.bf16.mxu0 0
      %483 = vmatpush1.bf16.msra.mxu0 %v438
      %484 = vmatprep.subr.bf16.mxu0 0
      %485 = vmatpush1.bf16.msra.mxu0 %v439
      %486 = vmatprep.subr.bf16.mxu0 0
      %487 = vmatpush1.bf16.msra.mxu0 %v440
      %488 = vmatprep.subr.bf16.mxu0 0
      %489 = vmatpush1.bf16.msra.mxu0 %v441
      %490 = vmatprep.mubr.bf16.mxu0 %v331
      %491 = vmatmul.mubr.bf16.gmra.mrb[0].mxu0 %v330
      %v492 = vpop.f32.mrb[0].mxu0
      %v493 = vadd.f32 %v280, %v492
      %v494 = vpop.f32.mrb[0].mxu0
      %v495 = vpop.f32.mrb[0].mxu0
      %v496 = vadd.f32 %v280, %v495
      %v497 = vpop.f32.mrb[0].mxu0
      %498 = vmatprep.mubr.bf16.mxu0 %v333
      %499 = vmatmul.mubr.bf16.gmra.mrb[0].mxu0 %v332
      %v500 = vpop.f32.mrb[0].mxu0
      %v501 = vadd.f32 %v280, %v500
      %v502 = vpop.f32.mrb[0].mxu0
      %v503 = vpop.f32.mrb[0].mxu0
      %v504 = vadd.f32 %v280, %v503
      %v505 = vpop.f32.mrb[0].mxu0
      %506 = vmatprep.mubr.bf16.mxu0 %v335
      %507 = vmatmul.mubr.bf16.gmra.mrb[0].mxu0 %v334
      %v508 = vpop.f32.mrb[0].mxu0
      %v509 = vadd.f32 %v280, %v508
      %v510 = vpop.f32.mrb[0].mxu0
      %v511 = vpop.f32.mrb[0].mxu0
      %v512 = vadd.f32 %v280, %v511
      %v513 = vpop.f32.mrb[0].mxu0
      %514 = vmatprep.mubr.bf16.mxu0 %v337
      %515 = vmatmul.mubr.bf16.gmra.mrb[0].mxu0 %v336
      %v516 = vpop.f32.mrb[0].mxu0
      %v517 = vadd.f32 %v280, %v516
      %v518 = vpop.f32.mrb[0].mxu0
      %v519 = vpop.f32.mrb[0].mxu0
      %v520 = vadd.f32 %v280, %v519
      %v521 = vpop.f32.mrb[0].mxu0
      %522 = vmatprep.mubr.bf16.mxu0 %v339
      %523 = vmatmul.mubr.bf16.gmra.mrb[0].mxu0 %v338
      %v524 = vpop.f32.mrb[0].mxu0
      %v525 = vadd.f32 %v280, %v524
      %v526 = vpop.f32.mrb[0].mxu0
      %v527 = vpop.f32.mrb[0].mxu0
      %v528 = vadd.f32 %v280, %v527
      %v529 = vpop.f32.mrb[0].mxu0
      %530 = vmatprep.mubr.bf16.mxu0 %v341
      %531 = vmatmul.mubr.bf16.gmra.mrb[0].mxu0 %v340
      %v532 = vpop.f32.mrb[0].mxu0
      %v533 = vadd.f32 %v280, %v532
      %v534 = vpop.f32.mrb[0].mxu0
      %v535 = vpop.f32.mrb[0].mxu0
      %v536 = vadd.f32 %v280, %v535
      %v537 = vpop.f32.mrb[0].mxu0
      %538 = vmatprep.mubr.bf16.mxu0 %v343
      %539 = vmatmul.mubr.bf16.gmra.mrb[0].mxu0 %v342
      %v540 = vpop.f32.mrb[0].mxu0
      %v541 = vadd.f32 %v280, %v540
      %v542 = vpop.f32.mrb[0].mxu0
      %v543 = vpop.f32.mrb[0].mxu0
      %v544 = vadd.f32 %v280, %v543
      %v545 = vpop.f32.mrb[0].mxu0
      %546 = vmatprep.mubr.bf16.mxu0 %v345
      %547 = vmatmul.mubr.bf16.gmra.mrb[0].mxu0 %v344
      %v548 = vpop.f32.mrb[0].mxu0
      %v549 = vadd.f32 %v280, %v548
      %v550 = vpop.f32.mrb[0].mxu0
      %v551 = vpop.f32.mrb[0].mxu0
      %v552 = vadd.f32 %v280, %v551
      %v553 = vpop.f32.mrb[0].mxu0
      %554 = vdwg.mxu0
      %vm555 = vcmp.gt.f32.partialorder %v493, 0.0
      %vm556 = vcmp.gt.f32.partialorder %v496, 0.0
      %vm557 = vcmp.gt.f32.partialorder %v501, 0.0
      %vm558 = vcmp.gt.f32.partialorder %v504, 0.0
      %vm559 = vcmp.gt.f32.partialorder %v509, 0.0
      %vm560 = vcmp.gt.f32.partialorder %v512, 0.0
      %vm561 = vcmp.gt.f32.partialorder %v517, 0.0
      %vm562 = vcmp.gt.f32.partialorder %v520, 0.0
      %vm563 = vcmp.gt.f32.partialorder %v525, 0.0
      %vm564 = vcmp.gt.f32.partialorder %v528, 0.0
      %vm565 = vcmp.gt.f32.partialorder %v533, 0.0
      %vm566 = vcmp.gt.f32.partialorder %v536, 0.0
      %vm567 = vcmp.gt.f32.partialorder %v541, 0.0
      %vm568 = vcmp.gt.f32.partialorder %v544, 0.0
      %vm569 = vcmp.gt.f32.partialorder %v549, 0.0
      %vm570 = vcmp.gt.f32.partialorder %v552, 0.0
      %v571 = vmul.f32 %v493, 0.25
      %v572 = vmul.f32 %v496, 0.25
      %v573 = vmul.f32 %v501, 0.25
      %v574 = vmul.f32 %v504, 0.25
      %v575 = vmul.f32 %v509, 0.25
      %v576 = vmul.f32 %v512, 0.25
      %v577 = vmul.f32 %v517, 0.25
      %v578 = vmul.f32 %v520, 0.25
      %v579 = vmul.f32 %v525, 0.25
      %v580 = vmul.f32 %v528, 0.25
      %v581 = vmul.f32 %v533, 0.25
      %v582 = vmul.f32 %v536, 0.25
      %v583 = vmul.f32 %v541, 0.25
      %v584 = vmul.f32 %v544, 0.25
      %v585 = vmul.f32 %v549, 0.25
      %v586 = vmul.f32 %v552, 0.25
      %v587 = vsel %vm555, %v493, %v571
      %v588 = vsel %vm556, %v496, %v572
      %v589 = vsel %vm557, %v501, %v573
      %v590 = vsel %vm558, %v504, %v574
      %v591 = vsel %vm559, %v509, %v575
      %v592 = vsel %vm560, %v512, %v576
      %v593 = vsel %vm561, %v517, %v577
      %v594 = vsel %vm562, %v520, %v578
      %v595 = vsel %vm563, %v525, %v579
      %v596 = vsel %vm564, %v528, %v580
      %v597 = vsel %vm565, %v533, %v581
      %v598 = vsel %vm566, %v536, %v582
      %v599 = vsel %vm567, %v541, %v583
      %v600 = vsel %vm568, %v544, %v584
      %v601 = vsel %vm569, %v549, %v585
      %v602 = vsel %vm570, %v552, %v586
      %v603 = vld [vmem:[%s218] sm:$0xf]
      %v604 = vld [vmem:[%s218 + $0x4] sm:$0xf]
      %v605 = vld [vmem:[%s218 + $0x8] sm:$0xf]
      %v606 = vld [vmem:[%s218 + $0xc] sm:$0xf]
      %v607 = vld [vmem:[%s218 + $0x10] sm:$0xf]
      %v608 = vld [vmem:[%s218 + $0x14] sm:$0xf]
      %v609 = vld [vmem:[%s218 + $0x18] sm:$0xf]
      %v610 = vld [vmem:[%s218 + $0x1c] sm:$0xf]
      %v611 = vld [vmem:[%s218 + $0x20] sm:$0xf]
      %v612 = vld [vmem:[%s218 + $0x24] sm:$0xf]
      %v613 = vld [vmem:[%s218 + $0x28] sm:$0xf]
      %v614 = vld [vmem:[%s218 + $0x2c] sm:$0xf]
      %v615 = vld [vmem:[%s218 + $0x30] sm:$0xf]
      %v616 = vld [vmem:[%s218 + $0x34] sm:$0xf]
      %v617 = vld [vmem:[%s218 + $0x38] sm:$0xf]
      %v618 = vld [vmem:[%s218 + $0x3c] sm:$0xf]
      %v619 = vunpack.c.l.bf16 %v603
      %v620 = vunpack.c.l.bf16 %v604
      %v621 = vunpack.c.l.bf16 %v605
      %v622 = vunpack.c.l.bf16 %v606
      %v623 = vunpack.c.l.bf16 %v607
      %v624 = vunpack.c.l.bf16 %v608
      %v625 = vunpack.c.l.bf16 %v609
      %v626 = vunpack.c.l.bf16 %v610
      %v627 = vunpack.c.l.bf16 %v611
      %v628 = vunpack.c.l.bf16 %v612
      %v629 = vunpack.c.l.bf16 %v613
      %v630 = vunpack.c.l.bf16 %v614
      %v631 = vunpack.c.l.bf16 %v615
      %v632 = vunpack.c.l.bf16 %v616
      %v633 = vunpack.c.l.bf16 %v617
      %v634 = vunpack.c.l.bf16 %v618
      %v635 = vadd.f32 %v587, %v619
      %v636 = vadd.f32 %v588, %v620
      %v637 = vadd.f32 %v589, %v621
      %v638 = vadd.f32 %v590, %v622
      %v639 = vadd.f32 %v591, %v623
      %v640 = vadd.f32 %v592, %v624
      %v641 = vadd.f32 %v593, %v625
      %v642 = vadd.f32 %v594, %v626
      %v643 = vadd.f32 %v595, %v627
      %v644 = vadd.f32 %v596, %v628
      %v645 = vadd.f32 %v597, %v629
      %v646 = vadd.f32 %v598, %v630
      %v647 = vadd.f32 %v599, %v631
      %v648 = vadd.f32 %v600, %v632
      %v649 = vadd.f32 %v601, %v633
      %v650 = vadd.f32 %v602, %v634
      %v651 = vpack.c.bf16 %v636, %v635
      %v652 = vpack.c.bf16 %v638, %v637
      %v653 = vpack.c.bf16 %v640, %v639
      %v654 = vpack.c.bf16 %v642, %v641
      %v655 = vpack.c.bf16 %v644, %v643
      %v656 = vpack.c.bf16 %v646, %v645
      %v657 = vpack.c.bf16 %v648, %v647
      %v658 = vpack.c.bf16 %v650, %v649
      %v667 = vunpack.c.l.b16 %v651
      %v668 = vunpack.c.h.b16 %v651
      %v669 = vunpack.c.l.b16 %v652
      %v670 = vunpack.c.h.b16 %v652
      %v671 = vunpack.c.l.b16 %v653
      %v672 = vunpack.c.h.b16 %v653
      %v673 = vunpack.c.l.b16 %v654
      %v674 = vunpack.c.h.b16 %v654
      %v675 = vunpack.c.l.b16 %v655
      %v676 = vunpack.c.h.b16 %v655
      %v677 = vunpack.c.l.b16 %v656
      %v678 = vunpack.c.h.b16 %v656
      %v679 = vunpack.c.l.b16 %v657
      %v680 = vunpack.c.h.b16 %v657
      %v681 = vunpack.c.l.b16 %v658
      %v682 = vunpack.c.h.b16 %v658
      %v683 = vpack.c.b16 %v667, %v667
      %v684 = vpack.c.b16 %v668, %v668
      %v685 = vpack.c.b16 %v669, %v669
      %v686 = vpack.c.b16 %v670, %v670
      %v687 = vpack.c.b16 %v671, %v671
      %v688 = vpack.c.b16 %v672, %v672
      %v689 = vpack.c.b16 %v673, %v673
      %v690 = vpack.c.b16 %v674, %v674
      %v691 = vpack.c.b16 %v675, %v675
      %v692 = vpack.c.b16 %v676, %v676
      %v693 = vpack.c.b16 %v677, %v677
      %v694 = vpack.c.b16 %v678, %v678
      %v695 = vpack.c.b16 %v679, %v679
      %v696 = vpack.c.b16 %v680, %v680
      %v697 = vpack.c.b16 %v681, %v681
      %v698 = vpack.c.b16 %v682, %v682
      %vm715 = vcmask 125952
      %716 = vst.msk [vmem:[%s224] sm:$0xf] %vm715, %v683
      %717 = vst.msk [vmem:[%s224 + $0x4] sm:$0xf] %vm715, %v684
      %718 = vst.msk [vmem:[%s224 + $0x8] sm:$0xf] %vm715, %v685
      %719 = vst.msk [vmem:[%s224 + $0xc] sm:$0xf] %vm715, %v686
      %720 = vst.msk [vmem:[%s224 + $0x10] sm:$0xf] %vm715, %v687
      %721 = vst.msk [vmem:[%s224 + $0x14] sm:$0xf] %vm715, %v688
      %722 = vst.msk [vmem:[%s224 + $0x18] sm:$0xf] %vm715, %v689
      %723 = vst.msk [vmem:[%s224 + $0x1c] sm:$0xf] %vm715, %v690
      %724 = vst.msk [vmem:[%s224 + $0x20] sm:$0xf] %vm715, %v691
      %725 = vst.msk [vmem:[%s224 + $0x24] sm:$0xf] %vm715, %v692
      %726 = vst.msk [vmem:[%s224 + $0x28] sm:$0xf] %vm715, %v693
      %727 = vst.msk [vmem:[%s224 + $0x2c] sm:$0xf] %vm715, %v694
      %728 = vst.msk [vmem:[%s224 + $0x30] sm:$0xf] %vm715, %v695
      %729 = vst.msk [vmem:[%s224 + $0x34] sm:$0xf] %vm715, %v696
      %730 = vst.msk [vmem:[%s224 + $0x38] sm:$0xf] %vm715, %v697
      %731 = vst.msk [vmem:[%s224 + $0x3c] sm:$0xf] %vm715, %v698
      %s732 = smul.u32 16, %s15
      %p733 = scmp.lt.s32.totalorder %s732, 31
      %s734 = scalar_select %p733, %s732, 31
      %s735 = smul.addr %s734, 4
      %s736 = scalar_lea.vmem %s4, %s735
      // Predicated region
      $region37: #{tounet_fwd.223} parent=35 // pred_check
        %p737 = pneg %p127
      $region38: #{tounet_fwd.223} parent=35 // pred_check_branch
        %739 = sbr.rel (%p737) target = $region40
      $region39: #{tounet_fwd.223} parent=35 // pred_region
        %s740 = smul.u32 16, %s15
      $region40: #{tounet_fwd.223} parent=35 // pred_fallthru
        _
    $region36: #{tounet_fwd.223} parent=5 // pred_fallthru
      _
    %p741 = scmp.le.s32.totalorder 2, %s10
    // Predicated region
    $region41: #{tounet_fwd.223} parent=5 // pred_check
      %p742 = pneg %p741
    $region42: #{tounet_fwd.223} parent=5 // pred_check_branch
      %744 = sbr.rel (%p742) target = $region44
    $region43: #{tounet_fwd.223} parent=5 // pred_region
      %s745 = ssub.s32 %s10, 2
      // Predicated region
      $region45: #{tounet_fwd.223} parent=43 // pred_check
        %p746 = pneg %p133
      $region46: #{tounet_fwd.223} parent=43 // pred_check_branch
        %748 = sbr.rel (%p746) target = $region48
      $region47: #{tounet_fwd.223} parent=43 // pred_region
        %s749 = smul.u32 16, %s16
        %p750 = scmp.lt.s32.totalorder %s749, 31
        %s751 = scalar_select %p750, %s749, 31
        %s752 = smul.addr %s751, 4
        %s753 = scalar_lea.vmem %s4, %s752
      $region48: #{tounet_fwd.223} parent=43 // pred_fallthru
        _
    $region44: #{tounet_fwd.223} parent=5 // pred_fallthru
      _
  $region6: #{tounet_fwd.223} parent=0 // loop_footer
    %s14 = sadd.s32 1, %s10
  $region7: #{tounet_fwd.223} parent=0 // loop_footer_branch
    %9 = sbr.rel target = $region3
  $region8: #{tounet_fwd.223} parent=0 // loop_exit
    _

// kernel: tounet_fwd.274
$region0: #{tounet_fwd.274}
  #allocation0 [shape = 'u32[]', space=smem, size = 0x4, offset = 0x4, fixed_abs, tag = 'smem constant byte address 0x4 - core index']
  #allocation1 [shape = 'u32[144,128]{1,0:T(1,128)}', space=vmem, size = 0x12000, scoped, tag = 'internal scratch']
  %s0 = inlined_call_operand.vmem [shape: bf16[256,384], index: 0, kind: input, shape index: {}]
  %s1 = inlined_call_operand.vmem [shape: bf16[384,128], index: 1, kind: input, shape index: {}]
  %s2 = inlined_call_operand.vmem [shape: f32[1,128], index: 2, kind: input, shape index: {}]
  %s3 = inlined_call_operand.vmem [shape: bf16[256,3], index: 3, kind: output, shape index: {}]
  %s4 = sld [smem:[#allocation0]]
  $region45: #{tounet_fwd.274} parent=0
    _
  %s6 = ssub.s32 1, %s4
  %s7 = scalar_select 0, %s6, %s4
  loop: start=0, step=1, limit=4
  $region2: #{tounet_fwd.274} parent=0 // loop_pre_header
    _
  $region3: #{tounet_fwd.274} parent=0 // loop_header
    %s9 = sphi 0, %s13
    %p10 = scmp.ge.s32.totalorder %s9, 4
    %s19 = sphi 0, %s21
    %s22 = sphi 0, %s19
    %s23 = sphi 0, %s22
    %s39 = sphi 0, %s23
    %s43 = sphi 0, %s43
    %s45 = sphi 0, %s43
    %s46 = sphi 0, %s45
    %s60 = sphi 0, %s46
    %s64 = sphi 0, %s64
    %s66 = sphi 0, %s64
    %s67 = sphi 0, %s66
    %s81 = sphi 0, %s67
    %s87 = sphi 0, %s89
    %s90 = sphi 0, %s87
    %s91 = sphi 0, %s90
    %s107 = sphi 0, %s91
  $region4: #{tounet_fwd.274} parent=0 // loop_header_branch
    %12 = sbr.rel (%p10) target = $region8
  $region5: #{tounet_fwd.274} parent=0 // loop_body
    %s14 = ssub.s32 %s9, 1
    %s15 = ssub.s32 %s9, 2
    %s16 = sadd.s32 %s9, 1
    %s17 = ssub.s32 %s9, %s16
    %p18 = scmp.eq.s32.totalorder %s17, 0
    %s20 = sadd.s32 %s19, 1
    %s21 = scalar_select %p18, %s19, %s20
    %p24 = pneg %p18
    %p25 = scmp.eq.s32.totalorder %s9, 1
    %p26 = por %p24, %p25
    %p27 = scmp.ne.s32.totalorder %s19, %s22
    %p28 = scmp.eq.s32.totalorder %s9, 0
    %p29 = por %p27, %p28
    %p30 = scmp.ne.s32.totalorder %s19, %s22
    %p31 = scmp.eq.s32.totalorder %s14, 1
    %p32 = por %p30, %p31
    %p33 = scmp.ne.s32.totalorder %s22, %s23
    %p34 = scmp.eq.s32.totalorder %s14, 0
    %p35 = por %p33, %p34
    %p36 = scmp.ne.s32.totalorder %s22, %s23
    %p37 = scmp.eq.s32.totalorder %s15, 1
    %p38 = por %p36, %p37
    %p40 = scmp.ne.s32.totalorder %s23, %s39
    %p41 = scmp.eq.s32.totalorder %s15, 0
    %p42 = por %p40, %p41
    %s44 = sadd.s32 %s43, 1
    %p47 = scmp.eq.s32.totalorder %s9, 1
    %p48 = scmp.ne.s32.totalorder %s43, %s45
    %p49 = scmp.eq.s32.totalorder %s9, 0
    %p50 = por %p48, %p49
    %p51 = scmp.ne.s32.totalorder %s43, %s45
    %p52 = scmp.eq.s32.totalorder %s14, 1
    %p53 = por %p51, %p52
    %p54 = scmp.ne.s32.totalorder %s45, %s46
    %p55 = scmp.eq.s32.totalorder %s14, 0
    %p56 = por %p54, %p55
    %p57 = scmp.ne.s32.totalorder %s45, %s46
    %p58 = scmp.eq.s32.totalorder %s15, 1
    %p59 = por %p57, %p58
    %p61 = scmp.ne.s32.totalorder %s46, %s60
    %p62 = scmp.eq.s32.totalorder %s15, 0
    %p63 = por %p61, %p62
    %s65 = sadd.s32 %s64, 1
    %p68 = scmp.eq.s32.totalorder %s9, 1
    %p69 = scmp.ne.s32.totalorder %s64, %s66
    %p70 = scmp.eq.s32.totalorder %s9, 0
    %p71 = por %p69, %p70
    %p72 = scmp.ne.s32.totalorder %s64, %s66
    %p73 = scmp.eq.s32.totalorder %s14, 1
    %p74 = por %p72, %p73
    %p75 = scmp.ne.s32.totalorder %s66, %s67
    %p76 = scmp.eq.s32.totalorder %s14, 0
    %p77 = por %p75, %p76
    %p78 = scmp.ne.s32.totalorder %s66, %s67
    %p79 = scmp.eq.s32.totalorder %s15, 1
    %p80 = por %p78, %p79
    %p82 = scmp.ne.s32.totalorder %s67, %s81
    %p83 = scmp.eq.s32.totalorder %s15, 0
    %p84 = por %p82, %p83
    %s85 = ssub.s32 %s9, %s16
    %p86 = scmp.eq.s32.totalorder %s85, 0
    %s88 = sadd.s32 %s87, 1
    %s89 = scalar_select %p86, %s87, %s88
    %p92 = pneg %p86
    %p93 = scmp.eq.s32.totalorder %s9, 1
    %p94 = por %p92, %p93
    %p95 = scmp.ne.s32.totalorder %s87, %s90
    %p96 = scmp.eq.s32.totalorder %s9, 0
    %p97 = por %p95, %p96
    %p98 = scmp.ne.s32.totalorder %s87, %s90
    %p99 = scmp.eq.s32.totalorder %s14, 1
    %p100 = por %p98, %p99
    %p101 = scmp.ne.s32.totalorder %s90, %s91
    %p102 = scmp.eq.s32.totalorder %s14, 0
    %p103 = por %p101, %p102
    %p104 = scmp.ne.s32.totalorder %s90, %s91
    %p105 = scmp.eq.s32.totalorder %s15, 1
    %p106 = por %p104, %p105
    %p108 = scmp.ne.s32.totalorder %s91, %s107
    %p109 = scmp.eq.s32.totalorder %s15, 0
    %p110 = por %p108, %p109
    %p111 = scmp.le.s32.totalorder 1, %s9
    %p112 = scmp.lt.s32.totalorder %s9, 3
    %p113 = pnand %p111, %p112
    %p114 = pneg %p113
    // Predicated region
    $region9: #{tounet_fwd.274} parent=5 // pred_check
      _
    $region10: #{tounet_fwd.274} parent=5 // pred_check_branch
      %116 = sbr.rel (%p113) target = $region12
    $region11: #{tounet_fwd.274} parent=5 // pred_region
      %s117 = ssub.s32 %s9, 1
      // Predicated region
      $region13: #{tounet_fwd.274} parent=11 // pred_check
        %p118 = pneg %p56
      $region14: #{tounet_fwd.274} parent=11 // pred_check_branch
        %120 = sbr.rel (%p118) target = $region16
      $region15: #{tounet_fwd.274} parent=11 // pred_region
        _
      $region16: #{tounet_fwd.274} parent=11 // pred_fallthru
        _
      // Predicated region
      $region17: #{tounet_fwd.274} parent=11 // pred_check
        %p121 = pneg %p77
      $region18: #{tounet_fwd.274} parent=11 // pred_check_branch
        %123 = sbr.rel (%p121) target = $region20
      $region19: #{tounet_fwd.274} parent=11 // pred_region
        _
      $region20: #{tounet_fwd.274} parent=11 // pred_fallthru
        _
    $region12: #{tounet_fwd.274} parent=5 // pred_fallthru
      _
    %p124 = scmp.lt.s32.totalorder %s9, 2
    // Predicated region
    $region21: #{tounet_fwd.274} parent=5 // pred_check
      %p125 = pneg %p124
    $region22: #{tounet_fwd.274} parent=5 // pred_check_branch
      %127 = sbr.rel (%p125) target = $region24
    $region23: #{tounet_fwd.274} parent=5 // pred_region
      // Predicated region
      $region25: #{tounet_fwd.274} parent=23 // pred_check
        %p128 = pneg %p29
      $region26: #{tounet_fwd.274} parent=23 // pred_check_branch
        %130 = sbr.rel (%p128) target = $region28
      $region27: #{tounet_fwd.274} parent=23 // pred_region
        %s131 = smul.u32 16, %s9
        %p132 = scmp.lt.s32.totalorder %s131, 31
        %s133 = scalar_select %p132, %s131, 31
        %s134 = smul.addr %s133, 3
        %s135 = smul.addr %s134, 4
        %s136 = scalar_lea.vmem %s0, %s135
        %s137 = smul.u32 16, %s9
      $region28: #{tounet_fwd.274} parent=23 // pred_fallthru
        _
    $region24: #{tounet_fwd.274} parent=5 // pred_fallthru
      _
    %p138 = scmp.le.s32.totalorder 1, %s9
    %p139 = scmp.lt.s32.totalorder %s9, 3
    %p140 = pnand %p138, %p139
    %p141 = pneg %p140
    // Predicated region
    $region29: #{tounet_fwd.274} parent=5 // pred_check
      _
    $region30: #{tounet_fwd.274} parent=5 // pred_check_branch
      %143 = sbr.rel (%p140) target = $region32
    $region31: #{tounet_fwd.274} parent=5 // pred_region
      %s144 = ssub.s32 %s9, 1
      %s145 = smul.u32 16, %s14
      %p146 = scmp.lt.s32.totalorder %s145, 31
      %s147 = scalar_select %p146, %s145, 31
      %s148 = smul.addr %s147, 3
      %s149 = smul.addr %s148, 4
      %s150 = scalar_lea.vmem %s0, %s149
      %p151 = pneg %p35
      %p152 = pneg %p32
      %p153 = pneg %p56
      %p154 = pneg %p53
      %p155 = pneg %p77
      %p156 = pneg %p74
      %p157 = pneg %p103
      %p158 = pneg %p100
      %s159 = smul.u32 16, %s14
      %p160 = scmp.lt.s32.totalorder %s159, 31
      %s161 = scalar_select %p160, %s159, 31
      %s162 = smul.addr %s161, 4
      %s163 = scalar_lea.vmem %s3, %s162
      %s164 = smul.u32 16, %s14
      %p165 = scmp.lt.s32.totalorder %s164, 31
      %s166 = scalar_select %p165, %s164, 31
      %s167 = smul.addr %s166, 3
      %s168 = smul.addr %s167, 4
      %s169 = scalar_lea.vmem %s0, %s168
      %s170 = smul.u32 16, %s14
      %s171 = smul.u32 16, %s14
      %p172 = scmp.lt.s32.totalorder %s171, 31
      %s173 = scalar_select %p172, %s171, 31
      %s174 = smul.addr %s173, 4
      %s175 = scalar_lea.vmem %s3, %s174
      %s176 = smul.u32 16, %s14
      %v178 = vld [vmem:[%s169] sm:$0xff]
      %v179 = vld [vmem:[%s169 + $0x8] sm:$0xf]
      %v180 = vld [vmem:[%s169 + $0xc] sm:$0xff]
      %v181 = vld [vmem:[%s169 + $0x14] sm:$0xf]
      %v182 = vld [vmem:[%s169 + $0x18] sm:$0xff]
      %v183 = vld [vmem:[%s169 + $0x20] sm:$0xf]
      %v184 = vld [vmem:[%s169 + $0x24] sm:$0xff]
      %v185 = vld [vmem:[%s169 + $0x2c] sm:$0xf]
      %v186 = vld [vmem:[%s169 + $0x30] sm:$0xff]
      %v187 = vld [vmem:[%s169 + $0x38] sm:$0xf]
      %v188 = vld [vmem:[%s169 + $0x3c] sm:$0xff]
      %v189 = vld [vmem:[%s169 + $0x44] sm:$0xf]
      %v190 = vld [vmem:[%s169 + $0x48] sm:$0xff]
      %v191 = vld [vmem:[%s169 + $0x50] sm:$0xf]
      %v192 = vld [vmem:[%s169 + $0x54] sm:$0xff]
      %v193 = vld [vmem:[%s169 + $0x5c] sm:$0xf]
      %v194 = vld [vmem:[%s169 + $0x60] sm:$0xff]
      %v195 = vld [vmem:[%s169 + $0x68] sm:$0xf]
      %v196 = vld [vmem:[%s169 + $0x6c] sm:$0xff]
      %v197 = vld [vmem:[%s169 + $0x74] sm:$0xf]
      %v198 = vld [vmem:[%s169 + $0x78] sm:$0xff]
      %v199 = vld [vmem:[%s169 + $0x80] sm:$0xf]
      %v200 = vld [vmem:[%s169 + $0x84] sm:$0xff]
      %v201 = vld [vmem:[%s169 + $0x8c] sm:$0xf]
      %v202 = vld [vmem:[%s169 + $0x90] sm:$0xff]
      %v203 = vld [vmem:[%s169 + $0x98] sm:$0xf]
      %v204 = vld [vmem:[%s169 + $0x9c] sm:$0xff]
      %v205 = vld [vmem:[%s169 + $0xa4] sm:$0xf]
      %v206 = vld [vmem:[%s169 + $0xa8] sm:$0xff]
      %v207 = vld [vmem:[%s169 + $0xb0] sm:$0xf]
      %v208 = vld [vmem:[%s169 + $0xb4] sm:$0xff]
      %v209 = vld [vmem:[%s169 + $0xbc] sm:$0xf]
      %v210 = vld [vmem:[%s1] sm:$0xf]
      %v211 = vld [vmem:[%s1 + $0x4] sm:$0xf]
      %v212 = vld [vmem:[%s1 + $0x8] sm:$0xf]
      %v213 = vld [vmem:[%s1 + $0xc] sm:$0xf]
      %v214 = vld [vmem:[%s1 + $0x10] sm:$0xf]
      %v215 = vld [vmem:[%s1 + $0x14] sm:$0xf]
      %v216 = vld [vmem:[%s1 + $0x18] sm:$0xf]
      %v217 = vld [vmem:[%s1 + $0x1c] sm:$0xf]
      %v218 = vld [vmem:[%s1 + $0x20] sm:$0xf]
      %v219 = vld [vmem:[%s1 + $0x24] sm:$0xf]
      %v220 = vld [vmem:[%s1 + $0x28] sm:$0xf]
      %v221 = vld [vmem:[%s1 + $0x2c] sm:$0xf]
      %v222 = vld [vmem:[%s1 + $0x30] sm:$0xf]
      %v223 = vld [vmem:[%s1 + $0x34] sm:$0xf]
      %v224 = vld [vmem:[%s1 + $0x38] sm:$0xf]
      %v225 = vld [vmem:[%s1 + $0x3c] sm:$0xf]
      %v226 = vld [vmem:[%s1 + $0x40] sm:$0xf]
      %v227 = vld [vmem:[%s1 + $0x44] sm:$0xf]
      %v228 = vld [vmem:[%s1 + $0x48] sm:$0xf]
      %v229 = vld [vmem:[%s1 + $0x4c] sm:$0xf]
      %v230 = vld [vmem:[%s1 + $0x50] sm:$0xf]
      %v231 = vld [vmem:[%s1 + $0x54] sm:$0xf]
      %v232 = vld [vmem:[%s1 + $0x58] sm:$0xf]
      %v233 = vld [vmem:[%s1 + $0x5c] sm:$0xf]
      %v234 = vld [vmem:[%s1 + $0x60] sm:$0xf]
      %v235 = vld [vmem:[%s1 + $0x64] sm:$0xf]
      %v236 = vld [vmem:[%s1 + $0x68] sm:$0xf]
      %v237 = vld [vmem:[%s1 + $0x6c] sm:$0xf]
      %v238 = vld [vmem:[%s1 + $0x70] sm:$0xf]
      %v239 = vld [vmem:[%s1 + $0x74] sm:$0xf]
      %v240 = vld [vmem:[%s1 + $0x78] sm:$0xf]
      %v241 = vld [vmem:[%s1 + $0x7c] sm:$0xf]
      %v242 = vld [vmem:[%s1 + $0x80] sm:$0xf]
      %v243 = vld [vmem:[%s1 + $0x84] sm:$0xf]
      %v244 = vld [vmem:[%s1 + $0x88] sm:$0xf]
      %v245 = vld [vmem:[%s1 + $0x8c] sm:$0xf]
      %v246 = vld [vmem:[%s1 + $0x90] sm:$0xf]
      %v247 = vld [vmem:[%s1 + $0x94] sm:$0xf]
      %v248 = vld [vmem:[%s1 + $0x98] sm:$0xf]
      %v249 = vld [vmem:[%s1 + $0x9c] sm:$0xf]
      %v250 = vld [vmem:[%s1 + $0xa0] sm:$0xf]
      %v251 = vld [vmem:[%s1 + $0xa4] sm:$0xf]
      %v252 = vld [vmem:[%s1 + $0xa8] sm:$0xf]
      %v253 = vld [vmem:[%s1 + $0xac] sm:$0xf]
      %v254 = vld [vmem:[%s1 + $0xb0] sm:$0xf]
      %v255 = vld [vmem:[%s1 + $0xb4] sm:$0xf]
      %v256 = vld [vmem:[%s1 + $0xb8] sm:$0xf]
      %v257 = vld [vmem:[%s1 + $0xbc] sm:$0xf]
      %v258 = vld [vmem:[%s2] sm:$0x1]
      %v260 = vlaneseq
      %v261 = vshrl.u32 %v260, 7
      %v262 = vsub.s32 0, %v261
      %v263 = vrot.slane %v258, %v262
      %v297 = vunpack.c.l.b16 %v178
      %v298 = vunpack.c.h.b16 %v178
      %v299 = vunpack.c.l.b16 %v179
      %v300 = vunpack.c.l.b16 %v180
      %v301 = vunpack.c.h.b16 %v180
      %v302 = vunpack.c.l.b16 %v181
      %v303 = vunpack.c.l.b16 %v182
      %v304 = vunpack.c.h.b16 %v182
      %v305 = vunpack.c.l.b16 %v183
      %v306 = vunpack.c.l.b16 %v184
      %v307 = vunpack.c.h.b16 %v184
      %v308 = vunpack.c.l.b16 %v185
      %v309 = vunpack.c.l.b16 %v186
      %v310 = vunpack.c.h.b16 %v186
      %v311 = vunpack.c.l.b16 %v187
      %v312 = vunpack.c.l.b16 %v188
      %v313 = vunpack.c.h.b16 %v188
      %v314 = vunpack.c.l.b16 %v189
      %v315 = vunpack.c.l.b16 %v190
      %v316 = vunpack.c.h.b16 %v190
      %v317 = vunpack.c.l.b16 %v191
      %v318 = vunpack.c.l.b16 %v192
      %v319 = vunpack.c.h.b16 %v192
      %v320 = vunpack.c.l.b16 %v193
      %v321 = vunpack.c.l.b16 %v194
      %v322 = vunpack.c.h.b16 %v194
      %v323 = vunpack.c.l.b16 %v195
      %v324 = vunpack.c.l.b16 %v196
      %v325 = vunpack.c.h.b16 %v196
      %v326 = vunpack.c.l.b16 %v197
      %v327 = vunpack.c.l.b16 %v198
      %v328 = vunpack.c.h.b16 %v198
      %v329 = vunpack.c.l.b16 %v199
      %v330 = vunpack.c.l.b16 %v200
      %v331 = vunpack.c.h.b16 %v200
      %v332 = vunpack.c.l.b16 %v201
      %v333 = vunpack.c.l.b16 %v202
      %v334 = vunpack.c.h.b16 %v202
      %v335 = vunpack.c.l.b16 %v203
      %v336 = vunpack.c.l.b16 %v204
      %v337 = vunpack.c.h.b16 %v204
      %v338 = vunpack.c.l.b16 %v205
      %v339 = vunpack.c.l.b16 %v206
      %v340 = vunpack.c.h.b16 %v206
      %v341 = vunpack.c.l.b16 %v207
      %v342 = vunpack.c.l.b16 %v208
      %v343 = vunpack.c.h.b16 %v208
      %v344 = vunpack.c.l.b16 %v209
      %v345 = vpack.c.b16 %v300, %v297
      %v346 = vpack.c.b16 %v301, %v298
      %v347 = vpack.c.b16 %v302, %v299
      %v348 = vpack.c.b16 %v306, %v303
      %v349 = vpack.c.b16 %v307, %v304
      %v350 = vpack.c.b16 %v308, %v305
      %v351 = vpack.c.b16 %v312, %v309
      %v352 = vpack.c.b16 %v313, %v310
      %v353 = vpack.c.b16 %v314, %v311
      %v354 = vpack.c.b16 %v318, %v315
      %v355 = vpack.c.b16 %v319, %v316
      %v356 = vpack.c.b16 %v320, %v317
      %v357 = vpack.c.b16 %v324, %v321
      %v358 = vpack.c.b16 %v325, %v322
      %v359 = vpack.c.b16 %v326, %v323
      %v360 = vpack.c.b16 %v330, %v327
      %v361 = vpack.c.b16 %v331, %v328
      %v362 = vpack.c.b16 %v332, %v329
      %v363 = vpack.c.b16 %v336, %v333
      %v364 = vpack.c.b16 %v337, %v334
      %v365 = vpack.c.b16 %v338, %v335
      %v366 = vpack.c.b16 %v342, %v339
      %v367 = vpack.c.b16 %v343, %v340
      %v368 = vpack.c.b16 %v344, %v341
      %v441 = vunpack.c.l.b16 %v210
      %v442 = vunpack.c.l.b16 %v211
      %v443 = vunpack.c.l.b16 %v212
      %v444 = vunpack.c.l.b16 %v213
      %v445 = vunpack.c.l.b16 %v214
      %v446 = vunpack.c.l.b16 %v215
      %v447 = vunpack.c.l.b16 %v216
      %v448 = vunpack.c.l.b16 %v217
      %v449 = vunpack.c.l.b16 %v218
      %v450 = vunpack.c.l.b16 %v219
      %v451 = vunpack.c.l.b16 %v220
      %v452 = vunpack.c.l.b16 %v221
      %v453 = vunpack.c.l.b16 %v222
      %v454 = vunpack.c.l.b16 %v223
      %v455 = vunpack.c.l.b16 %v224
      %v456 = vunpack.c.l.b16 %v225
      %v457 = vunpack.c.l.b16 %v226
      %v458 = vunpack.c.l.b16 %v227
      %v459 = vunpack.c.l.b16 %v228
      %v460 = vunpack.c.l.b16 %v229
      %v461 = vunpack.c.l.b16 %v230
      %v462 = vunpack.c.l.b16 %v231
      %v463 = vunpack.c.l.b16 %v232
      %v464 = vunpack.c.l.b16 %v233
      %v465 = vunpack.c.l.b16 %v234
      %v466 = vunpack.c.l.b16 %v235
      %v467 = vunpack.c.l.b16 %v236
      %v468 = vunpack.c.l.b16 %v237
      %v469 = vunpack.c.l.b16 %v238
      %v470 = vunpack.c.l.b16 %v239
      %v471 = vunpack.c.l.b16 %v240
      %v472 = vunpack.c.l.b16 %v241
      %v473 = vunpack.c.l.b16 %v242
      %v474 = vunpack.c.l.b16 %v243
      %v475 = vunpack.c.l.b16 %v244
      %v476 = vunpack.c.l.b16 %v245
      %v477 = vunpack.c.l.b16 %v246
      %v478 = vunpack.c.l.b16 %v247
      %v479 = vunpack.c.l.b16 %v248
      %v480 = vunpack.c.l.b16 %v249
      %v481 = vunpack.c.l.b16 %v250
      %v482 = vunpack.c.l.b16 %v251
      %v483 = vunpack.c.l.b16 %v252
      %v484 = vunpack.c.l.b16 %v253
      %v485 = vunpack.c.l.b16 %v254
      %v486 = vunpack.c.l.b16 %v255
      %v487 = vunpack.c.l.b16 %v256
      %v488 = vunpack.c.l.b16 %v257
      %v489 = vpack.c.b16 %v442, %v441
      %v490 = vpack.c.b16 %v444, %v443
      %v491 = vpack.c.b16 %v446, %v445
      %v492 = vpack.c.b16 %v448, %v447
      %v493 = vpack.c.b16 %v450, %v449
      %v494 = vpack.c.b16 %v452, %v451
      %v495 = vpack.c.b16 %v454, %v453
      %v496 = vpack.c.b16 %v456, %v455
      %v497 = vpack.c.b16 %v458, %v457
      %v498 = vpack.c.b16 %v460, %v459
      %v499 = vpack.c.b16 %v462, %v461
      %v500 = vpack.c.b16 %v464, %v463
      %v501 = vpack.c.b16 %v466, %v465
      %v502 = vpack.c.b16 %v468, %v467
      %v503 = vpack.c.b16 %v470, %v469
      %v504 = vpack.c.b16 %v472, %v471
      %v505 = vpack.c.b16 %v474, %v473
      %v506 = vpack.c.b16 %v476, %v475
      %v507 = vpack.c.b16 %v478, %v477
      %v508 = vpack.c.b16 %v480, %v479
      %v509 = vpack.c.b16 %v482, %v481
      %v510 = vpack.c.b16 %v484, %v483
      %v511 = vpack.c.b16 %v486, %v485
      %v512 = vpack.c.b16 %v488, %v487
      %537 = vmatprep.subr.bf16.mxu0 0
      %538 = vmatpush1.bf16.msra.mxu0 %v489
      %539 = vmatprep.subr.bf16.mxu0 0
      %540 = vmatpush1.bf16.msra.mxu0 %v490
      %541 = vmatprep.subr.bf16.mxu0 0
      %542 = vmatpush1.bf16.msra.mxu0 %v491
      %543 = vmatprep.subr.bf16.mxu0 0
      %544 = vmatpush1.bf16.msra.mxu0 %v492
      %545 = vmatprep.subr.bf16.mxu0 0
      %546 = vmatpush1.bf16.msra.mxu0 %v493
      %547 = vmatprep.subr.bf16.mxu0 0
      %548 = vmatpush1.bf16.msra.mxu0 %v494
      %549 = vmatprep.subr.bf16.mxu0 0
      %550 = vmatpush1.bf16.msra.mxu0 %v495
      %551 = vmatprep.subr.bf16.mxu0 0
      %552 = vmatpush1.bf16.msra.mxu0 %v496
      %553 = vmatprep.subr.bf16.mxu0 0
      %554 = vmatpush1.bf16.msra.mxu0 %v497
      %555 = vmatprep.subr.bf16.mxu0 0
      %556 = vmatpush1.bf16.msra.mxu0 %v498
      %557 = vmatprep.subr.bf16.mxu0 0
      %558 = vmatpush1.bf16.msra.mxu0 %v499
      %559 = vmatprep.subr.bf16.mxu0 0
      %560 = vmatpush1.bf16.msra.mxu0 %v500
      %561 = vmatprep.subr.bf16.mxu0 0
      %562 = vmatpush1.bf16.msra.mxu0 %v501
      %563 = vmatprep.subr.bf16.mxu0 0
      %564 = vmatpush1.bf16.msra.mxu0 %v502
      %565 = vmatprep.subr.bf16.mxu0 0
      %566 = vmatpush1.bf16.msra.mxu0 %v503
      %567 = vmatprep.subr.bf16.mxu0 0
      %568 = vmatpush1.bf16.msra.mxu0 %v504
      %569 = vmatprep.mubr.bf16.mxu0 %v346
      %570 = vmatmul.mubr.bf16.gmra.mrb[0].mxu0 %v345
      %v571 = vpop.f32.mrb[0].mxu0
      %v572 = vadd.f32 %v263, %v571
      %v573 = vpop.f32.mrb[0].mxu0
      %v574 = vpop.f32.mrb[0].mxu0
      %v575 = vadd.f32 %v263, %v574
      %v576 = vpop.f32.mrb[0].mxu0
      %577 = vmatprep.mubr.bf16.mxu0 %v349
      %578 = vmatmul.mubr.bf16.gmra.mrb[0].mxu0 %v348
      %v579 = vpop.f32.mrb[0].mxu0
      %v580 = vadd.f32 %v263, %v579
      %v581 = vpop.f32.mrb[0].mxu0
      %v582 = vpop.f32.mrb[0].mxu0
      %v583 = vadd.f32 %v263, %v582
      %v584 = vpop.f32.mrb[0].mxu0
      %585 = vmatprep.mubr.bf16.mxu0 %v352
      %586 = vmatmul.mubr.bf16.gmra.mrb[0].mxu0 %v351
      %v587 = vpop.f32.mrb[0].mxu0
      %v588 = vadd.f32 %v263, %v587
      %v589 = vpop.f32.mrb[0].mxu0
      %v590 = vpop.f32.mrb[0].mxu0
      %v591 = vadd.f32 %v263, %v590
      %v592 = vpop.f32.mrb[0].mxu0
      %593 = vmatprep.mubr.bf16.mxu0 %v355
      %594 = vmatmul.mubr.bf16.gmra.mrb[0].mxu0 %v354
      %v595 = vpop.f32.mrb[0].mxu0
      %v596 = vadd.f32 %v263, %v595
      %v597 = vpop.f32.mrb[0].mxu0
      %v598 = vpop.f32.mrb[0].mxu0
      %v599 = vadd.f32 %v263, %v598
      %v600 = vpop.f32.mrb[0].mxu0
      %601 = vmatprep.mubr.bf16.mxu0 %v358
      %602 = vmatmul.mubr.bf16.gmra.mrb[0].mxu0 %v357
      %v603 = vpop.f32.mrb[0].mxu0
      %v604 = vadd.f32 %v263, %v603
      %v605 = vpop.f32.mrb[0].mxu0
      %v606 = vpop.f32.mrb[0].mxu0
      %v607 = vadd.f32 %v263, %v606
      %v608 = vpop.f32.mrb[0].mxu0
      %609 = vmatprep.mubr.bf16.mxu0 %v361
      %610 = vmatmul.mubr.bf16.gmra.mrb[0].mxu0 %v360
      %v611 = vpop.f32.mrb[0].mxu0
      %v612 = vadd.f32 %v263, %v611
      %v613 = vpop.f32.mrb[0].mxu0
      %v614 = vpop.f32.mrb[0].mxu0
      %v615 = vadd.f32 %v263, %v614
      %v616 = vpop.f32.mrb[0].mxu0
      %617 = vmatprep.mubr.bf16.mxu0 %v364
      %618 = vmatmul.mubr.bf16.gmra.mrb[0].mxu0 %v363
      %v619 = vpop.f32.mrb[0].mxu0
      %v620 = vadd.f32 %v263, %v619
      %v621 = vpop.f32.mrb[0].mxu0
      %v622 = vpop.f32.mrb[0].mxu0
      %v623 = vadd.f32 %v263, %v622
      %v624 = vpop.f32.mrb[0].mxu0
      %625 = vmatprep.mubr.bf16.mxu0 %v367
      %626 = vmatmul.mubr.bf16.gmra.mrb[0].mxu0 %v366
      %v627 = vpop.f32.mrb[0].mxu0
      %v628 = vadd.f32 %v263, %v627
      %v629 = vpop.f32.mrb[0].mxu0
      %v630 = vpop.f32.mrb[0].mxu0
      %v631 = vadd.f32 %v263, %v630
      %v632 = vpop.f32.mrb[0].mxu0
      %633 = vdwg.mxu0
      %634 = vmatprep.subr.bf16.mxu0 0
      %635 = vmatpush1.bf16.msra.mxu0 %v505
      %636 = vmatprep.subr.bf16.mxu0 0
      %637 = vmatpush1.bf16.msra.mxu0 %v506
      %638 = vmatprep.subr.bf16.mxu0 0
      %639 = vmatpush1.bf16.msra.mxu0 %v507
      %640 = vmatprep.subr.bf16.mxu0 0
      %641 = vmatpush1.bf16.msra.mxu0 %v508
      %642 = vmatprep.subr.bf16.mxu0 0
      %643 = vmatpush1.bf16.msra.mxu0 %v509
      %644 = vmatprep.subr.bf16.mxu0 0
      %645 = vmatpush1.bf16.msra.mxu0 %v510
      %646 = vmatprep.subr.bf16.mxu0 0
      %647 = vmatpush1.bf16.msra.mxu0 %v511
      %648 = vmatprep.subr.bf16.mxu0 0
      %649 = vmatpush1.bf16.msra.mxu0 %v512
      %650 = vmatprep.subr.bf16.mxu0 0
      %651 = vmatpush1.bf16.msra.mxu0 0
      %652 = vmatprep.subr.bf16.mxu0 0
      %653 = vmatpush1.bf16.msra.mxu0 0
      %654 = vmatprep.subr.bf16.mxu0 0
      %655 = vmatpush1.bf16.msra.mxu0 0
      %656 = vmatprep.subr.bf16.mxu0 0
      %657 = vmatpush1.bf16.msra.mxu0 0
      %658 = vmatprep.subr.bf16.mxu0 0
      %659 = vmatpush1.bf16.msra.mxu0 0
      %660 = vmatprep.subr.bf16.mxu0 0
      %661 = vmatpush1.bf16.msra.mxu0 0
      %662 = vmatprep.subr.bf16.mxu0 0
      %663 = vmatpush1.bf16.msra.mxu0 0
      %664 = vmatprep.subr.bf16.mxu0 0
      %665 = vmatpush1.bf16.msra.mxu0 0
      %666 = vmatprep.mubr.bf16.mxu0 0
      %667 = vmatmul.mubr.bf16.gmra.mrb[0].mxu0 %v347
      %v668 = vpop.f32.mrb[0].mxu0
      %v669 = vadd.f32 %v572, %v668
      %v670 = vpop.f32.mrb[0].mxu0
      %v671 = vpop.f32.mrb[0].mxu0
      %v672 = vadd.f32 %v575, %v671
      %v673 = vpop.f32.mrb[0].mxu0
      %674 = vmatprep.mubr.bf16.mxu0 0
      %675 = vmatmul.mubr.bf16.gmra.mrb[0].mxu0 %v350
      %v676 = vpop.f32.mrb[0].mxu0
      %v677 = vadd.f32 %v580, %v676
      %v678 = vpop.f32.mrb[0].mxu0
      %v679 = vpop.f32.mrb[0].mxu0
      %v680 = vadd.f32 %v583, %v679
      %v681 = vpop.f32.mrb[0].mxu0
      %682 = vmatprep.mubr.bf16.mxu0 0
      %683 = vmatmul.mubr.bf16.gmra.mrb[0].mxu0 %v353
      %v684 = vpop.f32.mrb[0].mxu0
      %v685 = vadd.f32 %v588, %v684
      %v686 = vpop.f32.mrb[0].mxu0
      %v687 = vpop.f32.mrb[0].mxu0
      %v688 = vadd.f32 %v591, %v687
      %v689 = vpop.f32.mrb[0].mxu0
      %690 = vmatprep.mubr.bf16.mxu0 0
      %691 = vmatmul.mubr.bf16.gmra.mrb[0].mxu0 %v356
      %v692 = vpop.f32.mrb[0].mxu0
      %v693 = vadd.f32 %v596, %v692
      %v694 = vpop.f32.mrb[0].mxu0
      %v695 = vpop.f32.mrb[0].mxu0
      %v696 = vadd.f32 %v599, %v695
      %v697 = vpop.f32.mrb[0].mxu0
      %698 = vmatprep.mubr.bf16.mxu0 0
      %699 = vmatmul.mubr.bf16.gmra.mrb[0].mxu0 %v359
      %v700 = vpop.f32.mrb[0].mxu0
      %v701 = vadd.f32 %v604, %v700
      %v702 = vpop.f32.mrb[0].mxu0
      %v703 = vpop.f32.mrb[0].mxu0
      %v704 = vadd.f32 %v607, %v703
      %v705 = vpop.f32.mrb[0].mxu0
      %706 = vmatprep.mubr.bf16.mxu0 0
      %707 = vmatmul.mubr.bf16.gmra.mrb[0].mxu0 %v362
      %v708 = vpop.f32.mrb[0].mxu0
      %v709 = vadd.f32 %v612, %v708
      %v710 = vpop.f32.mrb[0].mxu0
      %v711 = vpop.f32.mrb[0].mxu0
      %v712 = vadd.f32 %v615, %v711
      %v713 = vpop.f32.mrb[0].mxu0
      %714 = vmatprep.mubr.bf16.mxu0 0
      %715 = vmatmul.mubr.bf16.gmra.mrb[0].mxu0 %v365
      %v716 = vpop.f32.mrb[0].mxu0
      %v717 = vadd.f32 %v620, %v716
      %v718 = vpop.f32.mrb[0].mxu0
      %v719 = vpop.f32.mrb[0].mxu0
      %v720 = vadd.f32 %v623, %v719
      %v721 = vpop.f32.mrb[0].mxu0
      %722 = vmatprep.mubr.bf16.mxu0 0
      %723 = vmatmul.mubr.bf16.gmra.mrb[0].mxu0 %v368
      %v724 = vpop.f32.mrb[0].mxu0
      %v725 = vadd.f32 %v628, %v724
      %v726 = vpop.f32.mrb[0].mxu0
      %v727 = vpop.f32.mrb[0].mxu0
      %v728 = vadd.f32 %v631, %v727
      %v729 = vpop.f32.mrb[0].mxu0
      %730 = vdwg.mxu0
      %v731 = vpack.c.bf16 %v672, %v669
      %v732 = vpack.c.bf16 %v680, %v677
      %v733 = vpack.c.bf16 %v688, %v685
      %v734 = vpack.c.bf16 %v696, %v693
      %v735 = vpack.c.bf16 %v704, %v701
      %v736 = vpack.c.bf16 %v712, %v709
      %v737 = vpack.c.bf16 %v720, %v717
      %v738 = vpack.c.bf16 %v728, %v725
      %v747 = vunpack.c.l.b16 %v731
      %v748 = vunpack.c.h.b16 %v731
      %v749 = vunpack.c.l.b16 %v732
      %v750 = vunpack.c.h.b16 %v732
      %v751 = vunpack.c.l.b16 %v733
      %v752 = vunpack.c.h.b16 %v733
      %v753 = vunpack.c.l.b16 %v734
      %v754 = vunpack.c.h.b16 %v734
      %v755 = vunpack.c.l.b16 %v735
      %v756 = vunpack.c.h.b16 %v735
      %v757 = vunpack.c.l.b16 %v736
      %v758 = vunpack.c.h.b16 %v736
      %v759 = vunpack.c.l.b16 %v737
      %v760 = vunpack.c.h.b16 %v737
      %v761 = vunpack.c.l.b16 %v738
      %v762 = vunpack.c.h.b16 %v738
      %v763 = vpack.c.b16 %v747, %v747
      %v764 = vpack.c.b16 %v748, %v748
      %v765 = vpack.c.b16 %v749, %v749
      %v766 = vpack.c.b16 %v750, %v750
      %v767 = vpack.c.b16 %v751, %v751
      %v768 = vpack.c.b16 %v752, %v752
      %v769 = vpack.c.b16 %v753, %v753
      %v770 = vpack.c.b16 %v754, %v754
      %v771 = vpack.c.b16 %v755, %v755
      %v772 = vpack.c.b16 %v756, %v756
      %v773 = vpack.c.b16 %v757, %v757
      %v774 = vpack.c.b16 %v758, %v758
      %v775 = vpack.c.b16 %v759, %v759
      %v776 = vpack.c.b16 %v760, %v760
      %v777 = vpack.c.b16 %v761, %v761
      %v778 = vpack.c.b16 %v762, %v762
      %vm795 = vcmask 19456
      %796 = vst.msk [vmem:[%s175] sm:$0xf] %vm795, %v763
      %797 = vst.msk [vmem:[%s175 + $0x4] sm:$0xf] %vm795, %v764
      %798 = vst.msk [vmem:[%s175 + $0x8] sm:$0xf] %vm795, %v765
      %799 = vst.msk [vmem:[%s175 + $0xc] sm:$0xf] %vm795, %v766
      %800 = vst.msk [vmem:[%s175 + $0x10] sm:$0xf] %vm795, %v767
      %801 = vst.msk [vmem:[%s175 + $0x14] sm:$0xf] %vm795, %v768
      %802 = vst.msk [vmem:[%s175 + $0x18] sm:$0xf] %vm795, %v769
      %803 = vst.msk [vmem:[%s175 + $0x1c] sm:$0xf] %vm795, %v770
      %804 = vst.msk [vmem:[%s175 + $0x20] sm:$0xf] %vm795, %v771
      %805 = vst.msk [vmem:[%s175 + $0x24] sm:$0xf] %vm795, %v772
      %806 = vst.msk [vmem:[%s175 + $0x28] sm:$0xf] %vm795, %v773
      %807 = vst.msk [vmem:[%s175 + $0x2c] sm:$0xf] %vm795, %v774
      %808 = vst.msk [vmem:[%s175 + $0x30] sm:$0xf] %vm795, %v775
      %809 = vst.msk [vmem:[%s175 + $0x34] sm:$0xf] %vm795, %v776
      %810 = vst.msk [vmem:[%s175 + $0x38] sm:$0xf] %vm795, %v777
      %811 = vst.msk [vmem:[%s175 + $0x3c] sm:$0xf] %vm795, %v778
      %s812 = smul.u32 16, %s14
      %p813 = scmp.lt.s32.totalorder %s812, 31
      %s814 = scalar_select %p813, %s812, 31
      %s815 = smul.addr %s814, 4
      %s816 = scalar_lea.vmem %s3, %s815
      // Predicated region
      $region33: #{tounet_fwd.274} parent=31 // pred_check
        %p817 = pneg %p100
      $region34: #{tounet_fwd.274} parent=31 // pred_check_branch
        %819 = sbr.rel (%p817) target = $region36
      $region35: #{tounet_fwd.274} parent=31 // pred_region
        %s820 = smul.u32 16, %s14
      $region36: #{tounet_fwd.274} parent=31 // pred_fallthru
        _
    $region32: #{tounet_fwd.274} parent=5 // pred_fallthru
      _
    %p821 = scmp.le.s32.totalorder 2, %s9
    // Predicated region
    $region37: #{tounet_fwd.274} parent=5 // pred_check
      %p822 = pneg %p821
    $region38: #{tounet_fwd.274} parent=5 // pred_check_branch
      %824 = sbr.rel (%p822) target = $region40
    $region39: #{tounet_fwd.274} parent=5 // pred_region
      %s825 = ssub.s32 %s9, 2
      // Predicated region
      $region41: #{tounet_fwd.274} parent=39 // pred_check
        %p826 = pneg %p106
      $region42: #{tounet_fwd.274} parent=39 // pred_check_branch
        %828 = sbr.rel (%p826) target = $region44
      $region43: #{tounet_fwd.274} parent=39 // pred_region
        %s829 = smul.u32 16, %s15
        %p830 = scmp.lt.s32.totalorder %s829, 31
        %s831 = scalar_select %p830, %s829, 31
        %s832 = smul.addr %s831, 4
        %s833 = scalar_lea.vmem %s3, %s832
      $region44: #{tounet_fwd.274} parent=39 // pred_fallthru
        _
    $region40: #{tounet_fwd.274} parent=5 // pred_fallthru
      _
  $region6: #{tounet_fwd.274} parent=0 // loop_footer
    %s13 = sadd.s32 1, %s9
  $region7: #{tounet_fwd.274} parent=0 // loop_footer_branch
    %8 = sbr.rel target = $region3
  $region8: #{tounet_fwd.274} parent=0 // loop_exit
    _

// kernel: tounet_fwd.365
$region0: #{tounet_fwd.365}
  #allocation0 [shape = 'u32[]', space=smem, size = 0x4, offset = 0x4, fixed_abs, tag = 'smem constant byte address 0x4 - core index']
  #allocation1 [shape = 'u32[144,128]{1,0:T(1,128)}', space=vmem, size = 0x12000, scoped, tag = 'internal scratch']
  %s0 = inlined_call_operand.vmem [shape: bf16[256,128], index: 0, kind: input, shape index: {}]
  %s1 = inlined_call_operand.vmem [shape: bf16[128,128], index: 1, kind: input, shape index: {}]
  %s2 = inlined_call_operand.vmem [shape: f32[1,128], index: 2, kind: input, shape index: {}]
  %s3 = inlined_call_operand.vmem [shape: bf16[256,3], index: 3, kind: output, shape index: {}]
  %s4 = sld [smem:[#allocation0]]
  $region45: #{tounet_fwd.365} parent=0
    _
  %s6 = ssub.s32 1, %s4
  %s7 = scalar_select 0, %s6, %s4
  loop: start=0, step=1, limit=4
  $region2: #{tounet_fwd.365} parent=0 // loop_pre_header
    _
  $region3: #{tounet_fwd.365} parent=0 // loop_header
    %s9 = sphi 0, %s13
    %p10 = scmp.ge.s32.totalorder %s9, 4
    %s19 = sphi 0, %s21
    %s22 = sphi 0, %s19
    %s23 = sphi 0, %s22
    %s39 = sphi 0, %s23
    %s43 = sphi 0, %s43
    %s45 = sphi 0, %s43
    %s46 = sphi 0, %s45
    %s60 = sphi 0, %s46
    %s64 = sphi 0, %s64
    %s66 = sphi 0, %s64
    %s67 = sphi 0, %s66
    %s81 = sphi 0, %s67
    %s87 = sphi 0, %s89
    %s90 = sphi 0, %s87
    %s91 = sphi 0, %s90
    %s107 = sphi 0, %s91
  $region4: #{tounet_fwd.365} parent=0 // loop_header_branch
    %12 = sbr.rel (%p10) target = $region8
  $region5: #{tounet_fwd.365} parent=0 // loop_body
    %s14 = ssub.s32 %s9, 1
    %s15 = ssub.s32 %s9, 2
    %s16 = sadd.s32 %s9, 1
    %s17 = ssub.s32 %s9, %s16
    %p18 = scmp.eq.s32.totalorder %s17, 0
    %s20 = sadd.s32 %s19, 1
    %s21 = scalar_select %p18, %s19, %s20
    %p24 = pneg %p18
    %p25 = scmp.eq.s32.totalorder %s9, 1
    %p26 = por %p24, %p25
    %p27 = scmp.ne.s32.totalorder %s19, %s22
    %p28 = scmp.eq.s32.totalorder %s9, 0
    %p29 = por %p27, %p28
    %p30 = scmp.ne.s32.totalorder %s19, %s22
    %p31 = scmp.eq.s32.totalorder %s14, 1
    %p32 = por %p30, %p31
    %p33 = scmp.ne.s32.totalorder %s22, %s23
    %p34 = scmp.eq.s32.totalorder %s14, 0
    %p35 = por %p33, %p34
    %p36 = scmp.ne.s32.totalorder %s22, %s23
    %p37 = scmp.eq.s32.totalorder %s15, 1
    %p38 = por %p36, %p37
    %p40 = scmp.ne.s32.totalorder %s23, %s39
    %p41 = scmp.eq.s32.totalorder %s15, 0
    %p42 = por %p40, %p41
    %s44 = sadd.s32 %s43, 1
    %p47 = scmp.eq.s32.totalorder %s9, 1
    %p48 = scmp.ne.s32.totalorder %s43, %s45
    %p49 = scmp.eq.s32.totalorder %s9, 0
    %p50 = por %p48, %p49
    %p51 = scmp.ne.s32.totalorder %s43, %s45
    %p52 = scmp.eq.s32.totalorder %s14, 1
    %p53 = por %p51, %p52
    %p54 = scmp.ne.s32.totalorder %s45, %s46
    %p55 = scmp.eq.s32.totalorder %s14, 0
    %p56 = por %p54, %p55
    %p57 = scmp.ne.s32.totalorder %s45, %s46
    %p58 = scmp.eq.s32.totalorder %s15, 1
    %p59 = por %p57, %p58
    %p61 = scmp.ne.s32.totalorder %s46, %s60
    %p62 = scmp.eq.s32.totalorder %s15, 0
    %p63 = por %p61, %p62
    %s65 = sadd.s32 %s64, 1
    %p68 = scmp.eq.s32.totalorder %s9, 1
    %p69 = scmp.ne.s32.totalorder %s64, %s66
    %p70 = scmp.eq.s32.totalorder %s9, 0
    %p71 = por %p69, %p70
    %p72 = scmp.ne.s32.totalorder %s64, %s66
    %p73 = scmp.eq.s32.totalorder %s14, 1
    %p74 = por %p72, %p73
    %p75 = scmp.ne.s32.totalorder %s66, %s67
    %p76 = scmp.eq.s32.totalorder %s14, 0
    %p77 = por %p75, %p76
    %p78 = scmp.ne.s32.totalorder %s66, %s67
    %p79 = scmp.eq.s32.totalorder %s15, 1
    %p80 = por %p78, %p79
    %p82 = scmp.ne.s32.totalorder %s67, %s81
    %p83 = scmp.eq.s32.totalorder %s15, 0
    %p84 = por %p82, %p83
    %s85 = ssub.s32 %s9, %s16
    %p86 = scmp.eq.s32.totalorder %s85, 0
    %s88 = sadd.s32 %s87, 1
    %s89 = scalar_select %p86, %s87, %s88
    %p92 = pneg %p86
    %p93 = scmp.eq.s32.totalorder %s9, 1
    %p94 = por %p92, %p93
    %p95 = scmp.ne.s32.totalorder %s87, %s90
    %p96 = scmp.eq.s32.totalorder %s9, 0
    %p97 = por %p95, %p96
    %p98 = scmp.ne.s32.totalorder %s87, %s90
    %p99 = scmp.eq.s32.totalorder %s14, 1
    %p100 = por %p98, %p99
    %p101 = scmp.ne.s32.totalorder %s90, %s91
    %p102 = scmp.eq.s32.totalorder %s14, 0
    %p103 = por %p101, %p102
    %p104 = scmp.ne.s32.totalorder %s90, %s91
    %p105 = scmp.eq.s32.totalorder %s15, 1
    %p106 = por %p104, %p105
    %p108 = scmp.ne.s32.totalorder %s91, %s107
    %p109 = scmp.eq.s32.totalorder %s15, 0
    %p110 = por %p108, %p109
    %p111 = scmp.le.s32.totalorder 1, %s9
    %p112 = scmp.lt.s32.totalorder %s9, 3
    %p113 = pnand %p111, %p112
    %p114 = pneg %p113
    // Predicated region
    $region9: #{tounet_fwd.365} parent=5 // pred_check
      _
    $region10: #{tounet_fwd.365} parent=5 // pred_check_branch
      %116 = sbr.rel (%p113) target = $region12
    $region11: #{tounet_fwd.365} parent=5 // pred_region
      %s117 = ssub.s32 %s9, 1
      // Predicated region
      $region13: #{tounet_fwd.365} parent=11 // pred_check
        %p118 = pneg %p56
      $region14: #{tounet_fwd.365} parent=11 // pred_check_branch
        %120 = sbr.rel (%p118) target = $region16
      $region15: #{tounet_fwd.365} parent=11 // pred_region
        _
      $region16: #{tounet_fwd.365} parent=11 // pred_fallthru
        _
      // Predicated region
      $region17: #{tounet_fwd.365} parent=11 // pred_check
        %p121 = pneg %p77
      $region18: #{tounet_fwd.365} parent=11 // pred_check_branch
        %123 = sbr.rel (%p121) target = $region20
      $region19: #{tounet_fwd.365} parent=11 // pred_region
        _
      $region20: #{tounet_fwd.365} parent=11 // pred_fallthru
        _
    $region12: #{tounet_fwd.365} parent=5 // pred_fallthru
      _
    %p124 = scmp.lt.s32.totalorder %s9, 2
    // Predicated region
    $region21: #{tounet_fwd.365} parent=5 // pred_check
      %p125 = pneg %p124
    $region22: #{tounet_fwd.365} parent=5 // pred_check_branch
      %127 = sbr.rel (%p125) target = $region24
    $region23: #{tounet_fwd.365} parent=5 // pred_region
      // Predicated region
      $region25: #{tounet_fwd.365} parent=23 // pred_check
        %p128 = pneg %p29
      $region26: #{tounet_fwd.365} parent=23 // pred_check_branch
        %130 = sbr.rel (%p128) target = $region28
      $region27: #{tounet_fwd.365} parent=23 // pred_region
        %s131 = smul.u32 16, %s9
        %p132 = scmp.lt.s32.totalorder %s131, 31
        %s133 = scalar_select %p132, %s131, 31
        %s134 = smul.addr %s133, 4
        %s135 = scalar_lea.vmem %s0, %s134
        %s136 = smul.u32 16, %s9
      $region28: #{tounet_fwd.365} parent=23 // pred_fallthru
        _
    $region24: #{tounet_fwd.365} parent=5 // pred_fallthru
      _
    %p137 = scmp.le.s32.totalorder 1, %s9
    %p138 = scmp.lt.s32.totalorder %s9, 3
    %p139 = pnand %p137, %p138
    %p140 = pneg %p139
    // Predicated region
    $region29: #{tounet_fwd.365} parent=5 // pred_check
      _
    $region30: #{tounet_fwd.365} parent=5 // pred_check_branch
      %142 = sbr.rel (%p139) target = $region32
    $region31: #{tounet_fwd.365} parent=5 // pred_region
      %s143 = ssub.s32 %s9, 1
      %s144 = smul.u32 16, %s14
      %p145 = scmp.lt.s32.totalorder %s144, 31
      %s146 = scalar_select %p145, %s144, 31
      %s147 = smul.addr %s146, 4
      %s148 = scalar_lea.vmem %s0, %s147
      %p149 = pneg %p35
      %p150 = pneg %p32
      %p151 = pneg %p56
      %p152 = pneg %p53
      %p153 = pneg %p77
      %p154 = pneg %p74
      %p155 = pneg %p103
      %p156 = pneg %p100
      %s157 = smul.u32 16, %s14
      %p158 = scmp.lt.s32.totalorder %s157, 31
      %s159 = scalar_select %p158, %s157, 31
      %s160 = smul.addr %s159, 4
      %s161 = scalar_lea.vmem %s3, %s160
      %s162 = smul.u32 16, %s14
      %p163 = scmp.lt.s32.totalorder %s162, 31
      %s164 = scalar_select %p163, %s162, 31
      %s165 = smul.addr %s164, 4
      %s166 = scalar_lea.vmem %s0, %s165
      %s167 = smul.u32 16, %s14
      %s168 = smul.u32 16, %s14
      %p169 = scmp.lt.s32.totalorder %s168, 31
      %s170 = scalar_select %p169, %s168, 31
      %s171 = smul.addr %s170, 4
      %s172 = scalar_lea.vmem %s3, %s171
      %s173 = smul.u32 16, %s14
      %v175 = vld [vmem:[%s166] sm:$0xf]
      %v176 = vld [vmem:[%s166 + $0x4] sm:$0xf]
      %v177 = vld [vmem:[%s166 + $0x8] sm:$0xf]
      %v178 = vld [vmem:[%s166 + $0xc] sm:$0xf]
      %v179 = vld [vmem:[%s166 + $0x10] sm:$0xf]
      %v180 = vld [vmem:[%s166 + $0x14] sm:$0xf]
      %v181 = vld [vmem:[%s166 + $0x18] sm:$0xf]
      %v182 = vld [vmem:[%s166 + $0x1c] sm:$0xf]
      %v183 = vld [vmem:[%s166 + $0x20] sm:$0xf]
      %v184 = vld [vmem:[%s166 + $0x24] sm:$0xf]
      %v185 = vld [vmem:[%s166 + $0x28] sm:$0xf]
      %v186 = vld [vmem:[%s166 + $0x2c] sm:$0xf]
      %v187 = vld [vmem:[%s166 + $0x30] sm:$0xf]
      %v188 = vld [vmem:[%s166 + $0x34] sm:$0xf]
      %v189 = vld [vmem:[%s166 + $0x38] sm:$0xf]
      %v190 = vld [vmem:[%s166 + $0x3c] sm:$0xf]
      %v191 = vld [vmem:[%s1] sm:$0xf]
      %v192 = vld [vmem:[%s1 + $0x4] sm:$0xf]
      %v193 = vld [vmem:[%s1 + $0x8] sm:$0xf]
      %v194 = vld [vmem:[%s1 + $0xc] sm:$0xf]
      %v195 = vld [vmem:[%s1 + $0x10] sm:$0xf]
      %v196 = vld [vmem:[%s1 + $0x14] sm:$0xf]
      %v197 = vld [vmem:[%s1 + $0x18] sm:$0xf]
      %v198 = vld [vmem:[%s1 + $0x1c] sm:$0xf]
      %v199 = vld [vmem:[%s1 + $0x20] sm:$0xf]
      %v200 = vld [vmem:[%s1 + $0x24] sm:$0xf]
      %v201 = vld [vmem:[%s1 + $0x28] sm:$0xf]
      %v202 = vld [vmem:[%s1 + $0x2c] sm:$0xf]
      %v203 = vld [vmem:[%s1 + $0x30] sm:$0xf]
      %v204 = vld [vmem:[%s1 + $0x34] sm:$0xf]
      %v205 = vld [vmem:[%s1 + $0x38] sm:$0xf]
      %v206 = vld [vmem:[%s1 + $0x3c] sm:$0xf]
      %v207 = vld [vmem:[%s2] sm:$0x1]
      %v209 = vlaneseq
      %v210 = vshrl.u32 %v209, 7
      %v211 = vsub.s32 0, %v210
      %v212 = vrot.slane %v207, %v211
      %v230 = vunpack.c.l.b16 %v175
      %v231 = vunpack.c.l.b16 %v176
      %v232 = vunpack.c.l.b16 %v177
      %v233 = vunpack.c.l.b16 %v178
      %v234 = vunpack.c.l.b16 %v179
      %v235 = vunpack.c.l.b16 %v180
      %v236 = vunpack.c.l.b16 %v181
      %v237 = vunpack.c.l.b16 %v182
      %v238 = vunpack.c.l.b16 %v183
      %v239 = vunpack.c.l.b16 %v184
      %v240 = vunpack.c.l.b16 %v185
      %v241 = vunpack.c.l.b16 %v186
      %v242 = vunpack.c.l.b16 %v187
      %v243 = vunpack.c.l.b16 %v188
      %v244 = vunpack.c.l.b16 %v189
      %v245 = vunpack.c.l.b16 %v190
      %v246 = vpack.c.b16 %v231, %v230
      %v247 = vpack.c.b16 %v233, %v232
      %v248 = vpack.c.b16 %v235, %v234
      %v249 = vpack.c.b16 %v237, %v236
      %v250 = vpack.c.b16 %v239, %v238
      %v251 = vpack.c.b16 %v241, %v240
      %v252 = vpack.c.b16 %v243, %v242
      %v253 = vpack.c.b16 %v245, %v244
      %v278 = vunpack.c.l.b16 %v191
      %v279 = vunpack.c.l.b16 %v192
      %v280 = vunpack.c.l.b16 %v193
      %v281 = vunpack.c.l.b16 %v194
      %v282 = vunpack.c.l.b16 %v195
      %v283 = vunpack.c.l.b16 %v196
      %v284 = vunpack.c.l.b16 %v197
      %v285 = vunpack.c.l.b16 %v198
      %v286 = vunpack.c.l.b16 %v199
      %v287 = vunpack.c.l.b16 %v200
      %v288 = vunpack.c.l.b16 %v201
      %v289 = vunpack.c.l.b16 %v202
      %v290 = vunpack.c.l.b16 %v203
      %v291 = vunpack.c.l.b16 %v204
      %v292 = vunpack.c.l.b16 %v205
      %v293 = vunpack.c.l.b16 %v206
      %v294 = vpack.c.b16 %v279, %v278
      %v295 = vpack.c.b16 %v281, %v280
      %v296 = vpack.c.b16 %v283, %v282
      %v297 = vpack.c.b16 %v285, %v284
      %v298 = vpack.c.b16 %v287, %v286
      %v299 = vpack.c.b16 %v289, %v288
      %v300 = vpack.c.b16 %v291, %v290
      %v301 = vpack.c.b16 %v293, %v292
      %310 = vmatprep.subr.bf16.mxu0 0
      %311 = vmatpush1.bf16.msra.mxu0 %v294
      %312 = vmatprep.subr.bf16.mxu0 0
      %313 = vmatpush1.bf16.msra.mxu0 %v295
      %314 = vmatprep.subr.bf16.mxu0 0
      %315 = vmatpush1.bf16.msra.mxu0 %v296
      %316 = vmatprep.subr.bf16.mxu0 0
      %317 = vmatpush1.bf16.msra.mxu0 %v297
      %318 = vmatprep.subr.bf16.mxu0 0
      %319 = vmatpush1.bf16.msra.mxu0 %v298
      %320 = vmatprep.subr.bf16.mxu0 0
      %321 = vmatpush1.bf16.msra.mxu0 %v299
      %322 = vmatprep.subr.bf16.mxu0 0
      %323 = vmatpush1.bf16.msra.mxu0 %v300
      %324 = vmatprep.subr.bf16.mxu0 0
      %325 = vmatpush1.bf16.msra.mxu0 %v301
      %326 = vmatprep.subr.bf16.mxu0 0
      %327 = vmatpush1.bf16.msra.mxu0 0
      %328 = vmatprep.subr.bf16.mxu0 0
      %329 = vmatpush1.bf16.msra.mxu0 0
      %330 = vmatprep.subr.bf16.mxu0 0
      %331 = vmatpush1.bf16.msra.mxu0 0
      %332 = vmatprep.subr.bf16.mxu0 0
      %333 = vmatpush1.bf16.msra.mxu0 0
      %334 = vmatprep.subr.bf16.mxu0 0
      %335 = vmatpush1.bf16.msra.mxu0 0
      %336 = vmatprep.subr.bf16.mxu0 0
      %337 = vmatpush1.bf16.msra.mxu0 0
      %338 = vmatprep.subr.bf16.mxu0 0
      %339 = vmatpush1.bf16.msra.mxu0 0
      %340 = vmatprep.subr.bf16.mxu0 0
      %341 = vmatpush1.bf16.msra.mxu0 0
      %342 = vmatprep.mubr.bf16.mxu0 0
      %343 = vmatmul.mubr.bf16.gmra.mrb[0].mxu0 %v246
      %v344 = vpop.f32.mrb[0].mxu0
      %v345 = vadd.f32 %v212, %v344
      %v346 = vpop.f32.mrb[0].mxu0
      %v347 = vpop.f32.mrb[0].mxu0
      %v348 = vadd.f32 %v212, %v347
      %v349 = vpop.f32.mrb[0].mxu0
      %350 = vmatprep.mubr.bf16.mxu0 0
      %351 = vmatmul.mubr.bf16.gmra.mrb[0].mxu0 %v247
      %v352 = vpop.f32.mrb[0].mxu0
      %v353 = vadd.f32 %v212, %v352
      %v354 = vpop.f32.mrb[0].mxu0
      %v355 = vpop.f32.mrb[0].mxu0
      %v356 = vadd.f32 %v212, %v355
      %v357 = vpop.f32.mrb[0].mxu0
      %358 = vmatprep.mubr.bf16.mxu0 0
      %359 = vmatmul.mubr.bf16.gmra.mrb[0].mxu0 %v248
      %v360 = vpop.f32.mrb[0].mxu0
      %v361 = vadd.f32 %v212, %v360
      %v362 = vpop.f32.mrb[0].mxu0
      %v363 = vpop.f32.mrb[0].mxu0
      %v364 = vadd.f32 %v212, %v363
      %v365 = vpop.f32.mrb[0].mxu0
      %366 = vmatprep.mubr.bf16.mxu0 0
      %367 = vmatmul.mubr.bf16.gmra.mrb[0].mxu0 %v249
      %v368 = vpop.f32.mrb[0].mxu0
      %v369 = vadd.f32 %v212, %v368
      %v370 = vpop.f32.mrb[0].mxu0
      %v371 = vpop.f32.mrb[0].mxu0
      %v372 = vadd.f32 %v212, %v371
      %v373 = vpop.f32.mrb[0].mxu0
      %374 = vmatprep.mubr.bf16.mxu0 0
      %375 = vmatmul.mubr.bf16.gmra.mrb[0].mxu0 %v250
      %v376 = vpop.f32.mrb[0].mxu0
      %v377 = vadd.f32 %v212, %v376
      %v378 = vpop.f32.mrb[0].mxu0
      %v379 = vpop.f32.mrb[0].mxu0
      %v380 = vadd.f32 %v212, %v379
      %v381 = vpop.f32.mrb[0].mxu0
      %382 = vmatprep.mubr.bf16.mxu0 0
      %383 = vmatmul.mubr.bf16.gmra.mrb[0].mxu0 %v251
      %v384 = vpop.f32.mrb[0].mxu0
      %v385 = vadd.f32 %v212, %v384
      %v386 = vpop.f32.mrb[0].mxu0
      %v387 = vpop.f32.mrb[0].mxu0
      %v388 = vadd.f32 %v212, %v387
      %v389 = vpop.f32.mrb[0].mxu0
      %390 = vmatprep.mubr.bf16.mxu0 0
      %391 = vmatmul.mubr.bf16.gmra.mrb[0].mxu0 %v252
      %v392 = vpop.f32.mrb[0].mxu0
      %v393 = vadd.f32 %v212, %v392
      %v394 = vpop.f32.mrb[0].mxu0
      %v395 = vpop.f32.mrb[0].mxu0
      %v396 = vadd.f32 %v212, %v395
      %v397 = vpop.f32.mrb[0].mxu0
      %398 = vmatprep.mubr.bf16.mxu0 0
      %399 = vmatmul.mubr.bf16.gmra.mrb[0].mxu0 %v253
      %v400 = vpop.f32.mrb[0].mxu0
      %v401 = vadd.f32 %v212, %v400
      %v402 = vpop.f32.mrb[0].mxu0
      %v403 = vpop.f32.mrb[0].mxu0
      %v404 = vadd.f32 %v212, %v403
      %v405 = vpop.f32.mrb[0].mxu0
      %406 = vdwg.mxu0
      %v407 = vpack.c.bf16 %v348, %v345
      %v408 = vpack.c.bf16 %v356, %v353
      %v409 = vpack.c.bf16 %v364, %v361
      %v410 = vpack.c.bf16 %v372, %v369
      %v411 = vpack.c.bf16 %v380, %v377
      %v412 = vpack.c.bf16 %v388, %v385
      %v413 = vpack.c.bf16 %v396, %v393
      %v414 = vpack.c.bf16 %v404, %v401
      %v423 = vunpack.c.l.b16 %v407
      %v424 = vunpack.c.h.b16 %v407
      %v425 = vunpack.c.l.b16 %v408
      %v426 = vunpack.c.h.b16 %v408
      %v427 = vunpack.c.l.b16 %v409
      %v428 = vunpack.c.h.b16 %v409
      %v429 = vunpack.c.l.b16 %v410
      %v430 = vunpack.c.h.b16 %v410
      %v431 = vunpack.c.l.b16 %v411
      %v432 = vunpack.c.h.b16 %v411
      %v433 = vunpack.c.l.b16 %v412
      %v434 = vunpack.c.h.b16 %v412
      %v435 = vunpack.c.l.b16 %v413
      %v436 = vunpack.c.h.b16 %v413
      %v437 = vunpack.c.l.b16 %v414
      %v438 = vunpack.c.h.b16 %v414
      %v439 = vpack.c.b16 %v423, %v423
      %v440 = vpack.c.b16 %v424, %v424
      %v441 = vpack.c.b16 %v425, %v425
      %v442 = vpack.c.b16 %v426, %v426
      %v443 = vpack.c.b16 %v427, %v427
      %v444 = vpack.c.b16 %v428, %v428
      %v445 = vpack.c.b16 %v429, %v429
      %v446 = vpack.c.b16 %v430, %v430
      %v447 = vpack.c.b16 %v431, %v431
      %v448 = vpack.c.b16 %v432, %v432
      %v449 = vpack.c.b16 %v433, %v433
      %v450 = vpack.c.b16 %v434, %v434
      %v451 = vpack.c.b16 %v435, %v435
      %v452 = vpack.c.b16 %v436, %v436
      %v453 = vpack.c.b16 %v437, %v437
      %v454 = vpack.c.b16 %v438, %v438
      %vm471 = vcmask 19456
      %472 = vst.msk [vmem:[%s172] sm:$0xf] %vm471, %v439
      %473 = vst.msk [vmem:[%s172 + $0x4] sm:$0xf] %vm471, %v440
      %474 = vst.msk [vmem:[%s172 + $0x8] sm:$0xf] %vm471, %v441
      %475 = vst.msk [vmem:[%s172 + $0xc] sm:$0xf] %vm471, %v442
      %476 = vst.msk [vmem:[%s172 + $0x10] sm:$0xf] %vm471, %v443
      %477 = vst.msk [vmem:[%s172 + $0x14] sm:$0xf] %vm471, %v444
      %478 = vst.msk [vmem:[%s172 + $0x18] sm:$0xf] %vm471, %v445
      %479 = vst.msk [vmem:[%s172 + $0x1c] sm:$0xf] %vm471, %v446
      %480 = vst.msk [vmem:[%s172 + $0x20] sm:$0xf] %vm471, %v447
      %481 = vst.msk [vmem:[%s172 + $0x24] sm:$0xf] %vm471, %v448
      %482 = vst.msk [vmem:[%s172 + $0x28] sm:$0xf] %vm471, %v449
      %483 = vst.msk [vmem:[%s172 + $0x2c] sm:$0xf] %vm471, %v450
      %484 = vst.msk [vmem:[%s172 + $0x30] sm:$0xf] %vm471, %v451
      %485 = vst.msk [vmem:[%s172 + $0x34] sm:$0xf] %vm471, %v452
      %486 = vst.msk [vmem:[%s172 + $0x38] sm:$0xf] %vm471, %v453
      %487 = vst.msk [vmem:[%s172 + $0x3c] sm:$0xf] %vm471, %v454
      %s488 = smul.u32 16, %s14
      %p489 = scmp.lt.s32.totalorder %s488, 31
      %s490 = scalar_select %p489, %s488, 31
      %s491 = smul.addr %s490, 4
      %s492 = scalar_lea.vmem %s3, %s491
      // Predicated region
      $region33: #{tounet_fwd.365} parent=31 // pred_check
        %p493 = pneg %p100
      $region34: #{tounet_fwd.365} parent=31 // pred_check_branch
        %495 = sbr.rel (%p493) target = $region36
      $region35: #{tounet_fwd.365} parent=31 // pred_region
        %s496 = smul.u32 16, %s14
      $region36: #{tounet_fwd.365} parent=31 // pred_fallthru
        _
    $region32: #{tounet_fwd.365} parent=5 // pred_fallthru
      _
    %p497 = scmp.le.s32.totalorder 2, %s9
    // Predicated region
    $region37: #{tounet_fwd.365} parent=5 // pred_check
      %p498 = pneg %p497
    $region38: #{tounet_fwd.365} parent=5 // pred_check_branch
      %500 = sbr.rel (%p498) target = $region40
    $region39: #{tounet_fwd.365} parent=5 // pred_region
      %s501 = ssub.s32 %s9, 2
      // Predicated region
      $region41: #{tounet_fwd.365} parent=39 // pred_check
        %p502 = pneg %p106
      $region42: #{tounet_fwd.365} parent=39 // pred_check_branch
        %504 = sbr.rel (%p502) target = $region44
      $region43: #{tounet_fwd.365} parent=39 // pred_region
        %s505 = smul.u32 16, %s15
        %p506 = scmp.lt.s32.totalorder %s505, 31
        %s507 = scalar_select %p506, %s505, 31
        %s508 = smul.addr %s507, 4
        %s509 = scalar_lea.vmem %s3, %s508
      $region44: #{tounet_fwd.365} parent=39 // pred_fallthru
        _
    $region40: #{tounet_fwd.365} parent=5 // pred_fallthru
      _
  $region6: #{tounet_fwd.365} parent=0 // loop_footer
    %s13 = sadd.s32 1, %s9
  $region7: #{tounet_fwd.365} parent=0 // loop_footer_branch
    %8 = sbr.rel target = $region3
  $region8: #{tounet_fwd.365} parent=0 // loop_exit
    _

</llo_original>
